<compile_context>
chip_gen: v7x
topology: tpu7x:2x2x1
jax: 0.10.0
libtpu: 0.0.40
codegen_flags: <defaults>
</compile_context>

<pallas_src>
import functools
import math

import jax
import jax.numpy as jnp
from jax.experimental import pallas as pl
from jax.experimental.pallas import tpu as pltpu


# ----------------------------------------------------------------------------
# In-kernel helpers (pure jnp, lower on all TPU generations)
# ----------------------------------------------------------------------------
def _layernorm(x, g, b, eps):
    mu = jnp.mean(x, axis=-1, keepdims=True)
    xc = x - mu
    var = jnp.mean(xc * xc, axis=-1, keepdims=True)      # biased var, like torch LN
    return xc * jax.lax.rsqrt(var + eps) * g + b


def _erf(z):
    # Abramowitz & Stegun 7.1.26 (|err| < 1.5e-7); only exp/mul/add/where.
    a1, a2, a3, a4, a5 = 0.254829592, -0.284496736, 1.421413741, -1.453152027, 1.061405429
    p = 0.3275911
    az = jnp.abs(z)
    t = 1.0 / (1.0 + p * az)
    poly = ((((a5 * t + a4) * t + a3) * t + a2) * t + a1) * t
    e = 1.0 - poly * jnp.exp(-az * az)
    return jnp.where(z < 0.0, -e, e)


def _gelu(x):
    # torch F.gelu default (exact erf form)
    return 0.5 * x * (1.0 + _erf(x * (1.0 / math.sqrt(2.0))))


# ----------------------------------------------------------------------------
# Fused encoder layer kernel (one grid step = one batch element, full VMEM-resident)
# ----------------------------------------------------------------------------
def _encoder_layer_kernel(x_ref, wqkv_ref, bqkv_ref, wo_ref, bo_ref,
                          w1_ref, b1_ref, w2_ref, b2_ref,
                          g1_ref, be1_ref, g2_ref, be2_ref,
                          cnt_ref, bias_ref, o_ref,
                          *, n_heads, d_head, u, u_pad, scale, eps):
    L, D = x_ref.shape
    x = x_ref[...]                                       # (L, D) f32 activations
    x_bf = x.astype(jnp.bfloat16)

    # ---- fused Q|K|V projection: one bf16 matmul, f32 accumulation ----------
    qkv = (jnp.dot(x_bf, wqkv_ref[...], preferred_element_type=jnp.float32)
           + bqkv_ref[...])                              # (L, 3D) f32

    cnt = cnt_ref[...]                                   # (L, L) bf16 sample multiplicity
    samp_bias = bias_ref[...]                            # (L, L) f32, 0 / -1e9 (unsampled)
    inv_lk = 1.0 / L

    # constants shared by every head (built once per grid step)
    row_i = jax.lax.broadcasted_iota(jnp.int32, (L, L), 0)
    col_j = jax.lax.broadcasted_iota(jnp.int32, (L, L), 1)
    tril = (row_i >= col_j).astype(jnp.float32)          # inclusive-cumsum operator
    eye = (row_i == col_j).astype(jnp.float32)           # for transpose-free row vectors
    rank_iota = jax.lax.broadcasted_iota(jnp.int32, (u_pad, L), 0).astype(jnp.float32)
    pos_iota = jax.lax.broadcasted_iota(jnp.int32, (u_pad, L), 1).astype(jnp.float32)

    head_ctx = []
    for h in range(n_heads):
        q = qkv[:, h * d_head:(h + 1) * d_head]          # (L, Dh) f32
        k = qkv[:, D + h * d_head:D + (h + 1) * d_head]
        v = qkv[:, 2 * D + h * d_head:2 * D + (h + 1) * d_head]
        q_bf = q.astype(jnp.bfloat16)
        k_bf = k.astype(jnp.bfloat16)
        v_bf = v.astype(jnp.bfloat16)

        # full L x L scores stay in VMEM/vregs only (never written to HBM)
        s = jnp.dot(q_bf, k_bf.T, preferred_element_type=jnp.float32)   # (L, L)

        # sparsity measure M = max over sampled keys - mean over sampled keys
        #   max : additive -1e9 bias at unsampled positions
        #   mean: q . (count @ K)   (Ksum trick, no (L,L) select/reduce)
        smax = jnp.max(s + samp_bias, axis=-1, keepdims=True)           # (L, 1)
        ksum = jnp.dot(cnt, k_bf, preferred_element_type=jnp.float32)   # (L, Dh)
        smean = jnp.sum(q * ksum, axis=-1, keepdims=True) * inv_lk      # (L, 1)
        m_col = smax - smean                                            # (L, 1)
        m_row = jnp.sum(m_col * eye, axis=0, keepdims=True)             # (1, L)

        # dense in-kernel top-k by ranking (value desc, index asc):
        # beats[i, j] = 1 iff query j outranks query i
        beats = jnp.logical_or(
            m_row > m_col,
            jnp.logical_and(m_row == m_col, col_j < row_i)).astype(jnp.float32)
        rank_col = jnp.sum(beats, axis=-1, keepdims=True)               # (L, 1) rank of i
        rank_row = (L - 1.0) - jnp.sum(beats, axis=0, keepdims=True)    # (1, L) rank of j
        sel_mask = (rank_col < float(u)).astype(jnp.float32)            # (L, 1)

        # rank-ordered one-hot selection matrix; pad rows r >= u stay all-zero
        sel = jnp.where(
            jnp.logical_and(rank_row == rank_iota, rank_iota < float(u)),
            1.0, 0.0)                                                   # (u_pad, L)
        q_pos = jnp.sum(sel * pos_iota, axis=-1, keepdims=True)         # (u_pad, 1)

        # gather selected score rows with a one-hot MXU matmul, apply causal ProbMask,
        # softmax, attend
        s_sel = jnp.dot(sel, s, preferred_element_type=jnp.float32) * scale
        s_sel = jnp.where(pos_iota > q_pos, -1e30, s_sel)
        p = jnp.exp(s_sel - jnp.max(s_sel, axis=-1, keepdims=True))
        attn = p * pl.reciprocal(jnp.sum(p, axis=-1, keepdims=True), approx=True)
        upd = jnp.dot(attn.astype(jnp.bfloat16), v_bf,
                      preferred_element_type=jnp.float32)               # (u_pad, Dh)

        # initial context = cumsum(V) (mask_flag=True) as a tril matmul in f32,
        # then scatter the updated rows back with the transposed one-hot matmul
        ctx0 = jnp.dot(tril, v, preferred_element_type=jnp.float32)     # (L, Dh)
        scat = jnp.dot(jnp.transpose(sel), upd,
                       preferred_element_type=jnp.float32)              # (L, Dh)
        head_ctx.append(sel_mask * scat + (1.0 - sel_mask) * ctx0)

    attn_out = jnp.concatenate(head_ctx, axis=-1)                       # (L, D) lane-dense

    # ---- out projection + norm1 ---------------------------------------------
    new_x = (jnp.dot(attn_out.astype(jnp.bfloat16), wo_ref[...],
                     preferred_element_type=jnp.float32) + bo_ref[...])
    x1 = _layernorm(x + new_x, g1_ref[...], be1_ref[...], eps)

    # ---- position-wise FFN (1x1 convs) + norm2 -------------------------------
    y = (jnp.dot(x1.astype(jnp.bfloat16), w1_ref[...],
                 preferred_element_type=jnp.float32) + b1_ref[...])
    y = _gelu(y)
    y = (jnp.dot(y.astype(jnp.bfloat16), w2_ref[...],
                 preferred_element_type=jnp.float32) + b2_ref[...])
    o_ref[...] = _layernorm(x1 + y, g2_ref[...], be2_ref[...], eps)


def encoder_layer(x2d, p, seq_len, n_heads, factor=5):
    """One fused Informer encoder layer; x2d: (B*L, D) f32."""
    L = seq_len
    N, D = x2d.shape
    B = N // L
    d_head = D // n_heads
    dff = p["w1"].shape[1]
    u = min(int(factor * math.ceil(math.log(L))), L)      # c * ln(L_q) == c * ln(L_k)
    u_pad = ((u + 7) // 8) * 8                            # sublane-clean selected-row count

    kern = functools.partial(_encoder_layer_kernel, n_heads=n_heads, d_head=d_head,
                             u=u, u_pad=u_pad, scale=1.0 / math.sqrt(d_head), eps=1e-5)
    row = lambda b: (b, 0)
    full = lambda b: (0, 0)
    return pl.pallas_call(
        kern,
        out_shape=jax.ShapeDtypeStruct((N, D), jnp.float32),
        grid_spec=pltpu.PrefetchScalarGridSpec(
            num_scalar_prefetch=0,
            grid=(B,),
            in_specs=[
                pl.BlockSpec((L, D), row),                # x
                pl.BlockSpec((D, 3 * D), full),           # w_qkv (bf16)
                pl.BlockSpec((1, 3 * D), full),           # b_qkv
                pl.BlockSpec((D, D), full),               # wo (bf16)
                pl.BlockSpec((1, D), full),               # bo
                pl.BlockSpec((D, dff), full),             # w1 (bf16)
                pl.BlockSpec((1, dff), full),             # b1
                pl.BlockSpec((dff, D), full),             # w2 (bf16)
                pl.BlockSpec((1, D), full),               # b2
                pl.BlockSpec((1, D), full),               # g1
                pl.BlockSpec((1, D), full),               # be1
                pl.BlockSpec((1, D), full),               # g2
                pl.BlockSpec((1, D), full),               # be2
                pl.BlockSpec((L, L), full),               # count (bf16)
                pl.BlockSpec((L, L), full),               # sample bias (f32)
            ],
            out_specs=pl.BlockSpec((L, D), row)),
        compiler_params=pltpu.CompilerParams(
            dimension_semantics=("parallel",),
            vmem_limit_bytes=32 * 1024 * 1024),
    )(x2d, p["w_qkv"], p["b_qkv"], p["wo"], p["bo"],
      p["w1"], p["b1"], p["w2"], p["b2"],
      p["g1"], p["be1"], p["g2"], p["be2"],
      p["count"], p["bias"])


# ----------------------------------------------------------------------------
# Embedding kernel: circular Conv1d(k=3, no bias) as matmul + positional embedding
# ----------------------------------------------------------------------------
def _embed_kernel(xs_ref, w_ref, pe_ref, o_ref):
    o_ref[...] = (jnp.dot(xs_ref[...].astype(jnp.bfloat16), w_ref[...],
                          preferred_element_type=jnp.float32) + pe_ref[...])


def embed_tokens(xs2d, w_tok, pe_l):
    N, C3 = xs2d.shape
    L, D = pe_l.shape
    B = N // L
    return pl.pallas_call(
        _embed_kernel,
        out_shape=jax.ShapeDtypeStruct((N, D), jnp.float32),
        grid_spec=pltpu.PrefetchScalarGridSpec(
            num_scalar_prefetch=0,
            grid=(B,),
            in_specs=[pl.BlockSpec((L, C3), lambda b: (b, 0)),
                      pl.BlockSpec((C3, D), lambda b: (0, 0)),
                      pl.BlockSpec((L, D), lambda b: (0, 0))],
            out_specs=pl.BlockSpec((L, D), lambda b: (b, 0))),
        compiler_params=pltpu.CompilerParams(dimension_semantics=("parallel",)),
    )(xs2d, w_tok, pe_l)


# ----------------------------------------------------------------------------
# Output head kernel: final LayerNorm + OutputLinear (lane-padded) + Sigmoid
# ----------------------------------------------------------------------------
def _output_head_kernel(x_ref, g_ref, b_ref, w_ref, bo_ref, o_ref, *, eps):
    xn = _layernorm(x_ref[...], g_ref[...], b_ref[...], eps)
    y = (jnp.dot(xn.astype(jnp.bfloat16), w_ref[...],
                 preferred_element_type=jnp.float32) + bo_ref[...])
    o_ref[...] = 1.0 / (1.0 + jnp.exp(-y))                # sigmoid


def output_head(x2d, g, b, w_out, b_out, seq_len):
    L = seq_len
    N, D = x2d.shape
    B = N // L
    Cp = w_out.shape[1]
    return pl.pallas_call(
        functools.partial(_output_head_kernel, eps=1e-5),
        out_shape=jax.ShapeDtypeStruct((N, Cp), jnp.float32),
        grid_spec=pltpu.PrefetchScalarGridSpec(
            num_scalar_prefetch=0,
            grid=(B,),
            in_specs=[pl.BlockSpec((L, D), lambda i: (i, 0)),
                      pl.BlockSpec((1, D), lambda i: (0, 0)),
                      pl.BlockSpec((1, D), lambda i: (0, 0)),
                      pl.BlockSpec((D, Cp), lambda i: (0, 0)),
                      pl.BlockSpec((1, Cp), lambda i: (0, 0))],
            out_specs=pl.BlockSpec((L, Cp), lambda i: (i, 0))),
        compiler_params=pltpu.CompilerParams(dimension_semantics=("parallel",)),
    )(x2d, g, b, w_out, b_out)


# ----------------------------------------------------------------------------
# Full forward
# ----------------------------------------------------------------------------
def my_informer_forward(params, src, attn_mask=None, *, n_heads, factor=5):
    # attn_mask is accepted but unused: ProbAttention(mask_flag=True) builds its own
    # causal ProbMask internally (exactly as the PyTorch code does).
    del attn_mask
    B, L, C = src.shape

    # TokenEmbedding: circular Conv1d(k=3, no bias) as a matmul over shifted concat,
    # with the PositionalEmbedding add fused into the same kernel.  dropout(p=0) == id.
    x_shift = jnp.concatenate(
        [jnp.roll(src, 1, axis=1), src, jnp.roll(src, -1, axis=1)], axis=-1)
    x = embed_tokens(x_shift.reshape(B * L, 3 * C), params["w_tok"], params["pe"][:L])

    for lp in params["layers"]:
        x = encoder_layer(x, lp, L, n_heads, factor=factor)

    # final encoder LayerNorm + OutputLinear + Sigmoid (lane-padded, sliced back here)
    out = output_head(x, params["g_f"], params["b_f"],
                      params["w_out_pad"], params["b_out_pad"], L)
    return out[:, :C].reshape(B, L, C)


# ----------------------------------------------------------------------------
# Deterministic parameter construction (synthetic weights, bf16-resident matrices)
# ----------------------------------------------------------------------------
def init_params(key, n_features, d_model, n_heads, n_hidden, e_layers,
                seq_len, factor=5, max_len=5000):
    keys = list(jax.random.split(key, 4 + 12 * e_layers))
    kit = iter(keys)

    def unif(shape, scale):
        return jax.random.uniform(next(kit), shape, jnp.float32, -scale, scale)

    p = {}
    # TokenEmbedding Conv1d weight (d_model, c_in, 3) -> flat (3*c_in, d_model), bf16
    w_tok = jax.random.normal(next(kit), (d_model, n_features, 3), jnp.float32) * 0.02
    p["w_tok"] = (w_tok.transpose(2, 1, 0)
                  .reshape(3 * n_features, d_model).astype(jnp.bfloat16))

    # PositionalEmbedding (sinusoidal)
    pos = jnp.arange(max_len, dtype=jnp.float32)[:, None]
    div = jnp.exp(jnp.arange(0, d_model, 2, dtype=jnp.float32)
                  * (-math.log(10000.0) / d_model))
    pe = jnp.zeros((max_len, d_model), jnp.float32)
    pe = pe.at[:, 0::2].set(jnp.sin(pos * div))
    pe = pe.at[:, 1::2].set(jnp.cos(pos * div))
    p["pe"] = pe

    # ProbAttention key sampling: deterministic per-layer replacement for torch.randint,
    # precomputed at init as (a) a multiplicity matrix (for the Ksum mean term) and
    # (b) an additive -1e9 bias at unsampled positions (for the max term).
    L = seq_len
    u_part = min(int(factor * math.ceil(math.log(L))), L)

    s_dm = 1.0 / math.sqrt(d_model)
    s_ff = 1.0 / math.sqrt(n_hidden)
    layers = []
    for li in range(e_layers):
        skey = jax.random.fold_in(jax.random.PRNGKey(1234), li)
        idx_sample = jax.random.randint(skey, (L, u_part), 0, L)
        count = jnp.zeros((L, L), jnp.float32).at[
            jnp.arange(L)[:, None], idx_sample].add(1.0)
        layers.append({
            # fused Q|K|V projection: columns [0:D]=Q, [D:2D]=K, [2D:3D]=V
            "w_qkv": unif((d_model, 3 * d_model), s_dm).astype(jnp.bfloat16),
            "b_qkv": unif((1, 3 * d_model), s_dm),
            "wo": unif((d_model, d_model), s_dm).astype(jnp.bfloat16),
            "bo": unif((1, d_model), s_dm),
            "w1": unif((d_model, n_hidden), s_dm).astype(jnp.bfloat16),
            "b1": unif((1, n_hidden), s_dm),
            "w2": unif((n_hidden, d_model), s_ff).astype(jnp.bfloat16),
            "b2": unif((1, d_model), s_ff),
            "g1": jnp.ones((1, d_model), jnp.float32),
            "be1": jnp.zeros((1, d_model), jnp.float32),
            "g2": jnp.ones((1, d_model), jnp.float32),
            "be2": jnp.zeros((1, d_model), jnp.float32),
            "count": count.astype(jnp.bfloat16),
            "bias": jnp.where(count > 0.0, 0.0, -1e9).astype(jnp.float32),
        })
    p["layers"] = layers
    p["g_f"] = jnp.ones((1, d_model), jnp.float32)
    p["b_f"] = jnp.zeros((1, d_model), jnp.float32)

    # OutputLinear per init_weights(): weight uniform(-0.1, 0.1), bias zero.
    # Zero-padded to a lane-dense multiple-of-128 output width; sliced back in forward().
    c_pad = ((n_features + 127) // 128) * 128
    w_out = unif((d_model, n_features), 0.1)
    p["w_out_pad"] = (jnp.zeros((d_model, c_pad), jnp.float32)
                      .at[:, :n_features].set(w_out).astype(jnp.bfloat16))
    p["b_out_pad"] = jnp.zeros((1, c_pad), jnp.float32)
    # NOTE: InputLinear and end_conv1 exist in __init__ but are unused in forward().
    return p


# ----------------------------------------------------------------------------
if __name__ == "__main__":
    B, L = 2, 64
    n_features, d_model, n_heads, n_hidden, e_layers = 16, 128, 4, 128, 2

    root = jax.random.PRNGKey(0)
    pkey, xkey = jax.random.split(root)
    params = init_params(pkey, n_features, d_model, n_heads, n_hidden, e_layers,
                         seq_len=L)
    src = jax.random.normal(xkey, (B, L, n_features), jnp.float32)
    attn_mask = None  # ignored by ProbAttention(mask_flag=True), same as PyTorch

    fwd = jax.jit(lambda s: my_informer_forward(params, s, attn_mask,
                                                n_heads=n_heads, factor=5))
    out = fwd(src)
    jax.block_until_ready(out)
    assert out.shape == (B, L, n_features) and out.dtype == jnp.float32
    assert bool(jnp.all(jnp.isfinite(out)))
    print("KERNEL_OK")
</pallas_src>

<mosaic_0001>
module attributes {stable_mosaic.version = 11 : i64} {
  func.func @_output_head_kernel(%arg0: i32, %arg1: memref<64x128xf32, #tpu.memory_space<vmem>>, %arg2: memref<1x128xf32, #tpu.memory_space<vmem>>, %arg3: memref<1x128xf32, #tpu.memory_space<vmem>>, %arg4: memref<128x128xbf16, #tpu.memory_space<vmem>>, %arg5: memref<1x128xf32, #tpu.memory_space<vmem>>, %arg6: memref<64x128xf32, #tpu.memory_space<vmem>>) attributes {dimension_semantics = [#tpu.dimension_semantics<parallel>], iteration_bounds = array<i64: 2>, scalar_prefetch = 0 : i64, scratch_operands = 0 : i64, tpu.core_type = #tpu.core_type<tc>, window_params = [{transform_indices = @transform_0, window_bounds = array<i64: 64, 128>}, {pipeline_mode = #tpu.pipeline_mode<synchronous>, transform_indices = @transform_1, window_bounds = array<i64: 1, 128>}, {pipeline_mode = #tpu.pipeline_mode<synchronous>, transform_indices = @transform_2, window_bounds = array<i64: 1, 128>}, {pipeline_mode = #tpu.pipeline_mode<synchronous>, transform_indices = @transform_3, window_bounds = array<i64: 128, 128>}, {pipeline_mode = #tpu.pipeline_mode<synchronous>, transform_indices = @transform_4, window_bounds = array<i64: 1, 128>}, {transform_indices = @transform_5, window_bounds = array<i64: 64, 128>}]} {
    %c0 = arith.constant 0 : index
    %c0_0 = arith.constant 0 : index
    %0 = vector.load %arg1[%c0, %c0_0] : memref<64x128xf32, #tpu.memory_space<vmem>>, vector<64x128xf32>
    %c0_1 = arith.constant 0 : index
    %c0_2 = arith.constant 0 : index
    %1 = vector.load %arg2[%c0_1, %c0_2] : memref<1x128xf32, #tpu.memory_space<vmem>>, vector<1x128xf32>
    %c0_3 = arith.constant 0 : index
    %c0_4 = arith.constant 0 : index
    %2 = vector.load %arg3[%c0_3, %c0_4] : memref<1x128xf32, #tpu.memory_space<vmem>>, vector<1x128xf32>
    %cst = arith.constant dense<0.000000e+00> : vector<64xf32>
    %3 = vector.multi_reduction <add>, %0, %cst [1] : vector<64x128xf32> to vector<64xf32>
    %4 = vector.shape_cast %3 : vector<64xf32> to vector<64x1xf32>
    %cst_5 = arith.constant 1.280000e+02 : f32
    %5 = vector.broadcast %cst_5 : f32 to vector<64x1xf32>
    %6 = arith.divf %4, %5 : vector<64x1xf32>
    %7 = vector.broadcast %6 : vector<64x1xf32> to vector<64x128xf32>
    %8 = arith.subf %0, %7 : vector<64x128xf32>
    %9 = arith.mulf %8, %8 : vector<64x128xf32>
    %cst_6 = arith.constant dense<0.000000e+00> : vector<64xf32>
    %10 = vector.multi_reduction <add>, %9, %cst_6 [1] : vector<64x128xf32> to vector<64xf32>
    %11 = vector.shape_cast %10 : vector<64xf32> to vector<64x1xf32>
    %cst_7 = arith.constant 1.280000e+02 : f32
    %12 = vector.broadcast %cst_7 : f32 to vector<64x1xf32>
    %13 = arith.divf %11, %12 : vector<64x1xf32>
    %cst_8 = arith.constant 9.99999974E-6 : f32
    %14 = vector.broadcast %cst_8 : f32 to vector<64x1xf32>
    %15 = arith.addf %13, %14 : vector<64x1xf32>
    %16 = math.rsqrt %15 : vector<64x1xf32>
    %17 = vector.broadcast %16 : vector<64x1xf32> to vector<64x128xf32>
    %18 = arith.mulf %8, %17 : vector<64x128xf32>
    %19 = vector.broadcast %1 : vector<1x128xf32> to vector<64x128xf32>
    %20 = arith.mulf %18, %19 : vector<64x128xf32>
    %21 = vector.broadcast %2 : vector<1x128xf32> to vector<64x128xf32>
    %22 = arith.addf %20, %21 : vector<64x128xf32>
    %23 = arith.truncf %22 : vector<64x128xf32> to vector<64x128xbf16>
    %c0_9 = arith.constant 0 : index
    %c0_10 = arith.constant 0 : index
    %24 = vector.load %arg4[%c0_9, %c0_10] : memref<128x128xbf16, #tpu.memory_space<vmem>>, vector<128x128xbf16>
    %cst_11 = arith.constant dense<0.000000e+00> : vector<64x128xf32>
    %25 = tpu.matmul %23, %24, %cst_11 {dimension_numbers = #tpu.dot_dimension_numbers<[1], [0], [0], [1], [0, 0, 1, 1], [], []>} : vector<64x128xbf16>, vector<128x128xbf16>, vector<64x128xf32> -> vector<64x128xf32>
    %c0_12 = arith.constant 0 : index
    %c0_13 = arith.constant 0 : index
    %26 = vector.load %arg5[%c0_12, %c0_13] : memref<1x128xf32, #tpu.memory_space<vmem>>, vector<1x128xf32>
    %27 = vector.broadcast %26 : vector<1x128xf32> to vector<64x128xf32>
    %28 = arith.addf %25, %27 : vector<64x128xf32>
    %cst_14 = arith.constant 0.000000e+00 : f32
    %29 = vector.broadcast %cst_14 : f32 to vector<64x128xf32>
    %30 = arith.subf %29, %28 : vector<64x128xf32>
    %31 = math.exp %30 : vector<64x128xf32>
    %cst_15 = arith.constant 1.000000e+00 : f32
    %32 = vector.broadcast %cst_15 : f32 to vector<64x128xf32>
    %33 = arith.addf %32, %31 : vector<64x128xf32>
    %cst_16 = arith.constant 1.000000e+00 : f32
    %34 = vector.broadcast %cst_16 : f32 to vector<64x128xf32>
    %35 = arith.divf %34, %33 : vector<64x128xf32>
    %c0_17 = arith.constant 0 : index
    %c0_18 = arith.constant 0 : index
    %36 = vector.load %arg6[%c0_17, %c0_18] : memref<64x128xf32, #tpu.memory_space<vmem>>, vector<64x128xf32>
    tpu.vector_store %arg6[%c0_17, %c0_18], %35 {strides = array<i32>} : memref<64x128xf32, #tpu.memory_space<vmem>>, vector<64x128xf32>,
    return
  }
  func.func @transform_0(%arg0: i32) -> (i32, i32) {
    %c0_i32 = arith.constant 0 : i32
    %c0_i32_0 = arith.constant 0 : i32
    return %arg0, %c0_i32 : i32, i32
  }
  func.func @transform_1(%arg0: i32) -> (i32, i32) {
    %c0_i32 = arith.constant 0 : i32
    %c0_i32_0 = arith.constant 0 : i32
    %c0_i32_1 = arith.constant 0 : i32
    return %c0_i32, %c0_i32_0 : i32, i32
  }
  func.func @transform_2(%arg0: i32) -> (i32, i32) {
    %c0_i32 = arith.constant 0 : i32
    %c0_i32_0 = arith.constant 0 : i32
    %c0_i32_1 = arith.constant 0 : i32
    return %c0_i32, %c0_i32_0 : i32, i32
  }
  func.func @transform_3(%arg0: i32) -> (i32, i32) {
    %c0_i32 = arith.constant 0 : i32
    %c0_i32_0 = arith.constant 0 : i32
    %c0_i32_1 = arith.constant 0 : i32
    return %c0_i32, %c0_i32_0 : i32, i32
  }
  func.func @transform_4(%arg0: i32) -> (i32, i32) {
    %c0_i32 = arith.constant 0 : i32
    %c0_i32_0 = arith.constant 0 : i32
    %c0_i32_1 = arith.constant 0 : i32
    return %c0_i32, %c0_i32_0 : i32, i32
  }
  func.func @transform_5(%arg0: i32) -> (i32, i32) {
    %c0_i32 = arith.constant 0 : i32
    %c0_i32_0 = arith.constant 0 : i32
    return %arg0, %c0_i32 : i32, i32
  }
}

module attributes {stable_mosaic.version = 11 : i64} {
  func.func @_embed_kernel(%arg0: i32, %arg1: memref<64x48xf32, #tpu.memory_space<vmem>>, %arg2: memref<48x128xbf16, #tpu.memory_space<vmem>>, %arg3: memref<64x128xf32, #tpu.memory_space<vmem>>, %arg4: memref<64x128xf32, #tpu.memory_space<vmem>>) attributes {dimension_semantics = [#tpu.dimension_semantics<parallel>], iteration_bounds = array<i64: 2>, scalar_prefetch = 0 : i64, scratch_operands = 0 : i64, tpu.core_type = #tpu.core_type<tc>, window_params = [{transform_indices = @transform_0, window_bounds = array<i64: 64, 48>}, {pipeline_mode = #tpu.pipeline_mode<synchronous>, transform_indices = @transform_1, window_bounds = array<i64: 48, 128>}, {pipeline_mode = #tpu.pipeline_mode<synchronous>, transform_indices = @transform_2, window_bounds = array<i64: 64, 128>}, {transform_indices = @transform_3, window_bounds = array<i64: 64, 128>}]} {
    %c0 = arith.constant 0 : index
    %c0_0 = arith.constant 0 : index
    %0 = vector.load %arg1[%c0, %c0_0] : memref<64x48xf32, #tpu.memory_space<vmem>>, vector<64x48xf32>
    %1 = arith.truncf %0 : vector<64x48xf32> to vector<64x48xbf16>
    %c0_1 = arith.constant 0 : index
    %c0_2 = arith.constant 0 : index
    %2 = vector.load %arg2[%c0_1, %c0_2] : memref<48x128xbf16, #tpu.memory_space<vmem>>, vector<48x128xbf16>
    %cst = arith.constant dense<0.000000e+00> : vector<64x128xf32>
    %3 = tpu.matmul %1, %2, %cst {dimension_numbers = #tpu.dot_dimension_numbers<[1], [0], [0], [1], [0, 0, 1, 1], [], []>} : vector<64x48xbf16>, vector<48x128xbf16>, vector<64x128xf32> -> vector<64x128xf32>
    %c0_3 = arith.constant 0 : index
    %c0_4 = arith.constant 0 : index
    %4 = vector.load %arg3[%c0_3, %c0_4] : memref<64x128xf32, #tpu.memory_space<vmem>>, vector<64x128xf32>
    %5 = arith.addf %3, %4 : vector<64x128xf32>
    %c0_5 = arith.constant 0 : index
    %c0_6 = arith.constant 0 : index
    %6 = vector.load %arg4[%c0_5, %c0_6] : memref<64x128xf32, #tpu.memory_space<vmem>>, vector<64x128xf32>
    tpu.vector_store %arg4[%c0_5, %c0_6], %5 {strides = array<i32>} : memref<64x128xf32, #tpu.memory_space<vmem>>, vector<64x128xf32>,
    return
  }
  func.func @transform_0(%arg0: i32) -> (i32, i32) {
    %c0_i32 = arith.constant 0 : i32
    %c0_i32_0 = arith.constant 0 : i32
    return %arg0, %c0_i32 : i32, i32
  }
  func.func @transform_1(%arg0: i32) -> (i32, i32) {
    %c0_i32 = arith.constant 0 : i32
    %c0_i32_0 = arith.constant 0 : i32
    %c0_i32_1 = arith.constant 0 : i32
    return %c0_i32, %c0_i32_0 : i32, i32
  }
  func.func @transform_2(%arg0: i32) -> (i32, i32) {
    %c0_i32 = arith.constant 0 : i32
    %c0_i32_0 = arith.constant 0 : i32
    %c0_i32_1 = arith.constant 0 : i32
    return %c0_i32, %c0_i32_0 : i32, i32
  }
  func.func @transform_3(%arg0: i32) -> (i32, i32) {
    %c0_i32 = arith.constant 0 : i32
    %c0_i32_0 = arith.constant 0 : i32
    return %arg0, %c0_i32 : i32, i32
  }
}

module attributes {stable_mosaic.version = 11 : i64} {
  func.func @_encoder_layer_kernel(%arg0: i32, %arg1: memref<64x128xf32, #tpu.memory_space<vmem>>, %arg2: memref<128x384xbf16, #tpu.memory_space<vmem>>, %arg3: memref<1x384xf32, #tpu.memory_space<vmem>>, %arg4: memref<128x128xbf16, #tpu.memory_space<vmem>>, %arg5: memref<1x128xf32, #tpu.memory_space<vmem>>, %arg6: memref<128x128xbf16, #tpu.memory_space<vmem>>, %arg7: memref<1x128xf32, #tpu.memory_space<vmem>>, %arg8: memref<128x128xbf16, #tpu.memory_space<vmem>>, %arg9: memref<1x128xf32, #tpu.memory_space<vmem>>, %arg10: memref<1x128xf32, #tpu.memory_space<vmem>>, %arg11: memref<1x128xf32, #tpu.memory_space<vmem>>, %arg12: memref<1x128xf32, #tpu.memory_space<vmem>>, %arg13: memref<1x128xf32, #tpu.memory_space<vmem>>, %arg14: memref<64x64xbf16, #tpu.memory_space<vmem>>, %arg15: memref<64x64xf32, #tpu.memory_space<vmem>>, %arg16: memref<64x128xf32, #tpu.memory_space<vmem>>) attributes {dimension_semantics = [#tpu.dimension_semantics<parallel>], iteration_bounds = array<i64: 2>, scalar_prefetch = 0 : i64, scratch_operands = 0 : i64, tpu.core_type = #tpu.core_type<tc>, window_params = [{transform_indices = @transform_0, window_bounds = array<i64: 64, 128>}, {pipeline_mode = #tpu.pipeline_mode<synchronous>, transform_indices = @transform_1, window_bounds = array<i64: 128, 384>}, {pipeline_mode = #tpu.pipeline_mode<synchronous>, transform_indices = @transform_2, window_bounds = array<i64: 1, 384>}, {pipeline_mode = #tpu.pipeline_mode<synchronous>, transform_indices = @transform_3, window_bounds = array<i64: 128, 128>}, {pipeline_mode = #tpu.pipeline_mode<synchronous>, transform_indices = @transform_4, window_bounds = array<i64: 1, 128>}, {pipeline_mode = #tpu.pipeline_mode<synchronous>, transform_indices = @transform_5, window_bounds = array<i64: 128, 128>}, {pipeline_mode = #tpu.pipeline_mode<synchronous>, transform_indices = @transform_6, window_bounds = array<i64: 1, 128>}, {pipeline_mode = #tpu.pipeline_mode<synchronous>, transform_indices = @transform_7, window_bounds = array<i64: 128, 128>}, {pipeline_mode = #tpu.pipeline_mode<synchronous>, transform_indices = @transform_8, window_bounds = array<i64: 1, 128>}, {pipeline_mode = #tpu.pipeline_mode<synchronous>, transform_indices = @transform_9, window_bounds = array<i64: 1, 128>}, {pipeline_mode = #tpu.pipeline_mode<synchronous>, transform_indices = @transform_10, window_bounds = array<i64: 1, 128>}, {pipeline_mode = #tpu.pipeline_mode<synchronous>, transform_indices = @transform_11, window_bounds = array<i64: 1, 128>}, {pipeline_mode = #tpu.pipeline_mode<synchronous>, transform_indices = @transform_12, window_bounds = array<i64: 1, 128>}, {pipeline_mode = #tpu.pipeline_mode<synchronous>, transform_indices = @transform_13, window_bounds = array<i64: 64, 64>}, {pipeline_mode = #tpu.pipeline_mode<synchronous>, transform_indices = @transform_14, window_bounds = array<i64: 64, 64>}, {transform_indices = @transform_15, window_bounds = array<i64: 64, 128>}]} {
    %c0 = arith.constant 0 : index
    %c0_0 = arith.constant 0 : index
    %0 = vector.load %arg1[%c0, %c0_0] : memref<64x128xf32, #tpu.memory_space<vmem>>, vector<64x128xf32>
    %1 = arith.truncf %0 : vector<64x128xf32> to vector<64x128xbf16>
    %c0_1 = arith.constant 0 : index
    %c0_2 = arith.constant 0 : index
    %2 = vector.load %arg2[%c0_1, %c0_2] : memref<128x384xbf16, #tpu.memory_space<vmem>>, vector<128x384xbf16>
    %cst = arith.constant dense<0.000000e+00> : vector<64x384xf32>
    %3 = tpu.matmul %1, %2, %cst {dimension_numbers = #tpu.dot_dimension_numbers<[1], [0], [0], [1], [0, 0, 1, 1], [], []>} : vector<64x128xbf16>, vector<128x384xbf16>, vector<64x384xf32> -> vector<64x384xf32>
    %c0_3 = arith.constant 0 : index
    %c0_4 = arith.constant 0 : index
    %4 = vector.load %arg3[%c0_3, %c0_4] : memref<1x384xf32, #tpu.memory_space<vmem>>, vector<1x384xf32>
    %5 = vector.broadcast %4 : vector<1x384xf32> to vector<64x384xf32>
    %6 = arith.addf %3, %5 : vector<64x384xf32>
    %c0_5 = arith.constant 0 : index
    %c0_6 = arith.constant 0 : index
    %7 = vector.load %arg14[%c0_5, %c0_6] : memref<64x64xbf16, #tpu.memory_space<vmem>>, vector<64x64xbf16>
    %c0_7 = arith.constant 0 : index
    %c0_8 = arith.constant 0 : index
    %8 = vector.load %arg15[%c0_7, %c0_8] : memref<64x64xf32, #tpu.memory_space<vmem>>, vector<64x64xf32>
    %9 = tpu.iota {dimensions = array<i32: 0>} : vector<64x64xi32>
    %10 = tpu.iota {dimensions = array<i32: 1>} : vector<64x64xi32>
    %11 = arith.cmpi sge, %9, %10 : vector<64x64xi32>
    %12 = arith.extui %11 : vector<64x64xi1> to vector<64x64xi32>
    %13 = arith.sitofp %12 : vector<64x64xi32> to vector<64x64xf32>
    %14 = arith.cmpi eq, %9, %10 : vector<64x64xi32>
    %15 = arith.extui %14 : vector<64x64xi1> to vector<64x64xi32>
    %16 = arith.sitofp %15 : vector<64x64xi32> to vector<64x64xf32>
    %17 = tpu.iota {dimensions = array<i32: 0>} : vector<32x64xi32>
    %18 = arith.sitofp %17 : vector<32x64xi32> to vector<32x64xf32>
    %19 = tpu.iota {dimensions = array<i32: 1>} : vector<32x64xi32>
    %20 = arith.sitofp %19 : vector<32x64xi32> to vector<32x64xf32>
    %21 = vector.extract_strided_slice %6 {offsets = [0, 0], sizes = [64, 32], strides = [1, 1]} : vector<64x384xf32> to vector<64x32xf32>
    %22 = vector.extract_strided_slice %6 {offsets = [0, 128], sizes = [64, 32], strides = [1, 1]} : vector<64x384xf32> to vector<64x32xf32>
    %23 = vector.extract_strided_slice %6 {offsets = [0, 256], sizes = [64, 32], strides = [1, 1]} : vector<64x384xf32> to vector<64x32xf32>
    %24 = arith.truncf %21 : vector<64x32xf32> to vector<64x32xbf16>
    %25 = arith.truncf %22 : vector<64x32xf32> to vector<64x32xbf16>
    %26 = arith.truncf %23 : vector<64x32xf32> to vector<64x32xbf16>
    %27 = tpu.transpose %25, [1, 0] : vector<64x32xbf16> -> vector<32x64xbf16>
    %cst_9 = arith.constant dense<0.000000e+00> : vector<64x64xf32>
    %28 = tpu.matmul %24, %27, %cst_9 {dimension_numbers = #tpu.dot_dimension_numbers<[1], [0], [0], [1], [0, 0, 1, 1], [], []>} : vector<64x32xbf16>, vector<32x64xbf16>, vector<64x64xf32> -> vector<64x64xf32>
    %29 = arith.addf %28, %8 : vector<64x64xf32>
    %cst_10 = arith.constant dense<0xFF800000> : vector<64xf32>
    %30 = vector.multi_reduction <maximumf>, %29, %cst_10 [1] : vector<64x64xf32> to vector<64xf32>
    %31 = vector.shape_cast %30 : vector<64xf32> to vector<64x1xf32>
    %cst_11 = arith.constant dense<0.000000e+00> : vector<64x32xf32>
    %32 = tpu.matmul %7, %25, %cst_11 {dimension_numbers = #tpu.dot_dimension_numbers<[1], [0], [0], [1], [0, 0, 1, 1], [], []>} : vector<64x64xbf16>, vector<64x32xbf16>, vector<64x32xf32> -> vector<64x32xf32>
    %33 = arith.mulf %21, %32 : vector<64x32xf32>
    %cst_12 = arith.constant dense<0.000000e+00> : vector<64xf32>
    %34 = vector.multi_reduction <add>, %33, %cst_12 [1] : vector<64x32xf32> to vector<64xf32>
    %35 = vector.shape_cast %34 : vector<64xf32> to vector<64x1xf32>
    %cst_13 = arith.constant 1.562500e-02 : f32
    %36 = vector.broadcast %cst_13 : f32 to vector<64x1xf32>
    %37 = arith.mulf %35, %36 : vector<64x1xf32>
    %38 = arith.subf %31, %37 : vector<64x1xf32>
    %39 = vector.broadcast %38 : vector<64x1xf32> to vector<64x64xf32>
    %40 = arith.mulf %39, %16 : vector<64x64xf32>
    %cst_14 = arith.constant dense<0.000000e+00> : vector<64xf32>
    %41 = vector.multi_reduction <add>, %40, %cst_14 [0] : vector<64x64xf32> to vector<64xf32>
    %42 = vector.shape_cast %41 : vector<64xf32> to vector<1x64xf32>
    %43 = vector.broadcast %42 : vector<1x64xf32> to vector<64x64xf32>
    %44 = vector.broadcast %38 : vector<64x1xf32> to vector<64x64xf32>
    %45 = arith.cmpf ogt, %43, %44 : vector<64x64xf32>
    %46 = vector.broadcast %42 : vector<1x64xf32> to vector<64x64xf32>
    %47 = vector.broadcast %38 : vector<64x1xf32> to vector<64x64xf32>
    %48 = arith.cmpf oeq, %46, %47 : vector<64x64xf32>
    %49 = arith.cmpi slt, %10, %9 : vector<64x64xi32>
    %50 = arith.andi %48, %49 : vector<64x64xi1>
    %51 = arith.ori %45, %50 : vector<64x64xi1>
    %52 = arith.extui %51 : vector<64x64xi1> to vector<64x64xi32>
    %53 = arith.sitofp %52 : vector<64x64xi32> to vector<64x64xf32>
    %cst_15 = arith.constant dense<0.000000e+00> : vector<64xf32>
    %54 = vector.multi_reduction <add>, %53, %cst_15 [1] : vector<64x64xf32> to vector<64xf32>
    %55 = vector.shape_cast %54 : vector<64xf32> to vector<64x1xf32>
    %cst_16 = arith.constant dense<0.000000e+00> : vector<64xf32>
    %56 = vector.multi_reduction <add>, %53, %cst_16 [0] : vector<64x64xf32> to vector<64xf32>
    %57 = vector.shape_cast %56 : vector<64xf32> to vector<1x64xf32>
    %cst_17 = arith.constant 6.300000e+01 : f32
    %58 = vector.broadcast %cst_17 : f32 to vector<1x64xf32>
    %59 = arith.subf %58, %57 : vector<1x64xf32>
    %cst_18 = arith.constant 2.500000e+01 : f32
    %60 = vector.broadcast %cst_18 : f32 to vector<64x1xf32>
    %61 = arith.cmpf olt, %55, %60 : vector<64x1xf32>
    %62 = arith.extui %61 : vector<64x1xi1> to vector<64x1xi32>
    %63 = arith.sitofp %62 : vector<64x1xi32> to vector<64x1xf32>
    %64 = vector.broadcast %59 : vector<1x64xf32> to vector<32x64xf32>
    %65 = arith.cmpf oeq, %64, %18 : vector<32x64xf32>
    %cst_19 = arith.constant 2.500000e+01 : f32
    %66 = vector.broadcast %cst_19 : f32 to vector<32x64xf32>
    %67 = arith.cmpf olt, %18, %66 : vector<32x64xf32>
    %68 = arith.andi %65, %67 : vector<32x64xi1>
    %cst_20 = arith.constant 1.000000e+00 : f32
    %cst_21 = arith.constant 0.000000e+00 : f32
    %69 = vector.broadcast %cst_20 : f32 to vector<32x64xf32>
    %70 = vector.broadcast %cst_21 : f32 to vector<32x64xf32>
    %71 = arith.select %68, %69, %70 : vector<32x64xi1>, vector<32x64xf32>
    %72 = arith.mulf %71, %20 : vector<32x64xf32>
    %cst_22 = arith.constant dense<0.000000e+00> : vector<32xf32>
    %73 = vector.multi_reduction <add>, %72, %cst_22 [1] : vector<32x64xf32> to vector<32xf32>
    %74 = vector.shape_cast %73 : vector<32xf32> to vector<32x1xf32>
    %cst_23 = arith.constant dense<0.000000e+00> : vector<32x64xf32>
    %75 = tpu.matmul %71, %28, %cst_23 {dimension_numbers = #tpu.dot_dimension_numbers<[1], [0], [0], [1], [0, 0, 1, 1], [], []>} : vector<32x64xf32>, vector<64x64xf32>, vector<32x64xf32> -> vector<32x64xf32>
    %cst_24 = arith.constant 0.176776692 : f32
    %76 = vector.broadcast %cst_24 : f32 to vector<32x64xf32>
    %77 = arith.mulf %75, %76 : vector<32x64xf32>
    %78 = vector.broadcast %74 : vector<32x1xf32> to vector<32x64xf32>
    %79 = arith.cmpf ogt, %20, %78 : vector<32x64xf32>
    %cst_25 = arith.constant -1.000000e+30 : f32
    %80 = vector.broadcast %cst_25 : f32 to vector<32x64xf32>
    %81 = arith.select %79, %80, %77 : vector<32x64xi1>, vector<32x64xf32>
    %cst_26 = arith.constant dense<0xFF800000> : vector<32xf32>
    %82 = vector.multi_reduction <maximumf>, %81, %cst_26 [1] : vector<32x64xf32> to vector<32xf32>
    %83 = vector.shape_cast %82 : vector<32xf32> to vector<32x1xf32>
    %84 = vector.broadcast %83 : vector<32x1xf32> to vector<32x64xf32>
    %85 = arith.subf %81, %84 : vector<32x64xf32>
    %86 = math.exp %85 : vector<32x64xf32>
    %cst_27 = arith.constant dense<0.000000e+00> : vector<32xf32>
    %87 = vector.multi_reduction <add>, %86, %cst_27 [1] : vector<32x64xf32> to vector<32xf32>
    %88 = vector.shape_cast %87 : vector<32xf32> to vector<32x1xf32>
    %89 = tpu.reciprocal %88 {approx = true} : vector<32x1xf32> -> vector<32x1xf32>
    %90 = vector.broadcast %89 : vector<32x1xf32> to vector<32x64xf32>
    %91 = arith.mulf %86, %90 : vector<32x64xf32>
    %92 = arith.truncf %91 : vector<32x64xf32> to vector<32x64xbf16>
    %cst_28 = arith.constant dense<0.000000e+00> : vector<32x32xf32>
    %93 = tpu.matmul %92, %26, %cst_28 {dimension_numbers = #tpu.dot_dimension_numbers<[1], [0], [0], [1], [0, 0, 1, 1], [], []>} : vector<32x64xbf16>, vector<64x32xbf16>, vector<32x32xf32> -> vector<32x32xf32>
    %cst_29 = arith.constant dense<0.000000e+00> : vector<64x32xf32>
    %94 = tpu.matmul %13, %23, %cst_29 {dimension_numbers = #tpu.dot_dimension_numbers<[1], [0], [0], [1], [0, 0, 1, 1], [], []>} : vector<64x64xf32>, vector<64x32xf32>, vector<64x32xf32> -> vector<64x32xf32>
    %95 = tpu.transpose %71, [1, 0] : vector<32x64xf32> -> vector<64x32xf32>
    %cst_30 = arith.constant dense<0.000000e+00> : vector<64x32xf32>
    %96 = tpu.matmul %95, %93, %cst_30 {dimension_numbers = #tpu.dot_dimension_numbers<[1], [0], [0], [1], [0, 0, 1, 1], [], []>} : vector<64x32xf32>, vector<32x32xf32>, vector<64x32xf32> -> vector<64x32xf32>
    %97 = vector.broadcast %63 : vector<64x1xf32> to vector<64x32xf32>
    %98 = arith.mulf %97, %96 : vector<64x32xf32>
    %cst_31 = arith.constant 1.000000e+00 : f32
    %99 = vector.broadcast %cst_31 : f32 to vector<64x1xf32>
    %100 = arith.subf %99, %63 : vector<64x1xf32>
    %101 = vector.broadcast %100 : vector<64x1xf32> to vector<64x32xf32>
    %102 = arith.mulf %101, %94 : vector<64x32xf32>
    %103 = arith.addf %98, %102 : vector<64x32xf32>
    %104 = vector.extract_strided_slice %6 {offsets = [0, 32], sizes = [64, 32], strides = [1, 1]} : vector<64x384xf32> to vector<64x32xf32>
    %105 = vector.extract_strided_slice %6 {offsets = [0, 160], sizes = [64, 32], strides = [1, 1]} : vector<64x384xf32> to vector<64x32xf32>
    %106 = vector.extract_strided_slice %6 {offsets = [0, 288], sizes = [64, 32], strides = [1, 1]} : vector<64x384xf32> to vector<64x32xf32>
    %107 = arith.truncf %104 : vector<64x32xf32> to vector<64x32xbf16>
    %108 = arith.truncf %105 : vector<64x32xf32> to vector<64x32xbf16>
    %109 = arith.truncf %106 : vector<64x32xf32> to vector<64x32xbf16>
    %110 = tpu.transpose %108, [1, 0] : vector<64x32xbf16> -> vector<32x64xbf16>
    %cst_32 = arith.constant dense<0.000000e+00> : vector<64x64xf32>
    %111 = tpu.matmul %107, %110, %cst_32 {dimension_numbers = #tpu.dot_dimension_numbers<[1], [0], [0], [1], [0, 0, 1, 1], [], []>} : vector<64x32xbf16>, vector<32x64xbf16>, vector<64x64xf32> -> vector<64x64xf32>
    %112 = arith.addf %111, %8 : vector<64x64xf32>
    %cst_33 = arith.constant dense<0xFF800000> : vector<64xf32>
    %113 = vector.multi_reduction <maximumf>, %112, %cst_33 [1] : vector<64x64xf32> to vector<64xf32>
    %114 = vector.shape_cast %113 : vector<64xf32> to vector<64x1xf32>
    %cst_34 = arith.constant dense<0.000000e+00> : vector<64x32xf32>
    %115 = tpu.matmul %7, %108, %cst_34 {dimension_numbers = #tpu.dot_dimension_numbers<[1], [0], [0], [1], [0, 0, 1, 1], [], []>} : vector<64x64xbf16>, vector<64x32xbf16>, vector<64x32xf32> -> vector<64x32xf32>
    %116 = arith.mulf %104, %115 : vector<64x32xf32>
    %cst_35 = arith.constant dense<0.000000e+00> : vector<64xf32>
    %117 = vector.multi_reduction <add>, %116, %cst_35 [1] : vector<64x32xf32> to vector<64xf32>
    %118 = vector.shape_cast %117 : vector<64xf32> to vector<64x1xf32>
    %cst_36 = arith.constant 1.562500e-02 : f32
    %119 = vector.broadcast %cst_36 : f32 to vector<64x1xf32>
    %120 = arith.mulf %118, %119 : vector<64x1xf32>
    %121 = arith.subf %114, %120 : vector<64x1xf32>
    %122 = vector.broadcast %121 : vector<64x1xf32> to vector<64x64xf32>
    %123 = arith.mulf %122, %16 : vector<64x64xf32>
    %cst_37 = arith.constant dense<0.000000e+00> : vector<64xf32>
    %124 = vector.multi_reduction <add>, %123, %cst_37 [0] : vector<64x64xf32> to vector<64xf32>
    %125 = vector.shape_cast %124 : vector<64xf32> to vector<1x64xf32>
    %126 = vector.broadcast %125 : vector<1x64xf32> to vector<64x64xf32>
    %127 = vector.broadcast %121 : vector<64x1xf32> to vector<64x64xf32>
    %128 = arith.cmpf ogt, %126, %127 : vector<64x64xf32>
    %129 = vector.broadcast %125 : vector<1x64xf32> to vector<64x64xf32>
    %130 = vector.broadcast %121 : vector<64x1xf32> to vector<64x64xf32>
    %131 = arith.cmpf oeq, %129, %130 : vector<64x64xf32>
    %132 = arith.cmpi slt, %10, %9 : vector<64x64xi32>
    %133 = arith.andi %131, %132 : vector<64x64xi1>
    %134 = arith.ori %128, %133 : vector<64x64xi1>
    %135 = arith.extui %134 : vector<64x64xi1> to vector<64x64xi32>
    %136 = arith.sitofp %135 : vector<64x64xi32> to vector<64x64xf32>
    %cst_38 = arith.constant dense<0.000000e+00> : vector<64xf32>
    %137 = vector.multi_reduction <add>, %136, %cst_38 [1] : vector<64x64xf32> to vector<64xf32>
    %138 = vector.shape_cast %137 : vector<64xf32> to vector<64x1xf32>
    %cst_39 = arith.constant dense<0.000000e+00> : vector<64xf32>
    %139 = vector.multi_reduction <add>, %136, %cst_39 [0] : vector<64x64xf32> to vector<64xf32>
    %140 = vector.shape_cast %139 : vector<64xf32> to vector<1x64xf32>
    %cst_40 = arith.constant 6.300000e+01 : f32
    %141 = vector.broadcast %cst_40 : f32 to vector<1x64xf32>
    %142 = arith.subf %141, %140 : vector<1x64xf32>
    %cst_41 = arith.constant 2.500000e+01 : f32
    %143 = vector.broadcast %cst_41 : f32 to vector<64x1xf32>
    %144 = arith.cmpf olt, %138, %143 : vector<64x1xf32>
    %145 = arith.extui %144 : vector<64x1xi1> to vector<64x1xi32>
    %146 = arith.sitofp %145 : vector<64x1xi32> to vector<64x1xf32>
    %147 = vector.broadcast %142 : vector<1x64xf32> to vector<32x64xf32>
    %148 = arith.cmpf oeq, %147, %18 : vector<32x64xf32>
    %cst_42 = arith.constant 2.500000e+01 : f32
    %149 = vector.broadcast %cst_42 : f32 to vector<32x64xf32>
    %150 = arith.cmpf olt, %18, %149 : vector<32x64xf32>
    %151 = arith.andi %148, %150 : vector<32x64xi1>
    %cst_43 = arith.constant 1.000000e+00 : f32
    %cst_44 = arith.constant 0.000000e+00 : f32
    %152 = vector.broadcast %cst_43 : f32 to vector<32x64xf32>
    %153 = vector.broadcast %cst_44 : f32 to vector<32x64xf32>
    %154 = arith.select %151, %152, %153 : vector<32x64xi1>, vector<32x64xf32>
    %155 = arith.mulf %154, %20 : vector<32x64xf32>
    %cst_45 = arith.constant dense<0.000000e+00> : vector<32xf32>
    %156 = vector.multi_reduction <add>, %155, %cst_45 [1] : vector<32x64xf32> to vector<32xf32>
    %157 = vector.shape_cast %156 : vector<32xf32> to vector<32x1xf32>
    %cst_46 = arith.constant dense<0.000000e+00> : vector<32x64xf32>
    %158 = tpu.matmul %154, %111, %cst_46 {dimension_numbers = #tpu.dot_dimension_numbers<[1], [0], [0], [1], [0, 0, 1, 1], [], []>} : vector<32x64xf32>, vector<64x64xf32>, vector<32x64xf32> -> vector<32x64xf32>
    %cst_47 = arith.constant 0.176776692 : f32
    %159 = vector.broadcast %cst_47 : f32 to vector<32x64xf32>
    %160 = arith.mulf %158, %159 : vector<32x64xf32>
    %161 = vector.broadcast %157 : vector<32x1xf32> to vector<32x64xf32>
    %162 = arith.cmpf ogt, %20, %161 : vector<32x64xf32>
    %cst_48 = arith.constant -1.000000e+30 : f32
    %163 = vector.broadcast %cst_48 : f32 to vector<32x64xf32>
    %164 = arith.select %162, %163, %160 : vector<32x64xi1>, vector<32x64xf32>
    %cst_49 = arith.constant dense<0xFF800000> : vector<32xf32>
    %165 = vector.multi_reduction <maximumf>, %164, %cst_49 [1] : vector<32x64xf32> to vector<32xf32>
    %166 = vector.shape_cast %165 : vector<32xf32> to vector<32x1xf32>
    %167 = vector.broadcast %166 : vector<32x1xf32> to vector<32x64xf32>
    %168 = arith.subf %164, %167 : vector<32x64xf32>
    %169 = math.exp %168 : vector<32x64xf32>
    %cst_50 = arith.constant dense<0.000000e+00> : vector<32xf32>
    %170 = vector.multi_reduction <add>, %169, %cst_50 [1] : vector<32x64xf32> to vector<32xf32>
    %171 = vector.shape_cast %170 : vector<32xf32> to vector<32x1xf32>
    %172 = tpu.reciprocal %171 {approx = true} : vector<32x1xf32> -> vector<32x1xf32>
    %173 = vector.broadcast %172 : vector<32x1xf32> to vector<32x64xf32>
    %174 = arith.mulf %169, %173 : vector<32x64xf32>
    %175 = arith.truncf %174 : vector<32x64xf32> to vector<32x64xbf16>
    %cst_51 = arith.constant dense<0.000000e+00> : vector<32x32xf32>
    %176 = tpu.matmul %175, %109, %cst_51 {dimension_numbers = #tpu.dot_dimension_numbers<[1], [0], [0], [1], [0, 0, 1, 1], [], []>} : vector<32x64xbf16>, vector<64x32xbf16>, vector<32x32xf32> -> vector<32x32xf32>
    %cst_52 = arith.constant dense<0.000000e+00> : vector<64x32xf32>
    %177 = tpu.matmul %13, %106, %cst_52 {dimension_numbers = #tpu.dot_dimension_numbers<[1], [0], [0], [1], [0, 0, 1, 1], [], []>} : vector<64x64xf32>, vector<64x32xf32>, vector<64x32xf32> -> vector<64x32xf32>
    %178 = tpu.transpose %154, [1, 0] : vector<32x64xf32> -> vector<64x32xf32>
    %cst_53 = arith.constant dense<0.000000e+00> : vector<64x32xf32>
    %179 = tpu.matmul %178, %176, %cst_53 {dimension_numbers = #tpu.dot_dimension_numbers<[1], [0], [0], [1], [0, 0, 1, 1], [], []>} : vector<64x32xf32>, vector<32x32xf32>, vector<64x32xf32> -> vector<64x32xf32>
    %180 = vector.broadcast %146 : vector<64x1xf32> to vector<64x32xf32>
    %181 = arith.mulf %180, %179 : vector<64x32xf32>
    %cst_54 = arith.constant 1.000000e+00 : f32
    %182 = vector.broadcast %cst_54 : f32 to vector<64x1xf32>
    %183 = arith.subf %182, %146 : vector<64x1xf32>
    %184 = vector.broadcast %183 : vector<64x1xf32> to vector<64x32xf32>
    %185 = arith.mulf %184, %177 : vector<64x32xf32>
    %186 = arith.addf %181, %185 : vector<64x32xf32>
    %187 = vector.extract_strided_slice %6 {offsets = [0, 64], sizes = [64, 32], strides = [1, 1]} : vector<64x384xf32> to vector<64x32xf32>
    %188 = vector.extract_strided_slice %6 {offsets = [0, 192], sizes = [64, 32], strides = [1, 1]} : vector<64x384xf32> to vector<64x32xf32>
    %189 = vector.extract_strided_slice %6 {offsets = [0, 320], sizes = [64, 32], strides = [1, 1]} : vector<64x384xf32> to vector<64x32xf32>
    %190 = arith.truncf %187 : vector<64x32xf32> to vector<64x32xbf16>
    %191 = arith.truncf %188 : vector<64x32xf32> to vector<64x32xbf16>
    %192 = arith.truncf %189 : vector<64x32xf32> to vector<64x32xbf16>
    %193 = tpu.transpose %191, [1, 0] : vector<64x32xbf16> -> vector<32x64xbf16>
    %cst_55 = arith.constant dense<0.000000e+00> : vector<64x64xf32>
    %194 = tpu.matmul %190, %193, %cst_55 {dimension_numbers = #tpu.dot_dimension_numbers<[1], [0], [0], [1], [0, 0, 1, 1], [], []>} : vector<64x32xbf16>, vector<32x64xbf16>, vector<64x64xf32> -> vector<64x64xf32>
    %195 = arith.addf %194, %8 : vector<64x64xf32>
    %cst_56 = arith.constant dense<0xFF800000> : vector<64xf32>
    %196 = vector.multi_reduction <maximumf>, %195, %cst_56 [1] : vector<64x64xf32> to vector<64xf32>
    %197 = vector.shape_cast %196 : vector<64xf32> to vector<64x1xf32>
    %cst_57 = arith.constant dense<0.000000e+00> : vector<64x32xf32>
    %198 = tpu.matmul %7, %191, %cst_57 {dimension_numbers = #tpu.dot_dimension_numbers<[1], [0], [0], [1], [0, 0, 1, 1], [], []>} : vector<64x64xbf16>, vector<64x32xbf16>, vector<64x32xf32> -> vector<64x32xf32>
    %199 = arith.mulf %187, %198 : vector<64x32xf32>
    %cst_58 = arith.constant dense<0.000000e+00> : vector<64xf32>
    %200 = vector.multi_reduction <add>, %199, %cst_58 [1] : vector<64x32xf32> to vector<64xf32>
    %201 = vector.shape_cast %200 : vector<64xf32> to vector<64x1xf32>
    %cst_59 = arith.constant 1.562500e-02 : f32
    %202 = vector.broadcast %cst_59 : f32 to vector<64x1xf32>
    %203 = arith.mulf %201, %202 : vector<64x1xf32>
    %204 = arith.subf %197, %203 : vector<64x1xf32>
    %205 = vector.broadcast %204 : vector<64x1xf32> to vector<64x64xf32>
    %206 = arith.mulf %205, %16 : vector<64x64xf32>
    %cst_60 = arith.constant dense<0.000000e+00> : vector<64xf32>
    %207 = vector.multi_reduction <add>, %206, %cst_60 [0] : vector<64x64xf32> to vector<64xf32>
    %208 = vector.shape_cast %207 : vector<64xf32> to vector<1x64xf32>
    %209 = vector.broadcast %208 : vector<1x64xf32> to vector<64x64xf32>
    %210 = vector.broadcast %204 : vector<64x1xf32> to vector<64x64xf32>
    %211 = arith.cmpf ogt, %209, %210 : vector<64x64xf32>
    %212 = vector.broadcast %208 : vector<1x64xf32> to vector<64x64xf32>
    %213 = vector.broadcast %204 : vector<64x1xf32> to vector<64x64xf32>
    %214 = arith.cmpf oeq, %212, %213 : vector<64x64xf32>
    %215 = arith.cmpi slt, %10, %9 : vector<64x64xi32>
    %216 = arith.andi %214, %215 : vector<64x64xi1>
    %217 = arith.ori %211, %216 : vector<64x64xi1>
    %218 = arith.extui %217 : vector<64x64xi1> to vector<64x64xi32>
    %219 = arith.sitofp %218 : vector<64x64xi32> to vector<64x64xf32>
    %cst_61 = arith.constant dense<0.000000e+00> : vector<64xf32>
    %220 = vector.multi_reduction <add>, %219, %cst_61 [1] : vector<64x64xf32> to vector<64xf32>
    %221 = vector.shape_cast %220 : vector<64xf32> to vector<64x1xf32>
    %cst_62 = arith.constant dense<0.000000e+00> : vector<64xf32>
    %222 = vector.multi_reduction <add>, %219, %cst_62 [0] : vector<64x64xf32> to vector<64xf32>
    %223 = vector.shape_cast %222 : vector<64xf32> to vector<1x64xf32>
    %cst_63 = arith.constant 6.300000e+01 : f32
    %224 = vector.broadcast %cst_63 : f32 to vector<1x64xf32>
    %225 = arith.subf %224, %223 : vector<1x64xf32>
    %cst_64 = arith.constant 2.500000e+01 : f32
    %226 = vector.broadcast %cst_64 : f32 to vector<64x1xf32>
    %227 = arith.cmpf olt, %221, %226 : vector<64x1xf32>
    %228 = arith.extui %227 : vector<64x1xi1> to vector<64x1xi32>
    %229 = arith.sitofp %228 : vector<64x1xi32> to vector<64x1xf32>
    %230 = vector.broadcast %225 : vector<1x64xf32> to vector<32x64xf32>
    %231 = arith.cmpf oeq, %230, %18 : vector<32x64xf32>
    %cst_65 = arith.constant 2.500000e+01 : f32
    %232 = vector.broadcast %cst_65 : f32 to vector<32x64xf32>
    %233 = arith.cmpf olt, %18, %232 : vector<32x64xf32>
    %234 = arith.andi %231, %233 : vector<32x64xi1>
    %cst_66 = arith.constant 1.000000e+00 : f32
    %cst_67 = arith.constant 0.000000e+00 : f32
    %235 = vector.broadcast %cst_66 : f32 to vector<32x64xf32>
    %236 = vector.broadcast %cst_67 : f32 to vector<32x64xf32>
    %237 = arith.select %234, %235, %236 : vector<32x64xi1>, vector<32x64xf32>
    %238 = arith.mulf %237, %20 : vector<32x64xf32>
    %cst_68 = arith.constant dense<0.000000e+00> : vector<32xf32>
    %239 = vector.multi_reduction <add>, %238, %cst_68 [1] : vector<32x64xf32> to vector<32xf32>
    %240 = vector.shape_cast %239 : vector<32xf32> to vector<32x1xf32>
    %cst_69 = arith.constant dense<0.000000e+00> : vector<32x64xf32>
    %241 = tpu.matmul %237, %194, %cst_69 {dimension_numbers = #tpu.dot_dimension_numbers<[1], [0], [0], [1], [0, 0, 1, 1], [], []>} : vector<32x64xf32>, vector<64x64xf32>, vector<32x64xf32> -> vector<32x64xf32>
    %cst_70 = arith.constant 0.176776692 : f32
    %242 = vector.broadcast %cst_70 : f32 to vector<32x64xf32>
    %243 = arith.mulf %241, %242 : vector<32x64xf32>
    %244 = vector.broadcast %240 : vector<32x1xf32> to vector<32x64xf32>
    %245 = arith.cmpf ogt, %20, %244 : vector<32x64xf32>
    %cst_71 = arith.constant -1.000000e+30 : f32
    %246 = vector.broadcast %cst_71 : f32 to vector<32x64xf32>
    %247 = arith.select %245, %246, %243 : vector<32x64xi1>, vector<32x64xf32>
    %cst_72 = arith.constant dense<0xFF800000> : vector<32xf32>
    %248 = vector.multi_reduction <maximumf>, %247, %cst_72 [1] : vector<32x64xf32> to vector<32xf32>
    %249 = vector.shape_cast %248 : vector<32xf32> to vector<32x1xf32>
    %250 = vector.broadcast %249 : vector<32x1xf32> to vector<32x64xf32>
    %251 = arith.subf %247, %250 : vector<32x64xf32>
    %252 = math.exp %251 : vector<32x64xf32>
    %cst_73 = arith.constant dense<0.000000e+00> : vector<32xf32>
    %253 = vector.multi_reduction <add>, %252, %cst_73 [1] : vector<32x64xf32> to vector<32xf32>
    %254 = vector.shape_cast %253 : vector<32xf32> to vector<32x1xf32>
    %255 = tpu.reciprocal %254 {approx = true} : vector<32x1xf32> -> vector<32x1xf32>
    %256 = vector.broadcast %255 : vector<32x1xf32> to vector<32x64xf32>
    %257 = arith.mulf %252, %256 : vector<32x64xf32>
    %258 = arith.truncf %257 : vector<32x64xf32> to vector<32x64xbf16>
    %cst_74 = arith.constant dense<0.000000e+00> : vector<32x32xf32>
    %259 = tpu.matmul %258, %192, %cst_74 {dimension_numbers = #tpu.dot_dimension_numbers<[1], [0], [0], [1], [0, 0, 1, 1], [], []>} : vector<32x64xbf16>, vector<64x32xbf16>, vector<32x32xf32> -> vector<32x32xf32>
    %cst_75 = arith.constant dense<0.000000e+00> : vector<64x32xf32>
    %260 = tpu.matmul %13, %189, %cst_75 {dimension_numbers = #tpu.dot_dimension_numbers<[1], [0], [0], [1], [0, 0, 1, 1], [], []>} : vector<64x64xf32>, vector<64x32xf32>, vector<64x32xf32> -> vector<64x32xf32>
    %261 = tpu.transpose %237, [1, 0] : vector<32x64xf32> -> vector<64x32xf32>
    %cst_76 = arith.constant dense<0.000000e+00> : vector<64x32xf32>
    %262 = tpu.matmul %261, %259, %cst_76 {dimension_numbers = #tpu.dot_dimension_numbers<[1], [0], [0], [1], [0, 0, 1, 1], [], []>} : vector<64x32xf32>, vector<32x32xf32>, vector<64x32xf32> -> vector<64x32xf32>
    %263 = vector.broadcast %229 : vector<64x1xf32> to vector<64x32xf32>
    %264 = arith.mulf %263, %262 : vector<64x32xf32>
    %cst_77 = arith.constant 1.000000e+00 : f32
    %265 = vector.broadcast %cst_77 : f32 to vector<64x1xf32>
    %266 = arith.subf %265, %229 : vector<64x1xf32>
    %267 = vector.broadcast %266 : vector<64x1xf32> to vector<64x32xf32>
    %268 = arith.mulf %267, %260 : vector<64x32xf32>
    %269 = arith.addf %264, %268 : vector<64x32xf32>
    %270 = vector.extract_strided_slice %6 {offsets = [0, 96], sizes = [64, 32], strides = [1, 1]} : vector<64x384xf32> to vector<64x32xf32>
    %271 = vector.extract_strided_slice %6 {offsets = [0, 224], sizes = [64, 32], strides = [1, 1]} : vector<64x384xf32> to vector<64x32xf32>
    %272 = vector.extract_strided_slice %6 {offsets = [0, 352], sizes = [64, 32], strides = [1, 1]} : vector<64x384xf32> to vector<64x32xf32>
    %273 = arith.truncf %270 : vector<64x32xf32> to vector<64x32xbf16>
    %274 = arith.truncf %271 : vector<64x32xf32> to vector<64x32xbf16>
    %275 = arith.truncf %272 : vector<64x32xf32> to vector<64x32xbf16>
    %276 = tpu.transpose %274, [1, 0] : vector<64x32xbf16> -> vector<32x64xbf16>
    %cst_78 = arith.constant dense<0.000000e+00> : vector<64x64xf32>
    %277 = tpu.matmul %273, %276, %cst_78 {dimension_numbers = #tpu.dot_dimension_numbers<[1], [0], [0], [1], [0, 0, 1, 1], [], []>} : vector<64x32xbf16>, vector<32x64xbf16>, vector<64x64xf32> -> vector<64x64xf32>
    %278 = arith.addf %277, %8 : vector<64x64xf32>
    %cst_79 = arith.constant dense<0xFF800000> : vector<64xf32>
    %279 = vector.multi_reduction <maximumf>, %278, %cst_79 [1] : vector<64x64xf32> to vector<64xf32>
    %280 = vector.shape_cast %279 : vector<64xf32> to vector<64x1xf32>
    %cst_80 = arith.constant dense<0.000000e+00> : vector<64x32xf32>
    %281 = tpu.matmul %7, %274, %cst_80 {dimension_numbers = #tpu.dot_dimension_numbers<[1], [0], [0], [1], [0, 0, 1, 1], [], []>} : vector<64x64xbf16>, vector<64x32xbf16>, vector<64x32xf32> -> vector<64x32xf32>
    %282 = arith.mulf %270, %281 : vector<64x32xf32>
    %cst_81 = arith.constant dense<0.000000e+00> : vector<64xf32>
    %283 = vector.multi_reduction <add>, %282, %cst_81 [1] : vector<64x32xf32> to vector<64xf32>
    %284 = vector.shape_cast %283 : vector<64xf32> to vector<64x1xf32>
    %cst_82 = arith.constant 1.562500e-02 : f32
    %285 = vector.broadcast %cst_82 : f32 to vector<64x1xf32>
    %286 = arith.mulf %284, %285 : vector<64x1xf32>
    %287 = arith.subf %280, %286 : vector<64x1xf32>
    %288 = vector.broadcast %287 : vector<64x1xf32> to vector<64x64xf32>
    %289 = arith.mulf %288, %16 : vector<64x64xf32>
    %cst_83 = arith.constant dense<0.000000e+00> : vector<64xf32>
    %290 = vector.multi_reduction <add>, %289, %cst_83 [0] : vector<64x64xf32> to vector<64xf32>
    %291 = vector.shape_cast %290 : vector<64xf32> to vector<1x64xf32>
    %292 = vector.broadcast %291 : vector<1x64xf32> to vector<64x64xf32>
    %293 = vector.broadcast %287 : vector<64x1xf32> to vector<64x64xf32>
    %294 = arith.cmpf ogt, %292, %293 : vector<64x64xf32>
    %295 = vector.broadcast %291 : vector<1x64xf32> to vector<64x64xf32>
    %296 = vector.broadcast %287 : vector<64x1xf32> to vector<64x64xf32>
    %297 = arith.cmpf oeq, %295, %296 : vector<64x64xf32>
    %298 = arith.cmpi slt, %10, %9 : vector<64x64xi32>
    %299 = arith.andi %297, %298 : vector<64x64xi1>
    %300 = arith.ori %294, %299 : vector<64x64xi1>
    %301 = arith.extui %300 : vector<64x64xi1> to vector<64x64xi32>
    %302 = arith.sitofp %301 : vector<64x64xi32> to vector<64x64xf32>
    %cst_84 = arith.constant dense<0.000000e+00> : vector<64xf32>
    %303 = vector.multi_reduction <add>, %302, %cst_84 [1] : vector<64x64xf32> to vector<64xf32>
    %304 = vector.shape_cast %303 : vector<64xf32> to vector<64x1xf32>
    %cst_85 = arith.constant dense<0.000000e+00> : vector<64xf32>
    %305 = vector.multi_reduction <add>, %302, %cst_85 [0] : vector<64x64xf32> to vector<64xf32>
    %306 = vector.shape_cast %305 : vector<64xf32> to vector<1x64xf32>
    %cst_86 = arith.constant 6.300000e+01 : f32
    %307 = vector.broadcast %cst_86 : f32 to vector<1x64xf32>
    %308 = arith.subf %307, %306 : vector<1x64xf32>
    %cst_87 = arith.constant 2.500000e+01 : f32
    %309 = vector.broadcast %cst_87 : f32 to vector<64x1xf32>
    %310 = arith.cmpf olt, %304, %309 : vector<64x1xf32>
    %311 = arith.extui %310 : vector<64x1xi1> to vector<64x1xi32>
    %312 = arith.sitofp %311 : vector<64x1xi32> to vector<64x1xf32>
    %313 = vector.broadcast %308 : vector<1x64xf32> to vector<32x64xf32>
    %314 = arith.cmpf oeq, %313, %18 : vector<32x64xf32>
    %cst_88 = arith.constant 2.500000e+01 : f32
    %315 = vector.broadcast %cst_88 : f32 to vector<32x64xf32>
    %316 = arith.cmpf olt, %18, %315 : vector<32x64xf32>
    %317 = arith.andi %314, %316 : vector<32x64xi1>
    %cst_89 = arith.constant 1.000000e+00 : f32
    %cst_90 = arith.constant 0.000000e+00 : f32
    %318 = vector.broadcast %cst_89 : f32 to vector<32x64xf32>
    %319 = vector.broadcast %cst_90 : f32 to vector<32x64xf32>
    %320 = arith.select %317, %318, %319 : vector<32x64xi1>, vector<32x64xf32>
    %321 = arith.mulf %320, %20 : vector<32x64xf32>
    %cst_91 = arith.constant dense<0.000000e+00> : vector<32xf32>
    %322 = vector.multi_reduction <add>, %321, %cst_91 [1] : vector<32x64xf32> to vector<32xf32>
    %323 = vector.shape_cast %322 : vector<32xf32> to vector<32x1xf32>
    %cst_92 = arith.constant dense<0.000000e+00> : vector<32x64xf32>
    %324 = tpu.matmul %320, %277, %cst_92 {dimension_numbers = #tpu.dot_dimension_numbers<[1], [0], [0], [1], [0, 0, 1, 1], [], []>} : vector<32x64xf32>, vector<64x64xf32>, vector<32x64xf32> -> vector<32x64xf32>
    %cst_93 = arith.constant 0.176776692 : f32
    %325 = vector.broadcast %cst_93 : f32 to vector<32x64xf32>
    %326 = arith.mulf %324, %325 : vector<32x64xf32>
    %327 = vector.broadcast %323 : vector<32x1xf32> to vector<32x64xf32>
    %328 = arith.cmpf ogt, %20, %327 : vector<32x64xf32>
    %cst_94 = arith.constant -1.000000e+30 : f32
    %329 = vector.broadcast %cst_94 : f32 to vector<32x64xf32>
    %330 = arith.select %328, %329, %326 : vector<32x64xi1>, vector<32x64xf32>
    %cst_95 = arith.constant dense<0xFF800000> : vector<32xf32>
    %331 = vector.multi_reduction <maximumf>, %330, %cst_95 [1] : vector<32x64xf32> to vector<32xf32>
    %332 = vector.shape_cast %331 : vector<32xf32> to vector<32x1xf32>
    %333 = vector.broadcast %332 : vector<32x1xf32> to vector<32x64xf32>
    %334 = arith.subf %330, %333 : vector<32x64xf32>
    %335 = math.exp %334 : vector<32x64xf32>
    %cst_96 = arith.constant dense<0.000000e+00> : vector<32xf32>
    %336 = vector.multi_reduction <add>, %335, %cst_96 [1] : vector<32x64xf32> to vector<32xf32>
    %337 = vector.shape_cast %336 : vector<32xf32> to vector<32x1xf32>
    %338 = tpu.reciprocal %337 {approx = true} : vector<32x1xf32> -> vector<32x1xf32>
    %339 = vector.broadcast %338 : vector<32x1xf32> to vector<32x64xf32>
    %340 = arith.mulf %335, %339 : vector<32x64xf32>
    %341 = arith.truncf %340 : vector<32x64xf32> to vector<32x64xbf16>
    %cst_97 = arith.constant dense<0.000000e+00> : vector<32x32xf32>
    %342 = tpu.matmul %341, %275, %cst_97 {dimension_numbers = #tpu.dot_dimension_numbers<[1], [0], [0], [1], [0, 0, 1, 1], [], []>} : vector<32x64xbf16>, vector<64x32xbf16>, vector<32x32xf32> -> vector<32x32xf32>
    %cst_98 = arith.constant dense<0.000000e+00> : vector<64x32xf32>
    %343 = tpu.matmul %13, %272, %cst_98 {dimension_numbers = #tpu.dot_dimension_numbers<[1], [0], [0], [1], [0, 0, 1, 1], [], []>} : vector<64x64xf32>, vector<64x32xf32>, vector<64x32xf32> -> vector<64x32xf32>
    %344 = tpu.transpose %320, [1, 0] : vector<32x64xf32> -> vector<64x32xf32>
    %cst_99 = arith.constant dense<0.000000e+00> : vector<64x32xf32>
    %345 = tpu.matmul %344, %342, %cst_99 {dimension_numbers = #tpu.dot_dimension_numbers<[1], [0], [0], [1], [0, 0, 1, 1], [], []>} : vector<64x32xf32>, vector<32x32xf32>, vector<64x32xf32> -> vector<64x32xf32>
    %346 = vector.broadcast %312 : vector<64x1xf32> to vector<64x32xf32>
    %347 = arith.mulf %346, %345 : vector<64x32xf32>
    %cst_100 = arith.constant 1.000000e+00 : f32
    %348 = vector.broadcast %cst_100 : f32 to vector<64x1xf32>
    %349 = arith.subf %348, %312 : vector<64x1xf32>
    %350 = vector.broadcast %349 : vector<64x1xf32> to vector<64x32xf32>
    %351 = arith.mulf %350, %343 : vector<64x32xf32>
    %352 = arith.addf %347, %351 : vector<64x32xf32>
    %353 = tpu.concatenate %103, %186, %269, %352 in 1 : vector<64x32xf32>, vector<64x32xf32>, vector<64x32xf32>, vector<64x32xf32> -> vector<64x128xf32>
    %354 = arith.truncf %353 : vector<64x128xf32> to vector<64x128xbf16>
    %c0_101 = arith.constant 0 : index
    %c0_102 = arith.constant 0 : index
    %355 = vector.load %arg4[%c0_101, %c0_102] : memref<128x128xbf16, #tpu.memory_space<vmem>>, vector<128x128xbf16>
    %cst_103 = arith.constant dense<0.000000e+00> : vector<64x128xf32>
    %356 = tpu.matmul %354, %355, %cst_103 {dimension_numbers = #tpu.dot_dimension_numbers<[1], [0], [0], [1], [0, 0, 1, 1], [], []>} : vector<64x128xbf16>, vector<128x128xbf16>, vector<64x128xf32> -> vector<64x128xf32>
    %c0_104 = arith.constant 0 : index
    %c0_105 = arith.constant 0 : index
    %357 = vector.load %arg5[%c0_104, %c0_105] : memref<1x128xf32, #tpu.memory_space<vmem>>, vector<1x128xf32>
    %358 = vector.broadcast %357 : vector<1x128xf32> to vector<64x128xf32>
    %359 = arith.addf %356, %358 : vector<64x128xf32>
    %360 = arith.addf %0, %359 : vector<64x128xf32>
    %c0_106 = arith.constant 0 : index
    %c0_107 = arith.constant 0 : index
    %361 = vector.load %arg10[%c0_106, %c0_107] : memref<1x128xf32, #tpu.memory_space<vmem>>, vector<1x128xf32>
    %c0_108 = arith.constant 0 : index
    %c0_109 = arith.constant 0 : index
    %362 = vector.load %arg11[%c0_108, %c0_109] : memref<1x128xf32, #tpu.memory_space<vmem>>, vector<1x128xf32>
    %cst_110 = arith.constant dense<0.000000e+00> : vector<64xf32>
    %363 = vector.multi_reduction <add>, %360, %cst_110 [1] : vector<64x128xf32> to vector<64xf32>
    %364 = vector.shape_cast %363 : vector<64xf32> to vector<64x1xf32>
    %cst_111 = arith.constant 1.280000e+02 : f32
    %365 = vector.broadcast %cst_111 : f32 to vector<64x1xf32>
    %366 = arith.divf %364, %365 : vector<64x1xf32>
    %367 = vector.broadcast %366 : vector<64x1xf32> to vector<64x128xf32>
    %368 = arith.subf %360, %367 : vector<64x128xf32>
    %369 = arith.mulf %368, %368 : vector<64x128xf32>
    %cst_112 = arith.constant dense<0.000000e+00> : vector<64xf32>
    %370 = vector.multi_reduction <add>, %369, %cst_112 [1] : vector<64x128xf32> to vector<64xf32>
    %371 = vector.shape_cast %370 : vector<64xf32> to vector<64x1xf32>
    %cst_113 = arith.constant 1.280000e+02 : f32
    %372 = vector.broadcast %cst_113 : f32 to vector<64x1xf32>
    %373 = arith.divf %371, %372 : vector<64x1xf32>
    %cst_114 = arith.constant 9.99999974E-6 : f32
    %374 = vector.broadcast %cst_114 : f32 to vector<64x1xf32>
    %375 = arith.addf %373, %374 : vector<64x1xf32>
    %376 = math.rsqrt %375 : vector<64x1xf32>
    %377 = vector.broadcast %376 : vector<64x1xf32> to vector<64x128xf32>
    %378 = arith.mulf %368, %377 : vector<64x128xf32>
    %379 = vector.broadcast %361 : vector<1x128xf32> to vector<64x128xf32>
    %380 = arith.mulf %378, %379 : vector<64x128xf32>
    %381 = vector.broadcast %362 : vector<1x128xf32> to vector<64x128xf32>
    %382 = arith.addf %380, %381 : vector<64x128xf32>
    %383 = arith.truncf %382 : vector<64x128xf32> to vector<64x128xbf16>
    %c0_115 = arith.constant 0 : index
    %c0_116 = arith.constant 0 : index
    %384 = vector.load %arg6[%c0_115, %c0_116] : memref<128x128xbf16, #tpu.memory_space<vmem>>, vector<128x128xbf16>
    %cst_117 = arith.constant dense<0.000000e+00> : vector<64x128xf32>
    %385 = tpu.matmul %383, %384, %cst_117 {dimension_numbers = #tpu.dot_dimension_numbers<[1], [0], [0], [1], [0, 0, 1, 1], [], []>} : vector<64x128xbf16>, vector<128x128xbf16>, vector<64x128xf32> -> vector<64x128xf32>
    %c0_118 = arith.constant 0 : index
    %c0_119 = arith.constant 0 : index
    %386 = vector.load %arg7[%c0_118, %c0_119] : memref<1x128xf32, #tpu.memory_space<vmem>>, vector<1x128xf32>
    %387 = vector.broadcast %386 : vector<1x128xf32> to vector<64x128xf32>
    %388 = arith.addf %385, %387 : vector<64x128xf32>
    %cst_120 = arith.constant 5.000000e-01 : f32
    %389 = vector.broadcast %cst_120 : f32 to vector<64x128xf32>
    %390 = arith.mulf %389, %388 : vector<64x128xf32>
    %cst_121 = arith.constant 0.707106769 : f32
    %391 = vector.broadcast %cst_121 : f32 to vector<64x128xf32>
    %392 = arith.mulf %388, %391 : vector<64x128xf32>
    %393 = math.absf %392 : vector<64x128xf32>
    %cst_122 = arith.constant 0.327591091 : f32
    %394 = vector.broadcast %cst_122 : f32 to vector<64x128xf32>
    %395 = arith.mulf %394, %393 : vector<64x128xf32>
    %cst_123 = arith.constant 1.000000e+00 : f32
    %396 = vector.broadcast %cst_123 : f32 to vector<64x128xf32>
    %397 = arith.addf %396, %395 : vector<64x128xf32>
    %cst_124 = arith.constant 1.000000e+00 : f32
    %398 = vector.broadcast %cst_124 : f32 to vector<64x128xf32>
    %399 = arith.divf %398, %397 : vector<64x128xf32>
    %cst_125 = arith.constant 1.06140542 : f32
    %400 = vector.broadcast %cst_125 : f32 to vector<64x128xf32>
    %401 = arith.mulf %400, %399 : vector<64x128xf32>
    %cst_126 = arith.constant -1.45315206 : f32
    %402 = vector.broadcast %cst_126 : f32 to vector<64x128xf32>
    %403 = arith.addf %401, %402 : vector<64x128xf32>
    %404 = arith.mulf %403, %399 : vector<64x128xf32>
    %cst_127 = arith.constant 1.42141378 : f32
    %405 = vector.broadcast %cst_127 : f32 to vector<64x128xf32>
    %406 = arith.addf %404, %405 : vector<64x128xf32>
    %407 = arith.mulf %406, %399 : vector<64x128xf32>
    %cst_128 = arith.constant -0.284496725 : f32
    %408 = vector.broadcast %cst_128 : f32 to vector<64x128xf32>
    %409 = arith.addf %407, %408 : vector<64x128xf32>
    %410 = arith.mulf %409, %399 : vector<64x128xf32>
    %cst_129 = arith.constant 0.254829586 : f32
    %411 = vector.broadcast %cst_129 : f32 to vector<64x128xf32>
    %412 = arith.addf %410, %411 : vector<64x128xf32>
    %413 = arith.mulf %412, %399 : vector<64x128xf32>
    %cst_130 = arith.constant 0.000000e+00 : f32
    %414 = vector.broadcast %cst_130 : f32 to vector<64x128xf32>
    %415 = arith.subf %414, %393 : vector<64x128xf32>
    %416 = arith.mulf %415, %393 : vector<64x128xf32>
    %417 = math.exp %416 : vector<64x128xf32>
    %418 = arith.mulf %413, %417 : vector<64x128xf32>
    %cst_131 = arith.constant 1.000000e+00 : f32
    %419 = vector.broadcast %cst_131 : f32 to vector<64x128xf32>
    %420 = arith.subf %419, %418 : vector<64x128xf32>
    %cst_132 = arith.constant 0.000000e+00 : f32
    %421 = vector.broadcast %cst_132 : f32 to vector<64x128xf32>
    %422 = arith.cmpf olt, %392, %421 : vector<64x128xf32>
    %cst_133 = arith.constant 0.000000e+00 : f32
    %423 = vector.broadcast %cst_133 : f32 to vector<64x128xf32>
    %424 = arith.subf %423, %420 : vector<64x128xf32>
    %425 = arith.select %422, %424, %420 : vector<64x128xi1>, vector<64x128xf32>
    %cst_134 = arith.constant 1.000000e+00 : f32
    %426 = vector.broadcast %cst_134 : f32 to vector<64x128xf32>
    %427 = arith.addf %426, %425 : vector<64x128xf32>
    %428 = arith.mulf %390, %427 : vector<64x128xf32>
    %429 = arith.truncf %428 : vector<64x128xf32> to vector<64x128xbf16>
    %c0_135 = arith.constant 0 : index
    %c0_136 = arith.constant 0 : index
    %430 = vector.load %arg8[%c0_135, %c0_136] : memref<128x128xbf16, #tpu.memory_space<vmem>>, vector<128x128xbf16>
    %cst_137 = arith.constant dense<0.000000e+00> : vector<64x128xf32>
    %431 = tpu.matmul %429, %430, %cst_137 {dimension_numbers = #tpu.dot_dimension_numbers<[1], [0], [0], [1], [0, 0, 1, 1], [], []>} : vector<64x128xbf16>, vector<128x128xbf16>, vector<64x128xf32> -> vector<64x128xf32>
    %c0_138 = arith.constant 0 : index
    %c0_139 = arith.constant 0 : index
    %432 = vector.load %arg9[%c0_138, %c0_139] : memref<1x128xf32, #tpu.memory_space<vmem>>, vector<1x128xf32>
    %433 = vector.broadcast %432 : vector<1x128xf32> to vector<64x128xf32>
    %434 = arith.addf %431, %433 : vector<64x128xf32>
    %435 = arith.addf %382, %434 : vector<64x128xf32>
    %c0_140 = arith.constant 0 : index
    %c0_141 = arith.constant 0 : index
    %436 = vector.load %arg12[%c0_140, %c0_141] : memref<1x128xf32, #tpu.memory_space<vmem>>, vector<1x128xf32>
    %c0_142 = arith.constant 0 : index
    %c0_143 = arith.constant 0 : index
    %437 = vector.load %arg13[%c0_142, %c0_143] : memref<1x128xf32, #tpu.memory_space<vmem>>, vector<1x128xf32>
    %cst_144 = arith.constant dense<0.000000e+00> : vector<64xf32>
    %438 = vector.multi_reduction <add>, %435, %cst_144 [1] : vector<64x128xf32> to vector<64xf32>
    %439 = vector.shape_cast %438 : vector<64xf32> to vector<64x1xf32>
    %cst_145 = arith.constant 1.280000e+02 : f32
    %440 = vector.broadcast %cst_145 : f32 to vector<64x1xf32>
    %441 = arith.divf %439, %440 : vector<64x1xf32>
    %442 = vector.broadcast %441 : vector<64x1xf32> to vector<64x128xf32>
    %443 = arith.subf %435, %442 : vector<64x128xf32>
    %444 = arith.mulf %443, %443 : vector<64x128xf32>
    %cst_146 = arith.constant dense<0.000000e+00> : vector<64xf32>
    %445 = vector.multi_reduction <add>, %444, %cst_146 [1] : vector<64x128xf32> to vector<64xf32>
    %446 = vector.shape_cast %445 : vector<64xf32> to vector<64x1xf32>
    %cst_147 = arith.constant 1.280000e+02 : f32
    %447 = vector.broadcast %cst_147 : f32 to vector<64x1xf32>
    %448 = arith.divf %446, %447 : vector<64x1xf32>
    %cst_148 = arith.constant 9.99999974E-6 : f32
    %449 = vector.broadcast %cst_148 : f32 to vector<64x1xf32>
    %450 = arith.addf %448, %449 : vector<64x1xf32>
    %451 = math.rsqrt %450 : vector<64x1xf32>
    %452 = vector.broadcast %451 : vector<64x1xf32> to vector<64x128xf32>
    %453 = arith.mulf %443, %452 : vector<64x128xf32>
    %454 = vector.broadcast %436 : vector<1x128xf32> to vector<64x128xf32>
    %455 = arith.mulf %453, %454 : vector<64x128xf32>
    %456 = vector.broadcast %437 : vector<1x128xf32> to vector<64x128xf32>
    %457 = arith.addf %455, %456 : vector<64x128xf32>
    %c0_149 = arith.constant 0 : index
    %c0_150 = arith.constant 0 : index
    %458 = vector.load %arg16[%c0_149, %c0_150] : memref<64x128xf32, #tpu.memory_space<vmem>>, vector<64x128xf32>
    tpu.vector_store %arg16[%c0_149, %c0_150], %457 {strides = array<i32>} : memref<64x128xf32, #tpu.memory_space<vmem>>, vector<64x128xf32>,
    return
  }
  func.func @transform_0(%arg0: i32) -> (i32, i32) {
    %c0_i32 = arith.constant 0 : i32
    %c0_i32_0 = arith.constant 0 : i32
    return %arg0, %c0_i32 : i32, i32
  }
  func.func @transform_1(%arg0: i32) -> (i32, i32) {
    %c0_i32 = arith.constant 0 : i32
    %c0_i32_0 = arith.constant 0 : i32
    %c0_i32_1 = arith.constant 0 : i32
    return %c0_i32, %c0_i32_0 : i32, i32
  }
  func.func @transform_2(%arg0: i32) -> (i32, i32) {
    %c0_i32 = arith.constant 0 : i32
    %c0_i32_0 = arith.constant 0 : i32
    %c0_i32_1 = arith.constant 0 : i32
    return %c0_i32, %c0_i32_0 : i32, i32
  }
  func.func @transform_3(%arg0: i32) -> (i32, i32) {
    %c0_i32 = arith.constant 0 : i32
    %c0_i32_0 = arith.constant 0 : i32
    %c0_i32_1 = arith.constant 0 : i32
    return %c0_i32, %c0_i32_0 : i32, i32
  }
  func.func @transform_4(%arg0: i32) -> (i32, i32) {
    %c0_i32 = arith.constant 0 : i32
    %c0_i32_0 = arith.constant 0 : i32
    %c0_i32_1 = arith.constant 0 : i32
    return %c0_i32, %c0_i32_0 : i32, i32
  }
  func.func @transform_5(%arg0: i32) -> (i32, i32) {
    %c0_i32 = arith.constant 0 : i32
    %c0_i32_0 = arith.constant 0 : i32
    %c0_i32_1 = arith.constant 0 : i32
    return %c0_i32, %c0_i32_0 : i32, i32
  }
  func.func @transform_6(%arg0: i32) -> (i32, i32) {
    %c0_i32 = arith.constant 0 : i32
    %c0_i32_0 = arith.constant 0 : i32
    %c0_i32_1 = arith.constant 0 : i32
    return %c0_i32, %c0_i32_0 : i32, i32
  }
  func.func @transform_7(%arg0: i32) -> (i32, i32) {
    %c0_i32 = arith.constant 0 : i32
    %c0_i32_0 = arith.constant 0 : i32
    %c0_i32_1 = arith.constant 0 : i32
    return %c0_i32, %c0_i32_0 : i32, i32
  }
  func.func @transform_8(%arg0: i32) -> (i32, i32) {
    %c0_i32 = arith.constant 0 : i32
    %c0_i32_0 = arith.constant 0 : i32
    %c0_i32_1 = arith.constant 0 : i32
    return %c0_i32, %c0_i32_0 : i32, i32
  }
  func.func @transform_9(%arg0: i32) -> (i32, i32) {
    %c0_i32 = arith.constant 0 : i32
    %c0_i32_0 = arith.constant 0 : i32
    %c0_i32_1 = arith.constant 0 : i32
    return %c0_i32, %c0_i32_0 : i32, i32
  }
  func.func @transform_10(%arg0: i32) -> (i32, i32) {
    %c0_i32 = arith.constant 0 : i32
    %c0_i32_0 = arith.constant 0 : i32
    %c0_i32_1 = arith.constant 0 : i32
    return %c0_i32, %c0_i32_0 : i32, i32
  }
  func.func @transform_11(%arg0: i32) -> (i32, i32) {
    %c0_i32 = arith.constant 0 : i32
    %c0_i32_0 = arith.constant 0 : i32
    %c0_i32_1 = arith.constant 0 : i32
    return %c0_i32, %c0_i32_0 : i32, i32
  }
  func.func @transform_12(%arg0: i32) -> (i32, i32) {
    %c0_i32 = arith.constant 0 : i32
    %c0_i32_0 = arith.constant 0 : i32
    %c0_i32_1 = arith.constant 0 : i32
    return %c0_i32, %c0_i32_0 : i32, i32
  }
  func.func @transform_13(%arg0: i32) -> (i32, i32) {
    %c0_i32 = arith.constant 0 : i32
    %c0_i32_0 = arith.constant 0 : i32
    %c0_i32_1 = arith.constant 0 : i32
    return %c0_i32, %c0_i32_0 : i32, i32
  }
  func.func @transform_14(%arg0: i32) -> (i32, i32) {
    %c0_i32 = arith.constant 0 : i32
    %c0_i32_0 = arith.constant 0 : i32
    %c0_i32_1 = arith.constant 0 : i32
    return %c0_i32, %c0_i32_0 : i32, i32
  }
  func.func @transform_15(%arg0: i32) -> (i32, i32) {
    %c0_i32 = arith.constant 0 : i32
    %c0_i32_0 = arith.constant 0 : i32
    return %arg0, %c0_i32 : i32, i32
  }
}

</mosaic_0001>

<llo_original>
// kernel: _lambda_.4
$region0: #{_lambda_.4}
  #allocation0 [shape = 'u32[]', space=smem, size = 0x4, offset = 0x4, fixed_abs, tag = 'smem constant byte address 0x4 - core index']
  #allocation1 [shape = 'u32[144,128]{1,0:T(1,128)}', space=vmem, size = 0x12000, scoped, tag = 'internal scratch']
  %s0 = inlined_call_operand.vmem [shape: f32[128,48], index: 0, kind: input, shape index: {}]
  %s1 = inlined_call_operand.vmem [shape: bf16[48,128], index: 1, kind: input, shape index: {}]
  %s2 = inlined_call_operand.vmem [shape: f32[64,128], index: 2, kind: input, shape index: {}]
  %s3 = inlined_call_operand.vmem [shape: f32[128,128], index: 3, kind: output, shape index: {}]
  %s4 = sld [smem:[#allocation0]]
  $region45: #{_lambda_.4} parent=0
    _
  %s6 = ssub.s32 1, %s4
  %s7 = scalar_select 0, %s6, %s4
  loop: start=0, step=1, limit=4
  $region2: #{_lambda_.4} parent=0 // loop_pre_header
    _
  $region3: #{_lambda_.4} parent=0 // loop_header
    %s9 = sphi 0, %s13
    %p10 = scmp.ge.s32.totalorder %s9, 4
    %s19 = sphi 0, %s21
    %s22 = sphi 0, %s19
    %s23 = sphi 0, %s22
    %s39 = sphi 0, %s23
    %s43 = sphi 0, %s43
    %s45 = sphi 0, %s43
    %s46 = sphi 0, %s45
    %s60 = sphi 0, %s46
    %s64 = sphi 0, %s64
    %s66 = sphi 0, %s64
    %s67 = sphi 0, %s66
    %s81 = sphi 0, %s67
    %s87 = sphi 0, %s89
    %s90 = sphi 0, %s87
    %s91 = sphi 0, %s90
    %s107 = sphi 0, %s91
  $region4: #{_lambda_.4} parent=0 // loop_header_branch
    %12 = sbr.rel (%p10) target = $region8
  $region5: #{_lambda_.4} parent=0 // loop_body
    %s14 = ssub.s32 %s9, 1
    %s15 = ssub.s32 %s9, 2
    %s16 = sadd.s32 %s9, 1
    %s17 = ssub.s32 %s9, %s16
    %p18 = scmp.eq.s32.totalorder %s17, 0
    %s20 = sadd.s32 %s19, 1
    %s21 = scalar_select %p18, %s19, %s20
    %p24 = pneg %p18
    %p25 = scmp.eq.s32.totalorder %s9, 1
    %p26 = por %p24, %p25
    %p27 = scmp.ne.s32.totalorder %s19, %s22
    %p28 = scmp.eq.s32.totalorder %s9, 0
    %p29 = por %p27, %p28
    %p30 = scmp.ne.s32.totalorder %s19, %s22
    %p31 = scmp.eq.s32.totalorder %s14, 1
    %p32 = por %p30, %p31
    %p33 = scmp.ne.s32.totalorder %s22, %s23
    %p34 = scmp.eq.s32.totalorder %s14, 0
    %p35 = por %p33, %p34
    %p36 = scmp.ne.s32.totalorder %s22, %s23
    %p37 = scmp.eq.s32.totalorder %s15, 1
    %p38 = por %p36, %p37
    %p40 = scmp.ne.s32.totalorder %s23, %s39
    %p41 = scmp.eq.s32.totalorder %s15, 0
    %p42 = por %p40, %p41
    %s44 = sadd.s32 %s43, 1
    %p47 = scmp.eq.s32.totalorder %s9, 1
    %p48 = scmp.ne.s32.totalorder %s43, %s45
    %p49 = scmp.eq.s32.totalorder %s9, 0
    %p50 = por %p48, %p49
    %p51 = scmp.ne.s32.totalorder %s43, %s45
    %p52 = scmp.eq.s32.totalorder %s14, 1
    %p53 = por %p51, %p52
    %p54 = scmp.ne.s32.totalorder %s45, %s46
    %p55 = scmp.eq.s32.totalorder %s14, 0
    %p56 = por %p54, %p55
    %p57 = scmp.ne.s32.totalorder %s45, %s46
    %p58 = scmp.eq.s32.totalorder %s15, 1
    %p59 = por %p57, %p58
    %p61 = scmp.ne.s32.totalorder %s46, %s60
    %p62 = scmp.eq.s32.totalorder %s15, 0
    %p63 = por %p61, %p62
    %s65 = sadd.s32 %s64, 1
    %p68 = scmp.eq.s32.totalorder %s9, 1
    %p69 = scmp.ne.s32.totalorder %s64, %s66
    %p70 = scmp.eq.s32.totalorder %s9, 0
    %p71 = por %p69, %p70
    %p72 = scmp.ne.s32.totalorder %s64, %s66
    %p73 = scmp.eq.s32.totalorder %s14, 1
    %p74 = por %p72, %p73
    %p75 = scmp.ne.s32.totalorder %s66, %s67
    %p76 = scmp.eq.s32.totalorder %s14, 0
    %p77 = por %p75, %p76
    %p78 = scmp.ne.s32.totalorder %s66, %s67
    %p79 = scmp.eq.s32.totalorder %s15, 1
    %p80 = por %p78, %p79
    %p82 = scmp.ne.s32.totalorder %s67, %s81
    %p83 = scmp.eq.s32.totalorder %s15, 0
    %p84 = por %p82, %p83
    %s85 = ssub.s32 %s9, %s16
    %p86 = scmp.eq.s32.totalorder %s85, 0
    %s88 = sadd.s32 %s87, 1
    %s89 = scalar_select %p86, %s87, %s88
    %p92 = pneg %p86
    %p93 = scmp.eq.s32.totalorder %s9, 1
    %p94 = por %p92, %p93
    %p95 = scmp.ne.s32.totalorder %s87, %s90
    %p96 = scmp.eq.s32.totalorder %s9, 0
    %p97 = por %p95, %p96
    %p98 = scmp.ne.s32.totalorder %s87, %s90
    %p99 = scmp.eq.s32.totalorder %s14, 1
    %p100 = por %p98, %p99
    %p101 = scmp.ne.s32.totalorder %s90, %s91
    %p102 = scmp.eq.s32.totalorder %s14, 0
    %p103 = por %p101, %p102
    %p104 = scmp.ne.s32.totalorder %s90, %s91
    %p105 = scmp.eq.s32.totalorder %s15, 1
    %p106 = por %p104, %p105
    %p108 = scmp.ne.s32.totalorder %s91, %s107
    %p109 = scmp.eq.s32.totalorder %s15, 0
    %p110 = por %p108, %p109
    %p111 = scmp.le.s32.totalorder 1, %s9
    %p112 = scmp.lt.s32.totalorder %s9, 3
    %p113 = pnand %p111, %p112
    %p114 = pneg %p113
    // Predicated region
    $region9: #{_lambda_.4} parent=5 // pred_check
      _
    $region10: #{_lambda_.4} parent=5 // pred_check_branch
      %116 = sbr.rel (%p113) target = $region12
    $region11: #{_lambda_.4} parent=5 // pred_region
      %s117 = ssub.s32 %s9, 1
      // Predicated region
      $region13: #{_lambda_.4} parent=11 // pred_check
        %p118 = pneg %p56
      $region14: #{_lambda_.4} parent=11 // pred_check_branch
        %120 = sbr.rel (%p118) target = $region16
      $region15: #{_lambda_.4} parent=11 // pred_region
        _
      $region16: #{_lambda_.4} parent=11 // pred_fallthru
        _
      // Predicated region
      $region17: #{_lambda_.4} parent=11 // pred_check
        %p121 = pneg %p77
      $region18: #{_lambda_.4} parent=11 // pred_check_branch
        %123 = sbr.rel (%p121) target = $region20
      $region19: #{_lambda_.4} parent=11 // pred_region
        _
      $region20: #{_lambda_.4} parent=11 // pred_fallthru
        _
    $region12: #{_lambda_.4} parent=5 // pred_fallthru
      _
    %p124 = scmp.lt.s32.totalorder %s9, 2
    // Predicated region
    $region21: #{_lambda_.4} parent=5 // pred_check
      %p125 = pneg %p124
    $region22: #{_lambda_.4} parent=5 // pred_check_branch
      %127 = sbr.rel (%p125) target = $region24
    $region23: #{_lambda_.4} parent=5 // pred_region
      // Predicated region
      $region25: #{_lambda_.4} parent=23 // pred_check
        %p128 = pneg %p29
      $region26: #{_lambda_.4} parent=23 // pred_check_branch
        %130 = sbr.rel (%p128) target = $region28
      $region27: #{_lambda_.4} parent=23 // pred_region
        %s131 = smul.u32 8, %s9
        %p132 = scmp.lt.s32.totalorder %s131, 15
        %s133 = scalar_select %p132, %s131, 15
        %s134 = smul.addr %s133, 8
        %s135 = scalar_lea.vmem %s0, %s134
        %s136 = smul.u32 8, %s9
      $region28: #{_lambda_.4} parent=23 // pred_fallthru
        _
    $region24: #{_lambda_.4} parent=5 // pred_fallthru
      _
    %p137 = scmp.le.s32.totalorder 1, %s9
    %p138 = scmp.lt.s32.totalorder %s9, 3
    %p139 = pnand %p137, %p138
    %p140 = pneg %p139
    // Predicated region
    $region29: #{_lambda_.4} parent=5 // pred_check
      _
    $region30: #{_lambda_.4} parent=5 // pred_check_branch
      %142 = sbr.rel (%p139) target = $region32
    $region31: #{_lambda_.4} parent=5 // pred_region
      %s143 = ssub.s32 %s9, 1
      %s144 = smul.u32 8, %s14
      %p145 = scmp.lt.s32.totalorder %s144, 15
      %s146 = scalar_select %p145, %s144, 15
      %s147 = smul.addr %s146, 8
      %s148 = scalar_lea.vmem %s0, %s147
      %p149 = pneg %p35
      %p150 = pneg %p32
      %p151 = pneg %p56
      %p152 = pneg %p53
      %p153 = pneg %p77
      %p154 = pneg %p74
      %p155 = pneg %p103
      %p156 = pneg %p100
      %s157 = smul.u32 8, %s14
      %p158 = scmp.lt.s32.totalorder %s157, 15
      %s159 = scalar_select %p158, %s157, 15
      %s160 = smul.addr %s159, 8
      %s161 = scalar_lea.vmem %s3, %s160
      %s162 = smul.u32 8, %s14
      %p163 = scmp.lt.s32.totalorder %s162, 15
      %s164 = scalar_select %p163, %s162, 15
      %s165 = smul.addr %s164, 8
      %s166 = scalar_lea.vmem %s0, %s165
      %s167 = smul.u32 8, %s14
      %s168 = smul.u32 8, %s14
      %p169 = scmp.lt.s32.totalorder %s168, 15
      %s170 = scalar_select %p169, %s168, 15
      %s171 = smul.addr %s170, 8
      %s172 = scalar_lea.vmem %s3, %s171
      %s173 = smul.u32 8, %s14
      %v175 = vld [vmem:[%s166] sm:$0xff]
      %v176 = vld [vmem:[%s166 + $0x8] sm:$0xff]
      %v177 = vld [vmem:[%s166 + $0x10] sm:$0xff]
      %v178 = vld [vmem:[%s166 + $0x18] sm:$0xff]
      %v179 = vld [vmem:[%s166 + $0x20] sm:$0xff]
      %v180 = vld [vmem:[%s166 + $0x28] sm:$0xff]
      %v181 = vld [vmem:[%s166 + $0x30] sm:$0xff]
      %v182 = vld [vmem:[%s166 + $0x38] sm:$0xff]
      %v183 = vpack.c.bf16 %v176, %v175
      %v184 = vpack.c.bf16 %v178, %v177
      %v185 = vpack.c.bf16 %v180, %v179
      %v186 = vpack.c.bf16 %v182, %v181
      %v187 = vld [vmem:[%s1] sm:$0xf]
      %v188 = vld [vmem:[%s1 + $0x4] sm:$0xf]
      %v189 = vld [vmem:[%s1 + $0x8] sm:$0xf]
      %v190 = vld [vmem:[%s1 + $0xc] sm:$0xf]
      %v191 = vld [vmem:[%s1 + $0x10] sm:$0xf]
      %v192 = vld [vmem:[%s1 + $0x14] sm:$0xf]
      %v193 = vld [vmem:[%s2] sm:$0xff]
      %v194 = vld [vmem:[%s2 + $0x8] sm:$0xff]
      %v195 = vld [vmem:[%s2 + $0x10] sm:$0xff]
      %v196 = vld [vmem:[%s2 + $0x18] sm:$0xff]
      %v197 = vld [vmem:[%s2 + $0x20] sm:$0xff]
      %v198 = vld [vmem:[%s2 + $0x28] sm:$0xff]
      %v199 = vld [vmem:[%s2 + $0x30] sm:$0xff]
      %v200 = vld [vmem:[%s2 + $0x38] sm:$0xff]
      %v207 = vunpack.c.l.b16 %v187
      %v208 = vunpack.c.l.b16 %v188
      %v209 = vunpack.c.l.b16 %v189
      %v210 = vunpack.c.l.b16 %v190
      %v211 = vunpack.c.l.b16 %v191
      %v212 = vunpack.c.l.b16 %v192
      %v213 = vpack.c.b16 %v208, %v207
      %v214 = vpack.c.b16 %v210, %v209
      %v215 = vpack.c.b16 %v212, %v211
      %vm219 = vcmask 392192
      %v221 = vsel %vm219, %v183, 0
      %v224 = vsel %vm219, %v184, 0
      %v227 = vsel %vm219, %v185, 0
      %v230 = vsel %vm219, %v186, 0
      %232 = vmatprep.subr.bf16.mxu0 0
      %233 = vmatpush1.bf16.msra.mxu0 %v213
      %234 = vmatprep.subr.bf16.mxu0 0
      %235 = vmatpush1.bf16.msra.mxu0 %v214
      %236 = vmatprep.subr.bf16.mxu0 0
      %237 = vmatpush1.bf16.msra.mxu0 %v215
      %238 = vmatprep.subr.bf16.mxu0 0
      %239 = vmatpush1.bf16.msra.mxu0 0
      %240 = vmatprep.subr.bf16.mxu0 0
      %241 = vmatpush1.bf16.msra.mxu0 0
      %242 = vmatprep.subr.bf16.mxu0 0
      %243 = vmatpush1.bf16.msra.mxu0 0
      %244 = vmatprep.subr.bf16.mxu0 0
      %245 = vmatpush1.bf16.msra.mxu0 0
      %246 = vmatprep.subr.bf16.mxu0 0
      %247 = vmatpush1.bf16.msra.mxu0 0
      %248 = vmatprep.subr.bf16.mxu0 0
      %249 = vmatpush1.bf16.msra.mxu0 0
      %250 = vmatprep.subr.bf16.mxu0 0
      %251 = vmatpush1.bf16.msra.mxu0 0
      %252 = vmatprep.subr.bf16.mxu0 0
      %253 = vmatpush1.bf16.msra.mxu0 0
      %254 = vmatprep.subr.bf16.mxu0 0
      %255 = vmatpush1.bf16.msra.mxu0 0
      %256 = vmatprep.subr.bf16.mxu0 0
      %257 = vmatpush1.bf16.msra.mxu0 0
      %258 = vmatprep.subr.bf16.mxu0 0
      %259 = vmatpush1.bf16.msra.mxu0 0
      %260 = vmatprep.subr.bf16.mxu0 0
      %261 = vmatpush1.bf16.msra.mxu0 0
      %262 = vmatprep.subr.bf16.mxu0 0
      %263 = vmatpush1.bf16.msra.mxu0 0
      %264 = vmatprep.mubr.bf16.mxu0 0
      %265 = vmatmul.mubr.bf16.gmra.mrb[0].mxu0 %v221
      %v266 = vpop.f32.mrb[0].mxu0
      %v267 = vadd.f32 %v193, %v266
      %v268 = vpop.f32.mrb[0].mxu0
      %v269 = vpop.f32.mrb[0].mxu0
      %v270 = vadd.f32 %v194, %v269
      %v271 = vpop.f32.mrb[0].mxu0
      %272 = vmatprep.mubr.bf16.mxu0 0
      %273 = vmatmul.mubr.bf16.gmra.mrb[0].mxu0 %v224
      %v274 = vpop.f32.mrb[0].mxu0
      %v275 = vadd.f32 %v195, %v274
      %v276 = vpop.f32.mrb[0].mxu0
      %v277 = vpop.f32.mrb[0].mxu0
      %v278 = vadd.f32 %v196, %v277
      %v279 = vpop.f32.mrb[0].mxu0
      %280 = vmatprep.mubr.bf16.mxu0 0
      %281 = vmatmul.mubr.bf16.gmra.mrb[0].mxu0 %v227
      %v282 = vpop.f32.mrb[0].mxu0
      %v283 = vadd.f32 %v197, %v282
      %v284 = vpop.f32.mrb[0].mxu0
      %v285 = vpop.f32.mrb[0].mxu0
      %v286 = vadd.f32 %v198, %v285
      %v287 = vpop.f32.mrb[0].mxu0
      %288 = vmatprep.mubr.bf16.mxu0 0
      %289 = vmatmul.mubr.bf16.gmra.mrb[0].mxu0 %v230
      %v290 = vpop.f32.mrb[0].mxu0
      %v291 = vadd.f32 %v199, %v290
      %v292 = vpop.f32.mrb[0].mxu0
      %v293 = vpop.f32.mrb[0].mxu0
      %v294 = vadd.f32 %v200, %v293
      %v295 = vpop.f32.mrb[0].mxu0
      %296 = vdwg.mxu0
      %297 = vst [vmem:[%s172] sm:$0xff] %v267
      %298 = vst [vmem:[%s172 + $0x8] sm:$0xff] %v270
      %299 = vst [vmem:[%s172 + $0x10] sm:$0xff] %v275
      %300 = vst [vmem:[%s172 + $0x18] sm:$0xff] %v278
      %301 = vst [vmem:[%s172 + $0x20] sm:$0xff] %v283
      %302 = vst [vmem:[%s172 + $0x28] sm:$0xff] %v286
      %303 = vst [vmem:[%s172 + $0x30] sm:$0xff] %v291
      %304 = vst [vmem:[%s172 + $0x38] sm:$0xff] %v294
      %s305 = smul.u32 8, %s14
      %p306 = scmp.lt.s32.totalorder %s305, 15
      %s307 = scalar_select %p306, %s305, 15
      %s308 = smul.addr %s307, 8
      %s309 = scalar_lea.vmem %s3, %s308
      // Predicated region
      $region33: #{_lambda_.4} parent=31 // pred_check
        %p310 = pneg %p100
      $region34: #{_lambda_.4} parent=31 // pred_check_branch
        %312 = sbr.rel (%p310) target = $region36
      $region35: #{_lambda_.4} parent=31 // pred_region
        %s313 = smul.u32 8, %s14
      $region36: #{_lambda_.4} parent=31 // pred_fallthru
        _
    $region32: #{_lambda_.4} parent=5 // pred_fallthru
      _
    %p314 = scmp.le.s32.totalorder 2, %s9
    // Predicated region
    $region37: #{_lambda_.4} parent=5 // pred_check
      %p315 = pneg %p314
    $region38: #{_lambda_.4} parent=5 // pred_check_branch
      %317 = sbr.rel (%p315) target = $region40
    $region39: #{_lambda_.4} parent=5 // pred_region
      %s318 = ssub.s32 %s9, 2
      // Predicated region
      $region41: #{_lambda_.4} parent=39 // pred_check
        %p319 = pneg %p106
      $region42: #{_lambda_.4} parent=39 // pred_check_branch
        %321 = sbr.rel (%p319) target = $region44
      $region43: #{_lambda_.4} parent=39 // pred_region
        %s322 = smul.u32 8, %s15
        %p323 = scmp.lt.s32.totalorder %s322, 15
        %s324 = scalar_select %p323, %s322, 15
        %s325 = smul.addr %s324, 8
        %s326 = scalar_lea.vmem %s3, %s325
      $region44: #{_lambda_.4} parent=39 // pred_fallthru
        _
    $region40: #{_lambda_.4} parent=5 // pred_fallthru
      _
  $region6: #{_lambda_.4} parent=0 // loop_footer
    %s13 = sadd.s32 1, %s9
  $region7: #{_lambda_.4} parent=0 // loop_footer_branch
    %8 = sbr.rel target = $region3
  $region8: #{_lambda_.4} parent=0 // loop_exit
    _

// kernel: _lambda_.7
$region0: #{_lambda_.7}
  #allocation0 [shape = 'u32[]', space=smem, size = 0x4, offset = 0x4, fixed_abs, tag = 'smem constant byte address 0x4 - core index']
  #allocation1 [shape = 'u32[144,128]{1,0:T(1,128)}', space=vmem, size = 0x12000, scoped, tag = 'internal scratch']
  %s0 = inlined_call_operand.vmem [shape: f32[128,128], index: 0, kind: input, shape index: {}]
  %s1 = inlined_call_operand.vmem [shape: f32[1,128], index: 1, kind: input, shape index: {}]
  %s2 = inlined_call_operand.vmem [shape: f32[1,128], index: 2, kind: input, shape index: {}, may-alias: {2,4}]
  %s3 = inlined_call_operand.vmem [shape: bf16[128,128], index: 3, kind: input, shape index: {}]
  %s4 = inlined_call_operand.vmem [shape: f32[1,128], index: 4, kind: input, shape index: {}, may-alias: {2,4}]
  %s5 = inlined_call_operand.vmem [shape: f32[128,128], index: 5, kind: output, shape index: {}]
  %s6 = sld [smem:[#allocation0]]
  $region53: #{_lambda_.7} parent=0
    _
  %s8 = ssub.s32 1, %s6
  %s9 = scalar_select 0, %s8, %s6
  loop: start=0, step=1, limit=4
  $region2: #{_lambda_.7} parent=0 // loop_pre_header
    _
  $region3: #{_lambda_.7} parent=0 // loop_header
    %s11 = sphi 0, %s15
    %p12 = scmp.ge.s32.totalorder %s11, 4
    %s21 = sphi 0, %s23
    %s24 = sphi 0, %s21
    %s25 = sphi 0, %s24
    %s41 = sphi 0, %s25
    %s45 = sphi 0, %s45
    %s47 = sphi 0, %s45
    %s48 = sphi 0, %s47
    %s62 = sphi 0, %s48
    %s66 = sphi 0, %s66
    %s68 = sphi 0, %s66
    %s69 = sphi 0, %s68
    %s83 = sphi 0, %s69
    %s87 = sphi 0, %s87
    %s89 = sphi 0, %s87
    %s90 = sphi 0, %s89
    %s104 = sphi 0, %s90
    %s108 = sphi 0, %s108
    %s110 = sphi 0, %s108
    %s111 = sphi 0, %s110
    %s125 = sphi 0, %s111
    %s131 = sphi 0, %s133
    %s134 = sphi 0, %s131
    %s135 = sphi 0, %s134
    %s151 = sphi 0, %s135
  $region4: #{_lambda_.7} parent=0 // loop_header_branch
    %14 = sbr.rel (%p12) target = $region8
  $region5: #{_lambda_.7} parent=0 // loop_body
    %s16 = ssub.s32 %s11, 1
    %s17 = ssub.s32 %s11, 2
    %s18 = sadd.s32 %s11, 1
    %s19 = ssub.s32 %s11, %s18
    %p20 = scmp.eq.s32.totalorder %s19, 0
    %s22 = sadd.s32 %s21, 1
    %s23 = scalar_select %p20, %s21, %s22
    %p26 = pneg %p20
    %p27 = scmp.eq.s32.totalorder %s11, 1
    %p28 = por %p26, %p27
    %p29 = scmp.ne.s32.totalorder %s21, %s24
    %p30 = scmp.eq.s32.totalorder %s11, 0
    %p31 = por %p29, %p30
    %p32 = scmp.ne.s32.totalorder %s21, %s24
    %p33 = scmp.eq.s32.totalorder %s16, 1
    %p34 = por %p32, %p33
    %p35 = scmp.ne.s32.totalorder %s24, %s25
    %p36 = scmp.eq.s32.totalorder %s16, 0
    %p37 = por %p35, %p36
    %p38 = scmp.ne.s32.totalorder %s24, %s25
    %p39 = scmp.eq.s32.totalorder %s17, 1
    %p40 = por %p38, %p39
    %p42 = scmp.ne.s32.totalorder %s25, %s41
    %p43 = scmp.eq.s32.totalorder %s17, 0
    %p44 = por %p42, %p43
    %s46 = sadd.s32 %s45, 1
    %p49 = scmp.eq.s32.totalorder %s11, 1
    %p50 = scmp.ne.s32.totalorder %s45, %s47
    %p51 = scmp.eq.s32.totalorder %s11, 0
    %p52 = por %p50, %p51
    %p53 = scmp.ne.s32.totalorder %s45, %s47
    %p54 = scmp.eq.s32.totalorder %s16, 1
    %p55 = por %p53, %p54
    %p56 = scmp.ne.s32.totalorder %s47, %s48
    %p57 = scmp.eq.s32.totalorder %s16, 0
    %p58 = por %p56, %p57
    %p59 = scmp.ne.s32.totalorder %s47, %s48
    %p60 = scmp.eq.s32.totalorder %s17, 1
    %p61 = por %p59, %p60
    %p63 = scmp.ne.s32.totalorder %s48, %s62
    %p64 = scmp.eq.s32.totalorder %s17, 0
    %p65 = por %p63, %p64
    %s67 = sadd.s32 %s66, 1
    %p70 = scmp.eq.s32.totalorder %s11, 1
    %p71 = scmp.ne.s32.totalorder %s66, %s68
    %p72 = scmp.eq.s32.totalorder %s11, 0
    %p73 = por %p71, %p72
    %p74 = scmp.ne.s32.totalorder %s66, %s68
    %p75 = scmp.eq.s32.totalorder %s16, 1
    %p76 = por %p74, %p75
    %p77 = scmp.ne.s32.totalorder %s68, %s69
    %p78 = scmp.eq.s32.totalorder %s16, 0
    %p79 = por %p77, %p78
    %p80 = scmp.ne.s32.totalorder %s68, %s69
    %p81 = scmp.eq.s32.totalorder %s17, 1
    %p82 = por %p80, %p81
    %p84 = scmp.ne.s32.totalorder %s69, %s83
    %p85 = scmp.eq.s32.totalorder %s17, 0
    %p86 = por %p84, %p85
    %s88 = sadd.s32 %s87, 1
    %p91 = scmp.eq.s32.totalorder %s11, 1
    %p92 = scmp.ne.s32.totalorder %s87, %s89
    %p93 = scmp.eq.s32.totalorder %s11, 0
    %p94 = por %p92, %p93
    %p95 = scmp.ne.s32.totalorder %s87, %s89
    %p96 = scmp.eq.s32.totalorder %s16, 1
    %p97 = por %p95, %p96
    %p98 = scmp.ne.s32.totalorder %s89, %s90
    %p99 = scmp.eq.s32.totalorder %s16, 0
    %p100 = por %p98, %p99
    %p101 = scmp.ne.s32.totalorder %s89, %s90
    %p102 = scmp.eq.s32.totalorder %s17, 1
    %p103 = por %p101, %p102
    %p105 = scmp.ne.s32.totalorder %s90, %s104
    %p106 = scmp.eq.s32.totalorder %s17, 0
    %p107 = por %p105, %p106
    %s109 = sadd.s32 %s108, 1
    %p112 = scmp.eq.s32.totalorder %s11, 1
    %p113 = scmp.ne.s32.totalorder %s108, %s110
    %p114 = scmp.eq.s32.totalorder %s11, 0
    %p115 = por %p113, %p114
    %p116 = scmp.ne.s32.totalorder %s108, %s110
    %p117 = scmp.eq.s32.totalorder %s16, 1
    %p118 = por %p116, %p117
    %p119 = scmp.ne.s32.totalorder %s110, %s111
    %p120 = scmp.eq.s32.totalorder %s16, 0
    %p121 = por %p119, %p120
    %p122 = scmp.ne.s32.totalorder %s110, %s111
    %p123 = scmp.eq.s32.totalorder %s17, 1
    %p124 = por %p122, %p123
    %p126 = scmp.ne.s32.totalorder %s111, %s125
    %p127 = scmp.eq.s32.totalorder %s17, 0
    %p128 = por %p126, %p127
    %s129 = ssub.s32 %s11, %s18
    %p130 = scmp.eq.s32.totalorder %s129, 0
    %s132 = sadd.s32 %s131, 1
    %s133 = scalar_select %p130, %s131, %s132
    %p136 = pneg %p130
    %p137 = scmp.eq.s32.totalorder %s11, 1
    %p138 = por %p136, %p137
    %p139 = scmp.ne.s32.totalorder %s131, %s134
    %p140 = scmp.eq.s32.totalorder %s11, 0
    %p141 = por %p139, %p140
    %p142 = scmp.ne.s32.totalorder %s131, %s134
    %p143 = scmp.eq.s32.totalorder %s16, 1
    %p144 = por %p142, %p143
    %p145 = scmp.ne.s32.totalorder %s134, %s135
    %p146 = scmp.eq.s32.totalorder %s16, 0
    %p147 = por %p145, %p146
    %p148 = scmp.ne.s32.totalorder %s134, %s135
    %p149 = scmp.eq.s32.totalorder %s17, 1
    %p150 = por %p148, %p149
    %p152 = scmp.ne.s32.totalorder %s135, %s151
    %p153 = scmp.eq.s32.totalorder %s17, 0
    %p154 = por %p152, %p153
    %p155 = scmp.le.s32.totalorder 1, %s11
    %p156 = scmp.lt.s32.totalorder %s11, 3
    %p157 = pnand %p155, %p156
    %p158 = pneg %p157
    // Predicated region
    $region9: #{_lambda_.7} parent=5 // pred_check
      _
    $region10: #{_lambda_.7} parent=5 // pred_check_branch
      %160 = sbr.rel (%p157) target = $region12
    $region11: #{_lambda_.7} parent=5 // pred_region
      %s161 = ssub.s32 %s11, 1
      // Predicated region
      $region13: #{_lambda_.7} parent=11 // pred_check
        %p162 = pneg %p58
      $region14: #{_lambda_.7} parent=11 // pred_check_branch
        %164 = sbr.rel (%p162) target = $region16
      $region15: #{_lambda_.7} parent=11 // pred_region
        _
      $region16: #{_lambda_.7} parent=11 // pred_fallthru
        _
      // Predicated region
      $region17: #{_lambda_.7} parent=11 // pred_check
        %p165 = pneg %p79
      $region18: #{_lambda_.7} parent=11 // pred_check_branch
        %167 = sbr.rel (%p165) target = $region20
      $region19: #{_lambda_.7} parent=11 // pred_region
        _
      $region20: #{_lambda_.7} parent=11 // pred_fallthru
        _
      // Predicated region
      $region21: #{_lambda_.7} parent=11 // pred_check
        %p168 = pneg %p100
      $region22: #{_lambda_.7} parent=11 // pred_check_branch
        %170 = sbr.rel (%p168) target = $region24
      $region23: #{_lambda_.7} parent=11 // pred_region
        _
      $region24: #{_lambda_.7} parent=11 // pred_fallthru
        _
      // Predicated region
      $region25: #{_lambda_.7} parent=11 // pred_check
        %p171 = pneg %p121
      $region26: #{_lambda_.7} parent=11 // pred_check_branch
        %173 = sbr.rel (%p171) target = $region28
      $region27: #{_lambda_.7} parent=11 // pred_region
        _
      $region28: #{_lambda_.7} parent=11 // pred_fallthru
        _
    $region12: #{_lambda_.7} parent=5 // pred_fallthru
      _
    %p174 = scmp.lt.s32.totalorder %s11, 2
    // Predicated region
    $region29: #{_lambda_.7} parent=5 // pred_check
      %p175 = pneg %p174
    $region30: #{_lambda_.7} parent=5 // pred_check_branch
      %177 = sbr.rel (%p175) target = $region32
    $region31: #{_lambda_.7} parent=5 // pred_region
      // Predicated region
      $region33: #{_lambda_.7} parent=31 // pred_check
        %p178 = pneg %p31
      $region34: #{_lambda_.7} parent=31 // pred_check_branch
        %180 = sbr.rel (%p178) target = $region36
      $region35: #{_lambda_.7} parent=31 // pred_region
        %s181 = smul.u32 8, %s11
        %p182 = scmp.lt.s32.totalorder %s181, 15
        %s183 = scalar_select %p182, %s181, 15
        %s184 = smul.addr %s183, 8
        %s185 = scalar_lea.vmem %s0, %s184
        %s186 = smul.u32 8, %s11
      $region36: #{_lambda_.7} parent=31 // pred_fallthru
        _
    $region32: #{_lambda_.7} parent=5 // pred_fallthru
      _
    %p187 = scmp.le.s32.totalorder 1, %s11
    %p188 = scmp.lt.s32.totalorder %s11, 3
    %p189 = pnand %p187, %p188
    %p190 = pneg %p189
    // Predicated region
    $region37: #{_lambda_.7} parent=5 // pred_check
      _
    $region38: #{_lambda_.7} parent=5 // pred_check_branch
      %192 = sbr.rel (%p189) target = $region40
    $region39: #{_lambda_.7} parent=5 // pred_region
      %s193 = ssub.s32 %s11, 1
      %s194 = smul.u32 8, %s16
      %p195 = scmp.lt.s32.totalorder %s194, 15
      %s196 = scalar_select %p195, %s194, 15
      %s197 = smul.addr %s196, 8
      %s198 = scalar_lea.vmem %s0, %s197
      %p199 = pneg %p37
      %p200 = pneg %p34
      %p201 = pneg %p58
      %p202 = pneg %p55
      %p203 = pneg %p79
      %p204 = pneg %p76
      %p205 = pneg %p100
      %p206 = pneg %p97
      %p207 = pneg %p121
      %p208 = pneg %p118
      %p209 = pneg %p147
      %p210 = pneg %p144
      %s211 = smul.u32 8, %s16
      %p212 = scmp.lt.s32.totalorder %s211, 15
      %s213 = scalar_select %p212, %s211, 15
      %s214 = smul.addr %s213, 8
      %s215 = scalar_lea.vmem %s5, %s214
      %s216 = smul.u32 8, %s16
      %p217 = scmp.lt.s32.totalorder %s216, 15
      %s218 = scalar_select %p217, %s216, 15
      %s219 = smul.addr %s218, 8
      %s220 = scalar_lea.vmem %s0, %s219
      %s221 = smul.u32 8, %s16
      %s222 = smul.u32 8, %s16
      %p223 = scmp.lt.s32.totalorder %s222, 15
      %s224 = scalar_select %p223, %s222, 15
      %s225 = smul.addr %s224, 8
      %s226 = scalar_lea.vmem %s5, %s225
      %s227 = smul.u32 8, %s16
      %v229 = vld [vmem:[%s220] sm:$0xff]
      %v230 = vld [vmem:[%s220 + $0x8] sm:$0xff]
      %v231 = vld [vmem:[%s220 + $0x10] sm:$0xff]
      %v232 = vld [vmem:[%s220 + $0x18] sm:$0xff]
      %v233 = vld [vmem:[%s220 + $0x20] sm:$0xff]
      %v234 = vld [vmem:[%s220 + $0x28] sm:$0xff]
      %v235 = vld [vmem:[%s220 + $0x30] sm:$0xff]
      %v236 = vld [vmem:[%s220 + $0x38] sm:$0xff]
      %v237 = vld [vmem:[%s1] sm:$0x1]
      %v238 = vld [vmem:[%s2] sm:$0x1]
      %239 = vadd.xlane.f32.xlu0 %v229
      %v240 = vpop.xlane.xlu0 %239
      %241 = vadd.xlane.f32.xlu0 %v230
      %v242 = vpop.xlane.xlu0 %241
      %243 = vadd.xlane.f32.xlu0 %v231
      %v244 = vpop.xlane.xlu0 %243
      %245 = vadd.xlane.f32.xlu0 %v232
      %v246 = vpop.xlane.xlu0 %245
      %247 = vadd.xlane.f32.xlu0 %v233
      %v248 = vpop.xlane.xlu0 %247
      %249 = vadd.xlane.f32.xlu0 %v234
      %v250 = vpop.xlane.xlu0 %249
      %251 = vadd.xlane.f32.xlu0 %v235
      %v252 = vpop.xlane.xlu0 %251
      %253 = vadd.xlane.f32.xlu0 %v236
      %v254 = vpop.xlane.xlu0 %253
      %v255 = vrcp.pop 128.0
      %v256 = vmul.f32 %v240, %v255
      %v257 = vmul.f32 %v242, %v255
      %v258 = vmul.f32 %v244, %v255
      %v259 = vmul.f32 %v246, %v255
      %v260 = vmul.f32 %v248, %v255
      %v261 = vmul.f32 %v250, %v255
      %v262 = vmul.f32 %v252, %v255
      %v263 = vmul.f32 %v254, %v255
      %v264 = vsub.f32 %v229, %v256
      %v265 = vsub.f32 %v230, %v257
      %v266 = vsub.f32 %v231, %v258
      %v267 = vsub.f32 %v232, %v259
      %v268 = vsub.f32 %v233, %v260
      %v269 = vsub.f32 %v234, %v261
      %v270 = vsub.f32 %v235, %v262
      %v271 = vsub.f32 %v236, %v263
      %v272 = vmul.f32 %v264, %v264
      %v273 = vmul.f32 %v265, %v265
      %v274 = vmul.f32 %v266, %v266
      %v275 = vmul.f32 %v267, %v267
      %v276 = vmul.f32 %v268, %v268
      %v277 = vmul.f32 %v269, %v269
      %v278 = vmul.f32 %v270, %v270
      %v279 = vmul.f32 %v271, %v271
      %280 = vadd.xlane.f32.xlu0 %v272
      %v281 = vpop.xlane.xlu0 %280
      %282 = vadd.xlane.f32.xlu0 %v273
      %v283 = vpop.xlane.xlu0 %282
      %284 = vadd.xlane.f32.xlu0 %v274
      %v285 = vpop.xlane.xlu0 %284
      %286 = vadd.xlane.f32.xlu0 %v275
      %v287 = vpop.xlane.xlu0 %286
      %288 = vadd.xlane.f32.xlu0 %v276
      %v289 = vpop.xlane.xlu0 %288
      %290 = vadd.xlane.f32.xlu0 %v277
      %v291 = vpop.xlane.xlu0 %290
      %292 = vadd.xlane.f32.xlu0 %v278
      %v293 = vpop.xlane.xlu0 %292
      %294 = vadd.xlane.f32.xlu0 %v279
      %v295 = vpop.xlane.xlu0 %294
      %v296 = vmul.f32 %v281, %v255
      %v297 = vmul.f32 %v283, %v255
      %v298 = vmul.f32 %v285, %v255
      %v299 = vmul.f32 %v287, %v255
      %v300 = vmul.f32 %v289, %v255
      %v301 = vmul.f32 %v291, %v255
      %v302 = vmul.f32 %v293, %v255
      %v303 = vmul.f32 %v295, %v255
      %v304 = vadd.f32 %v296, 1e-05
      %v305 = vadd.f32 %v297, 1e-05
      %v306 = vadd.f32 %v298, 1e-05
      %v307 = vadd.f32 %v299, 1e-05
      %v308 = vadd.f32 %v300, 1e-05
      %v309 = vadd.f32 %v301, 1e-05
      %v310 = vadd.f32 %v302, 1e-05
      %v311 = vadd.f32 %v303, 1e-05
      %v312 = vrsqrt.pop %v304
      %v313 = vrsqrt.pop %v305
      %v314 = vrsqrt.pop %v306
      %v315 = vrsqrt.pop %v307
      %v316 = vrsqrt.pop %v308
      %v317 = vrsqrt.pop %v309
      %v318 = vrsqrt.pop %v310
      %v319 = vrsqrt.pop %v311
      %v320 = vmul.f32 %v264, %v312
      %v321 = vmul.f32 %v265, %v313
      %v322 = vmul.f32 %v266, %v314
      %v323 = vmul.f32 %v267, %v315
      %v324 = vmul.f32 %v268, %v316
      %v325 = vmul.f32 %v269, %v317
      %v326 = vmul.f32 %v270, %v318
      %v327 = vmul.f32 %v271, %v319
      %v329 = vlaneseq
      %v330 = vshrl.u32 %v329, 7
      %v331 = vsub.s32 0, %v330
      %v332 = vrot.slane %v237, %v331
      %v334 = vmul.f32 %v320, %v332
      %v335 = vmul.f32 %v321, %v332
      %v336 = vmul.f32 %v322, %v332
      %v337 = vmul.f32 %v323, %v332
      %v338 = vmul.f32 %v324, %v332
      %v339 = vmul.f32 %v325, %v332
      %v340 = vmul.f32 %v326, %v332
      %v341 = vmul.f32 %v327, %v332
      %v343 = vlaneseq
      %v344 = vshrl.u32 %v343, 7
      %v345 = vsub.s32 0, %v344
      %v346 = vrot.slane %v238, %v345
      %v348 = vadd.f32 %v334, %v346
      %v349 = vadd.f32 %v335, %v346
      %v350 = vadd.f32 %v336, %v346
      %v351 = vadd.f32 %v337, %v346
      %v352 = vadd.f32 %v338, %v346
      %v353 = vadd.f32 %v339, %v346
      %v354 = vadd.f32 %v340, %v346
      %v355 = vadd.f32 %v341, %v346
      %v356 = vpack.c.bf16 %v349, %v348
      %v357 = vpack.c.bf16 %v351, %v350
      %v358 = vpack.c.bf16 %v353, %v352
      %v359 = vpack.c.bf16 %v355, %v354
      %v360 = vld [vmem:[%s3] sm:$0xf]
      %v361 = vld [vmem:[%s3 + $0x4] sm:$0xf]
      %v362 = vld [vmem:[%s3 + $0x8] sm:$0xf]
      %v363 = vld [vmem:[%s3 + $0xc] sm:$0xf]
      %v364 = vld [vmem:[%s3 + $0x10] sm:$0xf]
      %v365 = vld [vmem:[%s3 + $0x14] sm:$0xf]
      %v366 = vld [vmem:[%s3 + $0x18] sm:$0xf]
      %v367 = vld [vmem:[%s3 + $0x1c] sm:$0xf]
      %v368 = vld [vmem:[%s3 + $0x20] sm:$0xf]
      %v369 = vld [vmem:[%s3 + $0x24] sm:$0xf]
      %v370 = vld [vmem:[%s3 + $0x28] sm:$0xf]
      %v371 = vld [vmem:[%s3 + $0x2c] sm:$0xf]
      %v372 = vld [vmem:[%s3 + $0x30] sm:$0xf]
      %v373 = vld [vmem:[%s3 + $0x34] sm:$0xf]
      %v374 = vld [vmem:[%s3 + $0x38] sm:$0xf]
      %v375 = vld [vmem:[%s3 + $0x3c] sm:$0xf]
      %v376 = vld [vmem:[%s4] sm:$0x1]
      %v378 = vlaneseq
      %v379 = vshrl.u32 %v378, 7
      %v380 = vsub.s32 0, %v379
      %v381 = vrot.slane %v376, %v380
      %v399 = vunpack.c.l.b16 %v360
      %v400 = vunpack.c.l.b16 %v361
      %v401 = vunpack.c.l.b16 %v362
      %v402 = vunpack.c.l.b16 %v363
      %v403 = vunpack.c.l.b16 %v364
      %v404 = vunpack.c.l.b16 %v365
      %v405 = vunpack.c.l.b16 %v366
      %v406 = vunpack.c.l.b16 %v367
      %v407 = vunpack.c.l.b16 %v368
      %v408 = vunpack.c.l.b16 %v369
      %v409 = vunpack.c.l.b16 %v370
      %v410 = vunpack.c.l.b16 %v371
      %v411 = vunpack.c.l.b16 %v372
      %v412 = vunpack.c.l.b16 %v373
      %v413 = vunpack.c.l.b16 %v374
      %v414 = vunpack.c.l.b16 %v375
      %v415 = vpack.c.b16 %v400, %v399
      %v416 = vpack.c.b16 %v402, %v401
      %v417 = vpack.c.b16 %v404, %v403
      %v418 = vpack.c.b16 %v406, %v405
      %v419 = vpack.c.b16 %v408, %v407
      %v420 = vpack.c.b16 %v410, %v409
      %v421 = vpack.c.b16 %v412, %v411
      %v422 = vpack.c.b16 %v414, %v413
      %431 = vmatprep.subr.bf16.mxu0 0
      %432 = vmatpush1.bf16.msra.mxu0 %v415
      %433 = vmatprep.subr.bf16.mxu0 0
      %434 = vmatpush1.bf16.msra.mxu0 %v416
      %435 = vmatprep.subr.bf16.mxu0 0
      %436 = vmatpush1.bf16.msra.mxu0 %v417
      %437 = vmatprep.subr.bf16.mxu0 0
      %438 = vmatpush1.bf16.msra.mxu0 %v418
      %439 = vmatprep.subr.bf16.mxu0 0
      %440 = vmatpush1.bf16.msra.mxu0 %v419
      %441 = vmatprep.subr.bf16.mxu0 0
      %442 = vmatpush1.bf16.msra.mxu0 %v420
      %443 = vmatprep.subr.bf16.mxu0 0
      %444 = vmatpush1.bf16.msra.mxu0 %v421
      %445 = vmatprep.subr.bf16.mxu0 0
      %446 = vmatpush1.bf16.msra.mxu0 %v422
      %447 = vmatprep.subr.bf16.mxu0 0
      %448 = vmatpush1.bf16.msra.mxu0 0
      %449 = vmatprep.subr.bf16.mxu0 0
      %450 = vmatpush1.bf16.msra.mxu0 0
      %451 = vmatprep.subr.bf16.mxu0 0
      %452 = vmatpush1.bf16.msra.mxu0 0
      %453 = vmatprep.subr.bf16.mxu0 0
      %454 = vmatpush1.bf16.msra.mxu0 0
      %455 = vmatprep.subr.bf16.mxu0 0
      %456 = vmatpush1.bf16.msra.mxu0 0
      %457 = vmatprep.subr.bf16.mxu0 0
      %458 = vmatpush1.bf16.msra.mxu0 0
      %459 = vmatprep.subr.bf16.mxu0 0
      %460 = vmatpush1.bf16.msra.mxu0 0
      %461 = vmatprep.subr.bf16.mxu0 0
      %462 = vmatpush1.bf16.msra.mxu0 0
      %463 = vmatprep.mubr.bf16.mxu0 0
      %464 = vmatmul.mubr.bf16.gmra.mrb[0].mxu0 %v356
      %v465 = vpop.f32.mrb[0].mxu0
      %v466 = vadd.f32 %v381, %v465
      %v467 = vpop.f32.mrb[0].mxu0
      %v468 = vpop.f32.mrb[0].mxu0
      %v469 = vadd.f32 %v381, %v468
      %v470 = vpop.f32.mrb[0].mxu0
      %471 = vmatprep.mubr.bf16.mxu0 0
      %472 = vmatmul.mubr.bf16.gmra.mrb[0].mxu0 %v357
      %v473 = vpop.f32.mrb[0].mxu0
      %v474 = vadd.f32 %v381, %v473
      %v475 = vpop.f32.mrb[0].mxu0
      %v476 = vpop.f32.mrb[0].mxu0
      %v477 = vadd.f32 %v381, %v476
      %v478 = vpop.f32.mrb[0].mxu0
      %479 = vmatprep.mubr.bf16.mxu0 0
      %480 = vmatmul.mubr.bf16.gmra.mrb[0].mxu0 %v358
      %v481 = vpop.f32.mrb[0].mxu0
      %v482 = vadd.f32 %v381, %v481
      %v483 = vpop.f32.mrb[0].mxu0
      %v484 = vpop.f32.mrb[0].mxu0
      %v485 = vadd.f32 %v381, %v484
      %v486 = vpop.f32.mrb[0].mxu0
      %487 = vmatprep.mubr.bf16.mxu0 0
      %488 = vmatmul.mubr.bf16.gmra.mrb[0].mxu0 %v359
      %v489 = vpop.f32.mrb[0].mxu0
      %v490 = vadd.f32 %v381, %v489
      %v491 = vpop.f32.mrb[0].mxu0
      %v492 = vpop.f32.mrb[0].mxu0
      %v493 = vadd.f32 %v381, %v492
      %v494 = vpop.f32.mrb[0].mxu0
      %495 = vdwg.mxu0
      %v496 = vsub.f32 0.0, %v466
      %v497 = vsub.f32 0.0, %v469
      %v498 = vsub.f32 0.0, %v474
      %v499 = vsub.f32 0.0, %v477
      %v500 = vsub.f32 0.0, %v482
      %v501 = vsub.f32 0.0, %v485
      %v502 = vsub.f32 0.0, %v490
      %v503 = vsub.f32 0.0, %v493
      %v504 = vmul.f32 %v496, 1.442695
      %v505 = vpow.pop %v504
      %v506 = vmul.f32 %v497, 1.442695
      %v507 = vpow.pop %v506
      %v508 = vmul.f32 %v498, 1.442695
      %v509 = vpow.pop %v508
      %v510 = vmul.f32 %v499, 1.442695
      %v511 = vpow.pop %v510
      %v512 = vmul.f32 %v500, 1.442695
      %v513 = vpow.pop %v512
      %v514 = vmul.f32 %v501, 1.442695
      %v515 = vpow.pop %v514
      %v516 = vmul.f32 %v502, 1.442695
      %v517 = vpow.pop %v516
      %v518 = vmul.f32 %v503, 1.442695
      %v519 = vpow.pop %v518
      %v520 = vadd.f32 %v505, 1.0
      %v521 = vadd.f32 %v507, 1.0
      %v522 = vadd.f32 %v509, 1.0
      %v523 = vadd.f32 %v511, 1.0
      %v524 = vadd.f32 %v513, 1.0
      %v525 = vadd.f32 %v515, 1.0
      %v526 = vadd.f32 %v517, 1.0
      %v527 = vadd.f32 %v519, 1.0
      %v528 = vrcp.pop %v520
      %v529 = vmul.f32 1.0, %v528
      %v530 = vrcp.pop %v521
      %v531 = vmul.f32 1.0, %v530
      %v532 = vrcp.pop %v522
      %v533 = vmul.f32 1.0, %v532
      %v534 = vrcp.pop %v523
      %v535 = vmul.f32 1.0, %v534
      %v536 = vrcp.pop %v524
      %v537 = vmul.f32 1.0, %v536
      %v538 = vrcp.pop %v525
      %v539 = vmul.f32 1.0, %v538
      %v540 = vrcp.pop %v526
      %v541 = vmul.f32 1.0, %v540
      %v542 = vrcp.pop %v527
      %v543 = vmul.f32 1.0, %v542
      %544 = vst [vmem:[%s226] sm:$0xff] %v529
      %545 = vst [vmem:[%s226 + $0x8] sm:$0xff] %v531
      %546 = vst [vmem:[%s226 + $0x10] sm:$0xff] %v533
      %547 = vst [vmem:[%s226 + $0x18] sm:$0xff] %v535
      %548 = vst [vmem:[%s226 + $0x20] sm:$0xff] %v537
      %549 = vst [vmem:[%s226 + $0x28] sm:$0xff] %v539
      %550 = vst [vmem:[%s226 + $0x30] sm:$0xff] %v541
      %551 = vst [vmem:[%s226 + $0x38] sm:$0xff] %v543
      %s552 = smul.u32 8, %s16
      %p553 = scmp.lt.s32.totalorder %s552, 15
      %s554 = scalar_select %p553, %s552, 15
      %s555 = smul.addr %s554, 8
      %s556 = scalar_lea.vmem %s5, %s555
      // Predicated region
      $region41: #{_lambda_.7} parent=39 // pred_check
        %p557 = pneg %p144
      $region42: #{_lambda_.7} parent=39 // pred_check_branch
        %559 = sbr.rel (%p557) target = $region44
      $region43: #{_lambda_.7} parent=39 // pred_region
        %s560 = smul.u32 8, %s16
      $region44: #{_lambda_.7} parent=39 // pred_fallthru
        _
    $region40: #{_lambda_.7} parent=5 // pred_fallthru
      _
    %p561 = scmp.le.s32.totalorder 2, %s11
    // Predicated region
    $region45: #{_lambda_.7} parent=5 // pred_check
      %p562 = pneg %p561
    $region46: #{_lambda_.7} parent=5 // pred_check_branch
      %564 = sbr.rel (%p562) target = $region48
    $region47: #{_lambda_.7} parent=5 // pred_region
      %s565 = ssub.s32 %s11, 2
      // Predicated region
      $region49: #{_lambda_.7} parent=47 // pred_check
        %p566 = pneg %p150
      $region50: #{_lambda_.7} parent=47 // pred_check_branch
        %568 = sbr.rel (%p566) target = $region52
      $region51: #{_lambda_.7} parent=47 // pred_region
        %s569 = smul.u32 8, %s17
        %p570 = scmp.lt.s32.totalorder %s569, 15
        %s571 = scalar_select %p570, %s569, 15
        %s572 = smul.addr %s571, 8
        %s573 = scalar_lea.vmem %s5, %s572
      $region52: #{_lambda_.7} parent=47 // pred_fallthru
        _
    $region48: #{_lambda_.7} parent=5 // pred_fallthru
      _
  $region6: #{_lambda_.7} parent=0 // loop_footer
    %s15 = sadd.s32 1, %s11
  $region7: #{_lambda_.7} parent=0 // loop_footer_branch
    %10 = sbr.rel target = $region3
  $region8: #{_lambda_.7} parent=0 // loop_exit
    _

// kernel: _lambda_.5
$region0: #{_lambda_.5}
  #allocation0 [shape = 'u32[]', space=smem, size = 0x4, offset = 0x4, fixed_abs, tag = 'smem constant byte address 0x4 - core index']
  #allocation1 [shape = 'u32[144,128]{1,0:T(1,128)}', space=vmem, size = 0x12000, scoped, tag = 'internal scratch']
  %s0 = inlined_call_operand.vmem [shape: f32[128,128], index: 0, kind: input, shape index: {}]
  %s1 = inlined_call_operand.vmem [shape: bf16[128,384], index: 1, kind: input, shape index: {}]
  %s2 = inlined_call_operand.vmem [shape: f32[1,384], index: 2, kind: input, shape index: {}]
  %s3 = inlined_call_operand.vmem [shape: bf16[128,128], index: 3, kind: input, shape index: {}]
  %s4 = inlined_call_operand.vmem [shape: f32[1,128], index: 4, kind: input, shape index: {}]
  %s5 = inlined_call_operand.vmem [shape: bf16[128,128], index: 5, kind: input, shape index: {}]
  %s6 = inlined_call_operand.vmem [shape: f32[1,128], index: 6, kind: input, shape index: {}]
  %s7 = inlined_call_operand.vmem [shape: bf16[128,128], index: 7, kind: input, shape index: {}]
  %s8 = inlined_call_operand.vmem [shape: f32[1,128], index: 8, kind: input, shape index: {}]
  %s9 = inlined_call_operand.vmem [shape: f32[1,128], index: 9, kind: input, shape index: {}, may-alias: {9,11}]
  %s10 = inlined_call_operand.vmem [shape: f32[1,128], index: 10, kind: input, shape index: {}, may-alias: {10,12}]
  %s11 = inlined_call_operand.vmem [shape: f32[1,128], index: 11, kind: input, shape index: {}, may-alias: {9,11}]
  %s12 = inlined_call_operand.vmem [shape: f32[1,128], index: 12, kind: input, shape index: {}, may-alias: {10,12}]
  %s13 = inlined_call_operand.vmem [shape: bf16[64,64], index: 13, kind: input, shape index: {}]
  %s14 = inlined_call_operand.vmem [shape: f32[64,64], index: 14, kind: input, shape index: {}]
  %s15 = inlined_call_operand.vmem [shape: f32[128,128], index: 15, kind: output, shape index: {}]
  %s16 = sld [smem:[#allocation0]]
  $region93: #{_lambda_.5} parent=0
    _
  %s18 = ssub.s32 1, %s16
  %s19 = scalar_select 0, %s18, %s16
  loop: start=0, step=1, limit=4
  $region2: #{_lambda_.5} parent=0 // loop_pre_header
    _
  $region3: #{_lambda_.5} parent=0 // loop_header
    %s21 = sphi 0, %s25
    %p22 = scmp.ge.s32.totalorder %s21, 4
    %s31 = sphi 0, %s33
    %s34 = sphi 0, %s31
    %s35 = sphi 0, %s34
    %s51 = sphi 0, %s35
    %s55 = sphi 0, %s55
    %s57 = sphi 0, %s55
    %s58 = sphi 0, %s57
    %s72 = sphi 0, %s58
    %s76 = sphi 0, %s76
    %s78 = sphi 0, %s76
    %s79 = sphi 0, %s78
    %s93 = sphi 0, %s79
    %s97 = sphi 0, %s97
    %s99 = sphi 0, %s97
    %s100 = sphi 0, %s99
    %s114 = sphi 0, %s100
    %s118 = sphi 0, %s118
    %s120 = sphi 0, %s118
    %s121 = sphi 0, %s120
    %s135 = sphi 0, %s121
    %s139 = sphi 0, %s139
    %s141 = sphi 0, %s139
    %s142 = sphi 0, %s141
    %s156 = sphi 0, %s142
    %s160 = sphi 0, %s160
    %s162 = sphi 0, %s160
    %s163 = sphi 0, %s162
    %s177 = sphi 0, %s163
    %s181 = sphi 0, %s181
    %s183 = sphi 0, %s181
    %s184 = sphi 0, %s183
    %s198 = sphi 0, %s184
    %s202 = sphi 0, %s202
    %s204 = sphi 0, %s202
    %s205 = sphi 0, %s204
    %s219 = sphi 0, %s205
    %s223 = sphi 0, %s223
    %s225 = sphi 0, %s223
    %s226 = sphi 0, %s225
    %s240 = sphi 0, %s226
    %s244 = sphi 0, %s244
    %s246 = sphi 0, %s244
    %s247 = sphi 0, %s246
    %s261 = sphi 0, %s247
    %s265 = sphi 0, %s265
    %s267 = sphi 0, %s265
    %s268 = sphi 0, %s267
    %s282 = sphi 0, %s268
    %s286 = sphi 0, %s286
    %s288 = sphi 0, %s286
    %s289 = sphi 0, %s288
    %s303 = sphi 0, %s289
    %s307 = sphi 0, %s307
    %s309 = sphi 0, %s307
    %s310 = sphi 0, %s309
    %s324 = sphi 0, %s310
    %s328 = sphi 0, %s328
    %s330 = sphi 0, %s328
    %s331 = sphi 0, %s330
    %s345 = sphi 0, %s331
    %s351 = sphi 0, %s353
    %s354 = sphi 0, %s351
    %s355 = sphi 0, %s354
    %s371 = sphi 0, %s355
  $region4: #{_lambda_.5} parent=0 // loop_header_branch
    %24 = sbr.rel (%p22) target = $region8
  $region5: #{_lambda_.5} parent=0 // loop_body
    %s26 = ssub.s32 %s21, 1
    %s27 = ssub.s32 %s21, 2
    %s28 = sadd.s32 %s21, 1
    %s29 = ssub.s32 %s21, %s28
    %p30 = scmp.eq.s32.totalorder %s29, 0
    %s32 = sadd.s32 %s31, 1
    %s33 = scalar_select %p30, %s31, %s32
    %p36 = pneg %p30
    %p37 = scmp.eq.s32.totalorder %s21, 1
    %p38 = por %p36, %p37
    %p39 = scmp.ne.s32.totalorder %s31, %s34
    %p40 = scmp.eq.s32.totalorder %s21, 0
    %p41 = por %p39, %p40
    %p42 = scmp.ne.s32.totalorder %s31, %s34
    %p43 = scmp.eq.s32.totalorder %s26, 1
    %p44 = por %p42, %p43
    %p45 = scmp.ne.s32.totalorder %s34, %s35
    %p46 = scmp.eq.s32.totalorder %s26, 0
    %p47 = por %p45, %p46
    %p48 = scmp.ne.s32.totalorder %s34, %s35
    %p49 = scmp.eq.s32.totalorder %s27, 1
    %p50 = por %p48, %p49
    %p52 = scmp.ne.s32.totalorder %s35, %s51
    %p53 = scmp.eq.s32.totalorder %s27, 0
    %p54 = por %p52, %p53
    %s56 = sadd.s32 %s55, 1
    %p59 = scmp.eq.s32.totalorder %s21, 1
    %p60 = scmp.ne.s32.totalorder %s55, %s57
    %p61 = scmp.eq.s32.totalorder %s21, 0
    %p62 = por %p60, %p61
    %p63 = scmp.ne.s32.totalorder %s55, %s57
    %p64 = scmp.eq.s32.totalorder %s26, 1
    %p65 = por %p63, %p64
    %p66 = scmp.ne.s32.totalorder %s57, %s58
    %p67 = scmp.eq.s32.totalorder %s26, 0
    %p68 = por %p66, %p67
    %p69 = scmp.ne.s32.totalorder %s57, %s58
    %p70 = scmp.eq.s32.totalorder %s27, 1
    %p71 = por %p69, %p70
    %p73 = scmp.ne.s32.totalorder %s58, %s72
    %p74 = scmp.eq.s32.totalorder %s27, 0
    %p75 = por %p73, %p74
    %s77 = sadd.s32 %s76, 1
    %p80 = scmp.eq.s32.totalorder %s21, 1
    %p81 = scmp.ne.s32.totalorder %s76, %s78
    %p82 = scmp.eq.s32.totalorder %s21, 0
    %p83 = por %p81, %p82
    %p84 = scmp.ne.s32.totalorder %s76, %s78
    %p85 = scmp.eq.s32.totalorder %s26, 1
    %p86 = por %p84, %p85
    %p87 = scmp.ne.s32.totalorder %s78, %s79
    %p88 = scmp.eq.s32.totalorder %s26, 0
    %p89 = por %p87, %p88
    %p90 = scmp.ne.s32.totalorder %s78, %s79
    %p91 = scmp.eq.s32.totalorder %s27, 1
    %p92 = por %p90, %p91
    %p94 = scmp.ne.s32.totalorder %s79, %s93
    %p95 = scmp.eq.s32.totalorder %s27, 0
    %p96 = por %p94, %p95
    %s98 = sadd.s32 %s97, 1
    %p101 = scmp.eq.s32.totalorder %s21, 1
    %p102 = scmp.ne.s32.totalorder %s97, %s99
    %p103 = scmp.eq.s32.totalorder %s21, 0
    %p104 = por %p102, %p103
    %p105 = scmp.ne.s32.totalorder %s97, %s99
    %p106 = scmp.eq.s32.totalorder %s26, 1
    %p107 = por %p105, %p106
    %p108 = scmp.ne.s32.totalorder %s99, %s100
    %p109 = scmp.eq.s32.totalorder %s26, 0
    %p110 = por %p108, %p109
    %p111 = scmp.ne.s32.totalorder %s99, %s100
    %p112 = scmp.eq.s32.totalorder %s27, 1
    %p113 = por %p111, %p112
    %p115 = scmp.ne.s32.totalorder %s100, %s114
    %p116 = scmp.eq.s32.totalorder %s27, 0
    %p117 = por %p115, %p116
    %s119 = sadd.s32 %s118, 1
    %p122 = scmp.eq.s32.totalorder %s21, 1
    %p123 = scmp.ne.s32.totalorder %s118, %s120
    %p124 = scmp.eq.s32.totalorder %s21, 0
    %p125 = por %p123, %p124
    %p126 = scmp.ne.s32.totalorder %s118, %s120
    %p127 = scmp.eq.s32.totalorder %s26, 1
    %p128 = por %p126, %p127
    %p129 = scmp.ne.s32.totalorder %s120, %s121
    %p130 = scmp.eq.s32.totalorder %s26, 0
    %p131 = por %p129, %p130
    %p132 = scmp.ne.s32.totalorder %s120, %s121
    %p133 = scmp.eq.s32.totalorder %s27, 1
    %p134 = por %p132, %p133
    %p136 = scmp.ne.s32.totalorder %s121, %s135
    %p137 = scmp.eq.s32.totalorder %s27, 0
    %p138 = por %p136, %p137
    %s140 = sadd.s32 %s139, 1
    %p143 = scmp.eq.s32.totalorder %s21, 1
    %p144 = scmp.ne.s32.totalorder %s139, %s141
    %p145 = scmp.eq.s32.totalorder %s21, 0
    %p146 = por %p144, %p145
    %p147 = scmp.ne.s32.totalorder %s139, %s141
    %p148 = scmp.eq.s32.totalorder %s26, 1
    %p149 = por %p147, %p148
    %p150 = scmp.ne.s32.totalorder %s141, %s142
    %p151 = scmp.eq.s32.totalorder %s26, 0
    %p152 = por %p150, %p151
    %p153 = scmp.ne.s32.totalorder %s141, %s142
    %p154 = scmp.eq.s32.totalorder %s27, 1
    %p155 = por %p153, %p154
    %p157 = scmp.ne.s32.totalorder %s142, %s156
    %p158 = scmp.eq.s32.totalorder %s27, 0
    %p159 = por %p157, %p158
    %s161 = sadd.s32 %s160, 1
    %p164 = scmp.eq.s32.totalorder %s21, 1
    %p165 = scmp.ne.s32.totalorder %s160, %s162
    %p166 = scmp.eq.s32.totalorder %s21, 0
    %p167 = por %p165, %p166
    %p168 = scmp.ne.s32.totalorder %s160, %s162
    %p169 = scmp.eq.s32.totalorder %s26, 1
    %p170 = por %p168, %p169
    %p171 = scmp.ne.s32.totalorder %s162, %s163
    %p172 = scmp.eq.s32.totalorder %s26, 0
    %p173 = por %p171, %p172
    %p174 = scmp.ne.s32.totalorder %s162, %s163
    %p175 = scmp.eq.s32.totalorder %s27, 1
    %p176 = por %p174, %p175
    %p178 = scmp.ne.s32.totalorder %s163, %s177
    %p179 = scmp.eq.s32.totalorder %s27, 0
    %p180 = por %p178, %p179
    %s182 = sadd.s32 %s181, 1
    %p185 = scmp.eq.s32.totalorder %s21, 1
    %p186 = scmp.ne.s32.totalorder %s181, %s183
    %p187 = scmp.eq.s32.totalorder %s21, 0
    %p188 = por %p186, %p187
    %p189 = scmp.ne.s32.totalorder %s181, %s183
    %p190 = scmp.eq.s32.totalorder %s26, 1
    %p191 = por %p189, %p190
    %p192 = scmp.ne.s32.totalorder %s183, %s184
    %p193 = scmp.eq.s32.totalorder %s26, 0
    %p194 = por %p192, %p193
    %p195 = scmp.ne.s32.totalorder %s183, %s184
    %p196 = scmp.eq.s32.totalorder %s27, 1
    %p197 = por %p195, %p196
    %p199 = scmp.ne.s32.totalorder %s184, %s198
    %p200 = scmp.eq.s32.totalorder %s27, 0
    %p201 = por %p199, %p200
    %s203 = sadd.s32 %s202, 1
    %p206 = scmp.eq.s32.totalorder %s21, 1
    %p207 = scmp.ne.s32.totalorder %s202, %s204
    %p208 = scmp.eq.s32.totalorder %s21, 0
    %p209 = por %p207, %p208
    %p210 = scmp.ne.s32.totalorder %s202, %s204
    %p211 = scmp.eq.s32.totalorder %s26, 1
    %p212 = por %p210, %p211
    %p213 = scmp.ne.s32.totalorder %s204, %s205
    %p214 = scmp.eq.s32.totalorder %s26, 0
    %p215 = por %p213, %p214
    %p216 = scmp.ne.s32.totalorder %s204, %s205
    %p217 = scmp.eq.s32.totalorder %s27, 1
    %p218 = por %p216, %p217
    %p220 = scmp.ne.s32.totalorder %s205, %s219
    %p221 = scmp.eq.s32.totalorder %s27, 0
    %p222 = por %p220, %p221
    %s224 = sadd.s32 %s223, 1
    %p227 = scmp.eq.s32.totalorder %s21, 1
    %p228 = scmp.ne.s32.totalorder %s223, %s225
    %p229 = scmp.eq.s32.totalorder %s21, 0
    %p230 = por %p228, %p229
    %p231 = scmp.ne.s32.totalorder %s223, %s225
    %p232 = scmp.eq.s32.totalorder %s26, 1
    %p233 = por %p231, %p232
    %p234 = scmp.ne.s32.totalorder %s225, %s226
    %p235 = scmp.eq.s32.totalorder %s26, 0
    %p236 = por %p234, %p235
    %p237 = scmp.ne.s32.totalorder %s225, %s226
    %p238 = scmp.eq.s32.totalorder %s27, 1
    %p239 = por %p237, %p238
    %p241 = scmp.ne.s32.totalorder %s226, %s240
    %p242 = scmp.eq.s32.totalorder %s27, 0
    %p243 = por %p241, %p242
    %s245 = sadd.s32 %s244, 1
    %p248 = scmp.eq.s32.totalorder %s21, 1
    %p249 = scmp.ne.s32.totalorder %s244, %s246
    %p250 = scmp.eq.s32.totalorder %s21, 0
    %p251 = por %p249, %p250
    %p252 = scmp.ne.s32.totalorder %s244, %s246
    %p253 = scmp.eq.s32.totalorder %s26, 1
    %p254 = por %p252, %p253
    %p255 = scmp.ne.s32.totalorder %s246, %s247
    %p256 = scmp.eq.s32.totalorder %s26, 0
    %p257 = por %p255, %p256
    %p258 = scmp.ne.s32.totalorder %s246, %s247
    %p259 = scmp.eq.s32.totalorder %s27, 1
    %p260 = por %p258, %p259
    %p262 = scmp.ne.s32.totalorder %s247, %s261
    %p263 = scmp.eq.s32.totalorder %s27, 0
    %p264 = por %p262, %p263
    %s266 = sadd.s32 %s265, 1
    %p269 = scmp.eq.s32.totalorder %s21, 1
    %p270 = scmp.ne.s32.totalorder %s265, %s267
    %p271 = scmp.eq.s32.totalorder %s21, 0
    %p272 = por %p270, %p271
    %p273 = scmp.ne.s32.totalorder %s265, %s267
    %p274 = scmp.eq.s32.totalorder %s26, 1
    %p275 = por %p273, %p274
    %p276 = scmp.ne.s32.totalorder %s267, %s268
    %p277 = scmp.eq.s32.totalorder %s26, 0
    %p278 = por %p276, %p277
    %p279 = scmp.ne.s32.totalorder %s267, %s268
    %p280 = scmp.eq.s32.totalorder %s27, 1
    %p281 = por %p279, %p280
    %p283 = scmp.ne.s32.totalorder %s268, %s282
    %p284 = scmp.eq.s32.totalorder %s27, 0
    %p285 = por %p283, %p284
    %s287 = sadd.s32 %s286, 1
    %p290 = scmp.eq.s32.totalorder %s21, 1
    %p291 = scmp.ne.s32.totalorder %s286, %s288
    %p292 = scmp.eq.s32.totalorder %s21, 0
    %p293 = por %p291, %p292
    %p294 = scmp.ne.s32.totalorder %s286, %s288
    %p295 = scmp.eq.s32.totalorder %s26, 1
    %p296 = por %p294, %p295
    %p297 = scmp.ne.s32.totalorder %s288, %s289
    %p298 = scmp.eq.s32.totalorder %s26, 0
    %p299 = por %p297, %p298
    %p300 = scmp.ne.s32.totalorder %s288, %s289
    %p301 = scmp.eq.s32.totalorder %s27, 1
    %p302 = por %p300, %p301
    %p304 = scmp.ne.s32.totalorder %s289, %s303
    %p305 = scmp.eq.s32.totalorder %s27, 0
    %p306 = por %p304, %p305
    %s308 = sadd.s32 %s307, 1
    %p311 = scmp.eq.s32.totalorder %s21, 1
    %p312 = scmp.ne.s32.totalorder %s307, %s309
    %p313 = scmp.eq.s32.totalorder %s21, 0
    %p314 = por %p312, %p313
    %p315 = scmp.ne.s32.totalorder %s307, %s309
    %p316 = scmp.eq.s32.totalorder %s26, 1
    %p317 = por %p315, %p316
    %p318 = scmp.ne.s32.totalorder %s309, %s310
    %p319 = scmp.eq.s32.totalorder %s26, 0
    %p320 = por %p318, %p319
    %p321 = scmp.ne.s32.totalorder %s309, %s310
    %p322 = scmp.eq.s32.totalorder %s27, 1
    %p323 = por %p321, %p322
    %p325 = scmp.ne.s32.totalorder %s310, %s324
    %p326 = scmp.eq.s32.totalorder %s27, 0
    %p327 = por %p325, %p326
    %s329 = sadd.s32 %s328, 1
    %p332 = scmp.eq.s32.totalorder %s21, 1
    %p333 = scmp.ne.s32.totalorder %s328, %s330
    %p334 = scmp.eq.s32.totalorder %s21, 0
    %p335 = por %p333, %p334
    %p336 = scmp.ne.s32.totalorder %s328, %s330
    %p337 = scmp.eq.s32.totalorder %s26, 1
    %p338 = por %p336, %p337
    %p339 = scmp.ne.s32.totalorder %s330, %s331
    %p340 = scmp.eq.s32.totalorder %s26, 0
    %p341 = por %p339, %p340
    %p342 = scmp.ne.s32.totalorder %s330, %s331
    %p343 = scmp.eq.s32.totalorder %s27, 1
    %p344 = por %p342, %p343
    %p346 = scmp.ne.s32.totalorder %s331, %s345
    %p347 = scmp.eq.s32.totalorder %s27, 0
    %p348 = por %p346, %p347
    %s349 = ssub.s32 %s21, %s28
    %p350 = scmp.eq.s32.totalorder %s349, 0
    %s352 = sadd.s32 %s351, 1
    %s353 = scalar_select %p350, %s351, %s352
    %p356 = pneg %p350
    %p357 = scmp.eq.s32.totalorder %s21, 1
    %p358 = por %p356, %p357
    %p359 = scmp.ne.s32.totalorder %s351, %s354
    %p360 = scmp.eq.s32.totalorder %s21, 0
    %p361 = por %p359, %p360
    %p362 = scmp.ne.s32.totalorder %s351, %s354
    %p363 = scmp.eq.s32.totalorder %s26, 1
    %p364 = por %p362, %p363
    %p365 = scmp.ne.s32.totalorder %s354, %s355
    %p366 = scmp.eq.s32.totalorder %s26, 0
    %p367 = por %p365, %p366
    %p368 = scmp.ne.s32.totalorder %s354, %s355
    %p369 = scmp.eq.s32.totalorder %s27, 1
    %p370 = por %p368, %p369
    %p372 = scmp.ne.s32.totalorder %s355, %s371
    %p373 = scmp.eq.s32.totalorder %s27, 0
    %p374 = por %p372, %p373
    %p375 = scmp.le.s32.totalorder 1, %s21
    %p376 = scmp.lt.s32.totalorder %s21, 3
    %p377 = pnand %p375, %p376
    %p378 = pneg %p377
    // Predicated region
    $region9: #{_lambda_.5} parent=5 // pred_check
      _
    $region10: #{_lambda_.5} parent=5 // pred_check_branch
      %380 = sbr.rel (%p377) target = $region12
    $region11: #{_lambda_.5} parent=5 // pred_region
      %s381 = ssub.s32 %s21, 1
      // Predicated region
      $region13: #{_lambda_.5} parent=11 // pred_check
        %p382 = pneg %p68
      $region14: #{_lambda_.5} parent=11 // pred_check_branch
        %384 = sbr.rel (%p382) target = $region16
      $region15: #{_lambda_.5} parent=11 // pred_region
        _
      $region16: #{_lambda_.5} parent=11 // pred_fallthru
        _
      // Predicated region
      $region17: #{_lambda_.5} parent=11 // pred_check
        %p385 = pneg %p89
      $region18: #{_lambda_.5} parent=11 // pred_check_branch
        %387 = sbr.rel (%p385) target = $region20
      $region19: #{_lambda_.5} parent=11 // pred_region
        _
      $region20: #{_lambda_.5} parent=11 // pred_fallthru
        _
      // Predicated region
      $region21: #{_lambda_.5} parent=11 // pred_check
        %p388 = pneg %p110
      $region22: #{_lambda_.5} parent=11 // pred_check_branch
        %390 = sbr.rel (%p388) target = $region24
      $region23: #{_lambda_.5} parent=11 // pred_region
        _
      $region24: #{_lambda_.5} parent=11 // pred_fallthru
        _
      // Predicated region
      $region25: #{_lambda_.5} parent=11 // pred_check
        %p391 = pneg %p131
      $region26: #{_lambda_.5} parent=11 // pred_check_branch
        %393 = sbr.rel (%p391) target = $region28
      $region27: #{_lambda_.5} parent=11 // pred_region
        _
      $region28: #{_lambda_.5} parent=11 // pred_fallthru
        _
      // Predicated region
      $region29: #{_lambda_.5} parent=11 // pred_check
        %p394 = pneg %p152
      $region30: #{_lambda_.5} parent=11 // pred_check_branch
        %396 = sbr.rel (%p394) target = $region32
      $region31: #{_lambda_.5} parent=11 // pred_region
        _
      $region32: #{_lambda_.5} parent=11 // pred_fallthru
        _
      // Predicated region
      $region33: #{_lambda_.5} parent=11 // pred_check
        %p397 = pneg %p173
      $region34: #{_lambda_.5} parent=11 // pred_check_branch
        %399 = sbr.rel (%p397) target = $region36
      $region35: #{_lambda_.5} parent=11 // pred_region
        _
      $region36: #{_lambda_.5} parent=11 // pred_fallthru
        _
      // Predicated region
      $region37: #{_lambda_.5} parent=11 // pred_check
        %p400 = pneg %p194
      $region38: #{_lambda_.5} parent=11 // pred_check_branch
        %402 = sbr.rel (%p400) target = $region40
      $region39: #{_lambda_.5} parent=11 // pred_region
        _
      $region40: #{_lambda_.5} parent=11 // pred_fallthru
        _
      // Predicated region
      $region41: #{_lambda_.5} parent=11 // pred_check
        %p403 = pneg %p215
      $region42: #{_lambda_.5} parent=11 // pred_check_branch
        %405 = sbr.rel (%p403) target = $region44
      $region43: #{_lambda_.5} parent=11 // pred_region
        _
      $region44: #{_lambda_.5} parent=11 // pred_fallthru
        _
      // Predicated region
      $region45: #{_lambda_.5} parent=11 // pred_check
        %p406 = pneg %p236
      $region46: #{_lambda_.5} parent=11 // pred_check_branch
        %408 = sbr.rel (%p406) target = $region48
      $region47: #{_lambda_.5} parent=11 // pred_region
        _
      $region48: #{_lambda_.5} parent=11 // pred_fallthru
        _
      // Predicated region
      $region49: #{_lambda_.5} parent=11 // pred_check
        %p409 = pneg %p257
      $region50: #{_lambda_.5} parent=11 // pred_check_branch
        %411 = sbr.rel (%p409) target = $region52
      $region51: #{_lambda_.5} parent=11 // pred_region
        _
      $region52: #{_lambda_.5} parent=11 // pred_fallthru
        _
      // Predicated region
      $region53: #{_lambda_.5} parent=11 // pred_check
        %p412 = pneg %p278
      $region54: #{_lambda_.5} parent=11 // pred_check_branch
        %414 = sbr.rel (%p412) target = $region56
      $region55: #{_lambda_.5} parent=11 // pred_region
        _
      $region56: #{_lambda_.5} parent=11 // pred_fallthru
        _
      // Predicated region
      $region57: #{_lambda_.5} parent=11 // pred_check
        %p415 = pneg %p299
      $region58: #{_lambda_.5} parent=11 // pred_check_branch
        %417 = sbr.rel (%p415) target = $region60
      $region59: #{_lambda_.5} parent=11 // pred_region
        _
      $region60: #{_lambda_.5} parent=11 // pred_fallthru
        _
      // Predicated region
      $region61: #{_lambda_.5} parent=11 // pred_check
        %p418 = pneg %p320
      $region62: #{_lambda_.5} parent=11 // pred_check_branch
        %420 = sbr.rel (%p418) target = $region64
      $region63: #{_lambda_.5} parent=11 // pred_region
        _
      $region64: #{_lambda_.5} parent=11 // pred_fallthru
        _
      // Predicated region
      $region65: #{_lambda_.5} parent=11 // pred_check
        %p421 = pneg %p341
      $region66: #{_lambda_.5} parent=11 // pred_check_branch
        %423 = sbr.rel (%p421) target = $region68
      $region67: #{_lambda_.5} parent=11 // pred_region
        _
      $region68: #{_lambda_.5} parent=11 // pred_fallthru
        _
    $region12: #{_lambda_.5} parent=5 // pred_fallthru
      _
    %p424 = scmp.lt.s32.totalorder %s21, 2
    // Predicated region
    $region69: #{_lambda_.5} parent=5 // pred_check
      %p425 = pneg %p424
    $region70: #{_lambda_.5} parent=5 // pred_check_branch
      %427 = sbr.rel (%p425) target = $region72
    $region71: #{_lambda_.5} parent=5 // pred_region
      // Predicated region
      $region73: #{_lambda_.5} parent=71 // pred_check
        %p428 = pneg %p41
      $region74: #{_lambda_.5} parent=71 // pred_check_branch
        %430 = sbr.rel (%p428) target = $region76
      $region75: #{_lambda_.5} parent=71 // pred_region
        %s431 = smul.u32 8, %s21
        %p432 = scmp.lt.s32.totalorder %s431, 15
        %s433 = scalar_select %p432, %s431, 15
        %s434 = smul.addr %s433, 8
        %s435 = scalar_lea.vmem %s0, %s434
        %s436 = smul.u32 8, %s21
      $region76: #{_lambda_.5} parent=71 // pred_fallthru
        _
    $region72: #{_lambda_.5} parent=5 // pred_fallthru
      _
    %p437 = scmp.le.s32.totalorder 1, %s21
    %p438 = scmp.lt.s32.totalorder %s21, 3
    %p439 = pnand %p437, %p438
    %p440 = pneg %p439
    // Predicated region
    $region77: #{_lambda_.5} parent=5 // pred_check
      _
    $region78: #{_lambda_.5} parent=5 // pred_check_branch
      %442 = sbr.rel (%p439) target = $region80
    $region79: #{_lambda_.5} parent=5 // pred_region
      %s443 = ssub.s32 %s21, 1
      %s444 = smul.u32 8, %s26
      %p445 = scmp.lt.s32.totalorder %s444, 15
      %s446 = scalar_select %p445, %s444, 15
      %s447 = smul.addr %s446, 8
      %s448 = scalar_lea.vmem %s0, %s447
      %p449 = pneg %p47
      %p450 = pneg %p44
      %p451 = pneg %p68
      %p452 = pneg %p65
      %p453 = pneg %p89
      %p454 = pneg %p86
      %p455 = pneg %p110
      %p456 = pneg %p107
      %p457 = pneg %p131
      %p458 = pneg %p128
      %p459 = pneg %p152
      %p460 = pneg %p149
      %p461 = pneg %p173
      %p462 = pneg %p170
      %p463 = pneg %p194
      %p464 = pneg %p191
      %p465 = pneg %p215
      %p466 = pneg %p212
      %p467 = pneg %p236
      %p468 = pneg %p233
      %p469 = pneg %p257
      %p470 = pneg %p254
      %p471 = pneg %p278
      %p472 = pneg %p275
      %p473 = pneg %p299
      %p474 = pneg %p296
      %p475 = pneg %p320
      %p476 = pneg %p317
      %p477 = pneg %p341
      %p478 = pneg %p338
      %p479 = pneg %p367
      %p480 = pneg %p364
      %s481 = smul.u32 8, %s26
      %p482 = scmp.lt.s32.totalorder %s481, 15
      %s483 = scalar_select %p482, %s481, 15
      %s484 = smul.addr %s483, 8
      %s485 = scalar_lea.vmem %s15, %s484
      %s486 = smul.u32 8, %s26
      %p487 = scmp.lt.s32.totalorder %s486, 15
      %s488 = scalar_select %p487, %s486, 15
      %s489 = smul.addr %s488, 8
      %s490 = scalar_lea.vmem %s0, %s489
      %s491 = smul.u32 8, %s26
      %s492 = smul.u32 8, %s26
      %p493 = scmp.lt.s32.totalorder %s492, 15
      %s494 = scalar_select %p493, %s492, 15
      %s495 = smul.addr %s494, 8
      %s496 = scalar_lea.vmem %s15, %s495
      %s497 = smul.u32 8, %s26
      %v499 = vld [vmem:[%s490] sm:$0xff]
      %v500 = vld [vmem:[%s490 + $0x8] sm:$0xff]
      %v501 = vld [vmem:[%s490 + $0x10] sm:$0xff]
      %v502 = vld [vmem:[%s490 + $0x18] sm:$0xff]
      %v503 = vld [vmem:[%s490 + $0x20] sm:$0xff]
      %v504 = vld [vmem:[%s490 + $0x28] sm:$0xff]
      %v505 = vld [vmem:[%s490 + $0x30] sm:$0xff]
      %v506 = vld [vmem:[%s490 + $0x38] sm:$0xff]
      %v507 = vpack.c.bf16 %v500, %v499
      %v508 = vpack.c.bf16 %v502, %v501
      %v509 = vpack.c.bf16 %v504, %v503
      %v510 = vpack.c.bf16 %v506, %v505
      %v511 = vld [vmem:[%s1] sm:$0xff]
      %v512 = vld [vmem:[%s1 + $0x8] sm:$0xf]
      %v513 = vld [vmem:[%s1 + $0xc] sm:$0xff]
      %v514 = vld [vmem:[%s1 + $0x14] sm:$0xf]
      %v515 = vld [vmem:[%s1 + $0x18] sm:$0xff]
      %v516 = vld [vmem:[%s1 + $0x20] sm:$0xf]
      %v517 = vld [vmem:[%s1 + $0x24] sm:$0xff]
      %v518 = vld [vmem:[%s1 + $0x2c] sm:$0xf]
      %v519 = vld [vmem:[%s1 + $0x30] sm:$0xff]
      %v520 = vld [vmem:[%s1 + $0x38] sm:$0xf]
      %v521 = vld [vmem:[%s1 + $0x3c] sm:$0xff]
      %v522 = vld [vmem:[%s1 + $0x44] sm:$0xf]
      %v523 = vld [vmem:[%s1 + $0x48] sm:$0xff]
      %v524 = vld [vmem:[%s1 + $0x50] sm:$0xf]
      %v525 = vld [vmem:[%s1 + $0x54] sm:$0xff]
      %v526 = vld [vmem:[%s1 + $0x5c] sm:$0xf]
      %v527 = vld [vmem:[%s1 + $0x60] sm:$0xff]
      %v528 = vld [vmem:[%s1 + $0x68] sm:$0xf]
      %v529 = vld [vmem:[%s1 + $0x6c] sm:$0xff]
      %v530 = vld [vmem:[%s1 + $0x74] sm:$0xf]
      %v531 = vld [vmem:[%s1 + $0x78] sm:$0xff]
      %v532 = vld [vmem:[%s1 + $0x80] sm:$0xf]
      %v533 = vld [vmem:[%s1 + $0x84] sm:$0xff]
      %v534 = vld [vmem:[%s1 + $0x8c] sm:$0xf]
      %v535 = vld [vmem:[%s1 + $0x90] sm:$0xff]
      %v536 = vld [vmem:[%s1 + $0x98] sm:$0xf]
      %v537 = vld [vmem:[%s1 + $0x9c] sm:$0xff]
      %v538 = vld [vmem:[%s1 + $0xa4] sm:$0xf]
      %v539 = vld [vmem:[%s1 + $0xa8] sm:$0xff]
      %v540 = vld [vmem:[%s1 + $0xb0] sm:$0xf]
      %v541 = vld [vmem:[%s1 + $0xb4] sm:$0xff]
      %v542 = vld [vmem:[%s1 + $0xbc] sm:$0xf]
      %v543 = vld [vmem:[%s2] sm:$0x7]
      %v545 = vlaneseq
      %v546 = vshrl.u32 %v545, 7
      %v547 = vsub.s32 0, %v546
      %v548 = vrot.slane %v543, %v547
      %v549 = vlaneseq
      %v550 = vshrl.u32 %v549, 7
      %v551 = vsub.s32 1, %v550
      %v552 = vrot.slane %v543, %v551
      %v553 = vlaneseq
      %v554 = vshrl.u32 %v553, 7
      %v555 = vsub.s32 2, %v554
      %v556 = vrot.slane %v543, %v555
      %v592 = vunpack.c.l.b16 %v511
      %v593 = vunpack.c.h.b16 %v511
      %v594 = vunpack.c.l.b16 %v512
      %v595 = vunpack.c.l.b16 %v513
      %v596 = vunpack.c.h.b16 %v513
      %v597 = vunpack.c.l.b16 %v514
      %v598 = vunpack.c.l.b16 %v515
      %v599 = vunpack.c.h.b16 %v515
      %v600 = vunpack.c.l.b16 %v516
      %v601 = vunpack.c.l.b16 %v517
      %v602 = vunpack.c.h.b16 %v517
      %v603 = vunpack.c.l.b16 %v518
      %v604 = vunpack.c.l.b16 %v519
      %v605 = vunpack.c.h.b16 %v519
      %v606 = vunpack.c.l.b16 %v520
      %v607 = vunpack.c.l.b16 %v521
      %v608 = vunpack.c.h.b16 %v521
      %v609 = vunpack.c.l.b16 %v522
      %v610 = vunpack.c.l.b16 %v523
      %v611 = vunpack.c.h.b16 %v523
      %v612 = vunpack.c.l.b16 %v524
      %v613 = vunpack.c.l.b16 %v525
      %v614 = vunpack.c.h.b16 %v525
      %v615 = vunpack.c.l.b16 %v526
      %v616 = vunpack.c.l.b16 %v527
      %v617 = vunpack.c.h.b16 %v527
      %v618 = vunpack.c.l.b16 %v528
      %v619 = vunpack.c.l.b16 %v529
      %v620 = vunpack.c.h.b16 %v529
      %v621 = vunpack.c.l.b16 %v530
      %v622 = vunpack.c.l.b16 %v531
      %v623 = vunpack.c.h.b16 %v531
      %v624 = vunpack.c.l.b16 %v532
      %v625 = vunpack.c.l.b16 %v533
      %v626 = vunpack.c.h.b16 %v533
      %v627 = vunpack.c.l.b16 %v534
      %v628 = vunpack.c.l.b16 %v535
      %v629 = vunpack.c.h.b16 %v535
      %v630 = vunpack.c.l.b16 %v536
      %v631 = vunpack.c.l.b16 %v537
      %v632 = vunpack.c.h.b16 %v537
      %v633 = vunpack.c.l.b16 %v538
      %v634 = vunpack.c.l.b16 %v539
      %v635 = vunpack.c.h.b16 %v539
      %v636 = vunpack.c.l.b16 %v540
      %v637 = vunpack.c.l.b16 %v541
      %v638 = vunpack.c.h.b16 %v541
      %v639 = vunpack.c.l.b16 %v542
      %v640 = vpack.c.b16 %v595, %v592
      %v641 = vpack.c.b16 %v596, %v593
      %v642 = vpack.c.b16 %v597, %v594
      %v643 = vpack.c.b16 %v601, %v598
      %v644 = vpack.c.b16 %v602, %v599
      %v645 = vpack.c.b16 %v603, %v600
      %v646 = vpack.c.b16 %v607, %v604
      %v647 = vpack.c.b16 %v608, %v605
      %v648 = vpack.c.b16 %v609, %v606
      %v649 = vpack.c.b16 %v613, %v610
      %v650 = vpack.c.b16 %v614, %v611
      %v651 = vpack.c.b16 %v615, %v612
      %v652 = vpack.c.b16 %v619, %v616
      %v653 = vpack.c.b16 %v620, %v617
      %v654 = vpack.c.b16 %v621, %v618
      %v655 = vpack.c.b16 %v625, %v622
      %v656 = vpack.c.b16 %v626, %v623
      %v657 = vpack.c.b16 %v627, %v624
      %v658 = vpack.c.b16 %v631, %v628
      %v659 = vpack.c.b16 %v632, %v629
      %v660 = vpack.c.b16 %v633, %v630
      %v661 = vpack.c.b16 %v637, %v634
      %v662 = vpack.c.b16 %v638, %v635
      %v663 = vpack.c.b16 %v639, %v636
      %688 = vmatprep.subr.bf16.mxu0 %v641
      %689 = vmatpush1.bf16.msra.mxu0 %v640
      %690 = vmatprep.subr.bf16.mxu0 %v644
      %691 = vmatpush1.bf16.msra.mxu0 %v643
      %692 = vmatprep.subr.bf16.mxu0 %v647
      %693 = vmatpush1.bf16.msra.mxu0 %v646
      %694 = vmatprep.subr.bf16.mxu0 %v650
      %695 = vmatpush1.bf16.msra.mxu0 %v649
      %696 = vmatprep.subr.bf16.mxu0 %v653
      %697 = vmatpush1.bf16.msra.mxu0 %v652
      %698 = vmatprep.subr.bf16.mxu0 %v656
      %699 = vmatpush1.bf16.msra.mxu0 %v655
      %700 = vmatprep.subr.bf16.mxu0 %v659
      %701 = vmatpush1.bf16.msra.mxu0 %v658
      %702 = vmatprep.subr.bf16.mxu0 %v662
      %703 = vmatpush1.bf16.msra.mxu0 %v661
      %704 = vmatprep.subr.bf16.mxu0 0
      %705 = vmatpush1.bf16.msra.mxu0 0
      %706 = vmatprep.subr.bf16.mxu0 0
      %707 = vmatpush1.bf16.msra.mxu0 0
      %708 = vmatprep.subr.bf16.mxu0 0
      %709 = vmatpush1.bf16.msra.mxu0 0
      %710 = vmatprep.subr.bf16.mxu0 0
      %711 = vmatpush1.bf16.msra.mxu0 0
      %712 = vmatprep.subr.bf16.mxu0 0
      %713 = vmatpush1.bf16.msra.mxu0 0
      %714 = vmatprep.subr.bf16.mxu0 0
      %715 = vmatpush1.bf16.msra.mxu0 0
      %716 = vmatprep.subr.bf16.mxu0 0
      %717 = vmatpush1.bf16.msra.mxu0 0
      %718 = vmatprep.subr.bf16.mxu0 0
      %719 = vmatpush1.bf16.msra.mxu0 0
      %720 = vmatprep.mubr.bf16.mxu0 0
      %721 = vmatmul.mubr.bf16.gmra.mrb[0].mxu0 %v507
      %v722 = vpop.f32.mrb[0].mxu0
      %v723 = vadd.f32 %v548, %v722
      %v724 = vpop.f32.mrb[0].mxu0
      %v725 = vadd.f32 %v552, %v724
      %v726 = vpop.f32.mrb[0].mxu0
      %v727 = vadd.f32 %v548, %v726
      %v728 = vpop.f32.mrb[0].mxu0
      %v729 = vadd.f32 %v552, %v728
      %730 = vmatprep.mubr.bf16.mxu0 0
      %731 = vmatmul.mubr.bf16.gmra.mrb[0].mxu0 %v508
      %v732 = vpop.f32.mrb[0].mxu0
      %v733 = vadd.f32 %v548, %v732
      %v734 = vpop.f32.mrb[0].mxu0
      %v735 = vadd.f32 %v552, %v734
      %v736 = vpop.f32.mrb[0].mxu0
      %v737 = vadd.f32 %v548, %v736
      %v738 = vpop.f32.mrb[0].mxu0
      %v739 = vadd.f32 %v552, %v738
      %740 = vmatprep.mubr.bf16.mxu0 0
      %741 = vmatmul.mubr.bf16.gmra.mrb[0].mxu0 %v509
      %v742 = vpop.f32.mrb[0].mxu0
      %v743 = vadd.f32 %v548, %v742
      %v744 = vpop.f32.mrb[0].mxu0
      %v745 = vadd.f32 %v552, %v744
      %v746 = vpop.f32.mrb[0].mxu0
      %v747 = vadd.f32 %v548, %v746
      %v748 = vpop.f32.mrb[0].mxu0
      %v749 = vadd.f32 %v552, %v748
      %750 = vmatprep.mubr.bf16.mxu0 0
      %751 = vmatmul.mubr.bf16.gmra.mrb[0].mxu0 %v510
      %v752 = vpop.f32.mrb[0].mxu0
      %v753 = vadd.f32 %v548, %v752
      %v754 = vpop.f32.mrb[0].mxu0
      %v755 = vadd.f32 %v552, %v754
      %v756 = vpop.f32.mrb[0].mxu0
      %v757 = vadd.f32 %v548, %v756
      %v758 = vpop.f32.mrb[0].mxu0
      %v759 = vadd.f32 %v552, %v758
      %760 = vdwg.mxu0
      %761 = vmatprep.subr.bf16.mxu0 0
      %762 = vmatpush1.bf16.msra.mxu0 %v642
      %763 = vmatprep.subr.bf16.mxu0 0
      %764 = vmatpush1.bf16.msra.mxu0 %v645
      %765 = vmatprep.subr.bf16.mxu0 0
      %766 = vmatpush1.bf16.msra.mxu0 %v648
      %767 = vmatprep.subr.bf16.mxu0 0
      %768 = vmatpush1.bf16.msra.mxu0 %v651
      %769 = vmatprep.subr.bf16.mxu0 0
      %770 = vmatpush1.bf16.msra.mxu0 %v654
      %771 = vmatprep.subr.bf16.mxu0 0
      %772 = vmatpush1.bf16.msra.mxu0 %v657
      %773 = vmatprep.subr.bf16.mxu0 0
      %774 = vmatpush1.bf16.msra.mxu0 %v660
      %775 = vmatprep.subr.bf16.mxu0 0
      %776 = vmatpush1.bf16.msra.mxu0 %v663
      %777 = vmatprep.subr.bf16.mxu0 0
      %778 = vmatpush1.bf16.msra.mxu0 0
      %779 = vmatprep.subr.bf16.mxu0 0
      %780 = vmatpush1.bf16.msra.mxu0 0
      %781 = vmatprep.subr.bf16.mxu0 0
      %782 = vmatpush1.bf16.msra.mxu0 0
      %783 = vmatprep.subr.bf16.mxu0 0
      %784 = vmatpush1.bf16.msra.mxu0 0
      %785 = vmatprep.subr.bf16.mxu0 0
      %786 = vmatpush1.bf16.msra.mxu0 0
      %787 = vmatprep.subr.bf16.mxu0 0
      %788 = vmatpush1.bf16.msra.mxu0 0
      %789 = vmatprep.subr.bf16.mxu0 0
      %790 = vmatpush1.bf16.msra.mxu0 0
      %791 = vmatprep.subr.bf16.mxu0 0
      %792 = vmatpush1.bf16.msra.mxu0 0
      %793 = vmatprep.mubr.bf16.mxu0 0
      %794 = vmatmul.mubr.bf16.gmra.mrb[0].mxu0 %v507
      %v795 = vpop.f32.mrb[0].mxu0
      %v796 = vadd.f32 %v556, %v795
      %v797 = vpop.f32.mrb[0].mxu0
      %v798 = vpop.f32.mrb[0].mxu0
      %v799 = vadd.f32 %v556, %v798
      %v800 = vpop.f32.mrb[0].mxu0
      %801 = vmatprep.mubr.bf16.mxu0 0
      %802 = vmatmul.mubr.bf16.gmra.mrb[0].mxu0 %v508
      %v803 = vpop.f32.mrb[0].mxu0
      %v804 = vadd.f32 %v556, %v803
      %v805 = vpop.f32.mrb[0].mxu0
      %v806 = vpop.f32.mrb[0].mxu0
      %v807 = vadd.f32 %v556, %v806
      %v808 = vpop.f32.mrb[0].mxu0
      %809 = vmatprep.mubr.bf16.mxu0 0
      %810 = vmatmul.mubr.bf16.gmra.mrb[0].mxu0 %v509
      %v811 = vpop.f32.mrb[0].mxu0
      %v812 = vadd.f32 %v556, %v811
      %v813 = vpop.f32.mrb[0].mxu0
      %v814 = vpop.f32.mrb[0].mxu0
      %v815 = vadd.f32 %v556, %v814
      %v816 = vpop.f32.mrb[0].mxu0
      %817 = vmatprep.mubr.bf16.mxu0 0
      %818 = vmatmul.mubr.bf16.gmra.mrb[0].mxu0 %v510
      %v819 = vpop.f32.mrb[0].mxu0
      %v820 = vadd.f32 %v556, %v819
      %v821 = vpop.f32.mrb[0].mxu0
      %v822 = vpop.f32.mrb[0].mxu0
      %v823 = vadd.f32 %v556, %v822
      %v824 = vpop.f32.mrb[0].mxu0
      %825 = vdwg.mxu0
      %v826 = vld [vmem:[%s13] sm:$0xf]
      %v827 = vld [vmem:[%s13 + $0x4] sm:$0xf]
      %v828 = vld [vmem:[%s13 + $0x8] sm:$0xf]
      %v829 = vld [vmem:[%s13 + $0xc] sm:$0xf]
      %v830 = vld [vmem:[%s13 + $0x10] sm:$0xf]
      %v831 = vld [vmem:[%s13 + $0x14] sm:$0xf]
      %v832 = vld [vmem:[%s13 + $0x18] sm:$0xf]
      %v833 = vld [vmem:[%s13 + $0x1c] sm:$0xf]
      %v834 = vld [vmem:[%s14] sm:$0xff]
      %v835 = vld [vmem:[%s14 + $0x8] sm:$0xff]
      %v836 = vld [vmem:[%s14 + $0x10] sm:$0xff]
      %v837 = vld [vmem:[%s14 + $0x18] sm:$0xff]
      %v838 = vld [vmem:[%s14 + $0x20] sm:$0xff]
      %v839 = vld [vmem:[%s14 + $0x28] sm:$0xff]
      %v840 = vld [vmem:[%s14 + $0x30] sm:$0xff]
      %v841 = vld [vmem:[%s14 + $0x38] sm:$0xff]
      %v842 = vlaneseq
      %v843 = vshrl.u32 %v842, 7
      %v844 = vadd.s32 %v843, 8
      %v845 = vadd.s32 %v843, 16
      %v846 = vadd.s32 %v843, 24
      %v847 = vadd.s32 %v843, 32
      %v848 = vadd.s32 %v843, 40
      %v849 = vadd.s32 %v843, 48
      %v850 = vadd.s32 %v843, 56
      %v851 = vlaneseq
      %v852 = vand.u32 %v851, 127
      %vm853 = vcmp.ge.s32.totalorder %v843, %v852
      %vm854 = vcmp.ge.s32.totalorder %v844, %v852
      %vm855 = vcmp.ge.s32.totalorder %v845, %v852
      %vm856 = vcmp.ge.s32.totalorder %v846, %v852
      %vm857 = vcmp.ge.s32.totalorder %v847, %v852
      %vm858 = vcmp.ge.s32.totalorder %v848, %v852
      %vm859 = vcmp.ge.s32.totalorder %v849, %v852
      %vm860 = vcmp.ge.s32.totalorder %v850, %v852
      %v861 = vsel %vm853, 1, 0
      %v862 = vsel %vm854, 1, 0
      %v863 = vsel %vm855, 1, 0
      %v864 = vsel %vm856, 1, 0
      %v865 = vsel %vm857, 1, 0
      %v866 = vsel %vm858, 1, 0
      %v867 = vsel %vm859, 1, 0
      %v868 = vsel %vm860, 1, 0
      %v869 = vcvt.s32.f32 %v861
      %v870 = vcvt.s32.f32 %v862
      %v871 = vcvt.s32.f32 %v863
      %v872 = vcvt.s32.f32 %v864
      %v873 = vcvt.s32.f32 %v865
      %v874 = vcvt.s32.f32 %v866
      %v875 = vcvt.s32.f32 %v867
      %v876 = vcvt.s32.f32 %v868
      %vm877 = vcmp.eq.s32.totalorder %v843, %v852
      %vm878 = vcmp.eq.s32.totalorder %v844, %v852
      %vm879 = vcmp.eq.s32.totalorder %v845, %v852
      %vm880 = vcmp.eq.s32.totalorder %v846, %v852
      %vm881 = vcmp.eq.s32.totalorder %v847, %v852
      %vm882 = vcmp.eq.s32.totalorder %v848, %v852
      %vm883 = vcmp.eq.s32.totalorder %v849, %v852
      %vm884 = vcmp.eq.s32.totalorder %v850, %v852
      %v885 = vsel %vm877, 1, 0
      %v886 = vsel %vm878, 1, 0
      %v887 = vsel %vm879, 1, 0
      %v888 = vsel %vm880, 1, 0
      %v889 = vsel %vm881, 1, 0
      %v890 = vsel %vm882, 1, 0
      %v891 = vsel %vm883, 1, 0
      %v892 = vsel %vm884, 1, 0
      %v893 = vcvt.s32.f32 %v885
      %v894 = vcvt.s32.f32 %v886
      %v895 = vcvt.s32.f32 %v887
      %v896 = vcvt.s32.f32 %v888
      %v897 = vcvt.s32.f32 %v889
      %v898 = vcvt.s32.f32 %v890
      %v899 = vcvt.s32.f32 %v891
      %v900 = vcvt.s32.f32 %v892
      %v901 = vcvt.s32.f32 %v843
      %v902 = vcvt.s32.f32 %v844
      %v903 = vcvt.s32.f32 %v845
      %v904 = vcvt.s32.f32 %v846
      %v905 = vcvt.s32.f32 %v852
      %v906 = vpack.c.bf16 %v727, %v723
      %v907 = vpack.c.bf16 %v737, %v733
      %v908 = vpack.c.bf16 %v747, %v743
      %v909 = vpack.c.bf16 %v757, %v753
      %v910 = vpack.c.bf16 %v729, %v725
      %v911 = vpack.c.bf16 %v739, %v735
      %v912 = vpack.c.bf16 %v749, %v745
      %v913 = vpack.c.bf16 %v759, %v755
      %v914 = vpack.c.bf16 %v799, %v796
      %v915 = vpack.c.bf16 %v807, %v804
      %v916 = vpack.c.bf16 %v815, %v812
      %v917 = vpack.c.bf16 %v823, %v820
      %vm918 = vcmask 261120
      %v920 = vsel %vm918, %v906, 0
      %v923 = vsel %vm918, %v907, 0
      %v926 = vsel %vm918, %v908, 0
      %v929 = vsel %vm918, %v909, 0
      %v932 = vsel %vm918, %v910, 0
      %v935 = vsel %vm918, %v911, 0
      %v938 = vsel %vm918, %v912, 0
      %v941 = vsel %vm918, %v913, 0
      %943 = vmatprep.subr.bf16.mxu0 0
      %944 = vmatpush1.bf16.xpose.msra.mxu0 %v932
      %945 = vmatprep.subr.bf16.mxu0 0
      %946 = vmatpush1.bf16.xpose.msra.mxu0 %v935
      %947 = vmatprep.subr.bf16.mxu0 0
      %948 = vmatpush1.bf16.xpose.msra.mxu0 %v938
      %949 = vmatprep.subr.bf16.mxu0 0
      %950 = vmatpush1.bf16.xpose.msra.mxu0 %v941
      %951 = vmatprep.subr.bf16.mxu0 0
      %952 = vmatpush1.bf16.xpose.msra.mxu0 0
      %953 = vmatprep.subr.bf16.mxu0 0
      %954 = vmatpush1.bf16.xpose.msra.mxu0 0
      %955 = vmatprep.subr.bf16.mxu0 0
      %956 = vmatpush1.bf16.xpose.msra.mxu0 0
      %957 = vmatprep.subr.bf16.mxu0 0
      %958 = vmatpush1.bf16.xpose.msra.mxu0 0
      %959 = vmatprep.subr.bf16.mxu0 0
      %960 = vmatpush1.bf16.xpose.msra.mxu0 0
      %961 = vmatprep.subr.bf16.mxu0 0
      %962 = vmatpush1.bf16.xpose.msra.mxu0 0
      %963 = vmatprep.subr.bf16.mxu0 0
      %964 = vmatpush1.bf16.xpose.msra.mxu0 0
      %965 = vmatprep.subr.bf16.mxu0 0
      %966 = vmatpush1.bf16.xpose.msra.mxu0 0
      %967 = vmatprep.subr.bf16.mxu0 0
      %968 = vmatpush1.bf16.xpose.msra.mxu0 0
      %969 = vmatprep.subr.bf16.mxu0 0
      %970 = vmatpush1.bf16.xpose.msra.mxu0 0
      %971 = vmatprep.subr.bf16.mxu0 0
      %972 = vmatpush1.bf16.xpose.msra.mxu0 0
      %973 = vmatprep.subr.bf16.mxu0 0
      %974 = vmatpush1.bf16.xpose.msra.mxu0 0
      %975 = vmatprep.mubr.bf16.mxu0 0
      %976 = vmatmul.mubr.bf16.gmra.mrb[0].mxu0 %v920
      %v977 = vpop.f32.mrb[0].mxu0
      %v978 = vadd.f32 0.0, %v977
      %v979 = vpop.f32.mrb[0].mxu0
      %v980 = vpop.f32.mrb[0].mxu0
      %v981 = vadd.f32 0.0, %v980
      %v982 = vpop.f32.mrb[0].mxu0
      %983 = vmatprep.mubr.bf16.mxu0 0
      %984 = vmatmul.mubr.bf16.gmra.mrb[0].mxu0 %v923
      %v985 = vpop.f32.mrb[0].mxu0
      %v986 = vadd.f32 0.0, %v985
      %v987 = vpop.f32.mrb[0].mxu0
      %v988 = vpop.f32.mrb[0].mxu0
      %v989 = vadd.f32 0.0, %v988
      %v990 = vpop.f32.mrb[0].mxu0
      %991 = vmatprep.mubr.bf16.mxu0 0
      %992 = vmatmul.mubr.bf16.gmra.mrb[0].mxu0 %v926
      %v993 = vpop.f32.mrb[0].mxu0
      %v994 = vadd.f32 0.0, %v993
      %v995 = vpop.f32.mrb[0].mxu0
      %v996 = vpop.f32.mrb[0].mxu0
      %v997 = vadd.f32 0.0, %v996
      %v998 = vpop.f32.mrb[0].mxu0
      %999 = vmatprep.mubr.bf16.mxu0 0
      %1000 = vmatmul.mubr.bf16.gmra.mrb[0].mxu0 %v929
      %v1001 = vpop.f32.mrb[0].mxu0
      %v1002 = vadd.f32 0.0, %v1001
      %v1003 = vpop.f32.mrb[0].mxu0
      %v1004 = vpop.f32.mrb[0].mxu0
      %v1005 = vadd.f32 0.0, %v1004
      %v1006 = vpop.f32.mrb[0].mxu0
      %1007 = vdwg.mxu0
      %v1008 = vadd.f32 %v978, %v834
      %v1009 = vadd.f32 %v981, %v835
      %v1010 = vadd.f32 %v986, %v836
      %v1011 = vadd.f32 %v989, %v837
      %v1012 = vadd.f32 %v994, %v838
      %v1013 = vadd.f32 %v997, %v839
      %v1014 = vadd.f32 %v1002, %v840
      %v1015 = vadd.f32 %v1005, %v841
      %vm1016 = vcmask 523264
      %v1017 = vsel %vm1016, %v1008, -inf
      %1018 = vmax.xlane.f32.xlu0 %v1017
      %v1019 = vpop.xlane.xlu0 %1018
      %v1020 = vsel %vm1016, %v1009, -inf
      %1021 = vmax.xlane.f32.xlu0 %v1020
      %v1022 = vpop.xlane.xlu0 %1021
      %v1023 = vsel %vm1016, %v1010, -inf
      %1024 = vmax.xlane.f32.xlu0 %v1023
      %v1025 = vpop.xlane.xlu0 %1024
      %v1026 = vsel %vm1016, %v1011, -inf
      %1027 = vmax.xlane.f32.xlu0 %v1026
      %v1028 = vpop.xlane.xlu0 %1027
      %v1029 = vsel %vm1016, %v1012, -inf
      %1030 = vmax.xlane.f32.xlu0 %v1029
      %v1031 = vpop.xlane.xlu0 %1030
      %v1032 = vsel %vm1016, %v1013, -inf
      %1033 = vmax.xlane.f32.xlu0 %v1032
      %v1034 = vpop.xlane.xlu0 %1033
      %v1035 = vsel %vm1016, %v1014, -inf
      %1036 = vmax.xlane.f32.xlu0 %v1035
      %v1037 = vpop.xlane.xlu0 %1036
      %v1038 = vsel %vm1016, %v1015, -inf
      %1039 = vmax.xlane.f32.xlu0 %v1038
      %v1040 = vpop.xlane.xlu0 %1039
      %v1049 = vunpack.c.l.b16 %v826
      %v1050 = vunpack.c.l.b16 %v827
      %v1051 = vunpack.c.l.b16 %v828
      %v1052 = vunpack.c.l.b16 %v829
      %v1053 = vunpack.c.l.b16 %v830
      %v1054 = vunpack.c.l.b16 %v831
      %v1055 = vunpack.c.l.b16 %v832
      %v1056 = vunpack.c.l.b16 %v833
      %v1057 = vpack.c.b16 %v1050, %v1049
      %v1058 = vpack.c.b16 %v1052, %v1051
      %v1059 = vpack.c.b16 %v1054, %v1053
      %v1060 = vpack.c.b16 %v1056, %v1055
      %v1062 = vsel %vm1016, %v1057, 0
      %v1065 = vsel %vm1016, %v1058, 0
      %v1068 = vsel %vm1016, %v1059, 0
      %v1071 = vsel %vm1016, %v1060, 0
      %1073 = vmatprep.subr.bf16.mxu0 0
      %1074 = vmatpush1.bf16.msra.mxu0 %v910
      %1075 = vmatprep.subr.bf16.mxu0 0
      %1076 = vmatpush1.bf16.msra.mxu0 %v911
      %1077 = vmatprep.subr.bf16.mxu0 0
      %1078 = vmatpush1.bf16.msra.mxu0 %v912
      %1079 = vmatprep.subr.bf16.mxu0 0
      %1080 = vmatpush1.bf16.msra.mxu0 %v913
      %1081 = vmatprep.subr.bf16.mxu0 0
      %1082 = vmatpush1.bf16.msra.mxu0 0
      %1083 = vmatprep.subr.bf16.mxu0 0
      %1084 = vmatpush1.bf16.msra.mxu0 0
      %1085 = vmatprep.subr.bf16.mxu0 0
      %1086 = vmatpush1.bf16.msra.mxu0 0
      %1087 = vmatprep.subr.bf16.mxu0 0
      %1088 = vmatpush1.bf16.msra.mxu0 0
      %1089 = vmatprep.subr.bf16.mxu0 0
      %1090 = vmatpush1.bf16.msra.mxu0 0
      %1091 = vmatprep.subr.bf16.mxu0 0
      %1092 = vmatpush1.bf16.msra.mxu0 0
      %1093 = vmatprep.subr.bf16.mxu0 0
      %1094 = vmatpush1.bf16.msra.mxu0 0
      %1095 = vmatprep.subr.bf16.mxu0 0
      %1096 = vmatpush1.bf16.msra.mxu0 0
      %1097 = vmatprep.subr.bf16.mxu0 0
      %1098 = vmatpush1.bf16.msra.mxu0 0
      %1099 = vmatprep.subr.bf16.mxu0 0
      %1100 = vmatpush1.bf16.msra.mxu0 0
      %1101 = vmatprep.subr.bf16.mxu0 0
      %1102 = vmatpush1.bf16.msra.mxu0 0
      %1103 = vmatprep.subr.bf16.mxu0 0
      %1104 = vmatpush1.bf16.msra.mxu0 0
      %1105 = vmatprep.mubr.bf16.mxu0 0
      %1106 = vmatmul.mubr.bf16.gmra.mrb[0].mxu0 %v1062
      %v1107 = vpop.f32.mrb[0].mxu0
      %v1108 = vadd.f32 0.0, %v1107
      %v1109 = vpop.f32.mrb[0].mxu0
      %v1110 = vpop.f32.mrb[0].mxu0
      %v1111 = vadd.f32 0.0, %v1110
      %v1112 = vpop.f32.mrb[0].mxu0
      %1113 = vmatprep.mubr.bf16.mxu0 0
      %1114 = vmatmul.mubr.bf16.gmra.mrb[0].mxu0 %v1065
      %v1115 = vpop.f32.mrb[0].mxu0
      %v1116 = vadd.f32 0.0, %v1115
      %v1117 = vpop.f32.mrb[0].mxu0
      %v1118 = vpop.f32.mrb[0].mxu0
      %v1119 = vadd.f32 0.0, %v1118
      %v1120 = vpop.f32.mrb[0].mxu0
      %1121 = vmatprep.mubr.bf16.mxu0 0
      %1122 = vmatmul.mubr.bf16.gmra.mrb[0].mxu0 %v1068
      %v1123 = vpop.f32.mrb[0].mxu0
      %v1124 = vadd.f32 0.0, %v1123
      %v1125 = vpop.f32.mrb[0].mxu0
      %v1126 = vpop.f32.mrb[0].mxu0
      %v1127 = vadd.f32 0.0, %v1126
      %v1128 = vpop.f32.mrb[0].mxu0
      %1129 = vmatprep.mubr.bf16.mxu0 0
      %1130 = vmatmul.mubr.bf16.gmra.mrb[0].mxu0 %v1071
      %v1131 = vpop.f32.mrb[0].mxu0
      %v1132 = vadd.f32 0.0, %v1131
      %v1133 = vpop.f32.mrb[0].mxu0
      %v1134 = vpop.f32.mrb[0].mxu0
      %v1135 = vadd.f32 0.0, %v1134
      %v1136 = vpop.f32.mrb[0].mxu0
      %1137 = vdwg.mxu0
      %v1138 = vmul.f32 %v723, %v1108
      %v1139 = vmul.f32 %v727, %v1111
      %v1140 = vmul.f32 %v733, %v1116
      %v1141 = vmul.f32 %v737, %v1119
      %v1142 = vmul.f32 %v743, %v1124
      %v1143 = vmul.f32 %v747, %v1127
      %v1144 = vmul.f32 %v753, %v1132
      %v1145 = vmul.f32 %v757, %v1135
      %v1146 = vsel %vm918, %v1138, 0.0
      %1147 = vadd.xlane.f32.xlu0 %v1146
      %v1148 = vpop.xlane.xlu0 %1147
      %v1149 = vsel %vm918, %v1139, 0.0
      %1150 = vadd.xlane.f32.xlu0 %v1149
      %v1151 = vpop.xlane.xlu0 %1150
      %v1152 = vsel %vm918, %v1140, 0.0
      %1153 = vadd.xlane.f32.xlu0 %v1152
      %v1154 = vpop.xlane.xlu0 %1153
      %v1155 = vsel %vm918, %v1141, 0.0
      %1156 = vadd.xlane.f32.xlu0 %v1155
      %v1157 = vpop.xlane.xlu0 %1156
      %v1158 = vsel %vm918, %v1142, 0.0
      %1159 = vadd.xlane.f32.xlu0 %v1158
      %v1160 = vpop.xlane.xlu0 %1159
      %v1161 = vsel %vm918, %v1143, 0.0
      %1162 = vadd.xlane.f32.xlu0 %v1161
      %v1163 = vpop.xlane.xlu0 %1162
      %v1164 = vsel %vm918, %v1144, 0.0
      %1165 = vadd.xlane.f32.xlu0 %v1164
      %v1166 = vpop.xlane.xlu0 %1165
      %v1167 = vsel %vm918, %v1145, 0.0
      %1168 = vadd.xlane.f32.xlu0 %v1167
      %v1169 = vpop.xlane.xlu0 %1168
      %v1170 = vmul.f32 %v1148, 0.015625
      %v1171 = vmul.f32 %v1151, 0.015625
      %v1172 = vmul.f32 %v1154, 0.015625
      %v1173 = vmul.f32 %v1157, 0.015625
      %v1174 = vmul.f32 %v1160, 0.015625
      %v1175 = vmul.f32 %v1163, 0.015625
      %v1176 = vmul.f32 %v1166, 0.015625
      %v1177 = vmul.f32 %v1169, 0.015625
      %v1178 = vsub.f32 %v1019, %v1170
      %v1179 = vsub.f32 %v1022, %v1171
      %v1180 = vsub.f32 %v1025, %v1172
      %v1181 = vsub.f32 %v1028, %v1173
      %v1182 = vsub.f32 %v1031, %v1174
      %v1183 = vsub.f32 %v1034, %v1175
      %v1184 = vsub.f32 %v1037, %v1176
      %v1185 = vsub.f32 %v1040, %v1177
      %v1186 = vmul.f32 %v1178, %v893
      %v1187 = vmul.f32 %v1179, %v894
      %v1188 = vmul.f32 %v1180, %v895
      %v1189 = vmul.f32 %v1181, %v896
      %v1190 = vmul.f32 %v1182, %v897
      %v1191 = vmul.f32 %v1183, %v898
      %v1192 = vmul.f32 %v1184, %v899
      %v1193 = vmul.f32 %v1185, %v900
      %v1194 = vsel %vm1016, %v1186, 0.0
      %v1195 = vsel %vm1016, %v1187, 0.0
      %v1196 = vadd.f32 %v1194, %v1195
      %v1197 = vsel %vm1016, %v1188, 0.0
      %v1198 = vadd.f32 %v1196, %v1197
      %v1199 = vsel %vm1016, %v1189, 0.0
      %v1200 = vadd.f32 %v1198, %v1199
      %v1201 = vsel %vm1016, %v1190, 0.0
      %v1202 = vadd.f32 %v1200, %v1201
      %v1203 = vsel %vm1016, %v1191, 0.0
      %v1204 = vadd.f32 %v1202, %v1203
      %v1205 = vsel %vm1016, %v1192, 0.0
      %v1206 = vadd.f32 %v1204, %v1205
      %v1207 = vsel %vm1016, %v1193, 0.0
      %v1208 = vadd.f32 %v1206, %v1207
      %v1209 = vrot.slane %v1208, 4
      %v1210 = vadd.f32 %v1208, %v1209
      %v1211 = vrot.slane %v1210, 2
      %v1212 = vadd.f32 %v1210, %v1211
      %v1213 = vrot.slane %v1212, 1
      %v1214 = vadd.f32 %v1212, %v1213
      %vm1215 = vcmp.gt.f32.partialorder %v1214, %v1178
      %vm1216 = vcmp.gt.f32.partialorder %v1214, %v1179
      %vm1217 = vcmp.gt.f32.partialorder %v1214, %v1180
      %vm1218 = vcmp.gt.f32.partialorder %v1214, %v1181
      %vm1219 = vcmp.gt.f32.partialorder %v1214, %v1182
      %vm1220 = vcmp.gt.f32.partialorder %v1214, %v1183
      %vm1221 = vcmp.gt.f32.partialorder %v1214, %v1184
      %vm1222 = vcmp.gt.f32.partialorder %v1214, %v1185
      %vm1223 = vcmp.eq.f32.partialorder %v1214, %v1178
      %vm1224 = vcmp.eq.f32.partialorder %v1214, %v1179
      %vm1225 = vcmp.eq.f32.partialorder %v1214, %v1180
      %vm1226 = vcmp.eq.f32.partialorder %v1214, %v1181
      %vm1227 = vcmp.eq.f32.partialorder %v1214, %v1182
      %vm1228 = vcmp.eq.f32.partialorder %v1214, %v1183
      %vm1229 = vcmp.eq.f32.partialorder %v1214, %v1184
      %vm1230 = vcmp.eq.f32.partialorder %v1214, %v1185
      %vm1231 = vcmp.lt.s32.totalorder %v852, %v843
      %vm1232 = vcmp.lt.s32.totalorder %v852, %v844
      %vm1233 = vcmp.lt.s32.totalorder %v852, %v845
      %vm1234 = vcmp.lt.s32.totalorder %v852, %v846
      %vm1235 = vcmp.lt.s32.totalorder %v852, %v847
      %vm1236 = vcmp.lt.s32.totalorder %v852, %v848
      %vm1237 = vcmp.lt.s32.totalorder %v852, %v849
      %vm1238 = vcmp.lt.s32.totalorder %v852, %v850
      %vm1239 = vmand %vm1223, %vm1231
      %vm1240 = vmand %vm1224, %vm1232
      %vm1241 = vmand %vm1225, %vm1233
      %vm1242 = vmand %vm1226, %vm1234
      %vm1243 = vmand %vm1227, %vm1235
      %vm1244 = vmand %vm1228, %vm1236
      %vm1245 = vmand %vm1229, %vm1237
      %vm1246 = vmand %vm1230, %vm1238
      %vm1247 = vmor %vm1215, %vm1239
      %vm1248 = vmor %vm1216, %vm1240
      %vm1249 = vmor %vm1217, %vm1241
      %vm1250 = vmor %vm1218, %vm1242
      %vm1251 = vmor %vm1219, %vm1243
      %vm1252 = vmor %vm1220, %vm1244
      %vm1253 = vmor %vm1221, %vm1245
      %vm1254 = vmor %vm1222, %vm1246
      %v1255 = vsel %vm1247, 1, 0
      %v1256 = vsel %vm1248, 1, 0
      %v1257 = vsel %vm1249, 1, 0
      %v1258 = vsel %vm1250, 1, 0
      %v1259 = vsel %vm1251, 1, 0
      %v1260 = vsel %vm1252, 1, 0
      %v1261 = vsel %vm1253, 1, 0
      %v1262 = vsel %vm1254, 1, 0
      %v1263 = vcvt.s32.f32 %v1255
      %v1264 = vcvt.s32.f32 %v1256
      %v1265 = vcvt.s32.f32 %v1257
      %v1266 = vcvt.s32.f32 %v1258
      %v1267 = vcvt.s32.f32 %v1259
      %v1268 = vcvt.s32.f32 %v1260
      %v1269 = vcvt.s32.f32 %v1261
      %v1270 = vcvt.s32.f32 %v1262
      %v1271 = vsel %vm1016, %v1263, 0.0
      %1272 = vadd.xlane.f32.xlu0 %v1271
      %v1273 = vpop.xlane.xlu0 %1272
      %v1274 = vsel %vm1016, %v1264, 0.0
      %1275 = vadd.xlane.f32.xlu0 %v1274
      %v1276 = vpop.xlane.xlu0 %1275
      %v1277 = vsel %vm1016, %v1265, 0.0
      %1278 = vadd.xlane.f32.xlu0 %v1277
      %v1279 = vpop.xlane.xlu0 %1278
      %v1280 = vsel %vm1016, %v1266, 0.0
      %1281 = vadd.xlane.f32.xlu0 %v1280
      %v1282 = vpop.xlane.xlu0 %1281
      %v1283 = vsel %vm1016, %v1267, 0.0
      %1284 = vadd.xlane.f32.xlu0 %v1283
      %v1285 = vpop.xlane.xlu0 %1284
      %v1286 = vsel %vm1016, %v1268, 0.0
      %1287 = vadd.xlane.f32.xlu0 %v1286
      %v1288 = vpop.xlane.xlu0 %1287
      %v1289 = vsel %vm1016, %v1269, 0.0
      %1290 = vadd.xlane.f32.xlu0 %v1289
      %v1291 = vpop.xlane.xlu0 %1290
      %v1292 = vsel %vm1016, %v1270, 0.0
      %1293 = vadd.xlane.f32.xlu0 %v1292
      %v1294 = vpop.xlane.xlu0 %1293
      %v1295 = vadd.f32 %v1271, %v1274
      %v1296 = vadd.f32 %v1295, %v1277
      %v1297 = vadd.f32 %v1296, %v1280
      %v1298 = vadd.f32 %v1297, %v1283
      %v1299 = vadd.f32 %v1298, %v1286
      %v1300 = vadd.f32 %v1299, %v1289
      %v1301 = vadd.f32 %v1300, %v1292
      %v1302 = vrot.slane %v1301, 4
      %v1303 = vadd.f32 %v1301, %v1302
      %v1304 = vrot.slane %v1303, 2
      %v1305 = vadd.f32 %v1303, %v1304
      %v1306 = vrot.slane %v1305, 1
      %v1307 = vadd.f32 %v1305, %v1306
      %v1308 = vsub.f32 63.0, %v1307
      %vm1309 = vcmp.lt.f32.partialorder %v1273, 25.0
      %vm1310 = vcmp.lt.f32.partialorder %v1276, 25.0
      %vm1311 = vcmp.lt.f32.partialorder %v1279, 25.0
      %vm1312 = vcmp.lt.f32.partialorder %v1282, 25.0
      %vm1313 = vcmp.lt.f32.partialorder %v1285, 25.0
      %vm1314 = vcmp.lt.f32.partialorder %v1288, 25.0
      %vm1315 = vcmp.lt.f32.partialorder %v1291, 25.0
      %vm1316 = vcmp.lt.f32.partialorder %v1294, 25.0
      %v1317 = vsel %vm1309, 1, 0
      %v1318 = vsel %vm1310, 1, 0
      %v1319 = vsel %vm1311, 1, 0
      %v1320 = vsel %vm1312, 1, 0
      %v1321 = vsel %vm1313, 1, 0
      %v1322 = vsel %vm1314, 1, 0
      %v1323 = vsel %vm1315, 1, 0
      %v1324 = vsel %vm1316, 1, 0
      %v1325 = vcvt.s32.f32 %v1317
      %v1326 = vcvt.s32.f32 %v1318
      %v1327 = vcvt.s32.f32 %v1319
      %v1328 = vcvt.s32.f32 %v1320
      %v1329 = vcvt.s32.f32 %v1321
      %v1330 = vcvt.s32.f32 %v1322
      %v1331 = vcvt.s32.f32 %v1323
      %v1332 = vcvt.s32.f32 %v1324
      %vm1333 = vcmp.eq.f32.partialorder %v1308, %v901
      %vm1334 = vcmp.eq.f32.partialorder %v1308, %v902
      %vm1335 = vcmp.eq.f32.partialorder %v1308, %v903
      %vm1336 = vcmp.eq.f32.partialorder %v1308, %v904
      %vm1337 = vcmp.lt.f32.partialorder %v901, 25.0
      %vm1338 = vcmp.lt.f32.partialorder %v902, 25.0
      %vm1339 = vcmp.lt.f32.partialorder %v903, 25.0
      %vm1340 = vcmp.lt.f32.partialorder %v904, 25.0
      %vm1341 = vmand %vm1333, %vm1337
      %vm1342 = vmand %vm1334, %vm1338
      %vm1343 = vmand %vm1335, %vm1339
      %vm1344 = vmand %vm1336, %vm1340
      %v1345 = vsel %vm1341, 1.0, 0.0
      %v1346 = vsel %vm1342, 1.0, 0.0
      %v1347 = vsel %vm1343, 1.0, 0.0
      %v1348 = vsel %vm1344, 1.0, 0.0
      %v1349 = vmul.f32 %v1345, %v905
      %v1350 = vmul.f32 %v1346, %v905
      %v1351 = vmul.f32 %v1347, %v905
      %v1352 = vmul.f32 %v1348, %v905
      %v1353 = vsel %vm1016, %v1349, 0.0
      %1354 = vadd.xlane.f32.xlu0 %v1353
      %v1355 = vpop.xlane.xlu0 %1354
      %v1356 = vsel %vm1016, %v1350, 0.0
      %1357 = vadd.xlane.f32.xlu0 %v1356
      %v1358 = vpop.xlane.xlu0 %1357
      %v1359 = vsel %vm1016, %v1351, 0.0
      %1360 = vadd.xlane.f32.xlu0 %v1359
      %v1361 = vpop.xlane.xlu0 %1360
      %v1362 = vsel %vm1016, %v1352, 0.0
      %1363 = vadd.xlane.f32.xlu0 %v1362
      %v1364 = vpop.xlane.xlu0 %1363
      %v1366 = vsel %vm1016, %v1345, 0
      %v1369 = vsel %vm1016, %v1346, 0
      %v1372 = vsel %vm1016, %v1347, 0
      %v1375 = vsel %vm1016, %v1348, 0
      %1377 = vmatprep.subr.mxu0 0.0
      %1378 = vmatpush1.msra.mxu0 %v978
      %1379 = vmatprep.subr.mxu0 0.0
      %1380 = vmatpush1.msra.mxu0 %v981
      %1381 = vmatprep.subr.mxu0 0.0
      %1382 = vmatpush1.msra.mxu0 %v986
      %1383 = vmatprep.subr.mxu0 0.0
      %1384 = vmatpush1.msra.mxu0 %v989
      %1385 = vmatprep.subr.mxu0 0.0
      %1386 = vmatpush1.msra.mxu0 %v994
      %1387 = vmatprep.subr.mxu0 0.0
      %1388 = vmatpush1.msra.mxu0 %v997
      %1389 = vmatprep.subr.mxu0 0.0
      %1390 = vmatpush1.msra.mxu0 %v1002
      %1391 = vmatprep.subr.mxu0 0.0
      %1392 = vmatpush1.msra.mxu0 %v1005
      %1393 = vmatprep.subr.mxu0 0.0
      %1394 = vmatpush1.msra.mxu0 0.0
      %1395 = vmatprep.subr.mxu0 0.0
      %1396 = vmatpush1.msra.mxu0 0.0
      %1397 = vmatprep.subr.mxu0 0.0
      %1398 = vmatpush1.msra.mxu0 0.0
      %1399 = vmatprep.subr.mxu0 0.0
      %1400 = vmatpush1.msra.mxu0 0.0
      %1401 = vmatprep.subr.mxu0 0.0
      %1402 = vmatpush1.msra.mxu0 0.0
      %1403 = vmatprep.subr.mxu0 0.0
      %1404 = vmatpush1.msra.mxu0 0.0
      %1405 = vmatprep.subr.mxu0 0.0
      %1406 = vmatpush1.msra.mxu0 0.0
      %1407 = vmatprep.subr.mxu0 0.0
      %1408 = vmatpush1.msra.mxu0 0.0
      %1409 = vmatprep.subr.mxu0 0.0
      %1410 = vmatpush1.msra.mxu0 0.0
      %1411 = vmatprep.subr.mxu0 0.0
      %1412 = vmatpush1.msra.mxu0 0.0
      %1413 = vmatprep.subr.mxu0 0.0
      %1414 = vmatpush1.msra.mxu0 0.0
      %1415 = vmatprep.subr.mxu0 0.0
      %1416 = vmatpush1.msra.mxu0 0.0
      %1417 = vmatprep.subr.mxu0 0.0
      %1418 = vmatpush1.msra.mxu0 0.0
      %1419 = vmatprep.subr.mxu0 0.0
      %1420 = vmatpush1.msra.mxu0 0.0
      %1421 = vmatprep.subr.mxu0 0.0
      %1422 = vmatpush1.msra.mxu0 0.0
      %1423 = vmatprep.subr.mxu0 0.0
      %1424 = vmatpush1.msra.mxu0 0.0
      %1425 = vmatprep.subr.mxu0 0.0
      %1426 = vmatpush1.msra.mxu0 0.0
      %1427 = vmatprep.subr.mxu0 0.0
      %1428 = vmatpush1.msra.mxu0 0.0
      %1429 = vmatprep.subr.mxu0 0.0
      %1430 = vmatpush1.msra.mxu0 0.0
      %1431 = vmatprep.subr.mxu0 0.0
      %1432 = vmatpush1.msra.mxu0 0.0
      %1433 = vmatprep.subr.mxu0 0.0
      %1434 = vmatpush1.msra.mxu0 0.0
      %1435 = vmatprep.subr.mxu0 0.0
      %1436 = vmatpush1.msra.mxu0 0.0
      %1437 = vmatprep.subr.mxu0 0.0
      %1438 = vmatpush1.msra.mxu0 0.0
      %1439 = vmatprep.subr.mxu0 0.0
      %1440 = vmatpush1.msra.mxu0 0.0
      %1441 = vmatprep.mubr.f32.mxu0 0.0
      %1442 = vmatmul.mubr.f32.gmra.mrb[0].mxu0 %v1366
      %v1443 = vpop.f32.mrb[0].mxu0
      %v1444 = vadd.f32 0.0, %v1443
      %v1445 = vpop.f32.mrb[0].mxu0
      %1446 = vmatprep.mubr.f32.mxu0 0.0
      %1447 = vmatmul.mubr.f32.gmra.mrb[0].mxu0 %v1369
      %v1448 = vpop.f32.mrb[0].mxu0
      %v1449 = vadd.f32 0.0, %v1448
      %v1450 = vpop.f32.mrb[0].mxu0
      %1451 = vmatprep.mubr.f32.mxu0 0.0
      %1452 = vmatmul.mubr.f32.gmra.mrb[0].mxu0 %v1372
      %v1453 = vpop.f32.mrb[0].mxu0
      %v1454 = vadd.f32 0.0, %v1453
      %v1455 = vpop.f32.mrb[0].mxu0
      %1456 = vmatprep.mubr.f32.mxu0 0.0
      %1457 = vmatmul.mubr.f32.gmra.mrb[0].mxu0 %v1375
      %v1458 = vpop.f32.mrb[0].mxu0
      %v1459 = vadd.f32 0.0, %v1458
      %v1460 = vpop.f32.mrb[0].mxu0
      %1461 = vdwg.mxu0
      %v1462 = vmul.f32 %v1444, 0.17677669
      %v1463 = vmul.f32 %v1449, 0.17677669
      %v1464 = vmul.f32 %v1454, 0.17677669
      %v1465 = vmul.f32 %v1459, 0.17677669
      %vm1466 = vcmp.gt.f32.partialorder %v905, %v1355
      %vm1467 = vcmp.gt.f32.partialorder %v905, %v1358
      %vm1468 = vcmp.gt.f32.partialorder %v905, %v1361
      %vm1469 = vcmp.gt.f32.partialorder %v905, %v1364
      %v1470 = vsel %vm1466, -1e+30, %v1462
      %v1471 = vsel %vm1467, -1e+30, %v1463
      %v1472 = vsel %vm1468, -1e+30, %v1464
      %v1473 = vsel %vm1469, -1e+30, %v1465
      %v1474 = vsel %vm1016, %v1470, -inf
      %1475 = vmax.xlane.f32.xlu0 %v1474
      %v1476 = vpop.xlane.xlu0 %1475
      %v1477 = vsel %vm1016, %v1471, -inf
      %1478 = vmax.xlane.f32.xlu0 %v1477
      %v1479 = vpop.xlane.xlu0 %1478
      %v1480 = vsel %vm1016, %v1472, -inf
      %1481 = vmax.xlane.f32.xlu0 %v1480
      %v1482 = vpop.xlane.xlu0 %1481
      %v1483 = vsel %vm1016, %v1473, -inf
      %1484 = vmax.xlane.f32.xlu0 %v1483
      %v1485 = vpop.xlane.xlu0 %1484
      %v1486 = vsub.f32 %v1470, %v1476
      %v1487 = vsub.f32 %v1471, %v1479
      %v1488 = vsub.f32 %v1472, %v1482
      %v1489 = vsub.f32 %v1473, %v1485
      %v1490 = vmul.f32 %v1486, 1.442695
      %v1491 = vpow.pop %v1490
      %v1492 = vmul.f32 %v1487, 1.442695
      %v1493 = vpow.pop %v1492
      %v1494 = vmul.f32 %v1488, 1.442695
      %v1495 = vpow.pop %v1494
      %v1496 = vmul.f32 %v1489, 1.442695
      %v1497 = vpow.pop %v1496
      %v1498 = vsel %vm1016, %v1491, 0.0
      %1499 = vadd.xlane.f32.xlu0 %v1498
      %v1500 = vpop.xlane.xlu0 %1499
      %v1501 = vsel %vm1016, %v1493, 0.0
      %1502 = vadd.xlane.f32.xlu0 %v1501
      %v1503 = vpop.xlane.xlu0 %1502
      %v1504 = vsel %vm1016, %v1495, 0.0
      %1505 = vadd.xlane.f32.xlu0 %v1504
      %v1506 = vpop.xlane.xlu0 %1505
      %v1507 = vsel %vm1016, %v1497, 0.0
      %1508 = vadd.xlane.f32.xlu0 %v1507
      %v1509 = vpop.xlane.xlu0 %1508
      %v1510 = vrcp.pop %v1500
      %v1511 = vrcp.pop %v1503
      %v1512 = vrcp.pop %v1506
      %v1513 = vrcp.pop %v1509
      %v1514 = vmul.f32 %v1491, %v1510
      %v1515 = vmul.f32 %v1493, %v1511
      %v1516 = vmul.f32 %v1495, %v1512
      %v1517 = vmul.f32 %v1497, %v1513
      %v1518 = vpack.c.bf16 %v1515, %v1514
      %v1519 = vpack.c.bf16 %v1517, %v1516
      %v1521 = vsel %vm1016, %v1518, 0
      %v1524 = vsel %vm1016, %v1519, 0
      %1526 = vmatprep.subr.bf16.mxu0 0
      %1527 = vmatpush1.bf16.msra.mxu0 %v914
      %1528 = vmatprep.subr.bf16.mxu0 0
      %1529 = vmatpush1.bf16.msra.mxu0 %v915
      %1530 = vmatprep.subr.bf16.mxu0 0
      %1531 = vmatpush1.bf16.msra.mxu0 %v916
      %1532 = vmatprep.subr.bf16.mxu0 0
      %1533 = vmatpush1.bf16.msra.mxu0 %v917
      %1534 = vmatprep.subr.bf16.mxu0 0
      %1535 = vmatpush1.bf16.msra.mxu0 0
      %1536 = vmatprep.subr.bf16.mxu0 0
      %1537 = vmatpush1.bf16.msra.mxu0 0
      %1538 = vmatprep.subr.bf16.mxu0 0
      %1539 = vmatpush1.bf16.msra.mxu0 0
      %1540 = vmatprep.subr.bf16.mxu0 0
      %1541 = vmatpush1.bf16.msra.mxu0 0
      %1542 = vmatprep.subr.bf16.mxu0 0
      %1543 = vmatpush1.bf16.msra.mxu0 0
      %1544 = vmatprep.subr.bf16.mxu0 0
      %1545 = vmatpush1.bf16.msra.mxu0 0
      %1546 = vmatprep.subr.bf16.mxu0 0
      %1547 = vmatpush1.bf16.msra.mxu0 0
      %1548 = vmatprep.subr.bf16.mxu0 0
      %1549 = vmatpush1.bf16.msra.mxu0 0
      %1550 = vmatprep.subr.bf16.mxu0 0
      %1551 = vmatpush1.bf16.msra.mxu0 0
      %1552 = vmatprep.subr.bf16.mxu0 0
      %1553 = vmatpush1.bf16.msra.mxu0 0
      %1554 = vmatprep.subr.bf16.mxu0 0
      %1555 = vmatpush1.bf16.msra.mxu0 0
      %1556 = vmatprep.subr.bf16.mxu0 0
      %1557 = vmatpush1.bf16.msra.mxu0 0
      %1558 = vmatprep.mubr.bf16.mxu0 0
      %1559 = vmatmul.mubr.bf16.gmra.mrb[0].mxu0 %v1521
      %v1560 = vpop.f32.mrb[0].mxu0
      %v1561 = vadd.f32 0.0, %v1560
      %v1562 = vpop.f32.mrb[0].mxu0
      %v1563 = vpop.f32.mrb[0].mxu0
      %v1564 = vadd.f32 0.0, %v1563
      %v1565 = vpop.f32.mrb[0].mxu0
      %1566 = vmatprep.mubr.bf16.mxu0 0
      %1567 = vmatmul.mubr.bf16.gmra.mrb[0].mxu0 %v1524
      %v1568 = vpop.f32.mrb[0].mxu0
      %v1569 = vadd.f32 0.0, %v1568
      %v1570 = vpop.f32.mrb[0].mxu0
      %v1571 = vpop.f32.mrb[0].mxu0
      %v1572 = vadd.f32 0.0, %v1571
      %v1573 = vpop.f32.mrb[0].mxu0
      %1574 = vdwg.mxu0
      %v1576 = vsel %vm1016, %v869, 0
      %v1579 = vsel %vm1016, %v870, 0
      %v1582 = vsel %vm1016, %v871, 0
      %v1585 = vsel %vm1016, %v872, 0
      %v1588 = vsel %vm1016, %v873, 0
      %v1591 = vsel %vm1016, %v874, 0
      %v1594 = vsel %vm1016, %v875, 0
      %v1597 = vsel %vm1016, %v876, 0
      %1599 = vmatprep.subr.mxu0 0.0
      %1600 = vmatpush1.msra.mxu0 %v796
      %1601 = vmatprep.subr.mxu0 0.0
      %1602 = vmatpush1.msra.mxu0 %v799
      %1603 = vmatprep.subr.mxu0 0.0
      %1604 = vmatpush1.msra.mxu0 %v804
      %1605 = vmatprep.subr.mxu0 0.0
      %1606 = vmatpush1.msra.mxu0 %v807
      %1607 = vmatprep.subr.mxu0 0.0
      %1608 = vmatpush1.msra.mxu0 %v812
      %1609 = vmatprep.subr.mxu0 0.0
      %1610 = vmatpush1.msra.mxu0 %v815
      %1611 = vmatprep.subr.mxu0 0.0
      %1612 = vmatpush1.msra.mxu0 %v820
      %1613 = vmatprep.subr.mxu0 0.0
      %1614 = vmatpush1.msra.mxu0 %v823
      %1615 = vmatprep.subr.mxu0 0.0
      %1616 = vmatpush1.msra.mxu0 0.0
      %1617 = vmatprep.subr.mxu0 0.0
      %1618 = vmatpush1.msra.mxu0 0.0
      %1619 = vmatprep.subr.mxu0 0.0
      %1620 = vmatpush1.msra.mxu0 0.0
      %1621 = vmatprep.subr.mxu0 0.0
      %1622 = vmatpush1.msra.mxu0 0.0
      %1623 = vmatprep.subr.mxu0 0.0
      %1624 = vmatpush1.msra.mxu0 0.0
      %1625 = vmatprep.subr.mxu0 0.0
      %1626 = vmatpush1.msra.mxu0 0.0
      %1627 = vmatprep.subr.mxu0 0.0
      %1628 = vmatpush1.msra.mxu0 0.0
      %1629 = vmatprep.subr.mxu0 0.0
      %1630 = vmatpush1.msra.mxu0 0.0
      %1631 = vmatprep.subr.mxu0 0.0
      %1632 = vmatpush1.msra.mxu0 0.0
      %1633 = vmatprep.subr.mxu0 0.0
      %1634 = vmatpush1.msra.mxu0 0.0
      %1635 = vmatprep.subr.mxu0 0.0
      %1636 = vmatpush1.msra.mxu0 0.0
      %1637 = vmatprep.subr.mxu0 0.0
      %1638 = vmatpush1.msra.mxu0 0.0
      %1639 = vmatprep.subr.mxu0 0.0
      %1640 = vmatpush1.msra.mxu0 0.0
      %1641 = vmatprep.subr.mxu0 0.0
      %1642 = vmatpush1.msra.mxu0 0.0
      %1643 = vmatprep.subr.mxu0 0.0
      %1644 = vmatpush1.msra.mxu0 0.0
      %1645 = vmatprep.subr.mxu0 0.0
      %1646 = vmatpush1.msra.mxu0 0.0
      %1647 = vmatprep.subr.mxu0 0.0
      %1648 = vmatpush1.msra.mxu0 0.0
      %1649 = vmatprep.subr.mxu0 0.0
      %1650 = vmatpush1.msra.mxu0 0.0
      %1651 = vmatprep.subr.mxu0 0.0
      %1652 = vmatpush1.msra.mxu0 0.0
      %1653 = vmatprep.subr.mxu0 0.0
      %1654 = vmatpush1.msra.mxu0 0.0
      %1655 = vmatprep.subr.mxu0 0.0
      %1656 = vmatpush1.msra.mxu0 0.0
      %1657 = vmatprep.subr.mxu0 0.0
      %1658 = vmatpush1.msra.mxu0 0.0
      %1659 = vmatprep.subr.mxu0 0.0
      %1660 = vmatpush1.msra.mxu0 0.0
      %1661 = vmatprep.subr.mxu0 0.0
      %1662 = vmatpush1.msra.mxu0 0.0
      %1663 = vmatprep.mubr.f32.mxu0 0.0
      %1664 = vmatmul.mubr.f32.gmra.mrb[0].mxu0 %v1576
      %v1665 = vpop.f32.mrb[0].mxu0
      %v1666 = vadd.f32 0.0, %v1665
      %v1667 = vpop.f32.mrb[0].mxu0
      %1668 = vmatprep.mubr.f32.mxu0 0.0
      %1669 = vmatmul.mubr.f32.gmra.mrb[0].mxu0 %v1579
      %v1670 = vpop.f32.mrb[0].mxu0
      %v1671 = vadd.f32 0.0, %v1670
      %v1672 = vpop.f32.mrb[0].mxu0
      %1673 = vmatprep.mubr.f32.mxu0 0.0
      %1674 = vmatmul.mubr.f32.gmra.mrb[0].mxu0 %v1582
      %v1675 = vpop.f32.mrb[0].mxu0
      %v1676 = vadd.f32 0.0, %v1675
      %v1677 = vpop.f32.mrb[0].mxu0
      %1678 = vmatprep.mubr.f32.mxu0 0.0
      %1679 = vmatmul.mubr.f32.gmra.mrb[0].mxu0 %v1585
      %v1680 = vpop.f32.mrb[0].mxu0
      %v1681 = vadd.f32 0.0, %v1680
      %v1682 = vpop.f32.mrb[0].mxu0
      %1683 = vmatprep.mubr.f32.mxu0 0.0
      %1684 = vmatmul.mubr.f32.gmra.mrb[0].mxu0 %v1588
      %v1685 = vpop.f32.mrb[0].mxu0
      %v1686 = vadd.f32 0.0, %v1685
      %v1687 = vpop.f32.mrb[0].mxu0
      %1688 = vmatprep.mubr.f32.mxu0 0.0
      %1689 = vmatmul.mubr.f32.gmra.mrb[0].mxu0 %v1591
      %v1690 = vpop.f32.mrb[0].mxu0
      %v1691 = vadd.f32 0.0, %v1690
      %v1692 = vpop.f32.mrb[0].mxu0
      %1693 = vmatprep.mubr.f32.mxu0 0.0
      %1694 = vmatmul.mubr.f32.gmra.mrb[0].mxu0 %v1594
      %v1695 = vpop.f32.mrb[0].mxu0
      %v1696 = vadd.f32 0.0, %v1695
      %v1697 = vpop.f32.mrb[0].mxu0
      %1698 = vmatprep.mubr.f32.mxu0 0.0
      %1699 = vmatmul.mubr.f32.gmra.mrb[0].mxu0 %v1597
      %v1700 = vpop.f32.mrb[0].mxu0
      %v1701 = vadd.f32 0.0, %v1700
      %v1702 = vpop.f32.mrb[0].mxu0
      %1703 = vdwg.mxu0
      %1704 = vxpose.xlu0.b32.start [1/16] %v1345, 128
      %1705 = vxpose.xlu0.b32.cont [2/16] %v1346, 128
      %1706 = vxpose.xlu0.b32.cont [3/16] %v1347, 128
      %1707 = vxpose.xlu0.b32.cont [4/16] %v1348, 128
      %1708 = vxpose.xlu0.b32.cont [5/16] 0.0, 128
      %1709 = vxpose.xlu0.b32.cont [6/16] 0.0, 128
      %1710 = vxpose.xlu0.b32.cont [7/16] 0.0, 128
      %1711 = vxpose.xlu0.b32.cont [8/16] 0.0, 128
      %1712 = vxpose.xlu0.b32.cont [9/16] 0.0, 128
      %1713 = vxpose.xlu0.b32.cont [10/16] 0.0, 128
      %1714 = vxpose.xlu0.b32.cont [11/16] 0.0, 128
      %1715 = vxpose.xlu0.b32.cont [12/16] 0.0, 128
      %1716 = vxpose.xlu0.b32.cont [13/16] 0.0, 128
      %1717 = vxpose.xlu0.b32.cont [14/16] 0.0, 128
      %1718 = vxpose.xlu0.b32.cont [15/16] 0.0, 128
      %1719 = vxpose.xlu0.b32.end [16/16] 0.0, 128
      %v1720 = vpop.trf.xlu0
      %v1721 = vpop.trf.xlu0
      %v1722 = vpop.trf.xlu0
      %v1723 = vpop.trf.xlu0
      %v1724 = vpop.trf.xlu0
      %v1725 = vpop.trf.xlu0
      %v1726 = vpop.trf.xlu0
      %v1727 = vpop.trf.xlu0
      %v1728 = vpop.trf.xlu0
      %v1729 = vpop.trf.xlu0
      %v1730 = vpop.trf.xlu0
      %v1731 = vpop.trf.xlu0
      %v1732 = vpop.trf.xlu0
      %v1733 = vpop.trf.xlu0
      %v1734 = vpop.trf.xlu0
      %v1735 = vpop.trf.xlu0
      %v1737 = vsel %vm918, %v1720, 0
      %v1740 = vsel %vm918, %v1721, 0
      %v1743 = vsel %vm918, %v1722, 0
      %v1746 = vsel %vm918, %v1723, 0
      %v1749 = vsel %vm918, %v1724, 0
      %v1752 = vsel %vm918, %v1725, 0
      %v1755 = vsel %vm918, %v1726, 0
      %v1758 = vsel %vm918, %v1727, 0
      %1760 = vmatprep.subr.mxu0 0.0
      %1761 = vmatpush1.msra.mxu0 %v1561
      %1762 = vmatprep.subr.mxu0 0.0
      %1763 = vmatpush1.msra.mxu0 %v1564
      %1764 = vmatprep.subr.mxu0 0.0
      %1765 = vmatpush1.msra.mxu0 %v1569
      %1766 = vmatprep.subr.mxu0 0.0
      %1767 = vmatpush1.msra.mxu0 %v1572
      %1768 = vmatprep.subr.mxu0 0.0
      %1769 = vmatpush1.msra.mxu0 0.0
      %1770 = vmatprep.subr.mxu0 0.0
      %1771 = vmatpush1.msra.mxu0 0.0
      %1772 = vmatprep.subr.mxu0 0.0
      %1773 = vmatpush1.msra.mxu0 0.0
      %1774 = vmatprep.subr.mxu0 0.0
      %1775 = vmatpush1.msra.mxu0 0.0
      %1776 = vmatprep.subr.mxu0 0.0
      %1777 = vmatpush1.msra.mxu0 0.0
      %1778 = vmatprep.subr.mxu0 0.0
      %1779 = vmatpush1.msra.mxu0 0.0
      %1780 = vmatprep.subr.mxu0 0.0
      %1781 = vmatpush1.msra.mxu0 0.0
      %1782 = vmatprep.subr.mxu0 0.0
      %1783 = vmatpush1.msra.mxu0 0.0
      %1784 = vmatprep.subr.mxu0 0.0
      %1785 = vmatpush1.msra.mxu0 0.0
      %1786 = vmatprep.subr.mxu0 0.0
      %1787 = vmatpush1.msra.mxu0 0.0
      %1788 = vmatprep.subr.mxu0 0.0
      %1789 = vmatpush1.msra.mxu0 0.0
      %1790 = vmatprep.subr.mxu0 0.0
      %1791 = vmatpush1.msra.mxu0 0.0
      %1792 = vmatprep.subr.mxu0 0.0
      %1793 = vmatpush1.msra.mxu0 0.0
      %1794 = vmatprep.subr.mxu0 0.0
      %1795 = vmatpush1.msra.mxu0 0.0
      %1796 = vmatprep.subr.mxu0 0.0
      %1797 = vmatpush1.msra.mxu0 0.0
      %1798 = vmatprep.subr.mxu0 0.0
      %1799 = vmatpush1.msra.mxu0 0.0
      %1800 = vmatprep.subr.mxu0 0.0
      %1801 = vmatpush1.msra.mxu0 0.0
      %1802 = vmatprep.subr.mxu0 0.0
      %1803 = vmatpush1.msra.mxu0 0.0
      %1804 = vmatprep.subr.mxu0 0.0
      %1805 = vmatpush1.msra.mxu0 0.0
      %1806 = vmatprep.subr.mxu0 0.0
      %1807 = vmatpush1.msra.mxu0 0.0
      %1808 = vmatprep.subr.mxu0 0.0
      %1809 = vmatpush1.msra.mxu0 0.0
      %1810 = vmatprep.subr.mxu0 0.0
      %1811 = vmatpush1.msra.mxu0 0.0
      %1812 = vmatprep.subr.mxu0 0.0
      %1813 = vmatpush1.msra.mxu0 0.0
      %1814 = vmatprep.subr.mxu0 0.0
      %1815 = vmatpush1.msra.mxu0 0.0
      %1816 = vmatprep.subr.mxu0 0.0
      %1817 = vmatpush1.msra.mxu0 0.0
      %1818 = vmatprep.subr.mxu0 0.0
      %1819 = vmatpush1.msra.mxu0 0.0
      %1820 = vmatprep.subr.mxu0 0.0
      %1821 = vmatpush1.msra.mxu0 0.0
      %1822 = vmatprep.subr.mxu0 0.0
      %1823 = vmatpush1.msra.mxu0 0.0
      %1824 = vmatprep.mubr.f32.mxu0 0.0
      %1825 = vmatmul.mubr.f32.gmra.mrb[0].mxu0 %v1737
      %v1826 = vpop.f32.mrb[0].mxu0
      %v1827 = vadd.f32 0.0, %v1826
      %v1828 = vpop.f32.mrb[0].mxu0
      %1829 = vmatprep.mubr.f32.mxu0 0.0
      %1830 = vmatmul.mubr.f32.gmra.mrb[0].mxu0 %v1740
      %v1831 = vpop.f32.mrb[0].mxu0
      %v1832 = vadd.f32 0.0, %v1831
      %v1833 = vpop.f32.mrb[0].mxu0
      %1834 = vmatprep.mubr.f32.mxu0 0.0
      %1835 = vmatmul.mubr.f32.gmra.mrb[0].mxu0 %v1743
      %v1836 = vpop.f32.mrb[0].mxu0
      %v1837 = vadd.f32 0.0, %v1836
      %v1838 = vpop.f32.mrb[0].mxu0
      %1839 = vmatprep.mubr.f32.mxu0 0.0
      %1840 = vmatmul.mubr.f32.gmra.mrb[0].mxu0 %v1746
      %v1841 = vpop.f32.mrb[0].mxu0
      %v1842 = vadd.f32 0.0, %v1841
      %v1843 = vpop.f32.mrb[0].mxu0
      %1844 = vmatprep.mubr.f32.mxu0 0.0
      %1845 = vmatmul.mubr.f32.gmra.mrb[0].mxu0 %v1749
      %v1846 = vpop.f32.mrb[0].mxu0
      %v1847 = vadd.f32 0.0, %v1846
      %v1848 = vpop.f32.mrb[0].mxu0
      %1849 = vmatprep.mubr.f32.mxu0 0.0
      %1850 = vmatmul.mubr.f32.gmra.mrb[0].mxu0 %v1752
      %v1851 = vpop.f32.mrb[0].mxu0
      %v1852 = vadd.f32 0.0, %v1851
      %v1853 = vpop.f32.mrb[0].mxu0
      %1854 = vmatprep.mubr.f32.mxu0 0.0
      %1855 = vmatmul.mubr.f32.gmra.mrb[0].mxu0 %v1755
      %v1856 = vpop.f32.mrb[0].mxu0
      %v1857 = vadd.f32 0.0, %v1856
      %v1858 = vpop.f32.mrb[0].mxu0
      %1859 = vmatprep.mubr.f32.mxu0 0.0
      %1860 = vmatmul.mubr.f32.gmra.mrb[0].mxu0 %v1758
      %v1861 = vpop.f32.mrb[0].mxu0
      %v1862 = vadd.f32 0.0, %v1861
      %v1863 = vpop.f32.mrb[0].mxu0
      %1864 = vdwg.mxu0
      %v1865 = vmul.f32 %v1325, %v1827
      %v1866 = vmul.f32 %v1326, %v1832
      %v1867 = vmul.f32 %v1327, %v1837
      %v1868 = vmul.f32 %v1328, %v1842
      %v1869 = vmul.f32 %v1329, %v1847
      %v1870 = vmul.f32 %v1330, %v1852
      %v1871 = vmul.f32 %v1331, %v1857
      %v1872 = vmul.f32 %v1332, %v1862
      %v1873 = vsub.f32 1.0, %v1325
      %v1874 = vsub.f32 1.0, %v1326
      %v1875 = vsub.f32 1.0, %v1327
      %v1876 = vsub.f32 1.0, %v1328
      %v1877 = vsub.f32 1.0, %v1329
      %v1878 = vsub.f32 1.0, %v1330
      %v1879 = vsub.f32 1.0, %v1331
      %v1880 = vsub.f32 1.0, %v1332
      %v1881 = vmul.f32 %v1873, %v1666
      %v1882 = vmul.f32 %v1874, %v1671
      %v1883 = vmul.f32 %v1875, %v1676
      %v1884 = vmul.f32 %v1876, %v1681
      %v1885 = vmul.f32 %v1877, %v1686
      %v1886 = vmul.f32 %v1878, %v1691
      %v1887 = vmul.f32 %v1879, %v1696
      %v1888 = vmul.f32 %v1880, %v1701
      %v1889 = vadd.f32 %v1865, %v1881
      %v1890 = vadd.f32 %v1866, %v1882
      %v1891 = vadd.f32 %v1867, %v1883
      %v1892 = vadd.f32 %v1868, %v1884
      %v1893 = vadd.f32 %v1869, %v1885
      %v1894 = vadd.f32 %v1870, %v1886
      %v1895 = vadd.f32 %v1871, %v1887
      %v1896 = vadd.f32 %v1872, %v1888
      %1901 = vrot.lane.b32.xlu0 %v906, 96
      %v1902 = vpop.permute.xlu0 %1901
      %1903 = vrot.lane.b32.xlu0 %v907, 96
      %v1904 = vpop.permute.xlu0 %1903
      %1905 = vrot.lane.b32.xlu0 %v908, 96
      %v1906 = vpop.permute.xlu0 %1905
      %1907 = vrot.lane.b32.xlu0 %v909, 96
      %v1908 = vpop.permute.xlu0 %1907
      %1913 = vrot.lane.b32.xlu0 %v910, 96
      %v1914 = vpop.permute.xlu0 %1913
      %1915 = vrot.lane.b32.xlu0 %v911, 96
      %v1916 = vpop.permute.xlu0 %1915
      %1917 = vrot.lane.b32.xlu0 %v912, 96
      %v1918 = vpop.permute.xlu0 %1917
      %1919 = vrot.lane.b32.xlu0 %v913, 96
      %v1920 = vpop.permute.xlu0 %1919
      %v1922 = vsel %vm918, %v1902, 0
      %v1925 = vsel %vm918, %v1904, 0
      %v1928 = vsel %vm918, %v1906, 0
      %v1931 = vsel %vm918, %v1908, 0
      %v1934 = vsel %vm918, %v1914, 0
      %v1937 = vsel %vm918, %v1916, 0
      %v1940 = vsel %vm918, %v1918, 0
      %v1943 = vsel %vm918, %v1920, 0
      %1945 = vmatprep.subr.bf16.mxu0 0
      %1946 = vmatpush1.bf16.xpose.msra.mxu0 %v1934
      %1947 = vmatprep.subr.bf16.mxu0 0
      %1948 = vmatpush1.bf16.xpose.msra.mxu0 %v1937
      %1949 = vmatprep.subr.bf16.mxu0 0
      %1950 = vmatpush1.bf16.xpose.msra.mxu0 %v1940
      %1951 = vmatprep.subr.bf16.mxu0 0
      %1952 = vmatpush1.bf16.xpose.msra.mxu0 %v1943
      %1953 = vmatprep.subr.bf16.mxu0 0
      %1954 = vmatpush1.bf16.xpose.msra.mxu0 0
      %1955 = vmatprep.subr.bf16.mxu0 0
      %1956 = vmatpush1.bf16.xpose.msra.mxu0 0
      %1957 = vmatprep.subr.bf16.mxu0 0
      %1958 = vmatpush1.bf16.xpose.msra.mxu0 0
      %1959 = vmatprep.subr.bf16.mxu0 0
      %1960 = vmatpush1.bf16.xpose.msra.mxu0 0
      %1961 = vmatprep.subr.bf16.mxu0 0
      %1962 = vmatpush1.bf16.xpose.msra.mxu0 0
      %1963 = vmatprep.subr.bf16.mxu0 0
      %1964 = vmatpush1.bf16.xpose.msra.mxu0 0
      %1965 = vmatprep.subr.bf16.mxu0 0
      %1966 = vmatpush1.bf16.xpose.msra.mxu0 0
      %1967 = vmatprep.subr.bf16.mxu0 0
      %1968 = vmatpush1.bf16.xpose.msra.mxu0 0
      %1969 = vmatprep.subr.bf16.mxu0 0
      %1970 = vmatpush1.bf16.xpose.msra.mxu0 0
      %1971 = vmatprep.subr.bf16.mxu0 0
      %1972 = vmatpush1.bf16.xpose.msra.mxu0 0
      %1973 = vmatprep.subr.bf16.mxu0 0
      %1974 = vmatpush1.bf16.xpose.msra.mxu0 0
      %1975 = vmatprep.subr.bf16.mxu0 0
      %1976 = vmatpush1.bf16.xpose.msra.mxu0 0
      %1977 = vmatprep.mubr.bf16.mxu0 0
      %1978 = vmatmul.mubr.bf16.gmra.mrb[0].mxu0 %v1922
      %v1979 = vpop.f32.mrb[0].mxu0
      %v1980 = vadd.f32 0.0, %v1979
      %v1981 = vpop.f32.mrb[0].mxu0
      %v1982 = vpop.f32.mrb[0].mxu0
      %v1983 = vadd.f32 0.0, %v1982
      %v1984 = vpop.f32.mrb[0].mxu0
      %1985 = vmatprep.mubr.bf16.mxu0 0
      %1986 = vmatmul.mubr.bf16.gmra.mrb[0].mxu0 %v1925
      %v1987 = vpop.f32.mrb[0].mxu0
      %v1988 = vadd.f32 0.0, %v1987
      %v1989 = vpop.f32.mrb[0].mxu0
      %v1990 = vpop.f32.mrb[0].mxu0
      %v1991 = vadd.f32 0.0, %v1990
      %v1992 = vpop.f32.mrb[0].mxu0
      %1993 = vmatprep.mubr.bf16.mxu0 0
      %1994 = vmatmul.mubr.bf16.gmra.mrb[0].mxu0 %v1928
      %v1995 = vpop.f32.mrb[0].mxu0
      %v1996 = vadd.f32 0.0, %v1995
      %v1997 = vpop.f32.mrb[0].mxu0
      %v1998 = vpop.f32.mrb[0].mxu0
      %v1999 = vadd.f32 0.0, %v1998
      %v2000 = vpop.f32.mrb[0].mxu0
      %2001 = vmatprep.mubr.bf16.mxu0 0
      %2002 = vmatmul.mubr.bf16.gmra.mrb[0].mxu0 %v1931
      %v2003 = vpop.f32.mrb[0].mxu0
      %v2004 = vadd.f32 0.0, %v2003
      %v2005 = vpop.f32.mrb[0].mxu0
      %v2006 = vpop.f32.mrb[0].mxu0
      %v2007 = vadd.f32 0.0, %v2006
      %v2008 = vpop.f32.mrb[0].mxu0
      %2009 = vdwg.mxu0
      %v2010 = vadd.f32 %v1980, %v834
      %v2011 = vadd.f32 %v1983, %v835
      %v2012 = vadd.f32 %v1988, %v836
      %v2013 = vadd.f32 %v1991, %v837
      %v2014 = vadd.f32 %v1996, %v838
      %v2015 = vadd.f32 %v1999, %v839
      %v2016 = vadd.f32 %v2004, %v840
      %v2017 = vadd.f32 %v2007, %v841
      %v2018 = vsel %vm1016, %v2010, -inf
      %2019 = vmax.xlane.f32.xlu0 %v2018
      %v2020 = vpop.xlane.xlu0 %2019
      %v2021 = vsel %vm1016, %v2011, -inf
      %2022 = vmax.xlane.f32.xlu0 %v2021
      %v2023 = vpop.xlane.xlu0 %2022
      %v2024 = vsel %vm1016, %v2012, -inf
      %2025 = vmax.xlane.f32.xlu0 %v2024
      %v2026 = vpop.xlane.xlu0 %2025
      %v2027 = vsel %vm1016, %v2013, -inf
      %2028 = vmax.xlane.f32.xlu0 %v2027
      %v2029 = vpop.xlane.xlu0 %2028
      %v2030 = vsel %vm1016, %v2014, -inf
      %2031 = vmax.xlane.f32.xlu0 %v2030
      %v2032 = vpop.xlane.xlu0 %2031
      %v2033 = vsel %vm1016, %v2015, -inf
      %2034 = vmax.xlane.f32.xlu0 %v2033
      %v2035 = vpop.xlane.xlu0 %2034
      %v2036 = vsel %vm1016, %v2016, -inf
      %2037 = vmax.xlane.f32.xlu0 %v2036
      %v2038 = vpop.xlane.xlu0 %2037
      %v2039 = vsel %vm1016, %v2017, -inf
      %2040 = vmax.xlane.f32.xlu0 %v2039
      %v2041 = vpop.xlane.xlu0 %2040
      %2046 = vmatprep.subr.bf16.mxu0 0
      %2047 = vmatpush1.bf16.msra.mxu0 %v1914
      %2048 = vmatprep.subr.bf16.mxu0 0
      %2049 = vmatpush1.bf16.msra.mxu0 %v1916
      %2050 = vmatprep.subr.bf16.mxu0 0
      %2051 = vmatpush1.bf16.msra.mxu0 %v1918
      %2052 = vmatprep.subr.bf16.mxu0 0
      %2053 = vmatpush1.bf16.msra.mxu0 %v1920
      %2054 = vmatprep.subr.bf16.mxu0 0
      %2055 = vmatpush1.bf16.msra.mxu0 0
      %2056 = vmatprep.subr.bf16.mxu0 0
      %2057 = vmatpush1.bf16.msra.mxu0 0
      %2058 = vmatprep.subr.bf16.mxu0 0
      %2059 = vmatpush1.bf16.msra.mxu0 0
      %2060 = vmatprep.subr.bf16.mxu0 0
      %2061 = vmatpush1.bf16.msra.mxu0 0
      %2062 = vmatprep.subr.bf16.mxu0 0
      %2063 = vmatpush1.bf16.msra.mxu0 0
      %2064 = vmatprep.subr.bf16.mxu0 0
      %2065 = vmatpush1.bf16.msra.mxu0 0
      %2066 = vmatprep.subr.bf16.mxu0 0
      %2067 = vmatpush1.bf16.msra.mxu0 0
      %2068 = vmatprep.subr.bf16.mxu0 0
      %2069 = vmatpush1.bf16.msra.mxu0 0
      %2070 = vmatprep.subr.bf16.mxu0 0
      %2071 = vmatpush1.bf16.msra.mxu0 0
      %2072 = vmatprep.subr.bf16.mxu0 0
      %2073 = vmatpush1.bf16.msra.mxu0 0
      %2074 = vmatprep.subr.bf16.mxu0 0
      %2075 = vmatpush1.bf16.msra.mxu0 0
      %2076 = vmatprep.subr.bf16.mxu0 0
      %2077 = vmatpush1.bf16.msra.mxu0 0
      %2078 = vmatprep.mubr.bf16.mxu0 0
      %2079 = vmatmul.mubr.bf16.gmra.mrb[0].mxu0 %v1062
      %v2080 = vpop.f32.mrb[0].mxu0
      %v2081 = vadd.f32 0.0, %v2080
      %v2082 = vpop.f32.mrb[0].mxu0
      %v2083 = vpop.f32.mrb[0].mxu0
      %v2084 = vadd.f32 0.0, %v2083
      %v2085 = vpop.f32.mrb[0].mxu0
      %2086 = vmatprep.mubr.bf16.mxu0 0
      %2087 = vmatmul.mubr.bf16.gmra.mrb[0].mxu0 %v1065
      %v2088 = vpop.f32.mrb[0].mxu0
      %v2089 = vadd.f32 0.0, %v2088
      %v2090 = vpop.f32.mrb[0].mxu0
      %v2091 = vpop.f32.mrb[0].mxu0
      %v2092 = vadd.f32 0.0, %v2091
      %v2093 = vpop.f32.mrb[0].mxu0
      %2094 = vmatprep.mubr.bf16.mxu0 0
      %2095 = vmatmul.mubr.bf16.gmra.mrb[0].mxu0 %v1068
      %v2096 = vpop.f32.mrb[0].mxu0
      %v2097 = vadd.f32 0.0, %v2096
      %v2098 = vpop.f32.mrb[0].mxu0
      %v2099 = vpop.f32.mrb[0].mxu0
      %v2100 = vadd.f32 0.0, %v2099
      %v2101 = vpop.f32.mrb[0].mxu0
      %2102 = vmatprep.mubr.bf16.mxu0 0
      %2103 = vmatmul.mubr.bf16.gmra.mrb[0].mxu0 %v1071
      %v2104 = vpop.f32.mrb[0].mxu0
      %v2105 = vadd.f32 0.0, %v2104
      %v2106 = vpop.f32.mrb[0].mxu0
      %v2107 = vpop.f32.mrb[0].mxu0
      %v2108 = vadd.f32 0.0, %v2107
      %v2109 = vpop.f32.mrb[0].mxu0
      %2110 = vdwg.mxu0
      %2119 = vrot.lane.b32.xlu0 %v2081, 32
      %v2120 = vpop.permute.xlu0 %2119
      %2121 = vrot.lane.b32.xlu0 %v2084, 32
      %v2122 = vpop.permute.xlu0 %2121
      %2123 = vrot.lane.b32.xlu0 %v2089, 32
      %v2124 = vpop.permute.xlu0 %2123
      %2125 = vrot.lane.b32.xlu0 %v2092, 32
      %v2126 = vpop.permute.xlu0 %2125
      %2127 = vrot.lane.b32.xlu0 %v2097, 32
      %v2128 = vpop.permute.xlu0 %2127
      %2129 = vrot.lane.b32.xlu0 %v2100, 32
      %v2130 = vpop.permute.xlu0 %2129
      %2131 = vrot.lane.b32.xlu0 %v2105, 32
      %v2132 = vpop.permute.xlu0 %2131
      %2133 = vrot.lane.b32.xlu0 %v2108, 32
      %v2134 = vpop.permute.xlu0 %2133
      %v2143 = vmul.f32 %v723, %v2120
      %v2144 = vmul.f32 %v727, %v2122
      %v2145 = vmul.f32 %v733, %v2124
      %v2146 = vmul.f32 %v737, %v2126
      %v2147 = vmul.f32 %v743, %v2128
      %v2148 = vmul.f32 %v747, %v2130
      %v2149 = vmul.f32 %v753, %v2132
      %v2150 = vmul.f32 %v757, %v2134
      %2159 = vrot.lane.b32.xlu0 %v2143, 96
      %v2160 = vpop.permute.xlu0 %2159
      %2161 = vrot.lane.b32.xlu0 %v2144, 96
      %v2162 = vpop.permute.xlu0 %2161
      %2163 = vrot.lane.b32.xlu0 %v2145, 96
      %v2164 = vpop.permute.xlu0 %2163
      %2165 = vrot.lane.b32.xlu0 %v2146, 96
      %v2166 = vpop.permute.xlu0 %2165
      %2167 = vrot.lane.b32.xlu0 %v2147, 96
      %v2168 = vpop.permute.xlu0 %2167
      %2169 = vrot.lane.b32.xlu0 %v2148, 96
      %v2170 = vpop.permute.xlu0 %2169
      %2171 = vrot.lane.b32.xlu0 %v2149, 96
      %v2172 = vpop.permute.xlu0 %2171
      %2173 = vrot.lane.b32.xlu0 %v2150, 96
      %v2174 = vpop.permute.xlu0 %2173
      %v2183 = vsel %vm918, %v2160, 0.0
      %2184 = vadd.xlane.f32.xlu0 %v2183
      %v2185 = vpop.xlane.xlu0 %2184
      %v2186 = vsel %vm918, %v2162, 0.0
      %2187 = vadd.xlane.f32.xlu0 %v2186
      %v2188 = vpop.xlane.xlu0 %2187
      %v2189 = vsel %vm918, %v2164, 0.0
      %2190 = vadd.xlane.f32.xlu0 %v2189
      %v2191 = vpop.xlane.xlu0 %2190
      %v2192 = vsel %vm918, %v2166, 0.0
      %2193 = vadd.xlane.f32.xlu0 %v2192
      %v2194 = vpop.xlane.xlu0 %2193
      %v2195 = vsel %vm918, %v2168, 0.0
      %2196 = vadd.xlane.f32.xlu0 %v2195
      %v2197 = vpop.xlane.xlu0 %2196
      %v2198 = vsel %vm918, %v2170, 0.0
      %2199 = vadd.xlane.f32.xlu0 %v2198
      %v2200 = vpop.xlane.xlu0 %2199
      %v2201 = vsel %vm918, %v2172, 0.0
      %2202 = vadd.xlane.f32.xlu0 %v2201
      %v2203 = vpop.xlane.xlu0 %2202
      %v2204 = vsel %vm918, %v2174, 0.0
      %2205 = vadd.xlane.f32.xlu0 %v2204
      %v2206 = vpop.xlane.xlu0 %2205
      %v2207 = vmul.f32 %v2185, 0.015625
      %v2208 = vmul.f32 %v2188, 0.015625
      %v2209 = vmul.f32 %v2191, 0.015625
      %v2210 = vmul.f32 %v2194, 0.015625
      %v2211 = vmul.f32 %v2197, 0.015625
      %v2212 = vmul.f32 %v2200, 0.015625
      %v2213 = vmul.f32 %v2203, 0.015625
      %v2214 = vmul.f32 %v2206, 0.015625
      %v2215 = vsub.f32 %v2020, %v2207
      %v2216 = vsub.f32 %v2023, %v2208
      %v2217 = vsub.f32 %v2026, %v2209
      %v2218 = vsub.f32 %v2029, %v2210
      %v2219 = vsub.f32 %v2032, %v2211
      %v2220 = vsub.f32 %v2035, %v2212
      %v2221 = vsub.f32 %v2038, %v2213
      %v2222 = vsub.f32 %v2041, %v2214
      %v2223 = vmul.f32 %v2215, %v893
      %v2224 = vmul.f32 %v2216, %v894
      %v2225 = vmul.f32 %v2217, %v895
      %v2226 = vmul.f32 %v2218, %v896
      %v2227 = vmul.f32 %v2219, %v897
      %v2228 = vmul.f32 %v2220, %v898
      %v2229 = vmul.f32 %v2221, %v899
      %v2230 = vmul.f32 %v2222, %v900
      %v2231 = vsel %vm1016, %v2223, 0.0
      %v2232 = vsel %vm1016, %v2224, 0.0
      %v2233 = vadd.f32 %v2231, %v2232
      %v2234 = vsel %vm1016, %v2225, 0.0
      %v2235 = vadd.f32 %v2233, %v2234
      %v2236 = vsel %vm1016, %v2226, 0.0
      %v2237 = vadd.f32 %v2235, %v2236
      %v2238 = vsel %vm1016, %v2227, 0.0
      %v2239 = vadd.f32 %v2237, %v2238
      %v2240 = vsel %vm1016, %v2228, 0.0
      %v2241 = vadd.f32 %v2239, %v2240
      %v2242 = vsel %vm1016, %v2229, 0.0
      %v2243 = vadd.f32 %v2241, %v2242
      %v2244 = vsel %vm1016, %v2230, 0.0
      %v2245 = vadd.f32 %v2243, %v2244
      %v2246 = vrot.slane %v2245, 4
      %v2247 = vadd.f32 %v2245, %v2246
      %v2248 = vrot.slane %v2247, 2
      %v2249 = vadd.f32 %v2247, %v2248
      %v2250 = vrot.slane %v2249, 1
      %v2251 = vadd.f32 %v2249, %v2250
      %vm2252 = vcmp.gt.f32.partialorder %v2251, %v2215
      %vm2253 = vcmp.gt.f32.partialorder %v2251, %v2216
      %vm2254 = vcmp.gt.f32.partialorder %v2251, %v2217
      %vm2255 = vcmp.gt.f32.partialorder %v2251, %v2218
      %vm2256 = vcmp.gt.f32.partialorder %v2251, %v2219
      %vm2257 = vcmp.gt.f32.partialorder %v2251, %v2220
      %vm2258 = vcmp.gt.f32.partialorder %v2251, %v2221
      %vm2259 = vcmp.gt.f32.partialorder %v2251, %v2222
      %vm2260 = vcmp.eq.f32.partialorder %v2251, %v2215
      %vm2261 = vcmp.eq.f32.partialorder %v2251, %v2216
      %vm2262 = vcmp.eq.f32.partialorder %v2251, %v2217
      %vm2263 = vcmp.eq.f32.partialorder %v2251, %v2218
      %vm2264 = vcmp.eq.f32.partialorder %v2251, %v2219
      %vm2265 = vcmp.eq.f32.partialorder %v2251, %v2220
      %vm2266 = vcmp.eq.f32.partialorder %v2251, %v2221
      %vm2267 = vcmp.eq.f32.partialorder %v2251, %v2222
      %vm2268 = vmand %vm2260, %vm1231
      %vm2269 = vmand %vm2261, %vm1232
      %vm2270 = vmand %vm2262, %vm1233
      %vm2271 = vmand %vm2263, %vm1234
      %vm2272 = vmand %vm2264, %vm1235
      %vm2273 = vmand %vm2265, %vm1236
      %vm2274 = vmand %vm2266, %vm1237
      %vm2275 = vmand %vm2267, %vm1238
      %vm2276 = vmor %vm2252, %vm2268
      %vm2277 = vmor %vm2253, %vm2269
      %vm2278 = vmor %vm2254, %vm2270
      %vm2279 = vmor %vm2255, %vm2271
      %vm2280 = vmor %vm2256, %vm2272
      %vm2281 = vmor %vm2257, %vm2273
      %vm2282 = vmor %vm2258, %vm2274
      %vm2283 = vmor %vm2259, %vm2275
      %v2284 = vsel %vm2276, 1, 0
      %v2285 = vsel %vm2277, 1, 0
      %v2286 = vsel %vm2278, 1, 0
      %v2287 = vsel %vm2279, 1, 0
      %v2288 = vsel %vm2280, 1, 0
      %v2289 = vsel %vm2281, 1, 0
      %v2290 = vsel %vm2282, 1, 0
      %v2291 = vsel %vm2283, 1, 0
      %v2292 = vcvt.s32.f32 %v2284
      %v2293 = vcvt.s32.f32 %v2285
      %v2294 = vcvt.s32.f32 %v2286
      %v2295 = vcvt.s32.f32 %v2287
      %v2296 = vcvt.s32.f32 %v2288
      %v2297 = vcvt.s32.f32 %v2289
      %v2298 = vcvt.s32.f32 %v2290
      %v2299 = vcvt.s32.f32 %v2291
      %v2300 = vsel %vm1016, %v2292, 0.0
      %2301 = vadd.xlane.f32.xlu0 %v2300
      %v2302 = vpop.xlane.xlu0 %2301
      %v2303 = vsel %vm1016, %v2293, 0.0
      %2304 = vadd.xlane.f32.xlu0 %v2303
      %v2305 = vpop.xlane.xlu0 %2304
      %v2306 = vsel %vm1016, %v2294, 0.0
      %2307 = vadd.xlane.f32.xlu0 %v2306
      %v2308 = vpop.xlane.xlu0 %2307
      %v2309 = vsel %vm1016, %v2295, 0.0
      %2310 = vadd.xlane.f32.xlu0 %v2309
      %v2311 = vpop.xlane.xlu0 %2310
      %v2312 = vsel %vm1016, %v2296, 0.0
      %2313 = vadd.xlane.f32.xlu0 %v2312
      %v2314 = vpop.xlane.xlu0 %2313
      %v2315 = vsel %vm1016, %v2297, 0.0
      %2316 = vadd.xlane.f32.xlu0 %v2315
      %v2317 = vpop.xlane.xlu0 %2316
      %v2318 = vsel %vm1016, %v2298, 0.0
      %2319 = vadd.xlane.f32.xlu0 %v2318
      %v2320 = vpop.xlane.xlu0 %2319
      %v2321 = vsel %vm1016, %v2299, 0.0
      %2322 = vadd.xlane.f32.xlu0 %v2321
      %v2323 = vpop.xlane.xlu0 %2322
      %v2324 = vadd.f32 %v2300, %v2303
      %v2325 = vadd.f32 %v2324, %v2306
      %v2326 = vadd.f32 %v2325, %v2309
      %v2327 = vadd.f32 %v2326, %v2312
      %v2328 = vadd.f32 %v2327, %v2315
      %v2329 = vadd.f32 %v2328, %v2318
      %v2330 = vadd.f32 %v2329, %v2321
      %v2331 = vrot.slane %v2330, 4
      %v2332 = vadd.f32 %v2330, %v2331
      %v2333 = vrot.slane %v2332, 2
      %v2334 = vadd.f32 %v2332, %v2333
      %v2335 = vrot.slane %v2334, 1
      %v2336 = vadd.f32 %v2334, %v2335
      %v2337 = vsub.f32 63.0, %v2336
      %vm2338 = vcmp.lt.f32.partialorder %v2302, 25.0
      %vm2339 = vcmp.lt.f32.partialorder %v2305, 25.0
      %vm2340 = vcmp.lt.f32.partialorder %v2308, 25.0
      %vm2341 = vcmp.lt.f32.partialorder %v2311, 25.0
      %vm2342 = vcmp.lt.f32.partialorder %v2314, 25.0
      %vm2343 = vcmp.lt.f32.partialorder %v2317, 25.0
      %vm2344 = vcmp.lt.f32.partialorder %v2320, 25.0
      %vm2345 = vcmp.lt.f32.partialorder %v2323, 25.0
      %v2346 = vsel %vm2338, 1, 0
      %v2347 = vsel %vm2339, 1, 0
      %v2348 = vsel %vm2340, 1, 0
      %v2349 = vsel %vm2341, 1, 0
      %v2350 = vsel %vm2342, 1, 0
      %v2351 = vsel %vm2343, 1, 0
      %v2352 = vsel %vm2344, 1, 0
      %v2353 = vsel %vm2345, 1, 0
      %v2354 = vcvt.s32.f32 %v2346
      %v2355 = vcvt.s32.f32 %v2347
      %v2356 = vcvt.s32.f32 %v2348
      %v2357 = vcvt.s32.f32 %v2349
      %v2358 = vcvt.s32.f32 %v2350
      %v2359 = vcvt.s32.f32 %v2351
      %v2360 = vcvt.s32.f32 %v2352
      %v2361 = vcvt.s32.f32 %v2353
      %vm2362 = vcmp.eq.f32.partialorder %v2337, %v901
      %vm2363 = vcmp.eq.f32.partialorder %v2337, %v902
      %vm2364 = vcmp.eq.f32.partialorder %v2337, %v903
      %vm2365 = vcmp.eq.f32.partialorder %v2337, %v904
      %vm2366 = vmand %vm2362, %vm1337
      %vm2367 = vmand %vm2363, %vm1338
      %vm2368 = vmand %vm2364, %vm1339
      %vm2369 = vmand %vm2365, %vm1340
      %v2370 = vsel %vm2366, 1.0, 0.0
      %v2371 = vsel %vm2367, 1.0, 0.0
      %v2372 = vsel %vm2368, 1.0, 0.0
      %v2373 = vsel %vm2369, 1.0, 0.0
      %v2374 = vmul.f32 %v2370, %v905
      %v2375 = vmul.f32 %v2371, %v905
      %v2376 = vmul.f32 %v2372, %v905
      %v2377 = vmul.f32 %v2373, %v905
      %v2378 = vsel %vm1016, %v2374, 0.0
      %2379 = vadd.xlane.f32.xlu0 %v2378
      %v2380 = vpop.xlane.xlu0 %2379
      %v2381 = vsel %vm1016, %v2375, 0.0
      %2382 = vadd.xlane.f32.xlu0 %v2381
      %v2383 = vpop.xlane.xlu0 %2382
      %v2384 = vsel %vm1016, %v2376, 0.0
      %2385 = vadd.xlane.f32.xlu0 %v2384
      %v2386 = vpop.xlane.xlu0 %2385
      %v2387 = vsel %vm1016, %v2377, 0.0
      %2388 = vadd.xlane.f32.xlu0 %v2387
      %v2389 = vpop.xlane.xlu0 %2388
      %v2391 = vsel %vm1016, %v2370, 0
      %v2394 = vsel %vm1016, %v2371, 0
      %v2397 = vsel %vm1016, %v2372, 0
      %v2400 = vsel %vm1016, %v2373, 0
      %2402 = vmatprep.subr.mxu0 0.0
      %2403 = vmatpush1.msra.mxu0 %v1980
      %2404 = vmatprep.subr.mxu0 0.0
      %2405 = vmatpush1.msra.mxu0 %v1983
      %2406 = vmatprep.subr.mxu0 0.0
      %2407 = vmatpush1.msra.mxu0 %v1988
      %2408 = vmatprep.subr.mxu0 0.0
      %2409 = vmatpush1.msra.mxu0 %v1991
      %2410 = vmatprep.subr.mxu0 0.0
      %2411 = vmatpush1.msra.mxu0 %v1996
      %2412 = vmatprep.subr.mxu0 0.0
      %2413 = vmatpush1.msra.mxu0 %v1999
      %2414 = vmatprep.subr.mxu0 0.0
      %2415 = vmatpush1.msra.mxu0 %v2004
      %2416 = vmatprep.subr.mxu0 0.0
      %2417 = vmatpush1.msra.mxu0 %v2007
      %2418 = vmatprep.subr.mxu0 0.0
      %2419 = vmatpush1.msra.mxu0 0.0
      %2420 = vmatprep.subr.mxu0 0.0
      %2421 = vmatpush1.msra.mxu0 0.0
      %2422 = vmatprep.subr.mxu0 0.0
      %2423 = vmatpush1.msra.mxu0 0.0
      %2424 = vmatprep.subr.mxu0 0.0
      %2425 = vmatpush1.msra.mxu0 0.0
      %2426 = vmatprep.subr.mxu0 0.0
      %2427 = vmatpush1.msra.mxu0 0.0
      %2428 = vmatprep.subr.mxu0 0.0
      %2429 = vmatpush1.msra.mxu0 0.0
      %2430 = vmatprep.subr.mxu0 0.0
      %2431 = vmatpush1.msra.mxu0 0.0
      %2432 = vmatprep.subr.mxu0 0.0
      %2433 = vmatpush1.msra.mxu0 0.0
      %2434 = vmatprep.subr.mxu0 0.0
      %2435 = vmatpush1.msra.mxu0 0.0
      %2436 = vmatprep.subr.mxu0 0.0
      %2437 = vmatpush1.msra.mxu0 0.0
      %2438 = vmatprep.subr.mxu0 0.0
      %2439 = vmatpush1.msra.mxu0 0.0
      %2440 = vmatprep.subr.mxu0 0.0
      %2441 = vmatpush1.msra.mxu0 0.0
      %2442 = vmatprep.subr.mxu0 0.0
      %2443 = vmatpush1.msra.mxu0 0.0
      %2444 = vmatprep.subr.mxu0 0.0
      %2445 = vmatpush1.msra.mxu0 0.0
      %2446 = vmatprep.subr.mxu0 0.0
      %2447 = vmatpush1.msra.mxu0 0.0
      %2448 = vmatprep.subr.mxu0 0.0
      %2449 = vmatpush1.msra.mxu0 0.0
      %2450 = vmatprep.subr.mxu0 0.0
      %2451 = vmatpush1.msra.mxu0 0.0
      %2452 = vmatprep.subr.mxu0 0.0
      %2453 = vmatpush1.msra.mxu0 0.0
      %2454 = vmatprep.subr.mxu0 0.0
      %2455 = vmatpush1.msra.mxu0 0.0
      %2456 = vmatprep.subr.mxu0 0.0
      %2457 = vmatpush1.msra.mxu0 0.0
      %2458 = vmatprep.subr.mxu0 0.0
      %2459 = vmatpush1.msra.mxu0 0.0
      %2460 = vmatprep.subr.mxu0 0.0
      %2461 = vmatpush1.msra.mxu0 0.0
      %2462 = vmatprep.subr.mxu0 0.0
      %2463 = vmatpush1.msra.mxu0 0.0
      %2464 = vmatprep.subr.mxu0 0.0
      %2465 = vmatpush1.msra.mxu0 0.0
      %2466 = vmatprep.mubr.f32.mxu0 0.0
      %2467 = vmatmul.mubr.f32.gmra.mrb[0].mxu0 %v2391
      %v2468 = vpop.f32.mrb[0].mxu0
      %v2469 = vadd.f32 0.0, %v2468
      %v2470 = vpop.f32.mrb[0].mxu0
      %2471 = vmatprep.mubr.f32.mxu0 0.0
      %2472 = vmatmul.mubr.f32.gmra.mrb[0].mxu0 %v2394
      %v2473 = vpop.f32.mrb[0].mxu0
      %v2474 = vadd.f32 0.0, %v2473
      %v2475 = vpop.f32.mrb[0].mxu0
      %2476 = vmatprep.mubr.f32.mxu0 0.0
      %2477 = vmatmul.mubr.f32.gmra.mrb[0].mxu0 %v2397
      %v2478 = vpop.f32.mrb[0].mxu0
      %v2479 = vadd.f32 0.0, %v2478
      %v2480 = vpop.f32.mrb[0].mxu0
      %2481 = vmatprep.mubr.f32.mxu0 0.0
      %2482 = vmatmul.mubr.f32.gmra.mrb[0].mxu0 %v2400
      %v2483 = vpop.f32.mrb[0].mxu0
      %v2484 = vadd.f32 0.0, %v2483
      %v2485 = vpop.f32.mrb[0].mxu0
      %2486 = vdwg.mxu0
      %v2487 = vmul.f32 %v2469, 0.17677669
      %v2488 = vmul.f32 %v2474, 0.17677669
      %v2489 = vmul.f32 %v2479, 0.17677669
      %v2490 = vmul.f32 %v2484, 0.17677669
      %vm2491 = vcmp.gt.f32.partialorder %v905, %v2380
      %vm2492 = vcmp.gt.f32.partialorder %v905, %v2383
      %vm2493 = vcmp.gt.f32.partialorder %v905, %v2386
      %vm2494 = vcmp.gt.f32.partialorder %v905, %v2389
      %v2495 = vsel %vm2491, -1e+30, %v2487
      %v2496 = vsel %vm2492, -1e+30, %v2488
      %v2497 = vsel %vm2493, -1e+30, %v2489
      %v2498 = vsel %vm2494, -1e+30, %v2490
      %v2499 = vsel %vm1016, %v2495, -inf
      %2500 = vmax.xlane.f32.xlu0 %v2499
      %v2501 = vpop.xlane.xlu0 %2500
      %v2502 = vsel %vm1016, %v2496, -inf
      %2503 = vmax.xlane.f32.xlu0 %v2502
      %v2504 = vpop.xlane.xlu0 %2503
      %v2505 = vsel %vm1016, %v2497, -inf
      %2506 = vmax.xlane.f32.xlu0 %v2505
      %v2507 = vpop.xlane.xlu0 %2506
      %v2508 = vsel %vm1016, %v2498, -inf
      %2509 = vmax.xlane.f32.xlu0 %v2508
      %v2510 = vpop.xlane.xlu0 %2509
      %v2511 = vsub.f32 %v2495, %v2501
      %v2512 = vsub.f32 %v2496, %v2504
      %v2513 = vsub.f32 %v2497, %v2507
      %v2514 = vsub.f32 %v2498, %v2510
      %v2515 = vmul.f32 %v2511, 1.442695
      %v2516 = vpow.pop %v2515
      %v2517 = vmul.f32 %v2512, 1.442695
      %v2518 = vpow.pop %v2517
      %v2519 = vmul.f32 %v2513, 1.442695
      %v2520 = vpow.pop %v2519
      %v2521 = vmul.f32 %v2514, 1.442695
      %v2522 = vpow.pop %v2521
      %v2523 = vsel %vm1016, %v2516, 0.0
      %2524 = vadd.xlane.f32.xlu0 %v2523
      %v2525 = vpop.xlane.xlu0 %2524
      %v2526 = vsel %vm1016, %v2518, 0.0
      %2527 = vadd.xlane.f32.xlu0 %v2526
      %v2528 = vpop.xlane.xlu0 %2527
      %v2529 = vsel %vm1016, %v2520, 0.0
      %2530 = vadd.xlane.f32.xlu0 %v2529
      %v2531 = vpop.xlane.xlu0 %2530
      %v2532 = vsel %vm1016, %v2522, 0.0
      %2533 = vadd.xlane.f32.xlu0 %v2532
      %v2534 = vpop.xlane.xlu0 %2533
      %v2535 = vrcp.pop %v2525
      %v2536 = vrcp.pop %v2528
      %v2537 = vrcp.pop %v2531
      %v2538 = vrcp.pop %v2534
      %v2539 = vmul.f32 %v2516, %v2535
      %v2540 = vmul.f32 %v2518, %v2536
      %v2541 = vmul.f32 %v2520, %v2537
      %v2542 = vmul.f32 %v2522, %v2538
      %v2543 = vpack.c.bf16 %v2540, %v2539
      %v2544 = vpack.c.bf16 %v2542, %v2541
      %2549 = vrot.lane.b32.xlu0 %v914, 96
      %v2550 = vpop.permute.xlu0 %2549
      %2551 = vrot.lane.b32.xlu0 %v915, 96
      %v2552 = vpop.permute.xlu0 %2551
      %2553 = vrot.lane.b32.xlu0 %v916, 96
      %v2554 = vpop.permute.xlu0 %2553
      %2555 = vrot.lane.b32.xlu0 %v917, 96
      %v2556 = vpop.permute.xlu0 %2555
      %v2562 = vsel %vm1016, %v2543, 0
      %v2565 = vsel %vm1016, %v2544, 0
      %2567 = vmatprep.subr.bf16.mxu0 0
      %2568 = vmatpush1.bf16.msra.mxu0 %v2550
      %2569 = vmatprep.subr.bf16.mxu0 0
      %2570 = vmatpush1.bf16.msra.mxu0 %v2552
      %2571 = vmatprep.subr.bf16.mxu0 0
      %2572 = vmatpush1.bf16.msra.mxu0 %v2554
      %2573 = vmatprep.subr.bf16.mxu0 0
      %2574 = vmatpush1.bf16.msra.mxu0 %v2556
      %2575 = vmatprep.subr.bf16.mxu0 0
      %2576 = vmatpush1.bf16.msra.mxu0 0
      %2577 = vmatprep.subr.bf16.mxu0 0
      %2578 = vmatpush1.bf16.msra.mxu0 0
      %2579 = vmatprep.subr.bf16.mxu0 0
      %2580 = vmatpush1.bf16.msra.mxu0 0
      %2581 = vmatprep.subr.bf16.mxu0 0
      %2582 = vmatpush1.bf16.msra.mxu0 0
      %2583 = vmatprep.subr.bf16.mxu0 0
      %2584 = vmatpush1.bf16.msra.mxu0 0
      %2585 = vmatprep.subr.bf16.mxu0 0
      %2586 = vmatpush1.bf16.msra.mxu0 0
      %2587 = vmatprep.subr.bf16.mxu0 0
      %2588 = vmatpush1.bf16.msra.mxu0 0
      %2589 = vmatprep.subr.bf16.mxu0 0
      %2590 = vmatpush1.bf16.msra.mxu0 0
      %2591 = vmatprep.subr.bf16.mxu0 0
      %2592 = vmatpush1.bf16.msra.mxu0 0
      %2593 = vmatprep.subr.bf16.mxu0 0
      %2594 = vmatpush1.bf16.msra.mxu0 0
      %2595 = vmatprep.subr.bf16.mxu0 0
      %2596 = vmatpush1.bf16.msra.mxu0 0
      %2597 = vmatprep.subr.bf16.mxu0 0
      %2598 = vmatpush1.bf16.msra.mxu0 0
      %2599 = vmatprep.mubr.bf16.mxu0 0
      %2600 = vmatmul.mubr.bf16.gmra.mrb[0].mxu0 %v2562
      %v2601 = vpop.f32.mrb[0].mxu0
      %v2602 = vadd.f32 0.0, %v2601
      %v2603 = vpop.f32.mrb[0].mxu0
      %v2604 = vpop.f32.mrb[0].mxu0
      %v2605 = vadd.f32 0.0, %v2604
      %v2606 = vpop.f32.mrb[0].mxu0
      %2607 = vmatprep.mubr.bf16.mxu0 0
      %2608 = vmatmul.mubr.bf16.gmra.mrb[0].mxu0 %v2565
      %v2609 = vpop.f32.mrb[0].mxu0
      %v2610 = vadd.f32 0.0, %v2609
      %v2611 = vpop.f32.mrb[0].mxu0
      %v2612 = vpop.f32.mrb[0].mxu0
      %v2613 = vadd.f32 0.0, %v2612
      %v2614 = vpop.f32.mrb[0].mxu0
      %2615 = vdwg.mxu0
      %2624 = vrot.lane.b32.xlu0 %v796, 96
      %v2625 = vpop.permute.xlu0 %2624
      %2626 = vrot.lane.b32.xlu0 %v799, 96
      %v2627 = vpop.permute.xlu0 %2626
      %2628 = vrot.lane.b32.xlu0 %v804, 96
      %v2629 = vpop.permute.xlu0 %2628
      %2630 = vrot.lane.b32.xlu0 %v807, 96
      %v2631 = vpop.permute.xlu0 %2630
      %2632 = vrot.lane.b32.xlu0 %v812, 96
      %v2633 = vpop.permute.xlu0 %2632
      %2634 = vrot.lane.b32.xlu0 %v815, 96
      %v2635 = vpop.permute.xlu0 %2634
      %2636 = vrot.lane.b32.xlu0 %v820, 96
      %v2637 = vpop.permute.xlu0 %2636
      %2638 = vrot.lane.b32.xlu0 %v823, 96
      %v2639 = vpop.permute.xlu0 %2638
      %2648 = vmatprep.subr.mxu0 0.0
      %2649 = vmatpush1.msra.mxu0 %v2625
      %2650 = vmatprep.subr.mxu0 0.0
      %2651 = vmatpush1.msra.mxu0 %v2627
      %2652 = vmatprep.subr.mxu0 0.0
      %2653 = vmatpush1.msra.mxu0 %v2629
      %2654 = vmatprep.subr.mxu0 0.0
      %2655 = vmatpush1.msra.mxu0 %v2631
      %2656 = vmatprep.subr.mxu0 0.0
      %2657 = vmatpush1.msra.mxu0 %v2633
      %2658 = vmatprep.subr.mxu0 0.0
      %2659 = vmatpush1.msra.mxu0 %v2635
      %2660 = vmatprep.subr.mxu0 0.0
      %2661 = vmatpush1.msra.mxu0 %v2637
      %2662 = vmatprep.subr.mxu0 0.0
      %2663 = vmatpush1.msra.mxu0 %v2639
      %2664 = vmatprep.subr.mxu0 0.0
      %2665 = vmatpush1.msra.mxu0 0.0
      %2666 = vmatprep.subr.mxu0 0.0
      %2667 = vmatpush1.msra.mxu0 0.0
      %2668 = vmatprep.subr.mxu0 0.0
      %2669 = vmatpush1.msra.mxu0 0.0
      %2670 = vmatprep.subr.mxu0 0.0
      %2671 = vmatpush1.msra.mxu0 0.0
      %2672 = vmatprep.subr.mxu0 0.0
      %2673 = vmatpush1.msra.mxu0 0.0
      %2674 = vmatprep.subr.mxu0 0.0
      %2675 = vmatpush1.msra.mxu0 0.0
      %2676 = vmatprep.subr.mxu0 0.0
      %2677 = vmatpush1.msra.mxu0 0.0
      %2678 = vmatprep.subr.mxu0 0.0
      %2679 = vmatpush1.msra.mxu0 0.0
      %2680 = vmatprep.subr.mxu0 0.0
      %2681 = vmatpush1.msra.mxu0 0.0
      %2682 = vmatprep.subr.mxu0 0.0
      %2683 = vmatpush1.msra.mxu0 0.0
      %2684 = vmatprep.subr.mxu0 0.0
      %2685 = vmatpush1.msra.mxu0 0.0
      %2686 = vmatprep.subr.mxu0 0.0
      %2687 = vmatpush1.msra.mxu0 0.0
      %2688 = vmatprep.subr.mxu0 0.0
      %2689 = vmatpush1.msra.mxu0 0.0
      %2690 = vmatprep.subr.mxu0 0.0
      %2691 = vmatpush1.msra.mxu0 0.0
      %2692 = vmatprep.subr.mxu0 0.0
      %2693 = vmatpush1.msra.mxu0 0.0
      %2694 = vmatprep.subr.mxu0 0.0
      %2695 = vmatpush1.msra.mxu0 0.0
      %2696 = vmatprep.subr.mxu0 0.0
      %2697 = vmatpush1.msra.mxu0 0.0
      %2698 = vmatprep.subr.mxu0 0.0
      %2699 = vmatpush1.msra.mxu0 0.0
      %2700 = vmatprep.subr.mxu0 0.0
      %2701 = vmatpush1.msra.mxu0 0.0
      %2702 = vmatprep.subr.mxu0 0.0
      %2703 = vmatpush1.msra.mxu0 0.0
      %2704 = vmatprep.subr.mxu0 0.0
      %2705 = vmatpush1.msra.mxu0 0.0
      %2706 = vmatprep.subr.mxu0 0.0
      %2707 = vmatpush1.msra.mxu0 0.0
      %2708 = vmatprep.subr.mxu0 0.0
      %2709 = vmatpush1.msra.mxu0 0.0
      %2710 = vmatprep.subr.mxu0 0.0
      %2711 = vmatpush1.msra.mxu0 0.0
      %2712 = vmatprep.mubr.f32.mxu0 0.0
      %2713 = vmatmul.mubr.f32.gmra.mrb[0].mxu0 %v1576
      %v2714 = vpop.f32.mrb[0].mxu0
      %v2715 = vadd.f32 0.0, %v2714
      %v2716 = vpop.f32.mrb[0].mxu0
      %2717 = vmatprep.mubr.f32.mxu0 0.0
      %2718 = vmatmul.mubr.f32.gmra.mrb[0].mxu0 %v1579
      %v2719 = vpop.f32.mrb[0].mxu0
      %v2720 = vadd.f32 0.0, %v2719
      %v2721 = vpop.f32.mrb[0].mxu0
      %2722 = vmatprep.mubr.f32.mxu0 0.0
      %2723 = vmatmul.mubr.f32.gmra.mrb[0].mxu0 %v1582
      %v2724 = vpop.f32.mrb[0].mxu0
      %v2725 = vadd.f32 0.0, %v2724
      %v2726 = vpop.f32.mrb[0].mxu0
      %2727 = vmatprep.mubr.f32.mxu0 0.0
      %2728 = vmatmul.mubr.f32.gmra.mrb[0].mxu0 %v1585
      %v2729 = vpop.f32.mrb[0].mxu0
      %v2730 = vadd.f32 0.0, %v2729
      %v2731 = vpop.f32.mrb[0].mxu0
      %2732 = vmatprep.mubr.f32.mxu0 0.0
      %2733 = vmatmul.mubr.f32.gmra.mrb[0].mxu0 %v1588
      %v2734 = vpop.f32.mrb[0].mxu0
      %v2735 = vadd.f32 0.0, %v2734
      %v2736 = vpop.f32.mrb[0].mxu0
      %2737 = vmatprep.mubr.f32.mxu0 0.0
      %2738 = vmatmul.mubr.f32.gmra.mrb[0].mxu0 %v1591
      %v2739 = vpop.f32.mrb[0].mxu0
      %v2740 = vadd.f32 0.0, %v2739
      %v2741 = vpop.f32.mrb[0].mxu0
      %2742 = vmatprep.mubr.f32.mxu0 0.0
      %2743 = vmatmul.mubr.f32.gmra.mrb[0].mxu0 %v1594
      %v2744 = vpop.f32.mrb[0].mxu0
      %v2745 = vadd.f32 0.0, %v2744
      %v2746 = vpop.f32.mrb[0].mxu0
      %2747 = vmatprep.mubr.f32.mxu0 0.0
      %2748 = vmatmul.mubr.f32.gmra.mrb[0].mxu0 %v1597
      %v2749 = vpop.f32.mrb[0].mxu0
      %v2750 = vadd.f32 0.0, %v2749
      %v2751 = vpop.f32.mrb[0].mxu0
      %2752 = vdwg.mxu0
      %2753 = vxpose.xlu0.b32.start [1/16] %v2370, 128
      %2754 = vxpose.xlu0.b32.cont [2/16] %v2371, 128
      %2755 = vxpose.xlu0.b32.cont [3/16] %v2372, 128
      %2756 = vxpose.xlu0.b32.cont [4/16] %v2373, 128
      %2757 = vxpose.xlu0.b32.cont [5/16] 0.0, 128
      %2758 = vxpose.xlu0.b32.cont [6/16] 0.0, 128
      %2759 = vxpose.xlu0.b32.cont [7/16] 0.0, 128
      %2760 = vxpose.xlu0.b32.cont [8/16] 0.0, 128
      %2761 = vxpose.xlu0.b32.cont [9/16] 0.0, 128
      %2762 = vxpose.xlu0.b32.cont [10/16] 0.0, 128
      %2763 = vxpose.xlu0.b32.cont [11/16] 0.0, 128
      %2764 = vxpose.xlu0.b32.cont [12/16] 0.0, 128
      %2765 = vxpose.xlu0.b32.cont [13/16] 0.0, 128
      %2766 = vxpose.xlu0.b32.cont [14/16] 0.0, 128
      %2767 = vxpose.xlu0.b32.cont [15/16] 0.0, 128
      %2768 = vxpose.xlu0.b32.end [16/16] 0.0, 128
      %v2769 = vpop.trf.xlu0
      %v2770 = vpop.trf.xlu0
      %v2771 = vpop.trf.xlu0
      %v2772 = vpop.trf.xlu0
      %v2773 = vpop.trf.xlu0
      %v2774 = vpop.trf.xlu0
      %v2775 = vpop.trf.xlu0
      %v2776 = vpop.trf.xlu0
      %v2777 = vpop.trf.xlu0
      %v2778 = vpop.trf.xlu0
      %v2779 = vpop.trf.xlu0
      %v2780 = vpop.trf.xlu0
      %v2781 = vpop.trf.xlu0
      %v2782 = vpop.trf.xlu0
      %v2783 = vpop.trf.xlu0
      %v2784 = vpop.trf.xlu0
      %v2786 = vsel %vm918, %v2769, 0
      %v2789 = vsel %vm918, %v2770, 0
      %v2792 = vsel %vm918, %v2771, 0
      %v2795 = vsel %vm918, %v2772, 0
      %v2798 = vsel %vm918, %v2773, 0
      %v2801 = vsel %vm918, %v2774, 0
      %v2804 = vsel %vm918, %v2775, 0
      %v2807 = vsel %vm918, %v2776, 0
      %2809 = vmatprep.subr.mxu0 0.0
      %2810 = vmatpush1.msra.mxu0 %v2602
      %2811 = vmatprep.subr.mxu0 0.0
      %2812 = vmatpush1.msra.mxu0 %v2605
      %2813 = vmatprep.subr.mxu0 0.0
      %2814 = vmatpush1.msra.mxu0 %v2610
      %2815 = vmatprep.subr.mxu0 0.0
      %2816 = vmatpush1.msra.mxu0 %v2613
      %2817 = vmatprep.subr.mxu0 0.0
      %2818 = vmatpush1.msra.mxu0 0.0
      %2819 = vmatprep.subr.mxu0 0.0
      %2820 = vmatpush1.msra.mxu0 0.0
      %2821 = vmatprep.subr.mxu0 0.0
      %2822 = vmatpush1.msra.mxu0 0.0
      %2823 = vmatprep.subr.mxu0 0.0
      %2824 = vmatpush1.msra.mxu0 0.0
      %2825 = vmatprep.subr.mxu0 0.0
      %2826 = vmatpush1.msra.mxu0 0.0
      %2827 = vmatprep.subr.mxu0 0.0
      %2828 = vmatpush1.msra.mxu0 0.0
      %2829 = vmatprep.subr.mxu0 0.0
      %2830 = vmatpush1.msra.mxu0 0.0
      %2831 = vmatprep.subr.mxu0 0.0
      %2832 = vmatpush1.msra.mxu0 0.0
      %2833 = vmatprep.subr.mxu0 0.0
      %2834 = vmatpush1.msra.mxu0 0.0
      %2835 = vmatprep.subr.mxu0 0.0
      %2836 = vmatpush1.msra.mxu0 0.0
      %2837 = vmatprep.subr.mxu0 0.0
      %2838 = vmatpush1.msra.mxu0 0.0
      %2839 = vmatprep.subr.mxu0 0.0
      %2840 = vmatpush1.msra.mxu0 0.0
      %2841 = vmatprep.subr.mxu0 0.0
      %2842 = vmatpush1.msra.mxu0 0.0
      %2843 = vmatprep.subr.mxu0 0.0
      %2844 = vmatpush1.msra.mxu0 0.0
      %2845 = vmatprep.subr.mxu0 0.0
      %2846 = vmatpush1.msra.mxu0 0.0
      %2847 = vmatprep.subr.mxu0 0.0
      %2848 = vmatpush1.msra.mxu0 0.0
      %2849 = vmatprep.subr.mxu0 0.0
      %2850 = vmatpush1.msra.mxu0 0.0
      %2851 = vmatprep.subr.mxu0 0.0
      %2852 = vmatpush1.msra.mxu0 0.0
      %2853 = vmatprep.subr.mxu0 0.0
      %2854 = vmatpush1.msra.mxu0 0.0
      %2855 = vmatprep.subr.mxu0 0.0
      %2856 = vmatpush1.msra.mxu0 0.0
      %2857 = vmatprep.subr.mxu0 0.0
      %2858 = vmatpush1.msra.mxu0 0.0
      %2859 = vmatprep.subr.mxu0 0.0
      %2860 = vmatpush1.msra.mxu0 0.0
      %2861 = vmatprep.subr.mxu0 0.0
      %2862 = vmatpush1.msra.mxu0 0.0
      %2863 = vmatprep.subr.mxu0 0.0
      %2864 = vmatpush1.msra.mxu0 0.0
      %2865 = vmatprep.subr.mxu0 0.0
      %2866 = vmatpush1.msra.mxu0 0.0
      %2867 = vmatprep.subr.mxu0 0.0
      %2868 = vmatpush1.msra.mxu0 0.0
      %2869 = vmatprep.subr.mxu0 0.0
      %2870 = vmatpush1.msra.mxu0 0.0
      %2871 = vmatprep.subr.mxu0 0.0
      %2872 = vmatpush1.msra.mxu0 0.0
      %2873 = vmatprep.mubr.f32.mxu0 0.0
      %2874 = vmatmul.mubr.f32.gmra.mrb[0].mxu0 %v2786
      %v2875 = vpop.f32.mrb[0].mxu0
      %v2876 = vadd.f32 0.0, %v2875
      %v2877 = vpop.f32.mrb[0].mxu0
      %2878 = vmatprep.mubr.f32.mxu0 0.0
      %2879 = vmatmul.mubr.f32.gmra.mrb[0].mxu0 %v2789
      %v2880 = vpop.f32.mrb[0].mxu0
      %v2881 = vadd.f32 0.0, %v2880
      %v2882 = vpop.f32.mrb[0].mxu0
      %2883 = vmatprep.mubr.f32.mxu0 0.0
      %2884 = vmatmul.mubr.f32.gmra.mrb[0].mxu0 %v2792
      %v2885 = vpop.f32.mrb[0].mxu0
      %v2886 = vadd.f32 0.0, %v2885
      %v2887 = vpop.f32.mrb[0].mxu0
      %2888 = vmatprep.mubr.f32.mxu0 0.0
      %2889 = vmatmul.mubr.f32.gmra.mrb[0].mxu0 %v2795
      %v2890 = vpop.f32.mrb[0].mxu0
      %v2891 = vadd.f32 0.0, %v2890
      %v2892 = vpop.f32.mrb[0].mxu0
      %2893 = vmatprep.mubr.f32.mxu0 0.0
      %2894 = vmatmul.mubr.f32.gmra.mrb[0].mxu0 %v2798
      %v2895 = vpop.f32.mrb[0].mxu0
      %v2896 = vadd.f32 0.0, %v2895
      %v2897 = vpop.f32.mrb[0].mxu0
      %2898 = vmatprep.mubr.f32.mxu0 0.0
      %2899 = vmatmul.mubr.f32.gmra.mrb[0].mxu0 %v2801
      %v2900 = vpop.f32.mrb[0].mxu0
      %v2901 = vadd.f32 0.0, %v2900
      %v2902 = vpop.f32.mrb[0].mxu0
      %2903 = vmatprep.mubr.f32.mxu0 0.0
      %2904 = vmatmul.mubr.f32.gmra.mrb[0].mxu0 %v2804
      %v2905 = vpop.f32.mrb[0].mxu0
      %v2906 = vadd.f32 0.0, %v2905
      %v2907 = vpop.f32.mrb[0].mxu0
      %2908 = vmatprep.mubr.f32.mxu0 0.0
      %2909 = vmatmul.mubr.f32.gmra.mrb[0].mxu0 %v2807
      %v2910 = vpop.f32.mrb[0].mxu0
      %v2911 = vadd.f32 0.0, %v2910
      %v2912 = vpop.f32.mrb[0].mxu0
      %2913 = vdwg.mxu0
      %v2914 = vmul.f32 %v2354, %v2876
      %v2915 = vmul.f32 %v2355, %v2881
      %v2916 = vmul.f32 %v2356, %v2886
      %v2917 = vmul.f32 %v2357, %v2891
      %v2918 = vmul.f32 %v2358, %v2896
      %v2919 = vmul.f32 %v2359, %v2901
      %v2920 = vmul.f32 %v2360, %v2906
      %v2921 = vmul.f32 %v2361, %v2911
      %v2922 = vsub.f32 1.0, %v2354
      %v2923 = vsub.f32 1.0, %v2355
      %v2924 = vsub.f32 1.0, %v2356
      %v2925 = vsub.f32 1.0, %v2357
      %v2926 = vsub.f32 1.0, %v2358
      %v2927 = vsub.f32 1.0, %v2359
      %v2928 = vsub.f32 1.0, %v2360
      %v2929 = vsub.f32 1.0, %v2361
      %v2930 = vmul.f32 %v2922, %v2715
      %v2931 = vmul.f32 %v2923, %v2720
      %v2932 = vmul.f32 %v2924, %v2725
      %v2933 = vmul.f32 %v2925, %v2730
      %v2934 = vmul.f32 %v2926, %v2735
      %v2935 = vmul.f32 %v2927, %v2740
      %v2936 = vmul.f32 %v2928, %v2745
      %v2937 = vmul.f32 %v2929, %v2750
      %v2938 = vadd.f32 %v2914, %v2930
      %v2939 = vadd.f32 %v2915, %v2931
      %v2940 = vadd.f32 %v2916, %v2932
      %v2941 = vadd.f32 %v2917, %v2933
      %v2942 = vadd.f32 %v2918, %v2934
      %v2943 = vadd.f32 %v2919, %v2935
      %v2944 = vadd.f32 %v2920, %v2936
      %v2945 = vadd.f32 %v2921, %v2937
      %2946 = vrot.lane.b32.xlu0 %v906, 64
      %v2947 = vpop.permute.xlu0 %2946
      %2948 = vrot.lane.b32.xlu0 %v907, 64
      %v2949 = vpop.permute.xlu0 %2948
      %2950 = vrot.lane.b32.xlu0 %v908, 64
      %v2951 = vpop.permute.xlu0 %2950
      %2952 = vrot.lane.b32.xlu0 %v909, 64
      %v2953 = vpop.permute.xlu0 %2952
      %2954 = vrot.lane.b32.xlu0 %v910, 64
      %v2955 = vpop.permute.xlu0 %2954
      %2956 = vrot.lane.b32.xlu0 %v911, 64
      %v2957 = vpop.permute.xlu0 %2956
      %2958 = vrot.lane.b32.xlu0 %v912, 64
      %v2959 = vpop.permute.xlu0 %2958
      %2960 = vrot.lane.b32.xlu0 %v913, 64
      %v2961 = vpop.permute.xlu0 %2960
      %v2963 = vsel %vm918, %v2947, 0
      %v2966 = vsel %vm918, %v2949, 0
      %v2969 = vsel %vm918, %v2951, 0
      %v2972 = vsel %vm918, %v2953, 0
      %v2975 = vsel %vm918, %v2955, 0
      %v2978 = vsel %vm918, %v2957, 0
      %v2981 = vsel %vm918, %v2959, 0
      %v2984 = vsel %vm918, %v2961, 0
      %2986 = vmatprep.subr.bf16.mxu0 0
      %2987 = vmatpush1.bf16.xpose.msra.mxu0 %v2975
      %2988 = vmatprep.subr.bf16.mxu0 0
      %2989 = vmatpush1.bf16.xpose.msra.mxu0 %v2978
      %2990 = vmatprep.subr.bf16.mxu0 0
      %2991 = vmatpush1.bf16.xpose.msra.mxu0 %v2981
      %2992 = vmatprep.subr.bf16.mxu0 0
      %2993 = vmatpush1.bf16.xpose.msra.mxu0 %v2984
      %2994 = vmatprep.subr.bf16.mxu0 0
      %2995 = vmatpush1.bf16.xpose.msra.mxu0 0
      %2996 = vmatprep.subr.bf16.mxu0 0
      %2997 = vmatpush1.bf16.xpose.msra.mxu0 0
      %2998 = vmatprep.subr.bf16.mxu0 0
      %2999 = vmatpush1.bf16.xpose.msra.mxu0 0
      %3000 = vmatprep.subr.bf16.mxu0 0
      %3001 = vmatpush1.bf16.xpose.msra.mxu0 0
      %3002 = vmatprep.subr.bf16.mxu0 0
      %3003 = vmatpush1.bf16.xpose.msra.mxu0 0
      %3004 = vmatprep.subr.bf16.mxu0 0
      %3005 = vmatpush1.bf16.xpose.msra.mxu0 0
      %3006 = vmatprep.subr.bf16.mxu0 0
      %3007 = vmatpush1.bf16.xpose.msra.mxu0 0
      %3008 = vmatprep.subr.bf16.mxu0 0
      %3009 = vmatpush1.bf16.xpose.msra.mxu0 0
      %3010 = vmatprep.subr.bf16.mxu0 0
      %3011 = vmatpush1.bf16.xpose.msra.mxu0 0
      %3012 = vmatprep.subr.bf16.mxu0 0
      %3013 = vmatpush1.bf16.xpose.msra.mxu0 0
      %3014 = vmatprep.subr.bf16.mxu0 0
      %3015 = vmatpush1.bf16.xpose.msra.mxu0 0
      %3016 = vmatprep.subr.bf16.mxu0 0
      %3017 = vmatpush1.bf16.xpose.msra.mxu0 0
      %3018 = vmatprep.mubr.bf16.mxu0 0
      %3019 = vmatmul.mubr.bf16.gmra.mrb[0].mxu0 %v2963
      %v3020 = vpop.f32.mrb[0].mxu0
      %v3021 = vadd.f32 0.0, %v3020
      %v3022 = vpop.f32.mrb[0].mxu0
      %v3023 = vpop.f32.mrb[0].mxu0
      %v3024 = vadd.f32 0.0, %v3023
      %v3025 = vpop.f32.mrb[0].mxu0
      %3026 = vmatprep.mubr.bf16.mxu0 0
      %3027 = vmatmul.mubr.bf16.gmra.mrb[0].mxu0 %v2966
      %v3028 = vpop.f32.mrb[0].mxu0
      %v3029 = vadd.f32 0.0, %v3028
      %v3030 = vpop.f32.mrb[0].mxu0
      %v3031 = vpop.f32.mrb[0].mxu0
      %v3032 = vadd.f32 0.0, %v3031
      %v3033 = vpop.f32.mrb[0].mxu0
      %3034 = vmatprep.mubr.bf16.mxu0 0
      %3035 = vmatmul.mubr.bf16.gmra.mrb[0].mxu0 %v2969
      %v3036 = vpop.f32.mrb[0].mxu0
      %v3037 = vadd.f32 0.0, %v3036
      %v3038 = vpop.f32.mrb[0].mxu0
      %v3039 = vpop.f32.mrb[0].mxu0
      %v3040 = vadd.f32 0.0, %v3039
      %v3041 = vpop.f32.mrb[0].mxu0
      %3042 = vmatprep.mubr.bf16.mxu0 0
      %3043 = vmatmul.mubr.bf16.gmra.mrb[0].mxu0 %v2972
      %v3044 = vpop.f32.mrb[0].mxu0
      %v3045 = vadd.f32 0.0, %v3044
      %v3046 = vpop.f32.mrb[0].mxu0
      %v3047 = vpop.f32.mrb[0].mxu0
      %v3048 = vadd.f32 0.0, %v3047
      %v3049 = vpop.f32.mrb[0].mxu0
      %3050 = vdwg.mxu0
      %v3051 = vadd.f32 %v3021, %v834
      %v3052 = vadd.f32 %v3024, %v835
      %v3053 = vadd.f32 %v3029, %v836
      %v3054 = vadd.f32 %v3032, %v837
      %v3055 = vadd.f32 %v3037, %v838
      %v3056 = vadd.f32 %v3040, %v839
      %v3057 = vadd.f32 %v3045, %v840
      %v3058 = vadd.f32 %v3048, %v841
      %v3059 = vsel %vm1016, %v3051, -inf
      %3060 = vmax.xlane.f32.xlu0 %v3059
      %v3061 = vpop.xlane.xlu0 %3060
      %v3062 = vsel %vm1016, %v3052, -inf
      %3063 = vmax.xlane.f32.xlu0 %v3062
      %v3064 = vpop.xlane.xlu0 %3063
      %v3065 = vsel %vm1016, %v3053, -inf
      %3066 = vmax.xlane.f32.xlu0 %v3065
      %v3067 = vpop.xlane.xlu0 %3066
      %v3068 = vsel %vm1016, %v3054, -inf
      %3069 = vmax.xlane.f32.xlu0 %v3068
      %v3070 = vpop.xlane.xlu0 %3069
      %v3071 = vsel %vm1016, %v3055, -inf
      %3072 = vmax.xlane.f32.xlu0 %v3071
      %v3073 = vpop.xlane.xlu0 %3072
      %v3074 = vsel %vm1016, %v3056, -inf
      %3075 = vmax.xlane.f32.xlu0 %v3074
      %v3076 = vpop.xlane.xlu0 %3075
      %v3077 = vsel %vm1016, %v3057, -inf
      %3078 = vmax.xlane.f32.xlu0 %v3077
      %v3079 = vpop.xlane.xlu0 %3078
      %v3080 = vsel %vm1016, %v3058, -inf
      %3081 = vmax.xlane.f32.xlu0 %v3080
      %v3082 = vpop.xlane.xlu0 %3081
      %3087 = vmatprep.subr.bf16.mxu0 0
      %3088 = vmatpush1.bf16.msra.mxu0 %v2955
      %3089 = vmatprep.subr.bf16.mxu0 0
      %3090 = vmatpush1.bf16.msra.mxu0 %v2957
      %3091 = vmatprep.subr.bf16.mxu0 0
      %3092 = vmatpush1.bf16.msra.mxu0 %v2959
      %3093 = vmatprep.subr.bf16.mxu0 0
      %3094 = vmatpush1.bf16.msra.mxu0 %v2961
      %3095 = vmatprep.subr.bf16.mxu0 0
      %3096 = vmatpush1.bf16.msra.mxu0 0
      %3097 = vmatprep.subr.bf16.mxu0 0
      %3098 = vmatpush1.bf16.msra.mxu0 0
      %3099 = vmatprep.subr.bf16.mxu0 0
      %3100 = vmatpush1.bf16.msra.mxu0 0
      %3101 = vmatprep.subr.bf16.mxu0 0
      %3102 = vmatpush1.bf16.msra.mxu0 0
      %3103 = vmatprep.subr.bf16.mxu0 0
      %3104 = vmatpush1.bf16.msra.mxu0 0
      %3105 = vmatprep.subr.bf16.mxu0 0
      %3106 = vmatpush1.bf16.msra.mxu0 0
      %3107 = vmatprep.subr.bf16.mxu0 0
      %3108 = vmatpush1.bf16.msra.mxu0 0
      %3109 = vmatprep.subr.bf16.mxu0 0
      %3110 = vmatpush1.bf16.msra.mxu0 0
      %3111 = vmatprep.subr.bf16.mxu0 0
      %3112 = vmatpush1.bf16.msra.mxu0 0
      %3113 = vmatprep.subr.bf16.mxu0 0
      %3114 = vmatpush1.bf16.msra.mxu0 0
      %3115 = vmatprep.subr.bf16.mxu0 0
      %3116 = vmatpush1.bf16.msra.mxu0 0
      %3117 = vmatprep.subr.bf16.mxu0 0
      %3118 = vmatpush1.bf16.msra.mxu0 0
      %3119 = vmatprep.mubr.bf16.mxu0 0
      %3120 = vmatmul.mubr.bf16.gmra.mrb[0].mxu0 %v1062
      %v3121 = vpop.f32.mrb[0].mxu0
      %v3122 = vadd.f32 0.0, %v3121
      %v3123 = vpop.f32.mrb[0].mxu0
      %v3124 = vpop.f32.mrb[0].mxu0
      %v3125 = vadd.f32 0.0, %v3124
      %v3126 = vpop.f32.mrb[0].mxu0
      %3127 = vmatprep.mubr.bf16.mxu0 0
      %3128 = vmatmul.mubr.bf16.gmra.mrb[0].mxu0 %v1065
      %v3129 = vpop.f32.mrb[0].mxu0
      %v3130 = vadd.f32 0.0, %v3129
      %v3131 = vpop.f32.mrb[0].mxu0
      %v3132 = vpop.f32.mrb[0].mxu0
      %v3133 = vadd.f32 0.0, %v3132
      %v3134 = vpop.f32.mrb[0].mxu0
      %3135 = vmatprep.mubr.bf16.mxu0 0
      %3136 = vmatmul.mubr.bf16.gmra.mrb[0].mxu0 %v1068
      %v3137 = vpop.f32.mrb[0].mxu0
      %v3138 = vadd.f32 0.0, %v3137
      %v3139 = vpop.f32.mrb[0].mxu0
      %v3140 = vpop.f32.mrb[0].mxu0
      %v3141 = vadd.f32 0.0, %v3140
      %v3142 = vpop.f32.mrb[0].mxu0
      %3143 = vmatprep.mubr.bf16.mxu0 0
      %3144 = vmatmul.mubr.bf16.gmra.mrb[0].mxu0 %v1071
      %v3145 = vpop.f32.mrb[0].mxu0
      %v3146 = vadd.f32 0.0, %v3145
      %v3147 = vpop.f32.mrb[0].mxu0
      %v3148 = vpop.f32.mrb[0].mxu0
      %v3149 = vadd.f32 0.0, %v3148
      %v3150 = vpop.f32.mrb[0].mxu0
      %3151 = vdwg.mxu0
      %3160 = vrot.lane.b32.xlu0 %v3122, 64
      %v3161 = vpop.permute.xlu0 %3160
      %3162 = vrot.lane.b32.xlu0 %v3125, 64
      %v3163 = vpop.permute.xlu0 %3162
      %3164 = vrot.lane.b32.xlu0 %v3130, 64
      %v3165 = vpop.permute.xlu0 %3164
      %3166 = vrot.lane.b32.xlu0 %v3133, 64
      %v3167 = vpop.permute.xlu0 %3166
      %3168 = vrot.lane.b32.xlu0 %v3138, 64
      %v3169 = vpop.permute.xlu0 %3168
      %3170 = vrot.lane.b32.xlu0 %v3141, 64
      %v3171 = vpop.permute.xlu0 %3170
      %3172 = vrot.lane.b32.xlu0 %v3146, 64
      %v3173 = vpop.permute.xlu0 %3172
      %3174 = vrot.lane.b32.xlu0 %v3149, 64
      %v3175 = vpop.permute.xlu0 %3174
      %v3184 = vmul.f32 %v723, %v3161
      %v3185 = vmul.f32 %v727, %v3163
      %v3186 = vmul.f32 %v733, %v3165
      %v3187 = vmul.f32 %v737, %v3167
      %v3188 = vmul.f32 %v743, %v3169
      %v3189 = vmul.f32 %v747, %v3171
      %v3190 = vmul.f32 %v753, %v3173
      %v3191 = vmul.f32 %v757, %v3175
      %3200 = vrot.lane.b32.xlu0 %v3184, 64
      %v3201 = vpop.permute.xlu0 %3200
      %3202 = vrot.lane.b32.xlu0 %v3185, 64
      %v3203 = vpop.permute.xlu0 %3202
      %3204 = vrot.lane.b32.xlu0 %v3186, 64
      %v3205 = vpop.permute.xlu0 %3204
      %3206 = vrot.lane.b32.xlu0 %v3187, 64
      %v3207 = vpop.permute.xlu0 %3206
      %3208 = vrot.lane.b32.xlu0 %v3188, 64
      %v3209 = vpop.permute.xlu0 %3208
      %3210 = vrot.lane.b32.xlu0 %v3189, 64
      %v3211 = vpop.permute.xlu0 %3210
      %3212 = vrot.lane.b32.xlu0 %v3190, 64
      %v3213 = vpop.permute.xlu0 %3212
      %3214 = vrot.lane.b32.xlu0 %v3191, 64
      %v3215 = vpop.permute.xlu0 %3214
      %v3224 = vsel %vm918, %v3201, 0.0
      %3225 = vadd.xlane.f32.xlu0 %v3224
      %v3226 = vpop.xlane.xlu0 %3225
      %v3227 = vsel %vm918, %v3203, 0.0
      %3228 = vadd.xlane.f32.xlu0 %v3227
      %v3229 = vpop.xlane.xlu0 %3228
      %v3230 = vsel %vm918, %v3205, 0.0
      %3231 = vadd.xlane.f32.xlu0 %v3230
      %v3232 = vpop.xlane.xlu0 %3231
      %v3233 = vsel %vm918, %v3207, 0.0
      %3234 = vadd.xlane.f32.xlu0 %v3233
      %v3235 = vpop.xlane.xlu0 %3234
      %v3236 = vsel %vm918, %v3209, 0.0
      %3237 = vadd.xlane.f32.xlu0 %v3236
      %v3238 = vpop.xlane.xlu0 %3237
      %v3239 = vsel %vm918, %v3211, 0.0
      %3240 = vadd.xlane.f32.xlu0 %v3239
      %v3241 = vpop.xlane.xlu0 %3240
      %v3242 = vsel %vm918, %v3213, 0.0
      %3243 = vadd.xlane.f32.xlu0 %v3242
      %v3244 = vpop.xlane.xlu0 %3243
      %v3245 = vsel %vm918, %v3215, 0.0
      %3246 = vadd.xlane.f32.xlu0 %v3245
      %v3247 = vpop.xlane.xlu0 %3246
      %v3248 = vmul.f32 %v3226, 0.015625
      %v3249 = vmul.f32 %v3229, 0.015625
      %v3250 = vmul.f32 %v3232, 0.015625
      %v3251 = vmul.f32 %v3235, 0.015625
      %v3252 = vmul.f32 %v3238, 0.015625
      %v3253 = vmul.f32 %v3241, 0.015625
      %v3254 = vmul.f32 %v3244, 0.015625
      %v3255 = vmul.f32 %v3247, 0.015625
      %v3256 = vsub.f32 %v3061, %v3248
      %v3257 = vsub.f32 %v3064, %v3249
      %v3258 = vsub.f32 %v3067, %v3250
      %v3259 = vsub.f32 %v3070, %v3251
      %v3260 = vsub.f32 %v3073, %v3252
      %v3261 = vsub.f32 %v3076, %v3253
      %v3262 = vsub.f32 %v3079, %v3254
      %v3263 = vsub.f32 %v3082, %v3255
      %v3264 = vmul.f32 %v3256, %v893
      %v3265 = vmul.f32 %v3257, %v894
      %v3266 = vmul.f32 %v3258, %v895
      %v3267 = vmul.f32 %v3259, %v896
      %v3268 = vmul.f32 %v3260, %v897
      %v3269 = vmul.f32 %v3261, %v898
      %v3270 = vmul.f32 %v3262, %v899
      %v3271 = vmul.f32 %v3263, %v900
      %v3272 = vsel %vm1016, %v3264, 0.0
      %v3273 = vsel %vm1016, %v3265, 0.0
      %v3274 = vadd.f32 %v3272, %v3273
      %v3275 = vsel %vm1016, %v3266, 0.0
      %v3276 = vadd.f32 %v3274, %v3275
      %v3277 = vsel %vm1016, %v3267, 0.0
      %v3278 = vadd.f32 %v3276, %v3277
      %v3279 = vsel %vm1016, %v3268, 0.0
      %v3280 = vadd.f32 %v3278, %v3279
      %v3281 = vsel %vm1016, %v3269, 0.0
      %v3282 = vadd.f32 %v3280, %v3281
      %v3283 = vsel %vm1016, %v3270, 0.0
      %v3284 = vadd.f32 %v3282, %v3283
      %v3285 = vsel %vm1016, %v3271, 0.0
      %v3286 = vadd.f32 %v3284, %v3285
      %v3287 = vrot.slane %v3286, 4
      %v3288 = vadd.f32 %v3286, %v3287
      %v3289 = vrot.slane %v3288, 2
      %v3290 = vadd.f32 %v3288, %v3289
      %v3291 = vrot.slane %v3290, 1
      %v3292 = vadd.f32 %v3290, %v3291
      %vm3293 = vcmp.gt.f32.partialorder %v3292, %v3256
      %vm3294 = vcmp.gt.f32.partialorder %v3292, %v3257
      %vm3295 = vcmp.gt.f32.partialorder %v3292, %v3258
      %vm3296 = vcmp.gt.f32.partialorder %v3292, %v3259
      %vm3297 = vcmp.gt.f32.partialorder %v3292, %v3260
      %vm3298 = vcmp.gt.f32.partialorder %v3292, %v3261
      %vm3299 = vcmp.gt.f32.partialorder %v3292, %v3262
      %vm3300 = vcmp.gt.f32.partialorder %v3292, %v3263
      %vm3301 = vcmp.eq.f32.partialorder %v3292, %v3256
      %vm3302 = vcmp.eq.f32.partialorder %v3292, %v3257
      %vm3303 = vcmp.eq.f32.partialorder %v3292, %v3258
      %vm3304 = vcmp.eq.f32.partialorder %v3292, %v3259
      %vm3305 = vcmp.eq.f32.partialorder %v3292, %v3260
      %vm3306 = vcmp.eq.f32.partialorder %v3292, %v3261
      %vm3307 = vcmp.eq.f32.partialorder %v3292, %v3262
      %vm3308 = vcmp.eq.f32.partialorder %v3292, %v3263
      %vm3309 = vmand %vm3301, %vm1231
      %vm3310 = vmand %vm3302, %vm1232
      %vm3311 = vmand %vm3303, %vm1233
      %vm3312 = vmand %vm3304, %vm1234
      %vm3313 = vmand %vm3305, %vm1235
      %vm3314 = vmand %vm3306, %vm1236
      %vm3315 = vmand %vm3307, %vm1237
      %vm3316 = vmand %vm3308, %vm1238
      %vm3317 = vmor %vm3293, %vm3309
      %vm3318 = vmor %vm3294, %vm3310
      %vm3319 = vmor %vm3295, %vm3311
      %vm3320 = vmor %vm3296, %vm3312
      %vm3321 = vmor %vm3297, %vm3313
      %vm3322 = vmor %vm3298, %vm3314
      %vm3323 = vmor %vm3299, %vm3315
      %vm3324 = vmor %vm3300, %vm3316
      %v3325 = vsel %vm3317, 1, 0
      %v3326 = vsel %vm3318, 1, 0
      %v3327 = vsel %vm3319, 1, 0
      %v3328 = vsel %vm3320, 1, 0
      %v3329 = vsel %vm3321, 1, 0
      %v3330 = vsel %vm3322, 1, 0
      %v3331 = vsel %vm3323, 1, 0
      %v3332 = vsel %vm3324, 1, 0
      %v3333 = vcvt.s32.f32 %v3325
      %v3334 = vcvt.s32.f32 %v3326
      %v3335 = vcvt.s32.f32 %v3327
      %v3336 = vcvt.s32.f32 %v3328
      %v3337 = vcvt.s32.f32 %v3329
      %v3338 = vcvt.s32.f32 %v3330
      %v3339 = vcvt.s32.f32 %v3331
      %v3340 = vcvt.s32.f32 %v3332
      %v3341 = vsel %vm1016, %v3333, 0.0
      %3342 = vadd.xlane.f32.xlu0 %v3341
      %v3343 = vpop.xlane.xlu0 %3342
      %v3344 = vsel %vm1016, %v3334, 0.0
      %3345 = vadd.xlane.f32.xlu0 %v3344
      %v3346 = vpop.xlane.xlu0 %3345
      %v3347 = vsel %vm1016, %v3335, 0.0
      %3348 = vadd.xlane.f32.xlu0 %v3347
      %v3349 = vpop.xlane.xlu0 %3348
      %v3350 = vsel %vm1016, %v3336, 0.0
      %3351 = vadd.xlane.f32.xlu0 %v3350
      %v3352 = vpop.xlane.xlu0 %3351
      %v3353 = vsel %vm1016, %v3337, 0.0
      %3354 = vadd.xlane.f32.xlu0 %v3353
      %v3355 = vpop.xlane.xlu0 %3354
      %v3356 = vsel %vm1016, %v3338, 0.0
      %3357 = vadd.xlane.f32.xlu0 %v3356
      %v3358 = vpop.xlane.xlu0 %3357
      %v3359 = vsel %vm1016, %v3339, 0.0
      %3360 = vadd.xlane.f32.xlu0 %v3359
      %v3361 = vpop.xlane.xlu0 %3360
      %v3362 = vsel %vm1016, %v3340, 0.0
      %3363 = vadd.xlane.f32.xlu0 %v3362
      %v3364 = vpop.xlane.xlu0 %3363
      %v3365 = vadd.f32 %v3341, %v3344
      %v3366 = vadd.f32 %v3365, %v3347
      %v3367 = vadd.f32 %v3366, %v3350
      %v3368 = vadd.f32 %v3367, %v3353
      %v3369 = vadd.f32 %v3368, %v3356
      %v3370 = vadd.f32 %v3369, %v3359
      %v3371 = vadd.f32 %v3370, %v3362
      %v3372 = vrot.slane %v3371, 4
      %v3373 = vadd.f32 %v3371, %v3372
      %v3374 = vrot.slane %v3373, 2
      %v3375 = vadd.f32 %v3373, %v3374
      %v3376 = vrot.slane %v3375, 1
      %v3377 = vadd.f32 %v3375, %v3376
      %v3378 = vsub.f32 63.0, %v3377
      %vm3379 = vcmp.lt.f32.partialorder %v3343, 25.0
      %vm3380 = vcmp.lt.f32.partialorder %v3346, 25.0
      %vm3381 = vcmp.lt.f32.partialorder %v3349, 25.0
      %vm3382 = vcmp.lt.f32.partialorder %v3352, 25.0
      %vm3383 = vcmp.lt.f32.partialorder %v3355, 25.0
      %vm3384 = vcmp.lt.f32.partialorder %v3358, 25.0
      %vm3385 = vcmp.lt.f32.partialorder %v3361, 25.0
      %vm3386 = vcmp.lt.f32.partialorder %v3364, 25.0
      %v3387 = vsel %vm3379, 1, 0
      %v3388 = vsel %vm3380, 1, 0
      %v3389 = vsel %vm3381, 1, 0
      %v3390 = vsel %vm3382, 1, 0
      %v3391 = vsel %vm3383, 1, 0
      %v3392 = vsel %vm3384, 1, 0
      %v3393 = vsel %vm3385, 1, 0
      %v3394 = vsel %vm3386, 1, 0
      %v3395 = vcvt.s32.f32 %v3387
      %v3396 = vcvt.s32.f32 %v3388
      %v3397 = vcvt.s32.f32 %v3389
      %v3398 = vcvt.s32.f32 %v3390
      %v3399 = vcvt.s32.f32 %v3391
      %v3400 = vcvt.s32.f32 %v3392
      %v3401 = vcvt.s32.f32 %v3393
      %v3402 = vcvt.s32.f32 %v3394
      %vm3403 = vcmp.eq.f32.partialorder %v3378, %v901
      %vm3404 = vcmp.eq.f32.partialorder %v3378, %v902
      %vm3405 = vcmp.eq.f32.partialorder %v3378, %v903
      %vm3406 = vcmp.eq.f32.partialorder %v3378, %v904
      %vm3407 = vmand %vm3403, %vm1337
      %vm3408 = vmand %vm3404, %vm1338
      %vm3409 = vmand %vm3405, %vm1339
      %vm3410 = vmand %vm3406, %vm1340
      %v3411 = vsel %vm3407, 1.0, 0.0
      %v3412 = vsel %vm3408, 1.0, 0.0
      %v3413 = vsel %vm3409, 1.0, 0.0
      %v3414 = vsel %vm3410, 1.0, 0.0
      %v3415 = vmul.f32 %v3411, %v905
      %v3416 = vmul.f32 %v3412, %v905
      %v3417 = vmul.f32 %v3413, %v905
      %v3418 = vmul.f32 %v3414, %v905
      %v3419 = vsel %vm1016, %v3415, 0.0
      %3420 = vadd.xlane.f32.xlu0 %v3419
      %v3421 = vpop.xlane.xlu0 %3420
      %v3422 = vsel %vm1016, %v3416, 0.0
      %3423 = vadd.xlane.f32.xlu0 %v3422
      %v3424 = vpop.xlane.xlu0 %3423
      %v3425 = vsel %vm1016, %v3417, 0.0
      %3426 = vadd.xlane.f32.xlu0 %v3425
      %v3427 = vpop.xlane.xlu0 %3426
      %v3428 = vsel %vm1016, %v3418, 0.0
      %3429 = vadd.xlane.f32.xlu0 %v3428
      %v3430 = vpop.xlane.xlu0 %3429
      %v3432 = vsel %vm1016, %v3411, 0
      %v3435 = vsel %vm1016, %v3412, 0
      %v3438 = vsel %vm1016, %v3413, 0
      %v3441 = vsel %vm1016, %v3414, 0
      %3443 = vmatprep.subr.mxu0 0.0
      %3444 = vmatpush1.msra.mxu0 %v3021
      %3445 = vmatprep.subr.mxu0 0.0
      %3446 = vmatpush1.msra.mxu0 %v3024
      %3447 = vmatprep.subr.mxu0 0.0
      %3448 = vmatpush1.msra.mxu0 %v3029
      %3449 = vmatprep.subr.mxu0 0.0
      %3450 = vmatpush1.msra.mxu0 %v3032
      %3451 = vmatprep.subr.mxu0 0.0
      %3452 = vmatpush1.msra.mxu0 %v3037
      %3453 = vmatprep.subr.mxu0 0.0
      %3454 = vmatpush1.msra.mxu0 %v3040
      %3455 = vmatprep.subr.mxu0 0.0
      %3456 = vmatpush1.msra.mxu0 %v3045
      %3457 = vmatprep.subr.mxu0 0.0
      %3458 = vmatpush1.msra.mxu0 %v3048
      %3459 = vmatprep.subr.mxu0 0.0
      %3460 = vmatpush1.msra.mxu0 0.0
      %3461 = vmatprep.subr.mxu0 0.0
      %3462 = vmatpush1.msra.mxu0 0.0
      %3463 = vmatprep.subr.mxu0 0.0
      %3464 = vmatpush1.msra.mxu0 0.0
      %3465 = vmatprep.subr.mxu0 0.0
      %3466 = vmatpush1.msra.mxu0 0.0
      %3467 = vmatprep.subr.mxu0 0.0
      %3468 = vmatpush1.msra.mxu0 0.0
      %3469 = vmatprep.subr.mxu0 0.0
      %3470 = vmatpush1.msra.mxu0 0.0
      %3471 = vmatprep.subr.mxu0 0.0
      %3472 = vmatpush1.msra.mxu0 0.0
      %3473 = vmatprep.subr.mxu0 0.0
      %3474 = vmatpush1.msra.mxu0 0.0
      %3475 = vmatprep.subr.mxu0 0.0
      %3476 = vmatpush1.msra.mxu0 0.0
      %3477 = vmatprep.subr.mxu0 0.0
      %3478 = vmatpush1.msra.mxu0 0.0
      %3479 = vmatprep.subr.mxu0 0.0
      %3480 = vmatpush1.msra.mxu0 0.0
      %3481 = vmatprep.subr.mxu0 0.0
      %3482 = vmatpush1.msra.mxu0 0.0
      %3483 = vmatprep.subr.mxu0 0.0
      %3484 = vmatpush1.msra.mxu0 0.0
      %3485 = vmatprep.subr.mxu0 0.0
      %3486 = vmatpush1.msra.mxu0 0.0
      %3487 = vmatprep.subr.mxu0 0.0
      %3488 = vmatpush1.msra.mxu0 0.0
      %3489 = vmatprep.subr.mxu0 0.0
      %3490 = vmatpush1.msra.mxu0 0.0
      %3491 = vmatprep.subr.mxu0 0.0
      %3492 = vmatpush1.msra.mxu0 0.0
      %3493 = vmatprep.subr.mxu0 0.0
      %3494 = vmatpush1.msra.mxu0 0.0
      %3495 = vmatprep.subr.mxu0 0.0
      %3496 = vmatpush1.msra.mxu0 0.0
      %3497 = vmatprep.subr.mxu0 0.0
      %3498 = vmatpush1.msra.mxu0 0.0
      %3499 = vmatprep.subr.mxu0 0.0
      %3500 = vmatpush1.msra.mxu0 0.0
      %3501 = vmatprep.subr.mxu0 0.0
      %3502 = vmatpush1.msra.mxu0 0.0
      %3503 = vmatprep.subr.mxu0 0.0
      %3504 = vmatpush1.msra.mxu0 0.0
      %3505 = vmatprep.subr.mxu0 0.0
      %3506 = vmatpush1.msra.mxu0 0.0
      %3507 = vmatprep.mubr.f32.mxu0 0.0
      %3508 = vmatmul.mubr.f32.gmra.mrb[0].mxu0 %v3432
      %v3509 = vpop.f32.mrb[0].mxu0
      %v3510 = vadd.f32 0.0, %v3509
      %v3511 = vpop.f32.mrb[0].mxu0
      %3512 = vmatprep.mubr.f32.mxu0 0.0
      %3513 = vmatmul.mubr.f32.gmra.mrb[0].mxu0 %v3435
      %v3514 = vpop.f32.mrb[0].mxu0
      %v3515 = vadd.f32 0.0, %v3514
      %v3516 = vpop.f32.mrb[0].mxu0
      %3517 = vmatprep.mubr.f32.mxu0 0.0
      %3518 = vmatmul.mubr.f32.gmra.mrb[0].mxu0 %v3438
      %v3519 = vpop.f32.mrb[0].mxu0
      %v3520 = vadd.f32 0.0, %v3519
      %v3521 = vpop.f32.mrb[0].mxu0
      %3522 = vmatprep.mubr.f32.mxu0 0.0
      %3523 = vmatmul.mubr.f32.gmra.mrb[0].mxu0 %v3441
      %v3524 = vpop.f32.mrb[0].mxu0
      %v3525 = vadd.f32 0.0, %v3524
      %v3526 = vpop.f32.mrb[0].mxu0
      %3527 = vdwg.mxu0
      %v3528 = vmul.f32 %v3510, 0.17677669
      %v3529 = vmul.f32 %v3515, 0.17677669
      %v3530 = vmul.f32 %v3520, 0.17677669
      %v3531 = vmul.f32 %v3525, 0.17677669
      %vm3532 = vcmp.gt.f32.partialorder %v905, %v3421
      %vm3533 = vcmp.gt.f32.partialorder %v905, %v3424
      %vm3534 = vcmp.gt.f32.partialorder %v905, %v3427
      %vm3535 = vcmp.gt.f32.partialorder %v905, %v3430
      %v3536 = vsel %vm3532, -1e+30, %v3528
      %v3537 = vsel %vm3533, -1e+30, %v3529
      %v3538 = vsel %vm3534, -1e+30, %v3530
      %v3539 = vsel %vm3535, -1e+30, %v3531
      %v3540 = vsel %vm1016, %v3536, -inf
      %3541 = vmax.xlane.f32.xlu0 %v3540
      %v3542 = vpop.xlane.xlu0 %3541
      %v3543 = vsel %vm1016, %v3537, -inf
      %3544 = vmax.xlane.f32.xlu0 %v3543
      %v3545 = vpop.xlane.xlu0 %3544
      %v3546 = vsel %vm1016, %v3538, -inf
      %3547 = vmax.xlane.f32.xlu0 %v3546
      %v3548 = vpop.xlane.xlu0 %3547
      %v3549 = vsel %vm1016, %v3539, -inf
      %3550 = vmax.xlane.f32.xlu0 %v3549
      %v3551 = vpop.xlane.xlu0 %3550
      %v3552 = vsub.f32 %v3536, %v3542
      %v3553 = vsub.f32 %v3537, %v3545
      %v3554 = vsub.f32 %v3538, %v3548
      %v3555 = vsub.f32 %v3539, %v3551
      %v3556 = vmul.f32 %v3552, 1.442695
      %v3557 = vpow.pop %v3556
      %v3558 = vmul.f32 %v3553, 1.442695
      %v3559 = vpow.pop %v3558
      %v3560 = vmul.f32 %v3554, 1.442695
      %v3561 = vpow.pop %v3560
      %v3562 = vmul.f32 %v3555, 1.442695
      %v3563 = vpow.pop %v3562
      %v3564 = vsel %vm1016, %v3557, 0.0
      %3565 = vadd.xlane.f32.xlu0 %v3564
      %v3566 = vpop.xlane.xlu0 %3565
      %v3567 = vsel %vm1016, %v3559, 0.0
      %3568 = vadd.xlane.f32.xlu0 %v3567
      %v3569 = vpop.xlane.xlu0 %3568
      %v3570 = vsel %vm1016, %v3561, 0.0
      %3571 = vadd.xlane.f32.xlu0 %v3570
      %v3572 = vpop.xlane.xlu0 %3571
      %v3573 = vsel %vm1016, %v3563, 0.0
      %3574 = vadd.xlane.f32.xlu0 %v3573
      %v3575 = vpop.xlane.xlu0 %3574
      %v3576 = vrcp.pop %v3566
      %v3577 = vrcp.pop %v3569
      %v3578 = vrcp.pop %v3572
      %v3579 = vrcp.pop %v3575
      %v3580 = vmul.f32 %v3557, %v3576
      %v3581 = vmul.f32 %v3559, %v3577
      %v3582 = vmul.f32 %v3561, %v3578
      %v3583 = vmul.f32 %v3563, %v3579
      %v3584 = vpack.c.bf16 %v3581, %v3580
      %v3585 = vpack.c.bf16 %v3583, %v3582
      %3586 = vrot.lane.b32.xlu0 %v914, 64
      %v3587 = vpop.permute.xlu0 %3586
      %3588 = vrot.lane.b32.xlu0 %v915, 64
      %v3589 = vpop.permute.xlu0 %3588
      %3590 = vrot.lane.b32.xlu0 %v916, 64
      %v3591 = vpop.permute.xlu0 %3590
      %3592 = vrot.lane.b32.xlu0 %v917, 64
      %v3593 = vpop.permute.xlu0 %3592
      %v3599 = vsel %vm1016, %v3584, 0
      %v3602 = vsel %vm1016, %v3585, 0
      %3604 = vmatprep.subr.bf16.mxu0 0
      %3605 = vmatpush1.bf16.msra.mxu0 %v3587
      %3606 = vmatprep.subr.bf16.mxu0 0
      %3607 = vmatpush1.bf16.msra.mxu0 %v3589
      %3608 = vmatprep.subr.bf16.mxu0 0
      %3609 = vmatpush1.bf16.msra.mxu0 %v3591
      %3610 = vmatprep.subr.bf16.mxu0 0
      %3611 = vmatpush1.bf16.msra.mxu0 %v3593
      %3612 = vmatprep.subr.bf16.mxu0 0
      %3613 = vmatpush1.bf16.msra.mxu0 0
      %3614 = vmatprep.subr.bf16.mxu0 0
      %3615 = vmatpush1.bf16.msra.mxu0 0
      %3616 = vmatprep.subr.bf16.mxu0 0
      %3617 = vmatpush1.bf16.msra.mxu0 0
      %3618 = vmatprep.subr.bf16.mxu0 0
      %3619 = vmatpush1.bf16.msra.mxu0 0
      %3620 = vmatprep.subr.bf16.mxu0 0
      %3621 = vmatpush1.bf16.msra.mxu0 0
      %3622 = vmatprep.subr.bf16.mxu0 0
      %3623 = vmatpush1.bf16.msra.mxu0 0
      %3624 = vmatprep.subr.bf16.mxu0 0
      %3625 = vmatpush1.bf16.msra.mxu0 0
      %3626 = vmatprep.subr.bf16.mxu0 0
      %3627 = vmatpush1.bf16.msra.mxu0 0
      %3628 = vmatprep.subr.bf16.mxu0 0
      %3629 = vmatpush1.bf16.msra.mxu0 0
      %3630 = vmatprep.subr.bf16.mxu0 0
      %3631 = vmatpush1.bf16.msra.mxu0 0
      %3632 = vmatprep.subr.bf16.mxu0 0
      %3633 = vmatpush1.bf16.msra.mxu0 0
      %3634 = vmatprep.subr.bf16.mxu0 0
      %3635 = vmatpush1.bf16.msra.mxu0 0
      %3636 = vmatprep.mubr.bf16.mxu0 0
      %3637 = vmatmul.mubr.bf16.gmra.mrb[0].mxu0 %v3599
      %v3638 = vpop.f32.mrb[0].mxu0
      %v3639 = vadd.f32 0.0, %v3638
      %v3640 = vpop.f32.mrb[0].mxu0
      %v3641 = vpop.f32.mrb[0].mxu0
      %v3642 = vadd.f32 0.0, %v3641
      %v3643 = vpop.f32.mrb[0].mxu0
      %3644 = vmatprep.mubr.bf16.mxu0 0
      %3645 = vmatmul.mubr.bf16.gmra.mrb[0].mxu0 %v3602
      %v3646 = vpop.f32.mrb[0].mxu0
      %v3647 = vadd.f32 0.0, %v3646
      %v3648 = vpop.f32.mrb[0].mxu0
      %v3649 = vpop.f32.mrb[0].mxu0
      %v3650 = vadd.f32 0.0, %v3649
      %v3651 = vpop.f32.mrb[0].mxu0
      %3652 = vdwg.mxu0
      %3653 = vrot.lane.b32.xlu0 %v796, 64
      %v3654 = vpop.permute.xlu0 %3653
      %3655 = vrot.lane.b32.xlu0 %v799, 64
      %v3656 = vpop.permute.xlu0 %3655
      %3657 = vrot.lane.b32.xlu0 %v804, 64
      %v3658 = vpop.permute.xlu0 %3657
      %3659 = vrot.lane.b32.xlu0 %v807, 64
      %v3660 = vpop.permute.xlu0 %3659
      %3661 = vrot.lane.b32.xlu0 %v812, 64
      %v3662 = vpop.permute.xlu0 %3661
      %3663 = vrot.lane.b32.xlu0 %v815, 64
      %v3664 = vpop.permute.xlu0 %3663
      %3665 = vrot.lane.b32.xlu0 %v820, 64
      %v3666 = vpop.permute.xlu0 %3665
      %3667 = vrot.lane.b32.xlu0 %v823, 64
      %v3668 = vpop.permute.xlu0 %3667
      %3677 = vmatprep.subr.mxu0 0.0
      %3678 = vmatpush1.msra.mxu0 %v3654
      %3679 = vmatprep.subr.mxu0 0.0
      %3680 = vmatpush1.msra.mxu0 %v3656
      %3681 = vmatprep.subr.mxu0 0.0
      %3682 = vmatpush1.msra.mxu0 %v3658
      %3683 = vmatprep.subr.mxu0 0.0
      %3684 = vmatpush1.msra.mxu0 %v3660
      %3685 = vmatprep.subr.mxu0 0.0
      %3686 = vmatpush1.msra.mxu0 %v3662
      %3687 = vmatprep.subr.mxu0 0.0
      %3688 = vmatpush1.msra.mxu0 %v3664
      %3689 = vmatprep.subr.mxu0 0.0
      %3690 = vmatpush1.msra.mxu0 %v3666
      %3691 = vmatprep.subr.mxu0 0.0
      %3692 = vmatpush1.msra.mxu0 %v3668
      %3693 = vmatprep.subr.mxu0 0.0
      %3694 = vmatpush1.msra.mxu0 0.0
      %3695 = vmatprep.subr.mxu0 0.0
      %3696 = vmatpush1.msra.mxu0 0.0
      %3697 = vmatprep.subr.mxu0 0.0
      %3698 = vmatpush1.msra.mxu0 0.0
      %3699 = vmatprep.subr.mxu0 0.0
      %3700 = vmatpush1.msra.mxu0 0.0
      %3701 = vmatprep.subr.mxu0 0.0
      %3702 = vmatpush1.msra.mxu0 0.0
      %3703 = vmatprep.subr.mxu0 0.0
      %3704 = vmatpush1.msra.mxu0 0.0
      %3705 = vmatprep.subr.mxu0 0.0
      %3706 = vmatpush1.msra.mxu0 0.0
      %3707 = vmatprep.subr.mxu0 0.0
      %3708 = vmatpush1.msra.mxu0 0.0
      %3709 = vmatprep.subr.mxu0 0.0
      %3710 = vmatpush1.msra.mxu0 0.0
      %3711 = vmatprep.subr.mxu0 0.0
      %3712 = vmatpush1.msra.mxu0 0.0
      %3713 = vmatprep.subr.mxu0 0.0
      %3714 = vmatpush1.msra.mxu0 0.0
      %3715 = vmatprep.subr.mxu0 0.0
      %3716 = vmatpush1.msra.mxu0 0.0
      %3717 = vmatprep.subr.mxu0 0.0
      %3718 = vmatpush1.msra.mxu0 0.0
      %3719 = vmatprep.subr.mxu0 0.0
      %3720 = vmatpush1.msra.mxu0 0.0
      %3721 = vmatprep.subr.mxu0 0.0
      %3722 = vmatpush1.msra.mxu0 0.0
      %3723 = vmatprep.subr.mxu0 0.0
      %3724 = vmatpush1.msra.mxu0 0.0
      %3725 = vmatprep.subr.mxu0 0.0
      %3726 = vmatpush1.msra.mxu0 0.0
      %3727 = vmatprep.subr.mxu0 0.0
      %3728 = vmatpush1.msra.mxu0 0.0
      %3729 = vmatprep.subr.mxu0 0.0
      %3730 = vmatpush1.msra.mxu0 0.0
      %3731 = vmatprep.subr.mxu0 0.0
      %3732 = vmatpush1.msra.mxu0 0.0
      %3733 = vmatprep.subr.mxu0 0.0
      %3734 = vmatpush1.msra.mxu0 0.0
      %3735 = vmatprep.subr.mxu0 0.0
      %3736 = vmatpush1.msra.mxu0 0.0
      %3737 = vmatprep.subr.mxu0 0.0
      %3738 = vmatpush1.msra.mxu0 0.0
      %3739 = vmatprep.subr.mxu0 0.0
      %3740 = vmatpush1.msra.mxu0 0.0
      %3741 = vmatprep.mubr.f32.mxu0 0.0
      %3742 = vmatmul.mubr.f32.gmra.mrb[0].mxu0 %v1576
      %v3743 = vpop.f32.mrb[0].mxu0
      %v3744 = vadd.f32 0.0, %v3743
      %v3745 = vpop.f32.mrb[0].mxu0
      %3746 = vmatprep.mubr.f32.mxu0 0.0
      %3747 = vmatmul.mubr.f32.gmra.mrb[0].mxu0 %v1579
      %v3748 = vpop.f32.mrb[0].mxu0
      %v3749 = vadd.f32 0.0, %v3748
      %v3750 = vpop.f32.mrb[0].mxu0
      %3751 = vmatprep.mubr.f32.mxu0 0.0
      %3752 = vmatmul.mubr.f32.gmra.mrb[0].mxu0 %v1582
      %v3753 = vpop.f32.mrb[0].mxu0
      %v3754 = vadd.f32 0.0, %v3753
      %v3755 = vpop.f32.mrb[0].mxu0
      %3756 = vmatprep.mubr.f32.mxu0 0.0
      %3757 = vmatmul.mubr.f32.gmra.mrb[0].mxu0 %v1585
      %v3758 = vpop.f32.mrb[0].mxu0
      %v3759 = vadd.f32 0.0, %v3758
      %v3760 = vpop.f32.mrb[0].mxu0
      %3761 = vmatprep.mubr.f32.mxu0 0.0
      %3762 = vmatmul.mubr.f32.gmra.mrb[0].mxu0 %v1588
      %v3763 = vpop.f32.mrb[0].mxu0
      %v3764 = vadd.f32 0.0, %v3763
      %v3765 = vpop.f32.mrb[0].mxu0
      %3766 = vmatprep.mubr.f32.mxu0 0.0
      %3767 = vmatmul.mubr.f32.gmra.mrb[0].mxu0 %v1591
      %v3768 = vpop.f32.mrb[0].mxu0
      %v3769 = vadd.f32 0.0, %v3768
      %v3770 = vpop.f32.mrb[0].mxu0
      %3771 = vmatprep.mubr.f32.mxu0 0.0
      %3772 = vmatmul.mubr.f32.gmra.mrb[0].mxu0 %v1594
      %v3773 = vpop.f32.mrb[0].mxu0
      %v3774 = vadd.f32 0.0, %v3773
      %v3775 = vpop.f32.mrb[0].mxu0
      %3776 = vmatprep.mubr.f32.mxu0 0.0
      %3777 = vmatmul.mubr.f32.gmra.mrb[0].mxu0 %v1597
      %v3778 = vpop.f32.mrb[0].mxu0
      %v3779 = vadd.f32 0.0, %v3778
      %v3780 = vpop.f32.mrb[0].mxu0
      %3781 = vdwg.mxu0
      %3782 = vxpose.xlu0.b32.start [1/16] %v3411, 128
      %3783 = vxpose.xlu0.b32.cont [2/16] %v3412, 128
      %3784 = vxpose.xlu0.b32.cont [3/16] %v3413, 128
      %3785 = vxpose.xlu0.b32.cont [4/16] %v3414, 128
      %3786 = vxpose.xlu0.b32.cont [5/16] 0.0, 128
      %3787 = vxpose.xlu0.b32.cont [6/16] 0.0, 128
      %3788 = vxpose.xlu0.b32.cont [7/16] 0.0, 128
      %3789 = vxpose.xlu0.b32.cont [8/16] 0.0, 128
      %3790 = vxpose.xlu0.b32.cont [9/16] 0.0, 128
      %3791 = vxpose.xlu0.b32.cont [10/16] 0.0, 128
      %3792 = vxpose.xlu0.b32.cont [11/16] 0.0, 128
      %3793 = vxpose.xlu0.b32.cont [12/16] 0.0, 128
      %3794 = vxpose.xlu0.b32.cont [13/16] 0.0, 128
      %3795 = vxpose.xlu0.b32.cont [14/16] 0.0, 128
      %3796 = vxpose.xlu0.b32.cont [15/16] 0.0, 128
      %3797 = vxpose.xlu0.b32.end [16/16] 0.0, 128
      %v3798 = vpop.trf.xlu0
      %v3799 = vpop.trf.xlu0
      %v3800 = vpop.trf.xlu0
      %v3801 = vpop.trf.xlu0
      %v3802 = vpop.trf.xlu0
      %v3803 = vpop.trf.xlu0
      %v3804 = vpop.trf.xlu0
      %v3805 = vpop.trf.xlu0
      %v3806 = vpop.trf.xlu0
      %v3807 = vpop.trf.xlu0
      %v3808 = vpop.trf.xlu0
      %v3809 = vpop.trf.xlu0
      %v3810 = vpop.trf.xlu0
      %v3811 = vpop.trf.xlu0
      %v3812 = vpop.trf.xlu0
      %v3813 = vpop.trf.xlu0
      %v3815 = vsel %vm918, %v3798, 0
      %v3818 = vsel %vm918, %v3799, 0
      %v3821 = vsel %vm918, %v3800, 0
      %v3824 = vsel %vm918, %v3801, 0
      %v3827 = vsel %vm918, %v3802, 0
      %v3830 = vsel %vm918, %v3803, 0
      %v3833 = vsel %vm918, %v3804, 0
      %v3836 = vsel %vm918, %v3805, 0
      %3838 = vmatprep.subr.mxu0 0.0
      %3839 = vmatpush1.msra.mxu0 %v3639
      %3840 = vmatprep.subr.mxu0 0.0
      %3841 = vmatpush1.msra.mxu0 %v3642
      %3842 = vmatprep.subr.mxu0 0.0
      %3843 = vmatpush1.msra.mxu0 %v3647
      %3844 = vmatprep.subr.mxu0 0.0
      %3845 = vmatpush1.msra.mxu0 %v3650
      %3846 = vmatprep.subr.mxu0 0.0
      %3847 = vmatpush1.msra.mxu0 0.0
      %3848 = vmatprep.subr.mxu0 0.0
      %3849 = vmatpush1.msra.mxu0 0.0
      %3850 = vmatprep.subr.mxu0 0.0
      %3851 = vmatpush1.msra.mxu0 0.0
      %3852 = vmatprep.subr.mxu0 0.0
      %3853 = vmatpush1.msra.mxu0 0.0
      %3854 = vmatprep.subr.mxu0 0.0
      %3855 = vmatpush1.msra.mxu0 0.0
      %3856 = vmatprep.subr.mxu0 0.0
      %3857 = vmatpush1.msra.mxu0 0.0
      %3858 = vmatprep.subr.mxu0 0.0
      %3859 = vmatpush1.msra.mxu0 0.0
      %3860 = vmatprep.subr.mxu0 0.0
      %3861 = vmatpush1.msra.mxu0 0.0
      %3862 = vmatprep.subr.mxu0 0.0
      %3863 = vmatpush1.msra.mxu0 0.0
      %3864 = vmatprep.subr.mxu0 0.0
      %3865 = vmatpush1.msra.mxu0 0.0
      %3866 = vmatprep.subr.mxu0 0.0
      %3867 = vmatpush1.msra.mxu0 0.0
      %3868 = vmatprep.subr.mxu0 0.0
      %3869 = vmatpush1.msra.mxu0 0.0
      %3870 = vmatprep.subr.mxu0 0.0
      %3871 = vmatpush1.msra.mxu0 0.0
      %3872 = vmatprep.subr.mxu0 0.0
      %3873 = vmatpush1.msra.mxu0 0.0
      %3874 = vmatprep.subr.mxu0 0.0
      %3875 = vmatpush1.msra.mxu0 0.0
      %3876 = vmatprep.subr.mxu0 0.0
      %3877 = vmatpush1.msra.mxu0 0.0
      %3878 = vmatprep.subr.mxu0 0.0
      %3879 = vmatpush1.msra.mxu0 0.0
      %3880 = vmatprep.subr.mxu0 0.0
      %3881 = vmatpush1.msra.mxu0 0.0
      %3882 = vmatprep.subr.mxu0 0.0
      %3883 = vmatpush1.msra.mxu0 0.0
      %3884 = vmatprep.subr.mxu0 0.0
      %3885 = vmatpush1.msra.mxu0 0.0
      %3886 = vmatprep.subr.mxu0 0.0
      %3887 = vmatpush1.msra.mxu0 0.0
      %3888 = vmatprep.subr.mxu0 0.0
      %3889 = vmatpush1.msra.mxu0 0.0
      %3890 = vmatprep.subr.mxu0 0.0
      %3891 = vmatpush1.msra.mxu0 0.0
      %3892 = vmatprep.subr.mxu0 0.0
      %3893 = vmatpush1.msra.mxu0 0.0
      %3894 = vmatprep.subr.mxu0 0.0
      %3895 = vmatpush1.msra.mxu0 0.0
      %3896 = vmatprep.subr.mxu0 0.0
      %3897 = vmatpush1.msra.mxu0 0.0
      %3898 = vmatprep.subr.mxu0 0.0
      %3899 = vmatpush1.msra.mxu0 0.0
      %3900 = vmatprep.subr.mxu0 0.0
      %3901 = vmatpush1.msra.mxu0 0.0
      %3902 = vmatprep.mubr.f32.mxu0 0.0
      %3903 = vmatmul.mubr.f32.gmra.mrb[0].mxu0 %v3815
      %v3904 = vpop.f32.mrb[0].mxu0
      %v3905 = vadd.f32 0.0, %v3904
      %v3906 = vpop.f32.mrb[0].mxu0
      %3907 = vmatprep.mubr.f32.mxu0 0.0
      %3908 = vmatmul.mubr.f32.gmra.mrb[0].mxu0 %v3818
      %v3909 = vpop.f32.mrb[0].mxu0
      %v3910 = vadd.f32 0.0, %v3909
      %v3911 = vpop.f32.mrb[0].mxu0
      %3912 = vmatprep.mubr.f32.mxu0 0.0
      %3913 = vmatmul.mubr.f32.gmra.mrb[0].mxu0 %v3821
      %v3914 = vpop.f32.mrb[0].mxu0
      %v3915 = vadd.f32 0.0, %v3914
      %v3916 = vpop.f32.mrb[0].mxu0
      %3917 = vmatprep.mubr.f32.mxu0 0.0
      %3918 = vmatmul.mubr.f32.gmra.mrb[0].mxu0 %v3824
      %v3919 = vpop.f32.mrb[0].mxu0
      %v3920 = vadd.f32 0.0, %v3919
      %v3921 = vpop.f32.mrb[0].mxu0
      %3922 = vmatprep.mubr.f32.mxu0 0.0
      %3923 = vmatmul.mubr.f32.gmra.mrb[0].mxu0 %v3827
      %v3924 = vpop.f32.mrb[0].mxu0
      %v3925 = vadd.f32 0.0, %v3924
      %v3926 = vpop.f32.mrb[0].mxu0
      %3927 = vmatprep.mubr.f32.mxu0 0.0
      %3928 = vmatmul.mubr.f32.gmra.mrb[0].mxu0 %v3830
      %v3929 = vpop.f32.mrb[0].mxu0
      %v3930 = vadd.f32 0.0, %v3929
      %v3931 = vpop.f32.mrb[0].mxu0
      %3932 = vmatprep.mubr.f32.mxu0 0.0
      %3933 = vmatmul.mubr.f32.gmra.mrb[0].mxu0 %v3833
      %v3934 = vpop.f32.mrb[0].mxu0
      %v3935 = vadd.f32 0.0, %v3934
      %v3936 = vpop.f32.mrb[0].mxu0
      %3937 = vmatprep.mubr.f32.mxu0 0.0
      %3938 = vmatmul.mubr.f32.gmra.mrb[0].mxu0 %v3836
      %v3939 = vpop.f32.mrb[0].mxu0
      %v3940 = vadd.f32 0.0, %v3939
      %v3941 = vpop.f32.mrb[0].mxu0
      %3942 = vdwg.mxu0
      %v3943 = vmul.f32 %v3395, %v3905
      %v3944 = vmul.f32 %v3396, %v3910
      %v3945 = vmul.f32 %v3397, %v3915
      %v3946 = vmul.f32 %v3398, %v3920
      %v3947 = vmul.f32 %v3399, %v3925
      %v3948 = vmul.f32 %v3400, %v3930
      %v3949 = vmul.f32 %v3401, %v3935
      %v3950 = vmul.f32 %v3402, %v3940
      %v3951 = vsub.f32 1.0, %v3395
      %v3952 = vsub.f32 1.0, %v3396
      %v3953 = vsub.f32 1.0, %v3397
      %v3954 = vsub.f32 1.0, %v3398
      %v3955 = vsub.f32 1.0, %v3399
      %v3956 = vsub.f32 1.0, %v3400
      %v3957 = vsub.f32 1.0, %v3401
      %v3958 = vsub.f32 1.0, %v3402
      %v3959 = vmul.f32 %v3951, %v3744
      %v3960 = vmul.f32 %v3952, %v3749
      %v3961 = vmul.f32 %v3953, %v3754
      %v3962 = vmul.f32 %v3954, %v3759
      %v3963 = vmul.f32 %v3955, %v3764
      %v3964 = vmul.f32 %v3956, %v3769
      %v3965 = vmul.f32 %v3957, %v3774
      %v3966 = vmul.f32 %v3958, %v3779
      %v3967 = vadd.f32 %v3943, %v3959
      %v3968 = vadd.f32 %v3944, %v3960
      %v3969 = vadd.f32 %v3945, %v3961
      %v3970 = vadd.f32 %v3946, %v3962
      %v3971 = vadd.f32 %v3947, %v3963
      %v3972 = vadd.f32 %v3948, %v3964
      %v3973 = vadd.f32 %v3949, %v3965
      %v3974 = vadd.f32 %v3950, %v3966
      %3975 = vrot.lane.b32.xlu0 %v906, 32
      %v3976 = vpop.permute.xlu0 %3975
      %3977 = vrot.lane.b32.xlu0 %v907, 32
      %v3978 = vpop.permute.xlu0 %3977
      %3979 = vrot.lane.b32.xlu0 %v908, 32
      %v3980 = vpop.permute.xlu0 %3979
      %3981 = vrot.lane.b32.xlu0 %v909, 32
      %v3982 = vpop.permute.xlu0 %3981
      %3983 = vrot.lane.b32.xlu0 %v910, 32
      %v3984 = vpop.permute.xlu0 %3983
      %3985 = vrot.lane.b32.xlu0 %v911, 32
      %v3986 = vpop.permute.xlu0 %3985
      %3987 = vrot.lane.b32.xlu0 %v912, 32
      %v3988 = vpop.permute.xlu0 %3987
      %3989 = vrot.lane.b32.xlu0 %v913, 32
      %v3990 = vpop.permute.xlu0 %3989
      %v3992 = vsel %vm918, %v3976, 0
      %v3995 = vsel %vm918, %v3978, 0
      %v3998 = vsel %vm918, %v3980, 0
      %v4001 = vsel %vm918, %v3982, 0
      %v4004 = vsel %vm918, %v3984, 0
      %v4007 = vsel %vm918, %v3986, 0
      %v4010 = vsel %vm918, %v3988, 0
      %v4013 = vsel %vm918, %v3990, 0
      %4015 = vmatprep.subr.bf16.mxu0 0
      %4016 = vmatpush1.bf16.xpose.msra.mxu0 %v4004
      %4017 = vmatprep.subr.bf16.mxu0 0
      %4018 = vmatpush1.bf16.xpose.msra.mxu0 %v4007
      %4019 = vmatprep.subr.bf16.mxu0 0
      %4020 = vmatpush1.bf16.xpose.msra.mxu0 %v4010
      %4021 = vmatprep.subr.bf16.mxu0 0
      %4022 = vmatpush1.bf16.xpose.msra.mxu0 %v4013
      %4023 = vmatprep.subr.bf16.mxu0 0
      %4024 = vmatpush1.bf16.xpose.msra.mxu0 0
      %4025 = vmatprep.subr.bf16.mxu0 0
      %4026 = vmatpush1.bf16.xpose.msra.mxu0 0
      %4027 = vmatprep.subr.bf16.mxu0 0
      %4028 = vmatpush1.bf16.xpose.msra.mxu0 0
      %4029 = vmatprep.subr.bf16.mxu0 0
      %4030 = vmatpush1.bf16.xpose.msra.mxu0 0
      %4031 = vmatprep.subr.bf16.mxu0 0
      %4032 = vmatpush1.bf16.xpose.msra.mxu0 0
      %4033 = vmatprep.subr.bf16.mxu0 0
      %4034 = vmatpush1.bf16.xpose.msra.mxu0 0
      %4035 = vmatprep.subr.bf16.mxu0 0
      %4036 = vmatpush1.bf16.xpose.msra.mxu0 0
      %4037 = vmatprep.subr.bf16.mxu0 0
      %4038 = vmatpush1.bf16.xpose.msra.mxu0 0
      %4039 = vmatprep.subr.bf16.mxu0 0
      %4040 = vmatpush1.bf16.xpose.msra.mxu0 0
      %4041 = vmatprep.subr.bf16.mxu0 0
      %4042 = vmatpush1.bf16.xpose.msra.mxu0 0
      %4043 = vmatprep.subr.bf16.mxu0 0
      %4044 = vmatpush1.bf16.xpose.msra.mxu0 0
      %4045 = vmatprep.subr.bf16.mxu0 0
      %4046 = vmatpush1.bf16.xpose.msra.mxu0 0
      %4047 = vmatprep.mubr.bf16.mxu0 0
      %4048 = vmatmul.mubr.bf16.gmra.mrb[0].mxu0 %v3992
      %v4049 = vpop.f32.mrb[0].mxu0
      %v4050 = vadd.f32 0.0, %v4049
      %v4051 = vpop.f32.mrb[0].mxu0
      %v4052 = vpop.f32.mrb[0].mxu0
      %v4053 = vadd.f32 0.0, %v4052
      %v4054 = vpop.f32.mrb[0].mxu0
      %4055 = vmatprep.mubr.bf16.mxu0 0
      %4056 = vmatmul.mubr.bf16.gmra.mrb[0].mxu0 %v3995
      %v4057 = vpop.f32.mrb[0].mxu0
      %v4058 = vadd.f32 0.0, %v4057
      %v4059 = vpop.f32.mrb[0].mxu0
      %v4060 = vpop.f32.mrb[0].mxu0
      %v4061 = vadd.f32 0.0, %v4060
      %v4062 = vpop.f32.mrb[0].mxu0
      %4063 = vmatprep.mubr.bf16.mxu0 0
      %4064 = vmatmul.mubr.bf16.gmra.mrb[0].mxu0 %v3998
      %v4065 = vpop.f32.mrb[0].mxu0
      %v4066 = vadd.f32 0.0, %v4065
      %v4067 = vpop.f32.mrb[0].mxu0
      %v4068 = vpop.f32.mrb[0].mxu0
      %v4069 = vadd.f32 0.0, %v4068
      %v4070 = vpop.f32.mrb[0].mxu0
      %4071 = vmatprep.mubr.bf16.mxu0 0
      %4072 = vmatmul.mubr.bf16.gmra.mrb[0].mxu0 %v4001
      %v4073 = vpop.f32.mrb[0].mxu0
      %v4074 = vadd.f32 0.0, %v4073
      %v4075 = vpop.f32.mrb[0].mxu0
      %v4076 = vpop.f32.mrb[0].mxu0
      %v4077 = vadd.f32 0.0, %v4076
      %v4078 = vpop.f32.mrb[0].mxu0
      %4079 = vdwg.mxu0
      %v4080 = vadd.f32 %v4050, %v834
      %v4081 = vadd.f32 %v4053, %v835
      %v4082 = vadd.f32 %v4058, %v836
      %v4083 = vadd.f32 %v4061, %v837
      %v4084 = vadd.f32 %v4066, %v838
      %v4085 = vadd.f32 %v4069, %v839
      %v4086 = vadd.f32 %v4074, %v840
      %v4087 = vadd.f32 %v4077, %v841
      %v4088 = vsel %vm1016, %v4080, -inf
      %4089 = vmax.xlane.f32.xlu0 %v4088
      %v4090 = vpop.xlane.xlu0 %4089
      %v4091 = vsel %vm1016, %v4081, -inf
      %4092 = vmax.xlane.f32.xlu0 %v4091
      %v4093 = vpop.xlane.xlu0 %4092
      %v4094 = vsel %vm1016, %v4082, -inf
      %4095 = vmax.xlane.f32.xlu0 %v4094
      %v4096 = vpop.xlane.xlu0 %4095
      %v4097 = vsel %vm1016, %v4083, -inf
      %4098 = vmax.xlane.f32.xlu0 %v4097
      %v4099 = vpop.xlane.xlu0 %4098
      %v4100 = vsel %vm1016, %v4084, -inf
      %4101 = vmax.xlane.f32.xlu0 %v4100
      %v4102 = vpop.xlane.xlu0 %4101
      %v4103 = vsel %vm1016, %v4085, -inf
      %4104 = vmax.xlane.f32.xlu0 %v4103
      %v4105 = vpop.xlane.xlu0 %4104
      %v4106 = vsel %vm1016, %v4086, -inf
      %4107 = vmax.xlane.f32.xlu0 %v4106
      %v4108 = vpop.xlane.xlu0 %4107
      %v4109 = vsel %vm1016, %v4087, -inf
      %4110 = vmax.xlane.f32.xlu0 %v4109
      %v4111 = vpop.xlane.xlu0 %4110
      %4116 = vmatprep.subr.bf16.mxu0 0
      %4117 = vmatpush1.bf16.msra.mxu0 %v3984
      %4118 = vmatprep.subr.bf16.mxu0 0
      %4119 = vmatpush1.bf16.msra.mxu0 %v3986
      %4120 = vmatprep.subr.bf16.mxu0 0
      %4121 = vmatpush1.bf16.msra.mxu0 %v3988
      %4122 = vmatprep.subr.bf16.mxu0 0
      %4123 = vmatpush1.bf16.msra.mxu0 %v3990
      %4124 = vmatprep.subr.bf16.mxu0 0
      %4125 = vmatpush1.bf16.msra.mxu0 0
      %4126 = vmatprep.subr.bf16.mxu0 0
      %4127 = vmatpush1.bf16.msra.mxu0 0
      %4128 = vmatprep.subr.bf16.mxu0 0
      %4129 = vmatpush1.bf16.msra.mxu0 0
      %4130 = vmatprep.subr.bf16.mxu0 0
      %4131 = vmatpush1.bf16.msra.mxu0 0
      %4132 = vmatprep.subr.bf16.mxu0 0
      %4133 = vmatpush1.bf16.msra.mxu0 0
      %4134 = vmatprep.subr.bf16.mxu0 0
      %4135 = vmatpush1.bf16.msra.mxu0 0
      %4136 = vmatprep.subr.bf16.mxu0 0
      %4137 = vmatpush1.bf16.msra.mxu0 0
      %4138 = vmatprep.subr.bf16.mxu0 0
      %4139 = vmatpush1.bf16.msra.mxu0 0
      %4140 = vmatprep.subr.bf16.mxu0 0
      %4141 = vmatpush1.bf16.msra.mxu0 0
      %4142 = vmatprep.subr.bf16.mxu0 0
      %4143 = vmatpush1.bf16.msra.mxu0 0
      %4144 = vmatprep.subr.bf16.mxu0 0
      %4145 = vmatpush1.bf16.msra.mxu0 0
      %4146 = vmatprep.subr.bf16.mxu0 0
      %4147 = vmatpush1.bf16.msra.mxu0 0
      %4148 = vmatprep.mubr.bf16.mxu0 0
      %4149 = vmatmul.mubr.bf16.gmra.mrb[0].mxu0 %v1062
      %v4150 = vpop.f32.mrb[0].mxu0
      %v4151 = vadd.f32 0.0, %v4150
      %v4152 = vpop.f32.mrb[0].mxu0
      %v4153 = vpop.f32.mrb[0].mxu0
      %v4154 = vadd.f32 0.0, %v4153
      %v4155 = vpop.f32.mrb[0].mxu0
      %4156 = vmatprep.mubr.bf16.mxu0 0
      %4157 = vmatmul.mubr.bf16.gmra.mrb[0].mxu0 %v1065
      %v4158 = vpop.f32.mrb[0].mxu0
      %v4159 = vadd.f32 0.0, %v4158
      %v4160 = vpop.f32.mrb[0].mxu0
      %v4161 = vpop.f32.mrb[0].mxu0
      %v4162 = vadd.f32 0.0, %v4161
      %v4163 = vpop.f32.mrb[0].mxu0
      %4164 = vmatprep.mubr.bf16.mxu0 0
      %4165 = vmatmul.mubr.bf16.gmra.mrb[0].mxu0 %v1068
      %v4166 = vpop.f32.mrb[0].mxu0
      %v4167 = vadd.f32 0.0, %v4166
      %v4168 = vpop.f32.mrb[0].mxu0
      %v4169 = vpop.f32.mrb[0].mxu0
      %v4170 = vadd.f32 0.0, %v4169
      %v4171 = vpop.f32.mrb[0].mxu0
      %4172 = vmatprep.mubr.bf16.mxu0 0
      %4173 = vmatmul.mubr.bf16.gmra.mrb[0].mxu0 %v1071
      %v4174 = vpop.f32.mrb[0].mxu0
      %v4175 = vadd.f32 0.0, %v4174
      %v4176 = vpop.f32.mrb[0].mxu0
      %v4177 = vpop.f32.mrb[0].mxu0
      %v4178 = vadd.f32 0.0, %v4177
      %v4179 = vpop.f32.mrb[0].mxu0
      %4180 = vdwg.mxu0
      %4189 = vrot.lane.b32.xlu0 %v4151, 96
      %v4190 = vpop.permute.xlu0 %4189
      %4191 = vrot.lane.b32.xlu0 %v4154, 96
      %v4192 = vpop.permute.xlu0 %4191
      %4193 = vrot.lane.b32.xlu0 %v4159, 96
      %v4194 = vpop.permute.xlu0 %4193
      %4195 = vrot.lane.b32.xlu0 %v4162, 96
      %v4196 = vpop.permute.xlu0 %4195
      %4197 = vrot.lane.b32.xlu0 %v4167, 96
      %v4198 = vpop.permute.xlu0 %4197
      %4199 = vrot.lane.b32.xlu0 %v4170, 96
      %v4200 = vpop.permute.xlu0 %4199
      %4201 = vrot.lane.b32.xlu0 %v4175, 96
      %v4202 = vpop.permute.xlu0 %4201
      %4203 = vrot.lane.b32.xlu0 %v4178, 96
      %v4204 = vpop.permute.xlu0 %4203
      %v4213 = vmul.f32 %v723, %v4190
      %v4214 = vmul.f32 %v727, %v4192
      %v4215 = vmul.f32 %v733, %v4194
      %v4216 = vmul.f32 %v737, %v4196
      %v4217 = vmul.f32 %v743, %v4198
      %v4218 = vmul.f32 %v747, %v4200
      %v4219 = vmul.f32 %v753, %v4202
      %v4220 = vmul.f32 %v757, %v4204
      %4229 = vrot.lane.b32.xlu0 %v4213, 32
      %v4230 = vpop.permute.xlu0 %4229
      %4231 = vrot.lane.b32.xlu0 %v4214, 32
      %v4232 = vpop.permute.xlu0 %4231
      %4233 = vrot.lane.b32.xlu0 %v4215, 32
      %v4234 = vpop.permute.xlu0 %4233
      %4235 = vrot.lane.b32.xlu0 %v4216, 32
      %v4236 = vpop.permute.xlu0 %4235
      %4237 = vrot.lane.b32.xlu0 %v4217, 32
      %v4238 = vpop.permute.xlu0 %4237
      %4239 = vrot.lane.b32.xlu0 %v4218, 32
      %v4240 = vpop.permute.xlu0 %4239
      %4241 = vrot.lane.b32.xlu0 %v4219, 32
      %v4242 = vpop.permute.xlu0 %4241
      %4243 = vrot.lane.b32.xlu0 %v4220, 32
      %v4244 = vpop.permute.xlu0 %4243
      %v4253 = vsel %vm918, %v4230, 0.0
      %4254 = vadd.xlane.f32.xlu0 %v4253
      %v4255 = vpop.xlane.xlu0 %4254
      %v4256 = vsel %vm918, %v4232, 0.0
      %4257 = vadd.xlane.f32.xlu0 %v4256
      %v4258 = vpop.xlane.xlu0 %4257
      %v4259 = vsel %vm918, %v4234, 0.0
      %4260 = vadd.xlane.f32.xlu0 %v4259
      %v4261 = vpop.xlane.xlu0 %4260
      %v4262 = vsel %vm918, %v4236, 0.0
      %4263 = vadd.xlane.f32.xlu0 %v4262
      %v4264 = vpop.xlane.xlu0 %4263
      %v4265 = vsel %vm918, %v4238, 0.0
      %4266 = vadd.xlane.f32.xlu0 %v4265
      %v4267 = vpop.xlane.xlu0 %4266
      %v4268 = vsel %vm918, %v4240, 0.0
      %4269 = vadd.xlane.f32.xlu0 %v4268
      %v4270 = vpop.xlane.xlu0 %4269
      %v4271 = vsel %vm918, %v4242, 0.0
      %4272 = vadd.xlane.f32.xlu0 %v4271
      %v4273 = vpop.xlane.xlu0 %4272
      %v4274 = vsel %vm918, %v4244, 0.0
      %4275 = vadd.xlane.f32.xlu0 %v4274
      %v4276 = vpop.xlane.xlu0 %4275
      %v4277 = vmul.f32 %v4255, 0.015625
      %v4278 = vmul.f32 %v4258, 0.015625
      %v4279 = vmul.f32 %v4261, 0.015625
      %v4280 = vmul.f32 %v4264, 0.015625
      %v4281 = vmul.f32 %v4267, 0.015625
      %v4282 = vmul.f32 %v4270, 0.015625
      %v4283 = vmul.f32 %v4273, 0.015625
      %v4284 = vmul.f32 %v4276, 0.015625
      %v4285 = vsub.f32 %v4090, %v4277
      %v4286 = vsub.f32 %v4093, %v4278
      %v4287 = vsub.f32 %v4096, %v4279
      %v4288 = vsub.f32 %v4099, %v4280
      %v4289 = vsub.f32 %v4102, %v4281
      %v4290 = vsub.f32 %v4105, %v4282
      %v4291 = vsub.f32 %v4108, %v4283
      %v4292 = vsub.f32 %v4111, %v4284
      %v4293 = vmul.f32 %v4285, %v893
      %v4294 = vmul.f32 %v4286, %v894
      %v4295 = vmul.f32 %v4287, %v895
      %v4296 = vmul.f32 %v4288, %v896
      %v4297 = vmul.f32 %v4289, %v897
      %v4298 = vmul.f32 %v4290, %v898
      %v4299 = vmul.f32 %v4291, %v899
      %v4300 = vmul.f32 %v4292, %v900
      %v4301 = vsel %vm1016, %v4293, 0.0
      %v4302 = vsel %vm1016, %v4294, 0.0
      %v4303 = vadd.f32 %v4301, %v4302
      %v4304 = vsel %vm1016, %v4295, 0.0
      %v4305 = vadd.f32 %v4303, %v4304
      %v4306 = vsel %vm1016, %v4296, 0.0
      %v4307 = vadd.f32 %v4305, %v4306
      %v4308 = vsel %vm1016, %v4297, 0.0
      %v4309 = vadd.f32 %v4307, %v4308
      %v4310 = vsel %vm1016, %v4298, 0.0
      %v4311 = vadd.f32 %v4309, %v4310
      %v4312 = vsel %vm1016, %v4299, 0.0
      %v4313 = vadd.f32 %v4311, %v4312
      %v4314 = vsel %vm1016, %v4300, 0.0
      %v4315 = vadd.f32 %v4313, %v4314
      %v4316 = vrot.slane %v4315, 4
      %v4317 = vadd.f32 %v4315, %v4316
      %v4318 = vrot.slane %v4317, 2
      %v4319 = vadd.f32 %v4317, %v4318
      %v4320 = vrot.slane %v4319, 1
      %v4321 = vadd.f32 %v4319, %v4320
      %vm4322 = vcmp.gt.f32.partialorder %v4321, %v4285
      %vm4323 = vcmp.gt.f32.partialorder %v4321, %v4286
      %vm4324 = vcmp.gt.f32.partialorder %v4321, %v4287
      %vm4325 = vcmp.gt.f32.partialorder %v4321, %v4288
      %vm4326 = vcmp.gt.f32.partialorder %v4321, %v4289
      %vm4327 = vcmp.gt.f32.partialorder %v4321, %v4290
      %vm4328 = vcmp.gt.f32.partialorder %v4321, %v4291
      %vm4329 = vcmp.gt.f32.partialorder %v4321, %v4292
      %vm4330 = vcmp.eq.f32.partialorder %v4321, %v4285
      %vm4331 = vcmp.eq.f32.partialorder %v4321, %v4286
      %vm4332 = vcmp.eq.f32.partialorder %v4321, %v4287
      %vm4333 = vcmp.eq.f32.partialorder %v4321, %v4288
      %vm4334 = vcmp.eq.f32.partialorder %v4321, %v4289
      %vm4335 = vcmp.eq.f32.partialorder %v4321, %v4290
      %vm4336 = vcmp.eq.f32.partialorder %v4321, %v4291
      %vm4337 = vcmp.eq.f32.partialorder %v4321, %v4292
      %vm4338 = vmand %vm4330, %vm1231
      %vm4339 = vmand %vm4331, %vm1232
      %vm4340 = vmand %vm4332, %vm1233
      %vm4341 = vmand %vm4333, %vm1234
      %vm4342 = vmand %vm4334, %vm1235
      %vm4343 = vmand %vm4335, %vm1236
      %vm4344 = vmand %vm4336, %vm1237
      %vm4345 = vmand %vm4337, %vm1238
      %vm4346 = vmor %vm4322, %vm4338
      %vm4347 = vmor %vm4323, %vm4339
      %vm4348 = vmor %vm4324, %vm4340
      %vm4349 = vmor %vm4325, %vm4341
      %vm4350 = vmor %vm4326, %vm4342
      %vm4351 = vmor %vm4327, %vm4343
      %vm4352 = vmor %vm4328, %vm4344
      %vm4353 = vmor %vm4329, %vm4345
      %v4354 = vsel %vm4346, 1, 0
      %v4355 = vsel %vm4347, 1, 0
      %v4356 = vsel %vm4348, 1, 0
      %v4357 = vsel %vm4349, 1, 0
      %v4358 = vsel %vm4350, 1, 0
      %v4359 = vsel %vm4351, 1, 0
      %v4360 = vsel %vm4352, 1, 0
      %v4361 = vsel %vm4353, 1, 0
      %v4362 = vcvt.s32.f32 %v4354
      %v4363 = vcvt.s32.f32 %v4355
      %v4364 = vcvt.s32.f32 %v4356
      %v4365 = vcvt.s32.f32 %v4357
      %v4366 = vcvt.s32.f32 %v4358
      %v4367 = vcvt.s32.f32 %v4359
      %v4368 = vcvt.s32.f32 %v4360
      %v4369 = vcvt.s32.f32 %v4361
      %v4370 = vsel %vm1016, %v4362, 0.0
      %4371 = vadd.xlane.f32.xlu0 %v4370
      %v4372 = vpop.xlane.xlu0 %4371
      %v4373 = vsel %vm1016, %v4363, 0.0
      %4374 = vadd.xlane.f32.xlu0 %v4373
      %v4375 = vpop.xlane.xlu0 %4374
      %v4376 = vsel %vm1016, %v4364, 0.0
      %4377 = vadd.xlane.f32.xlu0 %v4376
      %v4378 = vpop.xlane.xlu0 %4377
      %v4379 = vsel %vm1016, %v4365, 0.0
      %4380 = vadd.xlane.f32.xlu0 %v4379
      %v4381 = vpop.xlane.xlu0 %4380
      %v4382 = vsel %vm1016, %v4366, 0.0
      %4383 = vadd.xlane.f32.xlu0 %v4382
      %v4384 = vpop.xlane.xlu0 %4383
      %v4385 = vsel %vm1016, %v4367, 0.0
      %4386 = vadd.xlane.f32.xlu0 %v4385
      %v4387 = vpop.xlane.xlu0 %4386
      %v4388 = vsel %vm1016, %v4368, 0.0
      %4389 = vadd.xlane.f32.xlu0 %v4388
      %v4390 = vpop.xlane.xlu0 %4389
      %v4391 = vsel %vm1016, %v4369, 0.0
      %4392 = vadd.xlane.f32.xlu0 %v4391
      %v4393 = vpop.xlane.xlu0 %4392
      %v4394 = vadd.f32 %v4370, %v4373
      %v4395 = vadd.f32 %v4394, %v4376
      %v4396 = vadd.f32 %v4395, %v4379
      %v4397 = vadd.f32 %v4396, %v4382
      %v4398 = vadd.f32 %v4397, %v4385
      %v4399 = vadd.f32 %v4398, %v4388
      %v4400 = vadd.f32 %v4399, %v4391
      %v4401 = vrot.slane %v4400, 4
      %v4402 = vadd.f32 %v4400, %v4401
      %v4403 = vrot.slane %v4402, 2
      %v4404 = vadd.f32 %v4402, %v4403
      %v4405 = vrot.slane %v4404, 1
      %v4406 = vadd.f32 %v4404, %v4405
      %v4407 = vsub.f32 63.0, %v4406
      %vm4408 = vcmp.lt.f32.partialorder %v4372, 25.0
      %vm4409 = vcmp.lt.f32.partialorder %v4375, 25.0
      %vm4410 = vcmp.lt.f32.partialorder %v4378, 25.0
      %vm4411 = vcmp.lt.f32.partialorder %v4381, 25.0
      %vm4412 = vcmp.lt.f32.partialorder %v4384, 25.0
      %vm4413 = vcmp.lt.f32.partialorder %v4387, 25.0
      %vm4414 = vcmp.lt.f32.partialorder %v4390, 25.0
      %vm4415 = vcmp.lt.f32.partialorder %v4393, 25.0
      %v4416 = vsel %vm4408, 1, 0
      %v4417 = vsel %vm4409, 1, 0
      %v4418 = vsel %vm4410, 1, 0
      %v4419 = vsel %vm4411, 1, 0
      %v4420 = vsel %vm4412, 1, 0
      %v4421 = vsel %vm4413, 1, 0
      %v4422 = vsel %vm4414, 1, 0
      %v4423 = vsel %vm4415, 1, 0
      %v4424 = vcvt.s32.f32 %v4416
      %v4425 = vcvt.s32.f32 %v4417
      %v4426 = vcvt.s32.f32 %v4418
      %v4427 = vcvt.s32.f32 %v4419
      %v4428 = vcvt.s32.f32 %v4420
      %v4429 = vcvt.s32.f32 %v4421
      %v4430 = vcvt.s32.f32 %v4422
      %v4431 = vcvt.s32.f32 %v4423
      %vm4432 = vcmp.eq.f32.partialorder %v4407, %v901
      %vm4433 = vcmp.eq.f32.partialorder %v4407, %v902
      %vm4434 = vcmp.eq.f32.partialorder %v4407, %v903
      %vm4435 = vcmp.eq.f32.partialorder %v4407, %v904
      %vm4436 = vmand %vm4432, %vm1337
      %vm4437 = vmand %vm4433, %vm1338
      %vm4438 = vmand %vm4434, %vm1339
      %vm4439 = vmand %vm4435, %vm1340
      %v4440 = vsel %vm4436, 1.0, 0.0
      %v4441 = vsel %vm4437, 1.0, 0.0
      %v4442 = vsel %vm4438, 1.0, 0.0
      %v4443 = vsel %vm4439, 1.0, 0.0
      %v4444 = vmul.f32 %v4440, %v905
      %v4445 = vmul.f32 %v4441, %v905
      %v4446 = vmul.f32 %v4442, %v905
      %v4447 = vmul.f32 %v4443, %v905
      %v4448 = vsel %vm1016, %v4444, 0.0
      %4449 = vadd.xlane.f32.xlu0 %v4448
      %v4450 = vpop.xlane.xlu0 %4449
      %v4451 = vsel %vm1016, %v4445, 0.0
      %4452 = vadd.xlane.f32.xlu0 %v4451
      %v4453 = vpop.xlane.xlu0 %4452
      %v4454 = vsel %vm1016, %v4446, 0.0
      %4455 = vadd.xlane.f32.xlu0 %v4454
      %v4456 = vpop.xlane.xlu0 %4455
      %v4457 = vsel %vm1016, %v4447, 0.0
      %4458 = vadd.xlane.f32.xlu0 %v4457
      %v4459 = vpop.xlane.xlu0 %4458
      %v4461 = vsel %vm1016, %v4440, 0
      %v4464 = vsel %vm1016, %v4441, 0
      %v4467 = vsel %vm1016, %v4442, 0
      %v4470 = vsel %vm1016, %v4443, 0
      %4472 = vmatprep.subr.mxu0 0.0
      %4473 = vmatpush1.msra.mxu0 %v4050
      %4474 = vmatprep.subr.mxu0 0.0
      %4475 = vmatpush1.msra.mxu0 %v4053
      %4476 = vmatprep.subr.mxu0 0.0
      %4477 = vmatpush1.msra.mxu0 %v4058
      %4478 = vmatprep.subr.mxu0 0.0
      %4479 = vmatpush1.msra.mxu0 %v4061
      %4480 = vmatprep.subr.mxu0 0.0
      %4481 = vmatpush1.msra.mxu0 %v4066
      %4482 = vmatprep.subr.mxu0 0.0
      %4483 = vmatpush1.msra.mxu0 %v4069
      %4484 = vmatprep.subr.mxu0 0.0
      %4485 = vmatpush1.msra.mxu0 %v4074
      %4486 = vmatprep.subr.mxu0 0.0
      %4487 = vmatpush1.msra.mxu0 %v4077
      %4488 = vmatprep.subr.mxu0 0.0
      %4489 = vmatpush1.msra.mxu0 0.0
      %4490 = vmatprep.subr.mxu0 0.0
      %4491 = vmatpush1.msra.mxu0 0.0
      %4492 = vmatprep.subr.mxu0 0.0
      %4493 = vmatpush1.msra.mxu0 0.0
      %4494 = vmatprep.subr.mxu0 0.0
      %4495 = vmatpush1.msra.mxu0 0.0
      %4496 = vmatprep.subr.mxu0 0.0
      %4497 = vmatpush1.msra.mxu0 0.0
      %4498 = vmatprep.subr.mxu0 0.0
      %4499 = vmatpush1.msra.mxu0 0.0
      %4500 = vmatprep.subr.mxu0 0.0
      %4501 = vmatpush1.msra.mxu0 0.0
      %4502 = vmatprep.subr.mxu0 0.0
      %4503 = vmatpush1.msra.mxu0 0.0
      %4504 = vmatprep.subr.mxu0 0.0
      %4505 = vmatpush1.msra.mxu0 0.0
      %4506 = vmatprep.subr.mxu0 0.0
      %4507 = vmatpush1.msra.mxu0 0.0
      %4508 = vmatprep.subr.mxu0 0.0
      %4509 = vmatpush1.msra.mxu0 0.0
      %4510 = vmatprep.subr.mxu0 0.0
      %4511 = vmatpush1.msra.mxu0 0.0
      %4512 = vmatprep.subr.mxu0 0.0
      %4513 = vmatpush1.msra.mxu0 0.0
      %4514 = vmatprep.subr.mxu0 0.0
      %4515 = vmatpush1.msra.mxu0 0.0
      %4516 = vmatprep.subr.mxu0 0.0
      %4517 = vmatpush1.msra.mxu0 0.0
      %4518 = vmatprep.subr.mxu0 0.0
      %4519 = vmatpush1.msra.mxu0 0.0
      %4520 = vmatprep.subr.mxu0 0.0
      %4521 = vmatpush1.msra.mxu0 0.0
      %4522 = vmatprep.subr.mxu0 0.0
      %4523 = vmatpush1.msra.mxu0 0.0
      %4524 = vmatprep.subr.mxu0 0.0
      %4525 = vmatpush1.msra.mxu0 0.0
      %4526 = vmatprep.subr.mxu0 0.0
      %4527 = vmatpush1.msra.mxu0 0.0
      %4528 = vmatprep.subr.mxu0 0.0
      %4529 = vmatpush1.msra.mxu0 0.0
      %4530 = vmatprep.subr.mxu0 0.0
      %4531 = vmatpush1.msra.mxu0 0.0
      %4532 = vmatprep.subr.mxu0 0.0
      %4533 = vmatpush1.msra.mxu0 0.0
      %4534 = vmatprep.subr.mxu0 0.0
      %4535 = vmatpush1.msra.mxu0 0.0
      %4536 = vmatprep.mubr.f32.mxu0 0.0
      %4537 = vmatmul.mubr.f32.gmra.mrb[0].mxu0 %v4461
      %v4538 = vpop.f32.mrb[0].mxu0
      %v4539 = vadd.f32 0.0, %v4538
      %v4540 = vpop.f32.mrb[0].mxu0
      %4541 = vmatprep.mubr.f32.mxu0 0.0
      %4542 = vmatmul.mubr.f32.gmra.mrb[0].mxu0 %v4464
      %v4543 = vpop.f32.mrb[0].mxu0
      %v4544 = vadd.f32 0.0, %v4543
      %v4545 = vpop.f32.mrb[0].mxu0
      %4546 = vmatprep.mubr.f32.mxu0 0.0
      %4547 = vmatmul.mubr.f32.gmra.mrb[0].mxu0 %v4467
      %v4548 = vpop.f32.mrb[0].mxu0
      %v4549 = vadd.f32 0.0, %v4548
      %v4550 = vpop.f32.mrb[0].mxu0
      %4551 = vmatprep.mubr.f32.mxu0 0.0
      %4552 = vmatmul.mubr.f32.gmra.mrb[0].mxu0 %v4470
      %v4553 = vpop.f32.mrb[0].mxu0
      %v4554 = vadd.f32 0.0, %v4553
      %v4555 = vpop.f32.mrb[0].mxu0
      %4556 = vdwg.mxu0
      %v4557 = vmul.f32 %v4539, 0.17677669
      %v4558 = vmul.f32 %v4544, 0.17677669
      %v4559 = vmul.f32 %v4549, 0.17677669
      %v4560 = vmul.f32 %v4554, 0.17677669
      %vm4561 = vcmp.gt.f32.partialorder %v905, %v4450
      %vm4562 = vcmp.gt.f32.partialorder %v905, %v4453
      %vm4563 = vcmp.gt.f32.partialorder %v905, %v4456
      %vm4564 = vcmp.gt.f32.partialorder %v905, %v4459
      %v4565 = vsel %vm4561, -1e+30, %v4557
      %v4566 = vsel %vm4562, -1e+30, %v4558
      %v4567 = vsel %vm4563, -1e+30, %v4559
      %v4568 = vsel %vm4564, -1e+30, %v4560
      %v4569 = vsel %vm1016, %v4565, -inf
      %4570 = vmax.xlane.f32.xlu0 %v4569
      %v4571 = vpop.xlane.xlu0 %4570
      %v4572 = vsel %vm1016, %v4566, -inf
      %4573 = vmax.xlane.f32.xlu0 %v4572
      %v4574 = vpop.xlane.xlu0 %4573
      %v4575 = vsel %vm1016, %v4567, -inf
      %4576 = vmax.xlane.f32.xlu0 %v4575
      %v4577 = vpop.xlane.xlu0 %4576
      %v4578 = vsel %vm1016, %v4568, -inf
      %4579 = vmax.xlane.f32.xlu0 %v4578
      %v4580 = vpop.xlane.xlu0 %4579
      %v4581 = vsub.f32 %v4565, %v4571
      %v4582 = vsub.f32 %v4566, %v4574
      %v4583 = vsub.f32 %v4567, %v4577
      %v4584 = vsub.f32 %v4568, %v4580
      %v4585 = vmul.f32 %v4581, 1.442695
      %v4586 = vpow.pop %v4585
      %v4587 = vmul.f32 %v4582, 1.442695
      %v4588 = vpow.pop %v4587
      %v4589 = vmul.f32 %v4583, 1.442695
      %v4590 = vpow.pop %v4589
      %v4591 = vmul.f32 %v4584, 1.442695
      %v4592 = vpow.pop %v4591
      %v4593 = vsel %vm1016, %v4586, 0.0
      %4594 = vadd.xlane.f32.xlu0 %v4593
      %v4595 = vpop.xlane.xlu0 %4594
      %v4596 = vsel %vm1016, %v4588, 0.0
      %4597 = vadd.xlane.f32.xlu0 %v4596
      %v4598 = vpop.xlane.xlu0 %4597
      %v4599 = vsel %vm1016, %v4590, 0.0
      %4600 = vadd.xlane.f32.xlu0 %v4599
      %v4601 = vpop.xlane.xlu0 %4600
      %v4602 = vsel %vm1016, %v4592, 0.0
      %4603 = vadd.xlane.f32.xlu0 %v4602
      %v4604 = vpop.xlane.xlu0 %4603
      %v4605 = vrcp.pop %v4595
      %v4606 = vrcp.pop %v4598
      %v4607 = vrcp.pop %v4601
      %v4608 = vrcp.pop %v4604
      %v4609 = vmul.f32 %v4586, %v4605
      %v4610 = vmul.f32 %v4588, %v4606
      %v4611 = vmul.f32 %v4590, %v4607
      %v4612 = vmul.f32 %v4592, %v4608
      %v4613 = vpack.c.bf16 %v4610, %v4609
      %v4614 = vpack.c.bf16 %v4612, %v4611
      %4615 = vrot.lane.b32.xlu0 %v914, 32
      %v4616 = vpop.permute.xlu0 %4615
      %4617 = vrot.lane.b32.xlu0 %v915, 32
      %v4618 = vpop.permute.xlu0 %4617
      %4619 = vrot.lane.b32.xlu0 %v916, 32
      %v4620 = vpop.permute.xlu0 %4619
      %4621 = vrot.lane.b32.xlu0 %v917, 32
      %v4622 = vpop.permute.xlu0 %4621
      %v4628 = vsel %vm1016, %v4613, 0
      %v4631 = vsel %vm1016, %v4614, 0
      %4633 = vmatprep.subr.bf16.mxu0 0
      %4634 = vmatpush1.bf16.msra.mxu0 %v4616
      %4635 = vmatprep.subr.bf16.mxu0 0
      %4636 = vmatpush1.bf16.msra.mxu0 %v4618
      %4637 = vmatprep.subr.bf16.mxu0 0
      %4638 = vmatpush1.bf16.msra.mxu0 %v4620
      %4639 = vmatprep.subr.bf16.mxu0 0
      %4640 = vmatpush1.bf16.msra.mxu0 %v4622
      %4641 = vmatprep.subr.bf16.mxu0 0
      %4642 = vmatpush1.bf16.msra.mxu0 0
      %4643 = vmatprep.subr.bf16.mxu0 0
      %4644 = vmatpush1.bf16.msra.mxu0 0
      %4645 = vmatprep.subr.bf16.mxu0 0
      %4646 = vmatpush1.bf16.msra.mxu0 0
      %4647 = vmatprep.subr.bf16.mxu0 0
      %4648 = vmatpush1.bf16.msra.mxu0 0
      %4649 = vmatprep.subr.bf16.mxu0 0
      %4650 = vmatpush1.bf16.msra.mxu0 0
      %4651 = vmatprep.subr.bf16.mxu0 0
      %4652 = vmatpush1.bf16.msra.mxu0 0
      %4653 = vmatprep.subr.bf16.mxu0 0
      %4654 = vmatpush1.bf16.msra.mxu0 0
      %4655 = vmatprep.subr.bf16.mxu0 0
      %4656 = vmatpush1.bf16.msra.mxu0 0
      %4657 = vmatprep.subr.bf16.mxu0 0
      %4658 = vmatpush1.bf16.msra.mxu0 0
      %4659 = vmatprep.subr.bf16.mxu0 0
      %4660 = vmatpush1.bf16.msra.mxu0 0
      %4661 = vmatprep.subr.bf16.mxu0 0
      %4662 = vmatpush1.bf16.msra.mxu0 0
      %4663 = vmatprep.subr.bf16.mxu0 0
      %4664 = vmatpush1.bf16.msra.mxu0 0
      %4665 = vmatprep.mubr.bf16.mxu0 0
      %4666 = vmatmul.mubr.bf16.gmra.mrb[0].mxu0 %v4628
      %v4667 = vpop.f32.mrb[0].mxu0
      %v4668 = vadd.f32 0.0, %v4667
      %v4669 = vpop.f32.mrb[0].mxu0
      %v4670 = vpop.f32.mrb[0].mxu0
      %v4671 = vadd.f32 0.0, %v4670
      %v4672 = vpop.f32.mrb[0].mxu0
      %4673 = vmatprep.mubr.bf16.mxu0 0
      %4674 = vmatmul.mubr.bf16.gmra.mrb[0].mxu0 %v4631
      %v4675 = vpop.f32.mrb[0].mxu0
      %v4676 = vadd.f32 0.0, %v4675
      %v4677 = vpop.f32.mrb[0].mxu0
      %v4678 = vpop.f32.mrb[0].mxu0
      %v4679 = vadd.f32 0.0, %v4678
      %v4680 = vpop.f32.mrb[0].mxu0
      %4681 = vdwg.mxu0
      %4682 = vrot.lane.b32.xlu0 %v796, 32
      %v4683 = vpop.permute.xlu0 %4682
      %4684 = vrot.lane.b32.xlu0 %v799, 32
      %v4685 = vpop.permute.xlu0 %4684
      %4686 = vrot.lane.b32.xlu0 %v804, 32
      %v4687 = vpop.permute.xlu0 %4686
      %4688 = vrot.lane.b32.xlu0 %v807, 32
      %v4689 = vpop.permute.xlu0 %4688
      %4690 = vrot.lane.b32.xlu0 %v812, 32
      %v4691 = vpop.permute.xlu0 %4690
      %4692 = vrot.lane.b32.xlu0 %v815, 32
      %v4693 = vpop.permute.xlu0 %4692
      %4694 = vrot.lane.b32.xlu0 %v820, 32
      %v4695 = vpop.permute.xlu0 %4694
      %4696 = vrot.lane.b32.xlu0 %v823, 32
      %v4697 = vpop.permute.xlu0 %4696
      %4706 = vmatprep.subr.mxu0 0.0
      %4707 = vmatpush1.msra.mxu0 %v4683
      %4708 = vmatprep.subr.mxu0 0.0
      %4709 = vmatpush1.msra.mxu0 %v4685
      %4710 = vmatprep.subr.mxu0 0.0
      %4711 = vmatpush1.msra.mxu0 %v4687
      %4712 = vmatprep.subr.mxu0 0.0
      %4713 = vmatpush1.msra.mxu0 %v4689
      %4714 = vmatprep.subr.mxu0 0.0
      %4715 = vmatpush1.msra.mxu0 %v4691
      %4716 = vmatprep.subr.mxu0 0.0
      %4717 = vmatpush1.msra.mxu0 %v4693
      %4718 = vmatprep.subr.mxu0 0.0
      %4719 = vmatpush1.msra.mxu0 %v4695
      %4720 = vmatprep.subr.mxu0 0.0
      %4721 = vmatpush1.msra.mxu0 %v4697
      %4722 = vmatprep.subr.mxu0 0.0
      %4723 = vmatpush1.msra.mxu0 0.0
      %4724 = vmatprep.subr.mxu0 0.0
      %4725 = vmatpush1.msra.mxu0 0.0
      %4726 = vmatprep.subr.mxu0 0.0
      %4727 = vmatpush1.msra.mxu0 0.0
      %4728 = vmatprep.subr.mxu0 0.0
      %4729 = vmatpush1.msra.mxu0 0.0
      %4730 = vmatprep.subr.mxu0 0.0
      %4731 = vmatpush1.msra.mxu0 0.0
      %4732 = vmatprep.subr.mxu0 0.0
      %4733 = vmatpush1.msra.mxu0 0.0
      %4734 = vmatprep.subr.mxu0 0.0
      %4735 = vmatpush1.msra.mxu0 0.0
      %4736 = vmatprep.subr.mxu0 0.0
      %4737 = vmatpush1.msra.mxu0 0.0
      %4738 = vmatprep.subr.mxu0 0.0
      %4739 = vmatpush1.msra.mxu0 0.0
      %4740 = vmatprep.subr.mxu0 0.0
      %4741 = vmatpush1.msra.mxu0 0.0
      %4742 = vmatprep.subr.mxu0 0.0
      %4743 = vmatpush1.msra.mxu0 0.0
      %4744 = vmatprep.subr.mxu0 0.0
      %4745 = vmatpush1.msra.mxu0 0.0
      %4746 = vmatprep.subr.mxu0 0.0
      %4747 = vmatpush1.msra.mxu0 0.0
      %4748 = vmatprep.subr.mxu0 0.0
      %4749 = vmatpush1.msra.mxu0 0.0
      %4750 = vmatprep.subr.mxu0 0.0
      %4751 = vmatpush1.msra.mxu0 0.0
      %4752 = vmatprep.subr.mxu0 0.0
      %4753 = vmatpush1.msra.mxu0 0.0
      %4754 = vmatprep.subr.mxu0 0.0
      %4755 = vmatpush1.msra.mxu0 0.0
      %4756 = vmatprep.subr.mxu0 0.0
      %4757 = vmatpush1.msra.mxu0 0.0
      %4758 = vmatprep.subr.mxu0 0.0
      %4759 = vmatpush1.msra.mxu0 0.0
      %4760 = vmatprep.subr.mxu0 0.0
      %4761 = vmatpush1.msra.mxu0 0.0
      %4762 = vmatprep.subr.mxu0 0.0
      %4763 = vmatpush1.msra.mxu0 0.0
      %4764 = vmatprep.subr.mxu0 0.0
      %4765 = vmatpush1.msra.mxu0 0.0
      %4766 = vmatprep.subr.mxu0 0.0
      %4767 = vmatpush1.msra.mxu0 0.0
      %4768 = vmatprep.subr.mxu0 0.0
      %4769 = vmatpush1.msra.mxu0 0.0
      %4770 = vmatprep.mubr.f32.mxu0 0.0
      %4771 = vmatmul.mubr.f32.gmra.mrb[0].mxu0 %v1576
      %v4772 = vpop.f32.mrb[0].mxu0
      %v4773 = vadd.f32 0.0, %v4772
      %v4774 = vpop.f32.mrb[0].mxu0
      %4775 = vmatprep.mubr.f32.mxu0 0.0
      %4776 = vmatmul.mubr.f32.gmra.mrb[0].mxu0 %v1579
      %v4777 = vpop.f32.mrb[0].mxu0
      %v4778 = vadd.f32 0.0, %v4777
      %v4779 = vpop.f32.mrb[0].mxu0
      %4780 = vmatprep.mubr.f32.mxu0 0.0
      %4781 = vmatmul.mubr.f32.gmra.mrb[0].mxu0 %v1582
      %v4782 = vpop.f32.mrb[0].mxu0
      %v4783 = vadd.f32 0.0, %v4782
      %v4784 = vpop.f32.mrb[0].mxu0
      %4785 = vmatprep.mubr.f32.mxu0 0.0
      %4786 = vmatmul.mubr.f32.gmra.mrb[0].mxu0 %v1585
      %v4787 = vpop.f32.mrb[0].mxu0
      %v4788 = vadd.f32 0.0, %v4787
      %v4789 = vpop.f32.mrb[0].mxu0
      %4790 = vmatprep.mubr.f32.mxu0 0.0
      %4791 = vmatmul.mubr.f32.gmra.mrb[0].mxu0 %v1588
      %v4792 = vpop.f32.mrb[0].mxu0
      %v4793 = vadd.f32 0.0, %v4792
      %v4794 = vpop.f32.mrb[0].mxu0
      %4795 = vmatprep.mubr.f32.mxu0 0.0
      %4796 = vmatmul.mubr.f32.gmra.mrb[0].mxu0 %v1591
      %v4797 = vpop.f32.mrb[0].mxu0
      %v4798 = vadd.f32 0.0, %v4797
      %v4799 = vpop.f32.mrb[0].mxu0
      %4800 = vmatprep.mubr.f32.mxu0 0.0
      %4801 = vmatmul.mubr.f32.gmra.mrb[0].mxu0 %v1594
      %v4802 = vpop.f32.mrb[0].mxu0
      %v4803 = vadd.f32 0.0, %v4802
      %v4804 = vpop.f32.mrb[0].mxu0
      %4805 = vmatprep.mubr.f32.mxu0 0.0
      %4806 = vmatmul.mubr.f32.gmra.mrb[0].mxu0 %v1597
      %v4807 = vpop.f32.mrb[0].mxu0
      %v4808 = vadd.f32 0.0, %v4807
      %v4809 = vpop.f32.mrb[0].mxu0
      %4810 = vdwg.mxu0
      %4811 = vxpose.xlu0.b32.start [1/16] %v4440, 128
      %4812 = vxpose.xlu0.b32.cont [2/16] %v4441, 128
      %4813 = vxpose.xlu0.b32.cont [3/16] %v4442, 128
      %4814 = vxpose.xlu0.b32.cont [4/16] %v4443, 128
      %4815 = vxpose.xlu0.b32.cont [5/16] 0.0, 128
      %4816 = vxpose.xlu0.b32.cont [6/16] 0.0, 128
      %4817 = vxpose.xlu0.b32.cont [7/16] 0.0, 128
      %4818 = vxpose.xlu0.b32.cont [8/16] 0.0, 128
      %4819 = vxpose.xlu0.b32.cont [9/16] 0.0, 128
      %4820 = vxpose.xlu0.b32.cont [10/16] 0.0, 128
      %4821 = vxpose.xlu0.b32.cont [11/16] 0.0, 128
      %4822 = vxpose.xlu0.b32.cont [12/16] 0.0, 128
      %4823 = vxpose.xlu0.b32.cont [13/16] 0.0, 128
      %4824 = vxpose.xlu0.b32.cont [14/16] 0.0, 128
      %4825 = vxpose.xlu0.b32.cont [15/16] 0.0, 128
      %4826 = vxpose.xlu0.b32.end [16/16] 0.0, 128
      %v4827 = vpop.trf.xlu0
      %v4828 = vpop.trf.xlu0
      %v4829 = vpop.trf.xlu0
      %v4830 = vpop.trf.xlu0
      %v4831 = vpop.trf.xlu0
      %v4832 = vpop.trf.xlu0
      %v4833 = vpop.trf.xlu0
      %v4834 = vpop.trf.xlu0
      %v4835 = vpop.trf.xlu0
      %v4836 = vpop.trf.xlu0
      %v4837 = vpop.trf.xlu0
      %v4838 = vpop.trf.xlu0
      %v4839 = vpop.trf.xlu0
      %v4840 = vpop.trf.xlu0
      %v4841 = vpop.trf.xlu0
      %v4842 = vpop.trf.xlu0
      %v4844 = vsel %vm918, %v4827, 0
      %v4847 = vsel %vm918, %v4828, 0
      %v4850 = vsel %vm918, %v4829, 0
      %v4853 = vsel %vm918, %v4830, 0
      %v4856 = vsel %vm918, %v4831, 0
      %v4859 = vsel %vm918, %v4832, 0
      %v4862 = vsel %vm918, %v4833, 0
      %v4865 = vsel %vm918, %v4834, 0
      %4867 = vmatprep.subr.mxu0 0.0
      %4868 = vmatpush1.msra.mxu0 %v4668
      %4869 = vmatprep.subr.mxu0 0.0
      %4870 = vmatpush1.msra.mxu0 %v4671
      %4871 = vmatprep.subr.mxu0 0.0
      %4872 = vmatpush1.msra.mxu0 %v4676
      %4873 = vmatprep.subr.mxu0 0.0
      %4874 = vmatpush1.msra.mxu0 %v4679
      %4875 = vmatprep.subr.mxu0 0.0
      %4876 = vmatpush1.msra.mxu0 0.0
      %4877 = vmatprep.subr.mxu0 0.0
      %4878 = vmatpush1.msra.mxu0 0.0
      %4879 = vmatprep.subr.mxu0 0.0
      %4880 = vmatpush1.msra.mxu0 0.0
      %4881 = vmatprep.subr.mxu0 0.0
      %4882 = vmatpush1.msra.mxu0 0.0
      %4883 = vmatprep.subr.mxu0 0.0
      %4884 = vmatpush1.msra.mxu0 0.0
      %4885 = vmatprep.subr.mxu0 0.0
      %4886 = vmatpush1.msra.mxu0 0.0
      %4887 = vmatprep.subr.mxu0 0.0
      %4888 = vmatpush1.msra.mxu0 0.0
      %4889 = vmatprep.subr.mxu0 0.0
      %4890 = vmatpush1.msra.mxu0 0.0
      %4891 = vmatprep.subr.mxu0 0.0
      %4892 = vmatpush1.msra.mxu0 0.0
      %4893 = vmatprep.subr.mxu0 0.0
      %4894 = vmatpush1.msra.mxu0 0.0
      %4895 = vmatprep.subr.mxu0 0.0
      %4896 = vmatpush1.msra.mxu0 0.0
      %4897 = vmatprep.subr.mxu0 0.0
      %4898 = vmatpush1.msra.mxu0 0.0
      %4899 = vmatprep.subr.mxu0 0.0
      %4900 = vmatpush1.msra.mxu0 0.0
      %4901 = vmatprep.subr.mxu0 0.0
      %4902 = vmatpush1.msra.mxu0 0.0
      %4903 = vmatprep.subr.mxu0 0.0
      %4904 = vmatpush1.msra.mxu0 0.0
      %4905 = vmatprep.subr.mxu0 0.0
      %4906 = vmatpush1.msra.mxu0 0.0
      %4907 = vmatprep.subr.mxu0 0.0
      %4908 = vmatpush1.msra.mxu0 0.0
      %4909 = vmatprep.subr.mxu0 0.0
      %4910 = vmatpush1.msra.mxu0 0.0
      %4911 = vmatprep.subr.mxu0 0.0
      %4912 = vmatpush1.msra.mxu0 0.0
      %4913 = vmatprep.subr.mxu0 0.0
      %4914 = vmatpush1.msra.mxu0 0.0
      %4915 = vmatprep.subr.mxu0 0.0
      %4916 = vmatpush1.msra.mxu0 0.0
      %4917 = vmatprep.subr.mxu0 0.0
      %4918 = vmatpush1.msra.mxu0 0.0
      %4919 = vmatprep.subr.mxu0 0.0
      %4920 = vmatpush1.msra.mxu0 0.0
      %4921 = vmatprep.subr.mxu0 0.0
      %4922 = vmatpush1.msra.mxu0 0.0
      %4923 = vmatprep.subr.mxu0 0.0
      %4924 = vmatpush1.msra.mxu0 0.0
      %4925 = vmatprep.subr.mxu0 0.0
      %4926 = vmatpush1.msra.mxu0 0.0
      %4927 = vmatprep.subr.mxu0 0.0
      %4928 = vmatpush1.msra.mxu0 0.0
      %4929 = vmatprep.subr.mxu0 0.0
      %4930 = vmatpush1.msra.mxu0 0.0
      %4931 = vmatprep.mubr.f32.mxu0 0.0
      %4932 = vmatmul.mubr.f32.gmra.mrb[0].mxu0 %v4844
      %v4933 = vpop.f32.mrb[0].mxu0
      %v4934 = vadd.f32 0.0, %v4933
      %v4935 = vpop.f32.mrb[0].mxu0
      %4936 = vmatprep.mubr.f32.mxu0 0.0
      %4937 = vmatmul.mubr.f32.gmra.mrb[0].mxu0 %v4847
      %v4938 = vpop.f32.mrb[0].mxu0
      %v4939 = vadd.f32 0.0, %v4938
      %v4940 = vpop.f32.mrb[0].mxu0
      %4941 = vmatprep.mubr.f32.mxu0 0.0
      %4942 = vmatmul.mubr.f32.gmra.mrb[0].mxu0 %v4850
      %v4943 = vpop.f32.mrb[0].mxu0
      %v4944 = vadd.f32 0.0, %v4943
      %v4945 = vpop.f32.mrb[0].mxu0
      %4946 = vmatprep.mubr.f32.mxu0 0.0
      %4947 = vmatmul.mubr.f32.gmra.mrb[0].mxu0 %v4853
      %v4948 = vpop.f32.mrb[0].mxu0
      %v4949 = vadd.f32 0.0, %v4948
      %v4950 = vpop.f32.mrb[0].mxu0
      %4951 = vmatprep.mubr.f32.mxu0 0.0
      %4952 = vmatmul.mubr.f32.gmra.mrb[0].mxu0 %v4856
      %v4953 = vpop.f32.mrb[0].mxu0
      %v4954 = vadd.f32 0.0, %v4953
      %v4955 = vpop.f32.mrb[0].mxu0
      %4956 = vmatprep.mubr.f32.mxu0 0.0
      %4957 = vmatmul.mubr.f32.gmra.mrb[0].mxu0 %v4859
      %v4958 = vpop.f32.mrb[0].mxu0
      %v4959 = vadd.f32 0.0, %v4958
      %v4960 = vpop.f32.mrb[0].mxu0
      %4961 = vmatprep.mubr.f32.mxu0 0.0
      %4962 = vmatmul.mubr.f32.gmra.mrb[0].mxu0 %v4862
      %v4963 = vpop.f32.mrb[0].mxu0
      %v4964 = vadd.f32 0.0, %v4963
      %v4965 = vpop.f32.mrb[0].mxu0
      %4966 = vmatprep.mubr.f32.mxu0 0.0
      %4967 = vmatmul.mubr.f32.gmra.mrb[0].mxu0 %v4865
      %v4968 = vpop.f32.mrb[0].mxu0
      %v4969 = vadd.f32 0.0, %v4968
      %v4970 = vpop.f32.mrb[0].mxu0
      %4971 = vdwg.mxu0
      %v4972 = vmul.f32 %v4424, %v4934
      %v4973 = vmul.f32 %v4425, %v4939
      %v4974 = vmul.f32 %v4426, %v4944
      %v4975 = vmul.f32 %v4427, %v4949
      %v4976 = vmul.f32 %v4428, %v4954
      %v4977 = vmul.f32 %v4429, %v4959
      %v4978 = vmul.f32 %v4430, %v4964
      %v4979 = vmul.f32 %v4431, %v4969
      %v4980 = vsub.f32 1.0, %v4424
      %v4981 = vsub.f32 1.0, %v4425
      %v4982 = vsub.f32 1.0, %v4426
      %v4983 = vsub.f32 1.0, %v4427
      %v4984 = vsub.f32 1.0, %v4428
      %v4985 = vsub.f32 1.0, %v4429
      %v4986 = vsub.f32 1.0, %v4430
      %v4987 = vsub.f32 1.0, %v4431
      %v4988 = vmul.f32 %v4980, %v4773
      %v4989 = vmul.f32 %v4981, %v4778
      %v4990 = vmul.f32 %v4982, %v4783
      %v4991 = vmul.f32 %v4983, %v4788
      %v4992 = vmul.f32 %v4984, %v4793
      %v4993 = vmul.f32 %v4985, %v4798
      %v4994 = vmul.f32 %v4986, %v4803
      %v4995 = vmul.f32 %v4987, %v4808
      %v4996 = vadd.f32 %v4972, %v4988
      %v4997 = vadd.f32 %v4973, %v4989
      %v4998 = vadd.f32 %v4974, %v4990
      %v4999 = vadd.f32 %v4975, %v4991
      %v5000 = vadd.f32 %v4976, %v4992
      %v5001 = vadd.f32 %v4977, %v4993
      %v5002 = vadd.f32 %v4978, %v4994
      %v5003 = vadd.f32 %v4979, %v4995
      %5012 = vrot.lane.b32.xlu0 %v2938, 32
      %v5013 = vpop.permute.xlu0 %5012
      %5014 = vrot.lane.b32.xlu0 %v2939, 32
      %v5015 = vpop.permute.xlu0 %5014
      %5016 = vrot.lane.b32.xlu0 %v2940, 32
      %v5017 = vpop.permute.xlu0 %5016
      %5018 = vrot.lane.b32.xlu0 %v2941, 32
      %v5019 = vpop.permute.xlu0 %5018
      %5020 = vrot.lane.b32.xlu0 %v2942, 32
      %v5021 = vpop.permute.xlu0 %5020
      %5022 = vrot.lane.b32.xlu0 %v2943, 32
      %v5023 = vpop.permute.xlu0 %5022
      %5024 = vrot.lane.b32.xlu0 %v2944, 32
      %v5025 = vpop.permute.xlu0 %5024
      %5026 = vrot.lane.b32.xlu0 %v2945, 32
      %v5027 = vpop.permute.xlu0 %5026
      %5044 = vrot.lane.b32.xlu0 %v3967, 64
      %v5045 = vpop.permute.xlu0 %5044
      %5046 = vrot.lane.b32.xlu0 %v3968, 64
      %v5047 = vpop.permute.xlu0 %5046
      %5048 = vrot.lane.b32.xlu0 %v3969, 64
      %v5049 = vpop.permute.xlu0 %5048
      %5050 = vrot.lane.b32.xlu0 %v3970, 64
      %v5051 = vpop.permute.xlu0 %5050
      %5052 = vrot.lane.b32.xlu0 %v3971, 64
      %v5053 = vpop.permute.xlu0 %5052
      %5054 = vrot.lane.b32.xlu0 %v3972, 64
      %v5055 = vpop.permute.xlu0 %5054
      %5056 = vrot.lane.b32.xlu0 %v3973, 64
      %v5057 = vpop.permute.xlu0 %5056
      %5058 = vrot.lane.b32.xlu0 %v3974, 64
      %v5059 = vpop.permute.xlu0 %5058
      %5076 = vrot.lane.b32.xlu0 %v4996, 96
      %v5077 = vpop.permute.xlu0 %5076
      %5078 = vrot.lane.b32.xlu0 %v4997, 96
      %v5079 = vpop.permute.xlu0 %5078
      %5080 = vrot.lane.b32.xlu0 %v4998, 96
      %v5081 = vpop.permute.xlu0 %5080
      %5082 = vrot.lane.b32.xlu0 %v4999, 96
      %v5083 = vpop.permute.xlu0 %5082
      %5084 = vrot.lane.b32.xlu0 %v5000, 96
      %v5085 = vpop.permute.xlu0 %5084
      %5086 = vrot.lane.b32.xlu0 %v5001, 96
      %v5087 = vpop.permute.xlu0 %5086
      %5088 = vrot.lane.b32.xlu0 %v5002, 96
      %v5089 = vpop.permute.xlu0 %5088
      %5090 = vrot.lane.b32.xlu0 %v5003, 96
      %v5091 = vpop.permute.xlu0 %5090
      %v5100 = vsel %vm918, %v1889, %v5013
      %v5101 = vsel %vm918, %v1890, %v5015
      %v5102 = vsel %vm918, %v1891, %v5017
      %v5103 = vsel %vm918, %v1892, %v5019
      %v5104 = vsel %vm918, %v1893, %v5021
      %v5105 = vsel %vm918, %v1894, %v5023
      %v5106 = vsel %vm918, %v1895, %v5025
      %v5107 = vsel %vm918, %v1896, %v5027
      %v5108 = vsel %vm1016, %v5100, %v5045
      %v5109 = vsel %vm1016, %v5101, %v5047
      %v5110 = vsel %vm1016, %v5102, %v5049
      %v5111 = vsel %vm1016, %v5103, %v5051
      %v5112 = vsel %vm1016, %v5104, %v5053
      %v5113 = vsel %vm1016, %v5105, %v5055
      %v5114 = vsel %vm1016, %v5106, %v5057
      %v5115 = vsel %vm1016, %v5107, %v5059
      %vm5116 = vcmask 785408
      %v5117 = vsel %vm5116, %v5108, %v5077
      %v5118 = vsel %vm5116, %v5109, %v5079
      %v5119 = vsel %vm5116, %v5110, %v5081
      %v5120 = vsel %vm5116, %v5111, %v5083
      %v5121 = vsel %vm5116, %v5112, %v5085
      %v5122 = vsel %vm5116, %v5113, %v5087
      %v5123 = vsel %vm5116, %v5114, %v5089
      %v5124 = vsel %vm5116, %v5115, %v5091
      %v5125 = vpack.c.bf16 %v5118, %v5117
      %v5126 = vpack.c.bf16 %v5120, %v5119
      %v5127 = vpack.c.bf16 %v5122, %v5121
      %v5128 = vpack.c.bf16 %v5124, %v5123
      %v5129 = vld [vmem:[%s3] sm:$0xf]
      %v5130 = vld [vmem:[%s3 + $0x4] sm:$0xf]
      %v5131 = vld [vmem:[%s3 + $0x8] sm:$0xf]
      %v5132 = vld [vmem:[%s3 + $0xc] sm:$0xf]
      %v5133 = vld [vmem:[%s3 + $0x10] sm:$0xf]
      %v5134 = vld [vmem:[%s3 + $0x14] sm:$0xf]
      %v5135 = vld [vmem:[%s3 + $0x18] sm:$0xf]
      %v5136 = vld [vmem:[%s3 + $0x1c] sm:$0xf]
      %v5137 = vld [vmem:[%s3 + $0x20] sm:$0xf]
      %v5138 = vld [vmem:[%s3 + $0x24] sm:$0xf]
      %v5139 = vld [vmem:[%s3 + $0x28] sm:$0xf]
      %v5140 = vld [vmem:[%s3 + $0x2c] sm:$0xf]
      %v5141 = vld [vmem:[%s3 + $0x30] sm:$0xf]
      %v5142 = vld [vmem:[%s3 + $0x34] sm:$0xf]
      %v5143 = vld [vmem:[%s3 + $0x38] sm:$0xf]
      %v5144 = vld [vmem:[%s3 + $0x3c] sm:$0xf]
      %v5145 = vld [vmem:[%s4] sm:$0x1]
      %v5147 = vlaneseq
      %v5148 = vshrl.u32 %v5147, 7
      %v5149 = vsub.s32 0, %v5148
      %v5150 = vrot.slane %v5145, %v5149
      %v5168 = vunpack.c.l.b16 %v5129
      %v5169 = vunpack.c.l.b16 %v5130
      %v5170 = vunpack.c.l.b16 %v5131
      %v5171 = vunpack.c.l.b16 %v5132
      %v5172 = vunpack.c.l.b16 %v5133
      %v5173 = vunpack.c.l.b16 %v5134
      %v5174 = vunpack.c.l.b16 %v5135
      %v5175 = vunpack.c.l.b16 %v5136
      %v5176 = vunpack.c.l.b16 %v5137
      %v5177 = vunpack.c.l.b16 %v5138
      %v5178 = vunpack.c.l.b16 %v5139
      %v5179 = vunpack.c.l.b16 %v5140
      %v5180 = vunpack.c.l.b16 %v5141
      %v5181 = vunpack.c.l.b16 %v5142
      %v5182 = vunpack.c.l.b16 %v5143
      %v5183 = vunpack.c.l.b16 %v5144
      %v5184 = vpack.c.b16 %v5169, %v5168
      %v5185 = vpack.c.b16 %v5171, %v5170
      %v5186 = vpack.c.b16 %v5173, %v5172
      %v5187 = vpack.c.b16 %v5175, %v5174
      %v5188 = vpack.c.b16 %v5177, %v5176
      %v5189 = vpack.c.b16 %v5179, %v5178
      %v5190 = vpack.c.b16 %v5181, %v5180
      %v5191 = vpack.c.b16 %v5183, %v5182
      %5200 = vmatprep.subr.bf16.mxu0 0
      %5201 = vmatpush1.bf16.msra.mxu0 %v5184
      %5202 = vmatprep.subr.bf16.mxu0 0
      %5203 = vmatpush1.bf16.msra.mxu0 %v5185
      %5204 = vmatprep.subr.bf16.mxu0 0
      %5205 = vmatpush1.bf16.msra.mxu0 %v5186
      %5206 = vmatprep.subr.bf16.mxu0 0
      %5207 = vmatpush1.bf16.msra.mxu0 %v5187
      %5208 = vmatprep.subr.bf16.mxu0 0
      %5209 = vmatpush1.bf16.msra.mxu0 %v5188
      %5210 = vmatprep.subr.bf16.mxu0 0
      %5211 = vmatpush1.bf16.msra.mxu0 %v5189
      %5212 = vmatprep.subr.bf16.mxu0 0
      %5213 = vmatpush1.bf16.msra.mxu0 %v5190
      %5214 = vmatprep.subr.bf16.mxu0 0
      %5215 = vmatpush1.bf16.msra.mxu0 %v5191
      %5216 = vmatprep.subr.bf16.mxu0 0
      %5217 = vmatpush1.bf16.msra.mxu0 0
      %5218 = vmatprep.subr.bf16.mxu0 0
      %5219 = vmatpush1.bf16.msra.mxu0 0
      %5220 = vmatprep.subr.bf16.mxu0 0
      %5221 = vmatpush1.bf16.msra.mxu0 0
      %5222 = vmatprep.subr.bf16.mxu0 0
      %5223 = vmatpush1.bf16.msra.mxu0 0
      %5224 = vmatprep.subr.bf16.mxu0 0
      %5225 = vmatpush1.bf16.msra.mxu0 0
      %5226 = vmatprep.subr.bf16.mxu0 0
      %5227 = vmatpush1.bf16.msra.mxu0 0
      %5228 = vmatprep.subr.bf16.mxu0 0
      %5229 = vmatpush1.bf16.msra.mxu0 0
      %5230 = vmatprep.subr.bf16.mxu0 0
      %5231 = vmatpush1.bf16.msra.mxu0 0
      %5232 = vmatprep.mubr.bf16.mxu0 0
      %5233 = vmatmul.mubr.bf16.gmra.mrb[0].mxu0 %v5125
      %v5234 = vpop.f32.mrb[0].mxu0
      %v5235 = vadd.f32 %v5150, %v5234
      %v5236 = vpop.f32.mrb[0].mxu0
      %v5237 = vpop.f32.mrb[0].mxu0
      %v5238 = vadd.f32 %v5150, %v5237
      %v5239 = vpop.f32.mrb[0].mxu0
      %5240 = vmatprep.mubr.bf16.mxu0 0
      %5241 = vmatmul.mubr.bf16.gmra.mrb[0].mxu0 %v5126
      %v5242 = vpop.f32.mrb[0].mxu0
      %v5243 = vadd.f32 %v5150, %v5242
      %v5244 = vpop.f32.mrb[0].mxu0
      %v5245 = vpop.f32.mrb[0].mxu0
      %v5246 = vadd.f32 %v5150, %v5245
      %v5247 = vpop.f32.mrb[0].mxu0
      %5248 = vmatprep.mubr.bf16.mxu0 0
      %5249 = vmatmul.mubr.bf16.gmra.mrb[0].mxu0 %v5127
      %v5250 = vpop.f32.mrb[0].mxu0
      %v5251 = vadd.f32 %v5150, %v5250
      %v5252 = vpop.f32.mrb[0].mxu0
      %v5253 = vpop.f32.mrb[0].mxu0
      %v5254 = vadd.f32 %v5150, %v5253
      %v5255 = vpop.f32.mrb[0].mxu0
      %5256 = vmatprep.mubr.bf16.mxu0 0
      %5257 = vmatmul.mubr.bf16.gmra.mrb[0].mxu0 %v5128
      %v5258 = vpop.f32.mrb[0].mxu0
      %v5259 = vadd.f32 %v5150, %v5258
      %v5260 = vpop.f32.mrb[0].mxu0
      %v5261 = vpop.f32.mrb[0].mxu0
      %v5262 = vadd.f32 %v5150, %v5261
      %v5263 = vpop.f32.mrb[0].mxu0
      %5264 = vdwg.mxu0
      %v5265 = vadd.f32 %v499, %v5235
      %v5266 = vadd.f32 %v500, %v5238
      %v5267 = vadd.f32 %v501, %v5243
      %v5268 = vadd.f32 %v502, %v5246
      %v5269 = vadd.f32 %v503, %v5251
      %v5270 = vadd.f32 %v504, %v5254
      %v5271 = vadd.f32 %v505, %v5259
      %v5272 = vadd.f32 %v506, %v5262
      %v5273 = vld [vmem:[%s9] sm:$0x1]
      %v5274 = vld [vmem:[%s10] sm:$0x1]
      %5275 = vadd.xlane.f32.xlu0 %v5265
      %v5276 = vpop.xlane.xlu0 %5275
      %5277 = vadd.xlane.f32.xlu0 %v5266
      %v5278 = vpop.xlane.xlu0 %5277
      %5279 = vadd.xlane.f32.xlu0 %v5267
      %v5280 = vpop.xlane.xlu0 %5279
      %5281 = vadd.xlane.f32.xlu0 %v5268
      %v5282 = vpop.xlane.xlu0 %5281
      %5283 = vadd.xlane.f32.xlu0 %v5269
      %v5284 = vpop.xlane.xlu0 %5283
      %5285 = vadd.xlane.f32.xlu0 %v5270
      %v5286 = vpop.xlane.xlu0 %5285
      %5287 = vadd.xlane.f32.xlu0 %v5271
      %v5288 = vpop.xlane.xlu0 %5287
      %5289 = vadd.xlane.f32.xlu0 %v5272
      %v5290 = vpop.xlane.xlu0 %5289
      %v5291 = vrcp.pop 128.0
      %v5292 = vmul.f32 %v5276, %v5291
      %v5293 = vmul.f32 %v5278, %v5291
      %v5294 = vmul.f32 %v5280, %v5291
      %v5295 = vmul.f32 %v5282, %v5291
      %v5296 = vmul.f32 %v5284, %v5291
      %v5297 = vmul.f32 %v5286, %v5291
      %v5298 = vmul.f32 %v5288, %v5291
      %v5299 = vmul.f32 %v5290, %v5291
      %v5300 = vsub.f32 %v5265, %v5292
      %v5301 = vsub.f32 %v5266, %v5293
      %v5302 = vsub.f32 %v5267, %v5294
      %v5303 = vsub.f32 %v5268, %v5295
      %v5304 = vsub.f32 %v5269, %v5296
      %v5305 = vsub.f32 %v5270, %v5297
      %v5306 = vsub.f32 %v5271, %v5298
      %v5307 = vsub.f32 %v5272, %v5299
      %v5308 = vmul.f32 %v5300, %v5300
      %v5309 = vmul.f32 %v5301, %v5301
      %v5310 = vmul.f32 %v5302, %v5302
      %v5311 = vmul.f32 %v5303, %v5303
      %v5312 = vmul.f32 %v5304, %v5304
      %v5313 = vmul.f32 %v5305, %v5305
      %v5314 = vmul.f32 %v5306, %v5306
      %v5315 = vmul.f32 %v5307, %v5307
      %5316 = vadd.xlane.f32.xlu0 %v5308
      %v5317 = vpop.xlane.xlu0 %5316
      %5318 = vadd.xlane.f32.xlu0 %v5309
      %v5319 = vpop.xlane.xlu0 %5318
      %5320 = vadd.xlane.f32.xlu0 %v5310
      %v5321 = vpop.xlane.xlu0 %5320
      %5322 = vadd.xlane.f32.xlu0 %v5311
      %v5323 = vpop.xlane.xlu0 %5322
      %5324 = vadd.xlane.f32.xlu0 %v5312
      %v5325 = vpop.xlane.xlu0 %5324
      %5326 = vadd.xlane.f32.xlu0 %v5313
      %v5327 = vpop.xlane.xlu0 %5326
      %5328 = vadd.xlane.f32.xlu0 %v5314
      %v5329 = vpop.xlane.xlu0 %5328
      %5330 = vadd.xlane.f32.xlu0 %v5315
      %v5331 = vpop.xlane.xlu0 %5330
      %v5332 = vmul.f32 %v5317, %v5291
      %v5333 = vmul.f32 %v5319, %v5291
      %v5334 = vmul.f32 %v5321, %v5291
      %v5335 = vmul.f32 %v5323, %v5291
      %v5336 = vmul.f32 %v5325, %v5291
      %v5337 = vmul.f32 %v5327, %v5291
      %v5338 = vmul.f32 %v5329, %v5291
      %v5339 = vmul.f32 %v5331, %v5291
      %v5340 = vadd.f32 %v5332, 1e-05
      %v5341 = vadd.f32 %v5333, 1e-05
      %v5342 = vadd.f32 %v5334, 1e-05
      %v5343 = vadd.f32 %v5335, 1e-05
      %v5344 = vadd.f32 %v5336, 1e-05
      %v5345 = vadd.f32 %v5337, 1e-05
      %v5346 = vadd.f32 %v5338, 1e-05
      %v5347 = vadd.f32 %v5339, 1e-05
      %v5348 = vrsqrt.pop %v5340
      %v5349 = vrsqrt.pop %v5341
      %v5350 = vrsqrt.pop %v5342
      %v5351 = vrsqrt.pop %v5343
      %v5352 = vrsqrt.pop %v5344
      %v5353 = vrsqrt.pop %v5345
      %v5354 = vrsqrt.pop %v5346
      %v5355 = vrsqrt.pop %v5347
      %v5356 = vmul.f32 %v5300, %v5348
      %v5357 = vmul.f32 %v5301, %v5349
      %v5358 = vmul.f32 %v5302, %v5350
      %v5359 = vmul.f32 %v5303, %v5351
      %v5360 = vmul.f32 %v5304, %v5352
      %v5361 = vmul.f32 %v5305, %v5353
      %v5362 = vmul.f32 %v5306, %v5354
      %v5363 = vmul.f32 %v5307, %v5355
      %v5365 = vlaneseq
      %v5366 = vshrl.u32 %v5365, 7
      %v5367 = vsub.s32 0, %v5366
      %v5368 = vrot.slane %v5273, %v5367
      %v5370 = vmul.f32 %v5356, %v5368
      %v5371 = vmul.f32 %v5357, %v5368
      %v5372 = vmul.f32 %v5358, %v5368
      %v5373 = vmul.f32 %v5359, %v5368
      %v5374 = vmul.f32 %v5360, %v5368
      %v5375 = vmul.f32 %v5361, %v5368
      %v5376 = vmul.f32 %v5362, %v5368
      %v5377 = vmul.f32 %v5363, %v5368
      %v5379 = vlaneseq
      %v5380 = vshrl.u32 %v5379, 7
      %v5381 = vsub.s32 0, %v5380
      %v5382 = vrot.slane %v5274, %v5381
      %v5384 = vadd.f32 %v5370, %v5382
      %v5385 = vadd.f32 %v5371, %v5382
      %v5386 = vadd.f32 %v5372, %v5382
      %v5387 = vadd.f32 %v5373, %v5382
      %v5388 = vadd.f32 %v5374, %v5382
      %v5389 = vadd.f32 %v5375, %v5382
      %v5390 = vadd.f32 %v5376, %v5382
      %v5391 = vadd.f32 %v5377, %v5382
      %v5392 = vpack.c.bf16 %v5385, %v5384
      %v5393 = vpack.c.bf16 %v5387, %v5386
      %v5394 = vpack.c.bf16 %v5389, %v5388
      %v5395 = vpack.c.bf16 %v5391, %v5390
      %v5396 = vld [vmem:[%s5] sm:$0xf]
      %v5397 = vld [vmem:[%s5 + $0x4] sm:$0xf]
      %v5398 = vld [vmem:[%s5 + $0x8] sm:$0xf]
      %v5399 = vld [vmem:[%s5 + $0xc] sm:$0xf]
      %v5400 = vld [vmem:[%s5 + $0x10] sm:$0xf]
      %v5401 = vld [vmem:[%s5 + $0x14] sm:$0xf]
      %v5402 = vld [vmem:[%s5 + $0x18] sm:$0xf]
      %v5403 = vld [vmem:[%s5 + $0x1c] sm:$0xf]
      %v5404 = vld [vmem:[%s5 + $0x20] sm:$0xf]
      %v5405 = vld [vmem:[%s5 + $0x24] sm:$0xf]
      %v5406 = vld [vmem:[%s5 + $0x28] sm:$0xf]
      %v5407 = vld [vmem:[%s5 + $0x2c] sm:$0xf]
      %v5408 = vld [vmem:[%s5 + $0x30] sm:$0xf]
      %v5409 = vld [vmem:[%s5 + $0x34] sm:$0xf]
      %v5410 = vld [vmem:[%s5 + $0x38] sm:$0xf]
      %v5411 = vld [vmem:[%s5 + $0x3c] sm:$0xf]
      %v5412 = vld [vmem:[%s6] sm:$0x1]
      %v5414 = vlaneseq
      %v5415 = vshrl.u32 %v5414, 7
      %v5416 = vsub.s32 0, %v5415
      %v5417 = vrot.slane %v5412, %v5416
      %v5435 = vunpack.c.l.b16 %v5396
      %v5436 = vunpack.c.l.b16 %v5397
      %v5437 = vunpack.c.l.b16 %v5398
      %v5438 = vunpack.c.l.b16 %v5399
      %v5439 = vunpack.c.l.b16 %v5400
      %v5440 = vunpack.c.l.b16 %v5401
      %v5441 = vunpack.c.l.b16 %v5402
      %v5442 = vunpack.c.l.b16 %v5403
      %v5443 = vunpack.c.l.b16 %v5404
      %v5444 = vunpack.c.l.b16 %v5405
      %v5445 = vunpack.c.l.b16 %v5406
      %v5446 = vunpack.c.l.b16 %v5407
      %v5447 = vunpack.c.l.b16 %v5408
      %v5448 = vunpack.c.l.b16 %v5409
      %v5449 = vunpack.c.l.b16 %v5410
      %v5450 = vunpack.c.l.b16 %v5411
      %v5451 = vpack.c.b16 %v5436, %v5435
      %v5452 = vpack.c.b16 %v5438, %v5437
      %v5453 = vpack.c.b16 %v5440, %v5439
      %v5454 = vpack.c.b16 %v5442, %v5441
      %v5455 = vpack.c.b16 %v5444, %v5443
      %v5456 = vpack.c.b16 %v5446, %v5445
      %v5457 = vpack.c.b16 %v5448, %v5447
      %v5458 = vpack.c.b16 %v5450, %v5449
      %5467 = vmatprep.subr.bf16.mxu0 0
      %5468 = vmatpush1.bf16.msra.mxu0 %v5451
      %5469 = vmatprep.subr.bf16.mxu0 0
      %5470 = vmatpush1.bf16.msra.mxu0 %v5452
      %5471 = vmatprep.subr.bf16.mxu0 0
      %5472 = vmatpush1.bf16.msra.mxu0 %v5453
      %5473 = vmatprep.subr.bf16.mxu0 0
      %5474 = vmatpush1.bf16.msra.mxu0 %v5454
      %5475 = vmatprep.subr.bf16.mxu0 0
      %5476 = vmatpush1.bf16.msra.mxu0 %v5455
      %5477 = vmatprep.subr.bf16.mxu0 0
      %5478 = vmatpush1.bf16.msra.mxu0 %v5456
      %5479 = vmatprep.subr.bf16.mxu0 0
      %5480 = vmatpush1.bf16.msra.mxu0 %v5457
      %5481 = vmatprep.subr.bf16.mxu0 0
      %5482 = vmatpush1.bf16.msra.mxu0 %v5458
      %5483 = vmatprep.subr.bf16.mxu0 0
      %5484 = vmatpush1.bf16.msra.mxu0 0
      %5485 = vmatprep.subr.bf16.mxu0 0
      %5486 = vmatpush1.bf16.msra.mxu0 0
      %5487 = vmatprep.subr.bf16.mxu0 0
      %5488 = vmatpush1.bf16.msra.mxu0 0
      %5489 = vmatprep.subr.bf16.mxu0 0
      %5490 = vmatpush1.bf16.msra.mxu0 0
      %5491 = vmatprep.subr.bf16.mxu0 0
      %5492 = vmatpush1.bf16.msra.mxu0 0
      %5493 = vmatprep.subr.bf16.mxu0 0
      %5494 = vmatpush1.bf16.msra.mxu0 0
      %5495 = vmatprep.subr.bf16.mxu0 0
      %5496 = vmatpush1.bf16.msra.mxu0 0
      %5497 = vmatprep.subr.bf16.mxu0 0
      %5498 = vmatpush1.bf16.msra.mxu0 0
      %5499 = vmatprep.mubr.bf16.mxu0 0
      %5500 = vmatmul.mubr.bf16.gmra.mrb[0].mxu0 %v5392
      %v5501 = vpop.f32.mrb[0].mxu0
      %v5502 = vadd.f32 %v5417, %v5501
      %v5503 = vpop.f32.mrb[0].mxu0
      %v5504 = vpop.f32.mrb[0].mxu0
      %v5505 = vadd.f32 %v5417, %v5504
      %v5506 = vpop.f32.mrb[0].mxu0
      %5507 = vmatprep.mubr.bf16.mxu0 0
      %5508 = vmatmul.mubr.bf16.gmra.mrb[0].mxu0 %v5393
      %v5509 = vpop.f32.mrb[0].mxu0
      %v5510 = vadd.f32 %v5417, %v5509
      %v5511 = vpop.f32.mrb[0].mxu0
      %v5512 = vpop.f32.mrb[0].mxu0
      %v5513 = vadd.f32 %v5417, %v5512
      %v5514 = vpop.f32.mrb[0].mxu0
      %5515 = vmatprep.mubr.bf16.mxu0 0
      %5516 = vmatmul.mubr.bf16.gmra.mrb[0].mxu0 %v5394
      %v5517 = vpop.f32.mrb[0].mxu0
      %v5518 = vadd.f32 %v5417, %v5517
      %v5519 = vpop.f32.mrb[0].mxu0
      %v5520 = vpop.f32.mrb[0].mxu0
      %v5521 = vadd.f32 %v5417, %v5520
      %v5522 = vpop.f32.mrb[0].mxu0
      %5523 = vmatprep.mubr.bf16.mxu0 0
      %5524 = vmatmul.mubr.bf16.gmra.mrb[0].mxu0 %v5395
      %v5525 = vpop.f32.mrb[0].mxu0
      %v5526 = vadd.f32 %v5417, %v5525
      %v5527 = vpop.f32.mrb[0].mxu0
      %v5528 = vpop.f32.mrb[0].mxu0
      %v5529 = vadd.f32 %v5417, %v5528
      %v5530 = vpop.f32.mrb[0].mxu0
      %5531 = vdwg.mxu0
      %v5532 = vmul.f32 %v5502, 0.5
      %v5533 = vmul.f32 %v5505, 0.5
      %v5534 = vmul.f32 %v5510, 0.5
      %v5535 = vmul.f32 %v5513, 0.5
      %v5536 = vmul.f32 %v5518, 0.5
      %v5537 = vmul.f32 %v5521, 0.5
      %v5538 = vmul.f32 %v5526, 0.5
      %v5539 = vmul.f32 %v5529, 0.5
      %v5540 = vmul.f32 %v5502, 0.70710677
      %v5541 = vmul.f32 %v5505, 0.70710677
      %v5542 = vmul.f32 %v5510, 0.70710677
      %v5543 = vmul.f32 %v5513, 0.70710677
      %v5544 = vmul.f32 %v5518, 0.70710677
      %v5545 = vmul.f32 %v5521, 0.70710677
      %v5546 = vmul.f32 %v5526, 0.70710677
      %v5547 = vmul.f32 %v5529, 0.70710677
      %v5548 = vand.u32 2147483647, %v5540
      %v5549 = vand.u32 2147483647, %v5541
      %v5550 = vand.u32 2147483647, %v5542
      %v5551 = vand.u32 2147483647, %v5543
      %v5552 = vand.u32 2147483647, %v5544
      %v5553 = vand.u32 2147483647, %v5545
      %v5554 = vand.u32 2147483647, %v5546
      %v5555 = vand.u32 2147483647, %v5547
      %v5556 = vmul.f32 %v5548, 0.3275911
      %v5557 = vmul.f32 %v5549, 0.3275911
      %v5558 = vmul.f32 %v5550, 0.3275911
      %v5559 = vmul.f32 %v5551, 0.3275911
      %v5560 = vmul.f32 %v5552, 0.3275911
      %v5561 = vmul.f32 %v5553, 0.3275911
      %v5562 = vmul.f32 %v5554, 0.3275911
      %v5563 = vmul.f32 %v5555, 0.3275911
      %v5564 = vadd.f32 %v5556, 1.0
      %v5565 = vadd.f32 %v5557, 1.0
      %v5566 = vadd.f32 %v5558, 1.0
      %v5567 = vadd.f32 %v5559, 1.0
      %v5568 = vadd.f32 %v5560, 1.0
      %v5569 = vadd.f32 %v5561, 1.0
      %v5570 = vadd.f32 %v5562, 1.0
      %v5571 = vadd.f32 %v5563, 1.0
      %v5572 = vrcp.pop %v5564
      %v5573 = vmul.f32 1.0, %v5572
      %v5574 = vrcp.pop %v5565
      %v5575 = vmul.f32 1.0, %v5574
      %v5576 = vrcp.pop %v5566
      %v5577 = vmul.f32 1.0, %v5576
      %v5578 = vrcp.pop %v5567
      %v5579 = vmul.f32 1.0, %v5578
      %v5580 = vrcp.pop %v5568
      %v5581 = vmul.f32 1.0, %v5580
      %v5582 = vrcp.pop %v5569
      %v5583 = vmul.f32 1.0, %v5582
      %v5584 = vrcp.pop %v5570
      %v5585 = vmul.f32 1.0, %v5584
      %v5586 = vrcp.pop %v5571
      %v5587 = vmul.f32 1.0, %v5586
      %v5588 = vmul.f32 %v5573, 1.0614054
      %v5589 = vmul.f32 %v5575, 1.0614054
      %v5590 = vmul.f32 %v5577, 1.0614054
      %v5591 = vmul.f32 %v5579, 1.0614054
      %v5592 = vmul.f32 %v5581, 1.0614054
      %v5593 = vmul.f32 %v5583, 1.0614054
      %v5594 = vmul.f32 %v5585, 1.0614054
      %v5595 = vmul.f32 %v5587, 1.0614054
      %v5596 = vadd.f32 %v5588, -1.4531521
      %v5597 = vadd.f32 %v5589, -1.4531521
      %v5598 = vadd.f32 %v5590, -1.4531521
      %v5599 = vadd.f32 %v5591, -1.4531521
      %v5600 = vadd.f32 %v5592, -1.4531521
      %v5601 = vadd.f32 %v5593, -1.4531521
      %v5602 = vadd.f32 %v5594, -1.4531521
      %v5603 = vadd.f32 %v5595, -1.4531521
      %v5604 = vmul.f32 %v5596, %v5573
      %v5605 = vmul.f32 %v5597, %v5575
      %v5606 = vmul.f32 %v5598, %v5577
      %v5607 = vmul.f32 %v5599, %v5579
      %v5608 = vmul.f32 %v5600, %v5581
      %v5609 = vmul.f32 %v5601, %v5583
      %v5610 = vmul.f32 %v5602, %v5585
      %v5611 = vmul.f32 %v5603, %v5587
      %v5612 = vadd.f32 %v5604, 1.4214138
      %v5613 = vadd.f32 %v5605, 1.4214138
      %v5614 = vadd.f32 %v5606, 1.4214138
      %v5615 = vadd.f32 %v5607, 1.4214138
      %v5616 = vadd.f32 %v5608, 1.4214138
      %v5617 = vadd.f32 %v5609, 1.4214138
      %v5618 = vadd.f32 %v5610, 1.4214138
      %v5619 = vadd.f32 %v5611, 1.4214138
      %v5620 = vmul.f32 %v5612, %v5573
      %v5621 = vmul.f32 %v5613, %v5575
      %v5622 = vmul.f32 %v5614, %v5577
      %v5623 = vmul.f32 %v5615, %v5579
      %v5624 = vmul.f32 %v5616, %v5581
      %v5625 = vmul.f32 %v5617, %v5583
      %v5626 = vmul.f32 %v5618, %v5585
      %v5627 = vmul.f32 %v5619, %v5587
      %v5628 = vadd.f32 %v5620, -0.28449672
      %v5629 = vadd.f32 %v5621, -0.28449672
      %v5630 = vadd.f32 %v5622, -0.28449672
      %v5631 = vadd.f32 %v5623, -0.28449672
      %v5632 = vadd.f32 %v5624, -0.28449672
      %v5633 = vadd.f32 %v5625, -0.28449672
      %v5634 = vadd.f32 %v5626, -0.28449672
      %v5635 = vadd.f32 %v5627, -0.28449672
      %v5636 = vmul.f32 %v5628, %v5573
      %v5637 = vmul.f32 %v5629, %v5575
      %v5638 = vmul.f32 %v5630, %v5577
      %v5639 = vmul.f32 %v5631, %v5579
      %v5640 = vmul.f32 %v5632, %v5581
      %v5641 = vmul.f32 %v5633, %v5583
      %v5642 = vmul.f32 %v5634, %v5585
      %v5643 = vmul.f32 %v5635, %v5587
      %v5644 = vadd.f32 %v5636, 0.2548296
      %v5645 = vadd.f32 %v5637, 0.2548296
      %v5646 = vadd.f32 %v5638, 0.2548296
      %v5647 = vadd.f32 %v5639, 0.2548296
      %v5648 = vadd.f32 %v5640, 0.2548296
      %v5649 = vadd.f32 %v5641, 0.2548296
      %v5650 = vadd.f32 %v5642, 0.2548296
      %v5651 = vadd.f32 %v5643, 0.2548296
      %v5652 = vmul.f32 %v5644, %v5573
      %v5653 = vmul.f32 %v5645, %v5575
      %v5654 = vmul.f32 %v5646, %v5577
      %v5655 = vmul.f32 %v5647, %v5579
      %v5656 = vmul.f32 %v5648, %v5581
      %v5657 = vmul.f32 %v5649, %v5583
      %v5658 = vmul.f32 %v5650, %v5585
      %v5659 = vmul.f32 %v5651, %v5587
      %v5660 = vsub.f32 0.0, %v5548
      %v5661 = vsub.f32 0.0, %v5549
      %v5662 = vsub.f32 0.0, %v5550
      %v5663 = vsub.f32 0.0, %v5551
      %v5664 = vsub.f32 0.0, %v5552
      %v5665 = vsub.f32 0.0, %v5553
      %v5666 = vsub.f32 0.0, %v5554
      %v5667 = vsub.f32 0.0, %v5555
      %v5668 = vmul.f32 %v5660, %v5548
      %v5669 = vmul.f32 %v5661, %v5549
      %v5670 = vmul.f32 %v5662, %v5550
      %v5671 = vmul.f32 %v5663, %v5551
      %v5672 = vmul.f32 %v5664, %v5552
      %v5673 = vmul.f32 %v5665, %v5553
      %v5674 = vmul.f32 %v5666, %v5554
      %v5675 = vmul.f32 %v5667, %v5555
      %v5676 = vmul.f32 %v5668, 1.442695
      %v5677 = vpow.pop %v5676
      %v5678 = vmul.f32 %v5669, 1.442695
      %v5679 = vpow.pop %v5678
      %v5680 = vmul.f32 %v5670, 1.442695
      %v5681 = vpow.pop %v5680
      %v5682 = vmul.f32 %v5671, 1.442695
      %v5683 = vpow.pop %v5682
      %v5684 = vmul.f32 %v5672, 1.442695
      %v5685 = vpow.pop %v5684
      %v5686 = vmul.f32 %v5673, 1.442695
      %v5687 = vpow.pop %v5686
      %v5688 = vmul.f32 %v5674, 1.442695
      %v5689 = vpow.pop %v5688
      %v5690 = vmul.f32 %v5675, 1.442695
      %v5691 = vpow.pop %v5690
      %v5692 = vmul.f32 %v5652, %v5677
      %v5693 = vmul.f32 %v5653, %v5679
      %v5694 = vmul.f32 %v5654, %v5681
      %v5695 = vmul.f32 %v5655, %v5683
      %v5696 = vmul.f32 %v5656, %v5685
      %v5697 = vmul.f32 %v5657, %v5687
      %v5698 = vmul.f32 %v5658, %v5689
      %v5699 = vmul.f32 %v5659, %v5691
      %v5700 = vsub.f32 1.0, %v5692
      %v5701 = vsub.f32 1.0, %v5693
      %v5702 = vsub.f32 1.0, %v5694
      %v5703 = vsub.f32 1.0, %v5695
      %v5704 = vsub.f32 1.0, %v5696
      %v5705 = vsub.f32 1.0, %v5697
      %v5706 = vsub.f32 1.0, %v5698
      %v5707 = vsub.f32 1.0, %v5699
      %vm5708 = vcmp.lt.f32.partialorder %v5540, 0.0
      %vm5709 = vcmp.lt.f32.partialorder %v5541, 0.0
      %vm5710 = vcmp.lt.f32.partialorder %v5542, 0.0
      %vm5711 = vcmp.lt.f32.partialorder %v5543, 0.0
      %vm5712 = vcmp.lt.f32.partialorder %v5544, 0.0
      %vm5713 = vcmp.lt.f32.partialorder %v5545, 0.0
      %vm5714 = vcmp.lt.f32.partialorder %v5546, 0.0
      %vm5715 = vcmp.lt.f32.partialorder %v5547, 0.0
      %v5716 = vsub.f32 0.0, %v5700
      %v5717 = vsub.f32 0.0, %v5701
      %v5718 = vsub.f32 0.0, %v5702
      %v5719 = vsub.f32 0.0, %v5703
      %v5720 = vsub.f32 0.0, %v5704
      %v5721 = vsub.f32 0.0, %v5705
      %v5722 = vsub.f32 0.0, %v5706
      %v5723 = vsub.f32 0.0, %v5707
      %v5724 = vsel %vm5708, %v5716, %v5700
      %v5725 = vsel %vm5709, %v5717, %v5701
      %v5726 = vsel %vm5710, %v5718, %v5702
      %v5727 = vsel %vm5711, %v5719, %v5703
      %v5728 = vsel %vm5712, %v5720, %v5704
      %v5729 = vsel %vm5713, %v5721, %v5705
      %v5730 = vsel %vm5714, %v5722, %v5706
      %v5731 = vsel %vm5715, %v5723, %v5707
      %v5732 = vadd.f32 %v5724, 1.0
      %v5733 = vadd.f32 %v5725, 1.0
      %v5734 = vadd.f32 %v5726, 1.0
      %v5735 = vadd.f32 %v5727, 1.0
      %v5736 = vadd.f32 %v5728, 1.0
      %v5737 = vadd.f32 %v5729, 1.0
      %v5738 = vadd.f32 %v5730, 1.0
      %v5739 = vadd.f32 %v5731, 1.0
      %v5740 = vmul.f32 %v5532, %v5732
      %v5741 = vmul.f32 %v5533, %v5733
      %v5742 = vmul.f32 %v5534, %v5734
      %v5743 = vmul.f32 %v5535, %v5735
      %v5744 = vmul.f32 %v5536, %v5736
      %v5745 = vmul.f32 %v5537, %v5737
      %v5746 = vmul.f32 %v5538, %v5738
      %v5747 = vmul.f32 %v5539, %v5739
      %v5748 = vpack.c.bf16 %v5741, %v5740
      %v5749 = vpack.c.bf16 %v5743, %v5742
      %v5750 = vpack.c.bf16 %v5745, %v5744
      %v5751 = vpack.c.bf16 %v5747, %v5746
      %v5752 = vld [vmem:[%s7] sm:$0xf]
      %v5753 = vld [vmem:[%s7 + $0x4] sm:$0xf]
      %v5754 = vld [vmem:[%s7 + $0x8] sm:$0xf]
      %v5755 = vld [vmem:[%s7 + $0xc] sm:$0xf]
      %v5756 = vld [vmem:[%s7 + $0x10] sm:$0xf]
      %v5757 = vld [vmem:[%s7 + $0x14] sm:$0xf]
      %v5758 = vld [vmem:[%s7 + $0x18] sm:$0xf]
      %v5759 = vld [vmem:[%s7 + $0x1c] sm:$0xf]
      %v5760 = vld [vmem:[%s7 + $0x20] sm:$0xf]
      %v5761 = vld [vmem:[%s7 + $0x24] sm:$0xf]
      %v5762 = vld [vmem:[%s7 + $0x28] sm:$0xf]
      %v5763 = vld [vmem:[%s7 + $0x2c] sm:$0xf]
      %v5764 = vld [vmem:[%s7 + $0x30] sm:$0xf]
      %v5765 = vld [vmem:[%s7 + $0x34] sm:$0xf]
      %v5766 = vld [vmem:[%s7 + $0x38] sm:$0xf]
      %v5767 = vld [vmem:[%s7 + $0x3c] sm:$0xf]
      %v5768 = vld [vmem:[%s8] sm:$0x1]
      %v5770 = vlaneseq
      %v5771 = vshrl.u32 %v5770, 7
      %v5772 = vsub.s32 0, %v5771
      %v5773 = vrot.slane %v5768, %v5772
      %v5791 = vunpack.c.l.b16 %v5752
      %v5792 = vunpack.c.l.b16 %v5753
      %v5793 = vunpack.c.l.b16 %v5754
      %v5794 = vunpack.c.l.b16 %v5755
      %v5795 = vunpack.c.l.b16 %v5756
      %v5796 = vunpack.c.l.b16 %v5757
      %v5797 = vunpack.c.l.b16 %v5758
      %v5798 = vunpack.c.l.b16 %v5759
      %v5799 = vunpack.c.l.b16 %v5760
      %v5800 = vunpack.c.l.b16 %v5761
      %v5801 = vunpack.c.l.b16 %v5762
      %v5802 = vunpack.c.l.b16 %v5763
      %v5803 = vunpack.c.l.b16 %v5764
      %v5804 = vunpack.c.l.b16 %v5765
      %v5805 = vunpack.c.l.b16 %v5766
      %v5806 = vunpack.c.l.b16 %v5767
      %v5807 = vpack.c.b16 %v5792, %v5791
      %v5808 = vpack.c.b16 %v5794, %v5793
      %v5809 = vpack.c.b16 %v5796, %v5795
      %v5810 = vpack.c.b16 %v5798, %v5797
      %v5811 = vpack.c.b16 %v5800, %v5799
      %v5812 = vpack.c.b16 %v5802, %v5801
      %v5813 = vpack.c.b16 %v5804, %v5803
      %v5814 = vpack.c.b16 %v5806, %v5805
      %5823 = vmatprep.subr.bf16.mxu0 0
      %5824 = vmatpush1.bf16.msra.mxu0 %v5807
      %5825 = vmatprep.subr.bf16.mxu0 0
      %5826 = vmatpush1.bf16.msra.mxu0 %v5808
      %5827 = vmatprep.subr.bf16.mxu0 0
      %5828 = vmatpush1.bf16.msra.mxu0 %v5809
      %5829 = vmatprep.subr.bf16.mxu0 0
      %5830 = vmatpush1.bf16.msra.mxu0 %v5810
      %5831 = vmatprep.subr.bf16.mxu0 0
      %5832 = vmatpush1.bf16.msra.mxu0 %v5811
      %5833 = vmatprep.subr.bf16.mxu0 0
      %5834 = vmatpush1.bf16.msra.mxu0 %v5812
      %5835 = vmatprep.subr.bf16.mxu0 0
      %5836 = vmatpush1.bf16.msra.mxu0 %v5813
      %5837 = vmatprep.subr.bf16.mxu0 0
      %5838 = vmatpush1.bf16.msra.mxu0 %v5814
      %5839 = vmatprep.subr.bf16.mxu0 0
      %5840 = vmatpush1.bf16.msra.mxu0 0
      %5841 = vmatprep.subr.bf16.mxu0 0
      %5842 = vmatpush1.bf16.msra.mxu0 0
      %5843 = vmatprep.subr.bf16.mxu0 0
      %5844 = vmatpush1.bf16.msra.mxu0 0
      %5845 = vmatprep.subr.bf16.mxu0 0
      %5846 = vmatpush1.bf16.msra.mxu0 0
      %5847 = vmatprep.subr.bf16.mxu0 0
      %5848 = vmatpush1.bf16.msra.mxu0 0
      %5849 = vmatprep.subr.bf16.mxu0 0
      %5850 = vmatpush1.bf16.msra.mxu0 0
      %5851 = vmatprep.subr.bf16.mxu0 0
      %5852 = vmatpush1.bf16.msra.mxu0 0
      %5853 = vmatprep.subr.bf16.mxu0 0
      %5854 = vmatpush1.bf16.msra.mxu0 0
      %5855 = vmatprep.mubr.bf16.mxu0 0
      %5856 = vmatmul.mubr.bf16.gmra.mrb[0].mxu0 %v5748
      %v5857 = vpop.f32.mrb[0].mxu0
      %v5858 = vadd.f32 %v5773, %v5857
      %v5859 = vpop.f32.mrb[0].mxu0
      %v5860 = vpop.f32.mrb[0].mxu0
      %v5861 = vadd.f32 %v5773, %v5860
      %v5862 = vpop.f32.mrb[0].mxu0
      %5863 = vmatprep.mubr.bf16.mxu0 0
      %5864 = vmatmul.mubr.bf16.gmra.mrb[0].mxu0 %v5749
      %v5865 = vpop.f32.mrb[0].mxu0
      %v5866 = vadd.f32 %v5773, %v5865
      %v5867 = vpop.f32.mrb[0].mxu0
      %v5868 = vpop.f32.mrb[0].mxu0
      %v5869 = vadd.f32 %v5773, %v5868
      %v5870 = vpop.f32.mrb[0].mxu0
      %5871 = vmatprep.mubr.bf16.mxu0 0
      %5872 = vmatmul.mubr.bf16.gmra.mrb[0].mxu0 %v5750
      %v5873 = vpop.f32.mrb[0].mxu0
      %v5874 = vadd.f32 %v5773, %v5873
      %v5875 = vpop.f32.mrb[0].mxu0
      %v5876 = vpop.f32.mrb[0].mxu0
      %v5877 = vadd.f32 %v5773, %v5876
      %v5878 = vpop.f32.mrb[0].mxu0
      %5879 = vmatprep.mubr.bf16.mxu0 0
      %5880 = vmatmul.mubr.bf16.gmra.mrb[0].mxu0 %v5751
      %v5881 = vpop.f32.mrb[0].mxu0
      %v5882 = vadd.f32 %v5773, %v5881
      %v5883 = vpop.f32.mrb[0].mxu0
      %v5884 = vpop.f32.mrb[0].mxu0
      %v5885 = vadd.f32 %v5773, %v5884
      %v5886 = vpop.f32.mrb[0].mxu0
      %5887 = vdwg.mxu0
      %v5888 = vadd.f32 %v5384, %v5858
      %v5889 = vadd.f32 %v5385, %v5861
      %v5890 = vadd.f32 %v5386, %v5866
      %v5891 = vadd.f32 %v5387, %v5869
      %v5892 = vadd.f32 %v5388, %v5874
      %v5893 = vadd.f32 %v5389, %v5877
      %v5894 = vadd.f32 %v5390, %v5882
      %v5895 = vadd.f32 %v5391, %v5885
      %v5896 = vld [vmem:[%s11] sm:$0x1]
      %v5897 = vld [vmem:[%s12] sm:$0x1]
      %5898 = vadd.xlane.f32.xlu0 %v5888
      %v5899 = vpop.xlane.xlu0 %5898
      %5900 = vadd.xlane.f32.xlu0 %v5889
      %v5901 = vpop.xlane.xlu0 %5900
      %5902 = vadd.xlane.f32.xlu0 %v5890
      %v5903 = vpop.xlane.xlu0 %5902
      %5904 = vadd.xlane.f32.xlu0 %v5891
      %v5905 = vpop.xlane.xlu0 %5904
      %5906 = vadd.xlane.f32.xlu0 %v5892
      %v5907 = vpop.xlane.xlu0 %5906
      %5908 = vadd.xlane.f32.xlu0 %v5893
      %v5909 = vpop.xlane.xlu0 %5908
      %5910 = vadd.xlane.f32.xlu0 %v5894
      %v5911 = vpop.xlane.xlu0 %5910
      %5912 = vadd.xlane.f32.xlu0 %v5895
      %v5913 = vpop.xlane.xlu0 %5912
      %v5914 = vmul.f32 %v5899, %v5291
      %v5915 = vmul.f32 %v5901, %v5291
      %v5916 = vmul.f32 %v5903, %v5291
      %v5917 = vmul.f32 %v5905, %v5291
      %v5918 = vmul.f32 %v5907, %v5291
      %v5919 = vmul.f32 %v5909, %v5291
      %v5920 = vmul.f32 %v5911, %v5291
      %v5921 = vmul.f32 %v5913, %v5291
      %v5922 = vsub.f32 %v5888, %v5914
      %v5923 = vsub.f32 %v5889, %v5915
      %v5924 = vsub.f32 %v5890, %v5916
      %v5925 = vsub.f32 %v5891, %v5917
      %v5926 = vsub.f32 %v5892, %v5918
      %v5927 = vsub.f32 %v5893, %v5919
      %v5928 = vsub.f32 %v5894, %v5920
      %v5929 = vsub.f32 %v5895, %v5921
      %v5930 = vmul.f32 %v5922, %v5922
      %v5931 = vmul.f32 %v5923, %v5923
      %v5932 = vmul.f32 %v5924, %v5924
      %v5933 = vmul.f32 %v5925, %v5925
      %v5934 = vmul.f32 %v5926, %v5926
      %v5935 = vmul.f32 %v5927, %v5927
      %v5936 = vmul.f32 %v5928, %v5928
      %v5937 = vmul.f32 %v5929, %v5929
      %5938 = vadd.xlane.f32.xlu0 %v5930
      %v5939 = vpop.xlane.xlu0 %5938
      %5940 = vadd.xlane.f32.xlu0 %v5931
      %v5941 = vpop.xlane.xlu0 %5940
      %5942 = vadd.xlane.f32.xlu0 %v5932
      %v5943 = vpop.xlane.xlu0 %5942
      %5944 = vadd.xlane.f32.xlu0 %v5933
      %v5945 = vpop.xlane.xlu0 %5944
      %5946 = vadd.xlane.f32.xlu0 %v5934
      %v5947 = vpop.xlane.xlu0 %5946
      %5948 = vadd.xlane.f32.xlu0 %v5935
      %v5949 = vpop.xlane.xlu0 %5948
      %5950 = vadd.xlane.f32.xlu0 %v5936
      %v5951 = vpop.xlane.xlu0 %5950
      %5952 = vadd.xlane.f32.xlu0 %v5937
      %v5953 = vpop.xlane.xlu0 %5952
      %v5954 = vmul.f32 %v5939, %v5291
      %v5955 = vmul.f32 %v5941, %v5291
      %v5956 = vmul.f32 %v5943, %v5291
      %v5957 = vmul.f32 %v5945, %v5291
      %v5958 = vmul.f32 %v5947, %v5291
      %v5959 = vmul.f32 %v5949, %v5291
      %v5960 = vmul.f32 %v5951, %v5291
      %v5961 = vmul.f32 %v5953, %v5291
      %v5962 = vadd.f32 %v5954, 1e-05
      %v5963 = vadd.f32 %v5955, 1e-05
      %v5964 = vadd.f32 %v5956, 1e-05
      %v5965 = vadd.f32 %v5957, 1e-05
      %v5966 = vadd.f32 %v5958, 1e-05
      %v5967 = vadd.f32 %v5959, 1e-05
      %v5968 = vadd.f32 %v5960, 1e-05
      %v5969 = vadd.f32 %v5961, 1e-05
      %v5970 = vrsqrt.pop %v5962
      %v5971 = vrsqrt.pop %v5963
      %v5972 = vrsqrt.pop %v5964
      %v5973 = vrsqrt.pop %v5965
      %v5974 = vrsqrt.pop %v5966
      %v5975 = vrsqrt.pop %v5967
      %v5976 = vrsqrt.pop %v5968
      %v5977 = vrsqrt.pop %v5969
      %v5978 = vmul.f32 %v5922, %v5970
      %v5979 = vmul.f32 %v5923, %v5971
      %v5980 = vmul.f32 %v5924, %v5972
      %v5981 = vmul.f32 %v5925, %v5973
      %v5982 = vmul.f32 %v5926, %v5974
      %v5983 = vmul.f32 %v5927, %v5975
      %v5984 = vmul.f32 %v5928, %v5976
      %v5985 = vmul.f32 %v5929, %v5977
      %v5987 = vlaneseq
      %v5988 = vshrl.u32 %v5987, 7
      %v5989 = vsub.s32 0, %v5988
      %v5990 = vrot.slane %v5896, %v5989
      %v5992 = vmul.f32 %v5978, %v5990
      %v5993 = vmul.f32 %v5979, %v5990
      %v5994 = vmul.f32 %v5980, %v5990
      %v5995 = vmul.f32 %v5981, %v5990
      %v5996 = vmul.f32 %v5982, %v5990
      %v5997 = vmul.f32 %v5983, %v5990
      %v5998 = vmul.f32 %v5984, %v5990
      %v5999 = vmul.f32 %v5985, %v5990
      %v6001 = vlaneseq
      %v6002 = vshrl.u32 %v6001, 7
      %v6003 = vsub.s32 0, %v6002
      %v6004 = vrot.slane %v5897, %v6003
      %v6006 = vadd.f32 %v5992, %v6004
      %v6007 = vadd.f32 %v5993, %v6004
      %v6008 = vadd.f32 %v5994, %v6004
      %v6009 = vadd.f32 %v5995, %v6004
      %v6010 = vadd.f32 %v5996, %v6004
      %v6011 = vadd.f32 %v5997, %v6004
      %v6012 = vadd.f32 %v5998, %v6004
      %v6013 = vadd.f32 %v5999, %v6004
      %6014 = vst [vmem:[%s496] sm:$0xff] %v6006
      %6015 = vst [vmem:[%s496 + $0x8] sm:$0xff] %v6007
      %6016 = vst [vmem:[%s496 + $0x10] sm:$0xff] %v6008
      %6017 = vst [vmem:[%s496 + $0x18] sm:$0xff] %v6009
      %6018 = vst [vmem:[%s496 + $0x20] sm:$0xff] %v6010
      %6019 = vst [vmem:[%s496 + $0x28] sm:$0xff] %v6011
      %6020 = vst [vmem:[%s496 + $0x30] sm:$0xff] %v6012
      %6021 = vst [vmem:[%s496 + $0x38] sm:$0xff] %v6013
      %s6022 = smul.u32 8, %s26
      %p6023 = scmp.lt.s32.totalorder %s6022, 15
      %s6024 = scalar_select %p6023, %s6022, 15
      %s6025 = smul.addr %s6024, 8
      %s6026 = scalar_lea.vmem %s15, %s6025
      // Predicated region
      $region81: #{_lambda_.5} parent=79 // pred_check
        %p6027 = pneg %p364
      $region82: #{_lambda_.5} parent=79 // pred_check_branch
        %6029 = sbr.rel (%p6027) target = $region84
      $region83: #{_lambda_.5} parent=79 // pred_region
        %s6030 = smul.u32 8, %s26
      $region84: #{_lambda_.5} parent=79 // pred_fallthru
        _
    $region80: #{_lambda_.5} parent=5 // pred_fallthru
      _
    %p6031 = scmp.le.s32.totalorder 2, %s21
    // Predicated region
    $region85: #{_lambda_.5} parent=5 // pred_check
      %p6032 = pneg %p6031
    $region86: #{_lambda_.5} parent=5 // pred_check_branch
      %6034 = sbr.rel (%p6032) target = $region88
    $region87: #{_lambda_.5} parent=5 // pred_region
      %s6035 = ssub.s32 %s21, 2
      // Predicated region
      $region89: #{_lambda_.5} parent=87 // pred_check
        %p6036 = pneg %p370
      $region90: #{_lambda_.5} parent=87 // pred_check_branch
        %6038 = sbr.rel (%p6036) target = $region92
      $region91: #{_lambda_.5} parent=87 // pred_region
        %s6039 = smul.u32 8, %s27
        %p6040 = scmp.lt.s32.totalorder %s6039, 15
        %s6041 = scalar_select %p6040, %s6039, 15
        %s6042 = smul.addr %s6041, 8
        %s6043 = scalar_lea.vmem %s15, %s6042
      $region92: #{_lambda_.5} parent=87 // pred_fallthru
        _
    $region88: #{_lambda_.5} parent=5 // pred_fallthru
      _
  $region6: #{_lambda_.5} parent=0 // loop_footer
    %s25 = sadd.s32 1, %s21
  $region7: #{_lambda_.5} parent=0 // loop_footer_branch
    %20 = sbr.rel target = $region3
  $region8: #{_lambda_.5} parent=0 // loop_exit
    _

</llo_original>
